<compile_context>
chip_gen: v7x
topology: tpu7x:2x2x1
jax: 0.10.0
libtpu: 0.0.40
codegen_flags: <defaults>
</compile_context>

<pallas_src>
import jax
import jax.numpy as jnp
from jax.experimental import pallas as pl
from jax.experimental.pallas import tpu as pltpu


def _disc_kernel(x_ref, w1, b1, w2, b2, w3, b3, wf1, bf1, wf2, bf2,
                 o_ref, max_sc):
    t = pl.program_id(0)

    @pl.when(t == 0)
    def _():
        max_sc[...] = jnp.full_like(max_sc, -jnp.inf)

    x = x_ref[...].astype(jnp.float32)                 # (B, TN, 3)
    B, TN, C = x.shape
    xf = x.reshape(B * TN, C)

    # ---- layer 1: Conv1d(3, 64, 1) + ReLU on the VPU (K=3 is wasted on the MXU) ----
    h = (xf[:, 0:1] * w1[0:1, :]
         + xf[:, 1:2] * w1[1:2, :]
         + xf[:, 2:3] * w1[2:3, :]
         + b1[...])                                    # (B*TN, 64) f32
    h = jnp.maximum(h, 0.0)

    # ---- layers 2 & 3: bf16 MXU matmuls with f32 accumulation ----
    h = jnp.dot(h.astype(jnp.bfloat16), w2[...],
                preferred_element_type=jnp.float32) + b2[...]
    h = jnp.maximum(h, 0.0)                            # (B*TN, 128) f32
    h = jnp.dot(h.astype(jnp.bfloat16), w3[...],
                preferred_element_type=jnp.float32) + b3[...]
    h = jnp.maximum(h, 0.0)                            # (B*TN, 256) f32

    # running max over the point dimension (torch.max(x, 2)[0]) -- kept in f32
    tile_max = jnp.max(h.reshape(B, TN, 256), axis=1)  # (B, 256)
    max_sc[...] = jnp.maximum(max_sc[...], tile_max)

    @pl.when(t == pl.num_programs(0) - 1)
    def _():
        feat = max_sc[...]                             # (B, 256) f32
        z = jnp.dot(feat.astype(jnp.bfloat16), wf1[...],
                    preferred_element_type=jnp.float32) + bf1[...]
        z = jnp.maximum(z, 0.0)                        # (B, 128) f32
        z = jnp.dot(z, wf2[...], preferred_element_type=jnp.float32) + bf2[...]
        o_ref[...] = jax.nn.sigmoid(z).astype(o_ref.dtype)


def _choose_tile_n(B, N, max_rows):
    """Largest point-tile (divisor of N) with B*tile_n <= max_rows; prefers
    multiples of 8 so the (B, tile_n, 3) block satisfies the (8,128) rule."""
    cap = max(1, max_rows // max(B, 1))
    if N <= cap:
        return N
    for t in range(cap, 0, -1):
        if N % t == 0 and t % 8 == 0:
            return t
    for t in range(cap, 0, -1):
        if N % t == 0:
            return t
    return N


def discriminator_modelnet(x, params, *, tile_n=None, max_rows_per_step=4096):
    """x: (B, N, 3) float32.  Returns (B, 1) sigmoid score."""
    B, N, C = x.shape
    assert C == 3
    if tile_n is None:
        # On v7x (64 MiB VMEM) with very large B, lower max_rows_per_step.
        tile_n = _choose_tile_n(B, N, max_rows_per_step)
    assert N % tile_n == 0
    grid = (N // tile_n,)

    (w1, b1, w2, b2, w3, b3, wf1, bf1, wf2, bf2) = params
    # bf16 for the MXU-heavy weights; small layer-1 / biases / final weight stay f32.
    kparams = (w1.astype(jnp.float32),  b1.astype(jnp.float32),
               w2.astype(jnp.bfloat16), b2.astype(jnp.float32),
               w3.astype(jnp.bfloat16), b3.astype(jnp.float32),
               wf1.astype(jnp.bfloat16), bf1.astype(jnp.float32),
               wf2.astype(jnp.float32), bf2.astype(jnp.float32))

    def full_spec(arr):
        # grid-invariant block (constant index_map) -> fetched once, no re-DMA.
        return pl.BlockSpec(arr.shape, lambda t, nd=arr.ndim: (0,) * nd)

    in_specs = [pl.BlockSpec((B, tile_n, C), lambda t: (0, t, 0))]
    in_specs += [full_spec(p) for p in kparams]

    return pl.pallas_call(
        _disc_kernel,
        out_shape=jax.ShapeDtypeStruct((B, 1), x.dtype),
        grid=grid,
        in_specs=in_specs,
        out_specs=pl.BlockSpec((B, 1), lambda t: (0, 0)),
        scratch_shapes=[pltpu.VMEM((B, 256), jnp.float32)],
        compiler_params=pltpu.CompilerParams(
            dimension_semantics=("arbitrary",),
            vmem_limit_bytes=48 * 1024 * 1024,
        ),
    )(x, *kparams)


def init_params(key):
    """Deterministic synthetic params.  PyTorch shapes:
    Conv1d(3,64,1): W(64,3,1) b(64,); Conv1d(64,128,1); Conv1d(128,256,1);
    Linear(256,128); Linear(128,1).  Stored pre-transposed for x @ W."""
    ks = jax.random.split(key, 10)
    def mk(k, shape, fan_in):
        return (jax.random.normal(k, shape, jnp.float32) / jnp.sqrt(fan_in)).astype(jnp.float32)
    w1  = mk(ks[0], (3, 64), 3);      b1  = mk(ks[1], (1, 64), 3)
    w2  = mk(ks[2], (64, 128), 64);   b2  = mk(ks[3], (1, 128), 64)
    w3  = mk(ks[4], (128, 256), 128); b3  = mk(ks[5], (1, 256), 128)
    wf1 = mk(ks[6], (256, 128), 256); bf1 = mk(ks[7], (1, 128), 256)
    wf2 = mk(ks[8], (128, 1), 128);   bf2 = mk(ks[9], (1, 1), 128)
    return (w1, b1, w2, b2, w3, b3, wf1, bf1, wf2, bf2)


def reference(x, params):
    (w1, b1, w2, b2, w3, b3, wf1, bf1, wf2, bf2) = params
    h = jax.nn.relu(x @ w1 + b1)          # (B, N, 64)
    h = jax.nn.relu(h @ w2 + b2)          # (B, N, 128)
    h = jax.nn.relu(h @ w3 + b3)          # (B, N, 256)
    feat = jnp.max(h, axis=1)             # (B, 256)  == torch.max(x, 2)[0]
    z = jax.nn.relu(feat @ wf1 + bf1)
    return jax.nn.sigmoid(z @ wf2 + bf2)  # (B, 1)


if __name__ == "__main__":
    key = jax.random.PRNGKey(0)
    kx, kp = jax.random.split(key)
    B, N = 2, 1024                         # module default num_points=1024
    x = jax.random.normal(kx, (B, N, 3), jnp.float32)
    params = init_params(kp)

    out = discriminator_modelnet(x, params)   # tile_n auto -> single grid step here
    out = jax.block_until_ready(out)

    ref = reference(x, params)
    assert out.shape == (B, 1)
    # bf16 MXU operands (f32 accumulation) => loosened tolerance vs the pure-f32 ref.
    assert jnp.allclose(out, ref, rtol=5e-2, atol=5e-2), float(jnp.max(jnp.abs(out - ref)))
    print("KERNEL_OK")
</pallas_src>

<mosaic_0001>
module attributes {stable_mosaic.version = 11 : i64} {
  func.func @_disc_kernel(%arg0: i32, %arg1: memref<2x1024x3xf32, #tpu.memory_space<vmem>>, %arg2: memref<3x64xf32, #tpu.memory_space<vmem>>, %arg3: memref<1x64xf32, #tpu.memory_space<vmem>>, %arg4: memref<64x128xbf16, #tpu.memory_space<vmem>>, %arg5: memref<1x128xf32, #tpu.memory_space<vmem>>, %arg6: memref<128x256xbf16, #tpu.memory_space<vmem>>, %arg7: memref<1x256xf32, #tpu.memory_space<vmem>>, %arg8: memref<256x128xbf16, #tpu.memory_space<vmem>>, %arg9: memref<1x128xf32, #tpu.memory_space<vmem>>, %arg10: memref<128x1xf32, #tpu.memory_space<vmem>>, %arg11: memref<1x1xf32, #tpu.memory_space<vmem>>, %arg12: memref<2x1xf32, #tpu.memory_space<vmem>>, %arg13: memref<2x256xf32, #tpu.memory_space<vmem>>) attributes {dimension_semantics = [#tpu.dimension_semantics<arbitrary>], iteration_bounds = array<i64: 1>, scalar_prefetch = 0 : i64, scratch_operands = 1 : i64, tpu.core_type = #tpu.core_type<tc>, window_params = [{transform_indices = @transform_0, window_bounds = array<i64: 2, 1024, 3>}, {pipeline_mode = #tpu.pipeline_mode<synchronous>, transform_indices = @transform_1, window_bounds = array<i64: 3, 64>}, {pipeline_mode = #tpu.pipeline_mode<synchronous>, transform_indices = @transform_2, window_bounds = array<i64: 1, 64>}, {pipeline_mode = #tpu.pipeline_mode<synchronous>, transform_indices = @transform_3, window_bounds = array<i64: 64, 128>}, {pipeline_mode = #tpu.pipeline_mode<synchronous>, transform_indices = @transform_4, window_bounds = array<i64: 1, 128>}, {pipeline_mode = #tpu.pipeline_mode<synchronous>, transform_indices = @transform_5, window_bounds = array<i64: 128, 256>}, {pipeline_mode = #tpu.pipeline_mode<synchronous>, transform_indices = @transform_6, window_bounds = array<i64: 1, 256>}, {pipeline_mode = #tpu.pipeline_mode<synchronous>, transform_indices = @transform_7, window_bounds = array<i64: 256, 128>}, {pipeline_mode = #tpu.pipeline_mode<synchronous>, transform_indices = @transform_8, window_bounds = array<i64: 1, 128>}, {pipeline_mode = #tpu.pipeline_mode<synchronous>, transform_indices = @transform_9, window_bounds = array<i64: 128, 1>}, {pipeline_mode = #tpu.pipeline_mode<synchronous>, transform_indices = @transform_10, window_bounds = array<i64: 1, 1>}, {pipeline_mode = #tpu.pipeline_mode<synchronous>, transform_indices = @transform_11, window_bounds = array<i64: 2, 1>}]} {
    %c0_i32 = arith.constant 0 : i32
    %0 = arith.cmpi eq, %arg0, %c0_i32 : i32
    %1 = arith.extui %0 : i1 to i32
    %c0_i32_0 = arith.constant 0 : i32
    %2 = arith.cmpi ne, %1, %c0_i32_0 : i32
    scf.if %2 {
      %cst_28 = arith.constant 0xFF800000 : f32
      %51 = vector.broadcast %cst_28 : f32 to vector<2x256xf32>
      %c0_29 = arith.constant 0 : index
      %c0_30 = arith.constant 0 : index
      %52 = vector.load %arg13[%c0_29, %c0_30] : memref<2x256xf32, #tpu.memory_space<vmem>>, vector<2x256xf32>
      tpu.vector_store %arg13[%c0_29, %c0_30], %51 {strides = array<i32>} : memref<2x256xf32, #tpu.memory_space<vmem>>, vector<2x256xf32>,
    } else {
    }
    %c0 = arith.constant 0 : index
    %c0_1 = arith.constant 0 : index
    %c0_2 = arith.constant 0 : index
    %3 = vector.load %arg1[%c0, %c0_1, %c0_2] : memref<2x1024x3xf32, #tpu.memory_space<vmem>>, vector<2x1024x3xf32>
    %4 = vector.shape_cast %3 : vector<2x1024x3xf32> to vector<2048x3xf32>
    %5 = vector.extract_strided_slice %4 {offsets = [0, 0], sizes = [2048, 1], strides = [1, 1]} : vector<2048x3xf32> to vector<2048x1xf32>
    %c0_3 = arith.constant 0 : index
    %c0_4 = arith.constant 0 : index
    %6 = vector.load %arg2[%c0_3, %c0_4] : memref<3x64xf32, #tpu.memory_space<vmem>>, vector<1x64xf32>
    %7 = vector.broadcast %5 : vector<2048x1xf32> to vector<2048x64xf32>
    %8 = vector.broadcast %6 : vector<1x64xf32> to vector<2048x64xf32>
    %9 = arith.mulf %7, %8 : vector<2048x64xf32>
    %10 = vector.extract_strided_slice %4 {offsets = [0, 1], sizes = [2048, 1], strides = [1, 1]} : vector<2048x3xf32> to vector<2048x1xf32>
    %c1 = arith.constant 1 : index
    %c0_5 = arith.constant 0 : index
    %11 = vector.load %arg2[%c1, %c0_5] : memref<3x64xf32, #tpu.memory_space<vmem>>, vector<1x64xf32>
    %12 = vector.broadcast %10 : vector<2048x1xf32> to vector<2048x64xf32>
    %13 = vector.broadcast %11 : vector<1x64xf32> to vector<2048x64xf32>
    %14 = arith.mulf %12, %13 : vector<2048x64xf32>
    %15 = arith.addf %9, %14 : vector<2048x64xf32>
    %16 = vector.extract_strided_slice %4 {offsets = [0, 2], sizes = [2048, 1], strides = [1, 1]} : vector<2048x3xf32> to vector<2048x1xf32>
    %c2 = arith.constant 2 : index
    %c0_6 = arith.constant 0 : index
    %17 = vector.load %arg2[%c2, %c0_6] : memref<3x64xf32, #tpu.memory_space<vmem>>, vector<1x64xf32>
    %18 = vector.broadcast %16 : vector<2048x1xf32> to vector<2048x64xf32>
    %19 = vector.broadcast %17 : vector<1x64xf32> to vector<2048x64xf32>
    %20 = arith.mulf %18, %19 : vector<2048x64xf32>
    %21 = arith.addf %15, %20 : vector<2048x64xf32>
    %c0_7 = arith.constant 0 : index
    %c0_8 = arith.constant 0 : index
    %22 = vector.load %arg3[%c0_7, %c0_8] : memref<1x64xf32, #tpu.memory_space<vmem>>, vector<1x64xf32>
    %23 = vector.broadcast %22 : vector<1x64xf32> to vector<2048x64xf32>
    %24 = arith.addf %21, %23 : vector<2048x64xf32>
    %cst = arith.constant 0.000000e+00 : f32
    %25 = vector.broadcast %cst : f32 to vector<2048x64xf32>
    %26 = arith.maximumf %24, %25 : vector<2048x64xf32>
    %27 = arith.truncf %26 : vector<2048x64xf32> to vector<2048x64xbf16>
    %c0_9 = arith.constant 0 : index
    %c0_10 = arith.constant 0 : index
    %28 = vector.load %arg4[%c0_9, %c0_10] : memref<64x128xbf16, #tpu.memory_space<vmem>>, vector<64x128xbf16>
    %cst_11 = arith.constant dense<0.000000e+00> : vector<2048x128xf32>
    %29 = tpu.matmul %27, %28, %cst_11 {dimension_numbers = #tpu.dot_dimension_numbers<[1], [0], [0], [1], [0, 0, 1, 1], [], []>} : vector<2048x64xbf16>, vector<64x128xbf16>, vector<2048x128xf32> -> vector<2048x128xf32>
    %c0_12 = arith.constant 0 : index
    %c0_13 = arith.constant 0 : index
    %30 = vector.load %arg5[%c0_12, %c0_13] : memref<1x128xf32, #tpu.memory_space<vmem>>, vector<1x128xf32>
    %31 = vector.broadcast %30 : vector<1x128xf32> to vector<2048x128xf32>
    %32 = arith.addf %29, %31 : vector<2048x128xf32>
    %cst_14 = arith.constant 0.000000e+00 : f32
    %33 = vector.broadcast %cst_14 : f32 to vector<2048x128xf32>
    %34 = arith.maximumf %32, %33 : vector<2048x128xf32>
    %35 = arith.truncf %34 : vector<2048x128xf32> to vector<2048x128xbf16>
    %c0_15 = arith.constant 0 : index
    %c0_16 = arith.constant 0 : index
    %36 = vector.load %arg6[%c0_15, %c0_16] : memref<128x256xbf16, #tpu.memory_space<vmem>>, vector<128x256xbf16>
    %cst_17 = arith.constant dense<0.000000e+00> : vector<2048x256xf32>
    %37 = tpu.matmul %35, %36, %cst_17 {dimension_numbers = #tpu.dot_dimension_numbers<[1], [0], [0], [1], [0, 0, 1, 1], [], []>} : vector<2048x128xbf16>, vector<128x256xbf16>, vector<2048x256xf32> -> vector<2048x256xf32>
    %c0_18 = arith.constant 0 : index
    %c0_19 = arith.constant 0 : index
    %38 = vector.load %arg7[%c0_18, %c0_19] : memref<1x256xf32, #tpu.memory_space<vmem>>, vector<1x256xf32>
    %39 = vector.broadcast %38 : vector<1x256xf32> to vector<2048x256xf32>
    %40 = arith.addf %37, %39 : vector<2048x256xf32>
    %cst_20 = arith.constant 0.000000e+00 : f32
    %41 = vector.broadcast %cst_20 : f32 to vector<2048x256xf32>
    %42 = arith.maximumf %40, %41 : vector<2048x256xf32>
    %43 = vector.shape_cast %42 : vector<2048x256xf32> to vector<2x1024x256xf32>
    %cst_21 = arith.constant dense<0xFF800000> : vector<2x256xf32>
    %44 = vector.multi_reduction <maximumf>, %43, %cst_21 [1] : vector<2x1024x256xf32> to vector<2x256xf32>
    %c0_22 = arith.constant 0 : index
    %c0_23 = arith.constant 0 : index
    %45 = vector.load %arg13[%c0_22, %c0_23] : memref<2x256xf32, #tpu.memory_space<vmem>>, vector<2x256xf32>
    %46 = arith.maximumf %45, %44 : vector<2x256xf32>
    %c0_24 = arith.constant 0 : index
    %c0_25 = arith.constant 0 : index
    %47 = vector.load %arg13[%c0_24, %c0_25] : memref<2x256xf32, #tpu.memory_space<vmem>>, vector<2x256xf32>
    tpu.vector_store %arg13[%c0_24, %c0_25], %46 {strides = array<i32>} : memref<2x256xf32, #tpu.memory_space<vmem>>, vector<2x256xf32>,
    %c0_i32_26 = arith.constant 0 : i32
    %48 = arith.cmpi eq, %arg0, %c0_i32_26 : i32
    %49 = arith.extui %48 : i1 to i32
    %c0_i32_27 = arith.constant 0 : i32
    %50 = arith.cmpi ne, %49, %c0_i32_27 : i32
    scf.if %50 {
      %c0_28 = arith.constant 0 : index
      %c0_29 = arith.constant 0 : index
      %51 = vector.load %arg13[%c0_28, %c0_29] : memref<2x256xf32, #tpu.memory_space<vmem>>, vector<2x256xf32>
      %52 = arith.truncf %51 : vector<2x256xf32> to vector<2x256xbf16>
      %c0_30 = arith.constant 0 : index
      %c0_31 = arith.constant 0 : index
      %53 = vector.load %arg8[%c0_30, %c0_31] : memref<256x128xbf16, #tpu.memory_space<vmem>>, vector<256x128xbf16>
      %cst_32 = arith.constant dense<0.000000e+00> : vector<2x128xf32>
      %54 = tpu.matmul %52, %53, %cst_32 {dimension_numbers = #tpu.dot_dimension_numbers<[1], [0], [0], [1], [0, 0, 1, 1], [], []>} : vector<2x256xbf16>, vector<256x128xbf16>, vector<2x128xf32> -> vector<2x128xf32>
      %c0_33 = arith.constant 0 : index
      %c0_34 = arith.constant 0 : index
      %55 = vector.load %arg9[%c0_33, %c0_34] : memref<1x128xf32, #tpu.memory_space<vmem>>, vector<1x128xf32>
      %56 = vector.broadcast %55 : vector<1x128xf32> to vector<2x128xf32>
      %57 = arith.addf %54, %56 : vector<2x128xf32>
      %cst_35 = arith.constant 0.000000e+00 : f32
      %58 = vector.broadcast %cst_35 : f32 to vector<2x128xf32>
      %59 = arith.maximumf %57, %58 : vector<2x128xf32>
      %c0_36 = arith.constant 0 : index
      %c0_37 = arith.constant 0 : index
      %60 = vector.load %arg10[%c0_36, %c0_37] : memref<128x1xf32, #tpu.memory_space<vmem>>, vector<128x1xf32>
      %cst_38 = arith.constant dense<0.000000e+00> : vector<2x1xf32>
      %61 = tpu.matmul %59, %60, %cst_38 {dimension_numbers = #tpu.dot_dimension_numbers<[1], [0], [0], [1], [0, 0, 1, 1], [], []>} : vector<2x128xf32>, vector<128x1xf32>, vector<2x1xf32> -> vector<2x1xf32>
      %c0_39 = arith.constant 0 : index
      %c0_40 = arith.constant 0 : index
      %62 = vector.load %arg11[%c0_39, %c0_40] : memref<1x1xf32, #tpu.memory_space<vmem>>, vector<1x1xf32>
      %63 = vector.broadcast %62 : vector<1x1xf32> to vector<2x1xf32>
      %64 = arith.addf %61, %63 : vector<2x1xf32>
      %65 = arith.negf %64 : vector<2x1xf32>
      %66 = math.exp %65 : vector<2x1xf32>
      %cst_41 = arith.constant 1.000000e+00 : f32
      %67 = vector.broadcast %cst_41 : f32 to vector<2x1xf32>
      %68 = arith.addf %67, %66 : vector<2x1xf32>
      %69 = arith.divf %67, %68 : vector<2x1xf32>
      %c0_42 = arith.constant 0 : index
      %c0_43 = arith.constant 0 : index
      %70 = vector.load %arg12[%c0_42, %c0_43] : memref<2x1xf32, #tpu.memory_space<vmem>>, vector<2x1xf32>
      tpu.vector_store %arg12[%c0_42, %c0_43], %69 {strides = array<i32>} : memref<2x1xf32, #tpu.memory_space<vmem>>, vector<2x1xf32>,
    } else {
    }
    return
  }
  func.func @transform_0(%arg0: i32) -> (i32, i32, i32) {
    %c0_i32 = arith.constant 0 : i32
    %c0_i32_0 = arith.constant 0 : i32
    %c0_i32_1 = arith.constant 0 : i32
    return %c0_i32, %arg0, %c0_i32_0 : i32, i32, i32
  }
  func.func @transform_1(%arg0: i32) -> (i32, i32) {
    %c0_i32 = arith.constant 0 : i32
    %c0_i32_0 = arith.constant 0 : i32
    %c0_i32_1 = arith.constant 0 : i32
    return %c0_i32, %c0_i32_0 : i32, i32
  }
  func.func @transform_2(%arg0: i32) -> (i32, i32) {
    %c0_i32 = arith.constant 0 : i32
    %c0_i32_0 = arith.constant 0 : i32
    %c0_i32_1 = arith.constant 0 : i32
    return %c0_i32, %c0_i32_0 : i32, i32
  }
  func.func @transform_3(%arg0: i32) -> (i32, i32) {
    %c0_i32 = arith.constant 0 : i32
    %c0_i32_0 = arith.constant 0 : i32
    %c0_i32_1 = arith.constant 0 : i32
    return %c0_i32, %c0_i32_0 : i32, i32
  }
  func.func @transform_4(%arg0: i32) -> (i32, i32) {
    %c0_i32 = arith.constant 0 : i32
    %c0_i32_0 = arith.constant 0 : i32
    %c0_i32_1 = arith.constant 0 : i32
    return %c0_i32, %c0_i32_0 : i32, i32
  }
  func.func @transform_5(%arg0: i32) -> (i32, i32) {
    %c0_i32 = arith.constant 0 : i32
    %c0_i32_0 = arith.constant 0 : i32
    %c0_i32_1 = arith.constant 0 : i32
    return %c0_i32, %c0_i32_0 : i32, i32
  }
  func.func @transform_6(%arg0: i32) -> (i32, i32) {
    %c0_i32 = arith.constant 0 : i32
    %c0_i32_0 = arith.constant 0 : i32
    %c0_i32_1 = arith.constant 0 : i32
    return %c0_i32, %c0_i32_0 : i32, i32
  }
  func.func @transform_7(%arg0: i32) -> (i32, i32) {
    %c0_i32 = arith.constant 0 : i32
    %c0_i32_0 = arith.constant 0 : i32
    %c0_i32_1 = arith.constant 0 : i32
    return %c0_i32, %c0_i32_0 : i32, i32
  }
  func.func @transform_8(%arg0: i32) -> (i32, i32) {
    %c0_i32 = arith.constant 0 : i32
    %c0_i32_0 = arith.constant 0 : i32
    %c0_i32_1 = arith.constant 0 : i32
    return %c0_i32, %c0_i32_0 : i32, i32
  }
  func.func @transform_9(%arg0: i32) -> (i32, i32) {
    %c0_i32 = arith.constant 0 : i32
    %c0_i32_0 = arith.constant 0 : i32
    %c0_i32_1 = arith.constant 0 : i32
    return %c0_i32, %c0_i32_0 : i32, i32
  }
  func.func @transform_10(%arg0: i32) -> (i32, i32) {
    %c0_i32 = arith.constant 0 : i32
    %c0_i32_0 = arith.constant 0 : i32
    %c0_i32_1 = arith.constant 0 : i32
    return %c0_i32, %c0_i32_0 : i32, i32
  }
  func.func @transform_11(%arg0: i32) -> (i32, i32) {
    %c0_i32 = arith.constant 0 : i32
    %c0_i32_0 = arith.constant 0 : i32
    %c0_i32_1 = arith.constant 0 : i32
    return %c0_i32, %c0_i32_0 : i32, i32
  }
}

</mosaic_0001>

<llo_original>
// kernel: tpu_custom_call.1
$region0: #{tpu_custom_call.1}
  #allocation0 [shape = 'u32[]', space=smem, size = 0x4, offset = 0x4, fixed_abs, tag = 'smem constant byte address 0x4 - core index']
  #allocation1 [shape = 'u32[144,128]{1,0:T(1,128)}', space=vmem, size = 0x12000, scoped, tag = 'internal scratch']
  #allocation2 [shape = 'f32[2,256]{1,0:T(2,128)}', space=vmem, size = 0x800, scoped, tag = 'scratch operand']
  #allocation3 [shape = 'f32[1,1]{1,0:T(1,128)S(1)}', space=vmem, size = 0x200, scoped, tag = 'scoped memory for tpu_custom_call.1']
  %s0 = inlined_call_operand.vmem [shape: f32[2,1024,3], index: 0, kind: input, shape index: {}]
  %s1 = inlined_call_operand.vmem [shape: f32[3,64], index: 1, kind: input, shape index: {}]
  %s2 = inlined_call_operand.vmem [shape: f32[1,64], index: 2, kind: input, shape index: {}]
  %s3 = inlined_call_operand.vmem [shape: bf16[64,128], index: 3, kind: input, shape index: {}]
  %s4 = inlined_call_operand.vmem [shape: f32[1,128], index: 4, kind: input, shape index: {}]
  %s5 = inlined_call_operand.vmem [shape: bf16[128,256], index: 5, kind: input, shape index: {}]
  %s6 = inlined_call_operand.vmem [shape: f32[1,256], index: 6, kind: input, shape index: {}]
  %s7 = inlined_call_operand.vmem [shape: bf16[256,128], index: 7, kind: input, shape index: {}]
  %s8 = inlined_call_operand.vmem [shape: f32[1,128], index: 8, kind: input, shape index: {}]
  %s9 = inlined_call_operand.vmem [shape: f32[128,1], index: 9, kind: input, shape index: {}]
  %s10 = inlined_call_operand.<no memory space> [shape: f32[1,1], index: 10, kind: input, shape index: {}]
  %s11 = inlined_call_operand.vmem [shape: f32[2,1], index: 11, kind: output, shape index: {}]
  %s12 = sld [smem:[#allocation0]]
  $region62: #{tpu_custom_call.1} parent=0
    _
  %s14 = ssub.s32 1, %s12
  %s15 = scalar_select 0, %s14, %s12
  %v16 = vstv %s10
  %17 = vst [vmem:[#allocation3] sm:$0x1] %v16
  // Predicated region
  $region2: #{tpu_custom_call.1} parent=0 // pred_check
    _
  $region3: #{tpu_custom_call.1} parent=0 // pred_check_branch
    %19 = sbr.rel (0) target = $region5
  $region4: #{tpu_custom_call.1} parent=0 // pred_region
    _
  $region5: #{tpu_custom_call.1} parent=0 // pred_fallthru
    _
  // Predicated region
  $region6: #{tpu_custom_call.1} parent=0 // pred_check
    _
  $region7: #{tpu_custom_call.1} parent=0 // pred_check_branch
    %21 = sbr.rel (0) target = $region9
  $region8: #{tpu_custom_call.1} parent=0 // pred_region
    _
  $region9: #{tpu_custom_call.1} parent=0 // pred_fallthru
    _
  // Predicated region
  $region10: #{tpu_custom_call.1} parent=0 // pred_check
    _
  $region11: #{tpu_custom_call.1} parent=0 // pred_check_branch
    %23 = sbr.rel (0) target = $region13
  $region12: #{tpu_custom_call.1} parent=0 // pred_region
    _
  $region13: #{tpu_custom_call.1} parent=0 // pred_fallthru
    _
  // Predicated region
  $region14: #{tpu_custom_call.1} parent=0 // pred_check
    _
  $region15: #{tpu_custom_call.1} parent=0 // pred_check_branch
    %25 = sbr.rel (0) target = $region17
  $region16: #{tpu_custom_call.1} parent=0 // pred_region
    _
  $region17: #{tpu_custom_call.1} parent=0 // pred_fallthru
    _
  // Predicated region
  $region18: #{tpu_custom_call.1} parent=0 // pred_check
    _
  $region19: #{tpu_custom_call.1} parent=0 // pred_check_branch
    %27 = sbr.rel (0) target = $region21
  $region20: #{tpu_custom_call.1} parent=0 // pred_region
    _
  $region21: #{tpu_custom_call.1} parent=0 // pred_fallthru
    _
  // Predicated region
  $region22: #{tpu_custom_call.1} parent=0 // pred_check
    _
  $region23: #{tpu_custom_call.1} parent=0 // pred_check_branch
    %29 = sbr.rel (0) target = $region25
  $region24: #{tpu_custom_call.1} parent=0 // pred_region
    _
  $region25: #{tpu_custom_call.1} parent=0 // pred_fallthru
    _
  // Predicated region
  $region26: #{tpu_custom_call.1} parent=0 // pred_check
    _
  $region27: #{tpu_custom_call.1} parent=0 // pred_check_branch
    %31 = sbr.rel (0) target = $region29
  $region28: #{tpu_custom_call.1} parent=0 // pred_region
    _
  $region29: #{tpu_custom_call.1} parent=0 // pred_fallthru
    _
  // Predicated region
  $region30: #{tpu_custom_call.1} parent=0 // pred_check
    _
  $region31: #{tpu_custom_call.1} parent=0 // pred_check_branch
    %33 = sbr.rel (0) target = $region33
  $region32: #{tpu_custom_call.1} parent=0 // pred_region
    _
  $region33: #{tpu_custom_call.1} parent=0 // pred_fallthru
    _
  // Predicated region
  $region34: #{tpu_custom_call.1} parent=0 // pred_check
    _
  $region35: #{tpu_custom_call.1} parent=0 // pred_check_branch
    %35 = sbr.rel (0) target = $region37
  $region36: #{tpu_custom_call.1} parent=0 // pred_region
    _
  $region37: #{tpu_custom_call.1} parent=0 // pred_fallthru
    _
  // Predicated region
  $region38: #{tpu_custom_call.1} parent=0 // pred_check
    _
  $region39: #{tpu_custom_call.1} parent=0 // pred_check_branch
    %37 = sbr.rel (0) target = $region41
  $region40: #{tpu_custom_call.1} parent=0 // pred_region
    _
  $region41: #{tpu_custom_call.1} parent=0 // pred_fallthru
    _
  // Predicated region
  $region42: #{tpu_custom_call.1} parent=0 // pred_check
    _
  $region43: #{tpu_custom_call.1} parent=0 // pred_check_branch
    %39 = sbr.rel (0) target = $region45
  $region44: #{tpu_custom_call.1} parent=0 // pred_region
    _
  $region45: #{tpu_custom_call.1} parent=0 // pred_fallthru
    _
  %p41 = scmp.eq.s32.totalorder 0, 0
  // Predicated region
  $region46: #{tpu_custom_call.1} parent=0 // pred_check
    %p42 = pneg %p41
  $region47: #{tpu_custom_call.1} parent=0 // pred_check_branch
    %44 = sbr.rel (%p42) target = $region49
  $region48: #{tpu_custom_call.1} parent=0 // pred_region
    %45 = vst [vmem:[#allocation2] sm:$0xf] -inf
  $region49: #{tpu_custom_call.1} parent=0 // pred_fallthru
    _
  %v46 = vld [vmem:[%s0] sm:$0xff]
  %v47 = vld [vmem:[%s0 + $0x8] sm:$0xff]
  %v48 = vld [vmem:[%s0 + $0x10] sm:$0xff]
  %v49 = vld [vmem:[%s0 + $0x18] sm:$0xff]
  %v50 = vld [vmem:[%s0 + $0x20] sm:$0xff]
  %v51 = vld [vmem:[%s0 + $0x28] sm:$0xff]
  %v52 = vld [vmem:[%s0 + $0x30] sm:$0xff]
  %v53 = vld [vmem:[%s0 + $0x38] sm:$0xff]
  %v54 = vld [vmem:[%s0 + $0x40] sm:$0xff]
  %v55 = vld [vmem:[%s0 + $0x48] sm:$0xff]
  %v56 = vld [vmem:[%s0 + $0x50] sm:$0xff]
  %v57 = vld [vmem:[%s0 + $0x58] sm:$0xff]
  %v58 = vld [vmem:[%s0 + $0x60] sm:$0xff]
  %v59 = vld [vmem:[%s0 + $0x68] sm:$0xff]
  %v60 = vld [vmem:[%s0 + $0x70] sm:$0xff]
  %v61 = vld [vmem:[%s0 + $0x78] sm:$0xff]
  %v62 = vld [vmem:[%s0 + $0x80] sm:$0xff]
  %v63 = vld [vmem:[%s0 + $0x88] sm:$0xff]
  %v64 = vld [vmem:[%s0 + $0x90] sm:$0xff]
  %v65 = vld [vmem:[%s0 + $0x98] sm:$0xff]
  %v66 = vld [vmem:[%s0 + $0xa0] sm:$0xff]
  %v67 = vld [vmem:[%s0 + $0xa8] sm:$0xff]
  %v68 = vld [vmem:[%s0 + $0xb0] sm:$0xff]
  %v69 = vld [vmem:[%s0 + $0xb8] sm:$0xff]
  %v70 = vld [vmem:[%s0 + $0xc0] sm:$0xff]
  %v71 = vld [vmem:[%s0 + $0xc8] sm:$0xff]
  %v72 = vld [vmem:[%s0 + $0xd0] sm:$0xff]
  %v73 = vld [vmem:[%s0 + $0xd8] sm:$0xff]
  %v74 = vld [vmem:[%s0 + $0xe0] sm:$0xff]
  %v75 = vld [vmem:[%s0 + $0xe8] sm:$0xff]
  %v76 = vld [vmem:[%s0 + $0xf0] sm:$0xff]
  %v77 = vld [vmem:[%s0 + $0xf8] sm:$0xff]
  %v78 = vld [vmem:[%s0 + $0x100] sm:$0xff]
  %v79 = vld [vmem:[%s0 + $0x108] sm:$0xff]
  %v80 = vld [vmem:[%s0 + $0x110] sm:$0xff]
  %v81 = vld [vmem:[%s0 + $0x118] sm:$0xff]
  %v82 = vld [vmem:[%s0 + $0x120] sm:$0xff]
  %v83 = vld [vmem:[%s0 + $0x128] sm:$0xff]
  %v84 = vld [vmem:[%s0 + $0x130] sm:$0xff]
  %v85 = vld [vmem:[%s0 + $0x138] sm:$0xff]
  %v86 = vld [vmem:[%s0 + $0x140] sm:$0xff]
  %v87 = vld [vmem:[%s0 + $0x148] sm:$0xff]
  %v88 = vld [vmem:[%s0 + $0x150] sm:$0xff]
  %v89 = vld [vmem:[%s0 + $0x158] sm:$0xff]
  %v90 = vld [vmem:[%s0 + $0x160] sm:$0xff]
  %v91 = vld [vmem:[%s0 + $0x168] sm:$0xff]
  %v92 = vld [vmem:[%s0 + $0x170] sm:$0xff]
  %v93 = vld [vmem:[%s0 + $0x178] sm:$0xff]
  %v94 = vld [vmem:[%s0 + $0x180] sm:$0xff]
  %v95 = vld [vmem:[%s0 + $0x188] sm:$0xff]
  %v96 = vld [vmem:[%s0 + $0x190] sm:$0xff]
  %v97 = vld [vmem:[%s0 + $0x198] sm:$0xff]
  %v98 = vld [vmem:[%s0 + $0x1a0] sm:$0xff]
  %v99 = vld [vmem:[%s0 + $0x1a8] sm:$0xff]
  %v100 = vld [vmem:[%s0 + $0x1b0] sm:$0xff]
  %v101 = vld [vmem:[%s0 + $0x1b8] sm:$0xff]
  %v102 = vld [vmem:[%s0 + $0x1c0] sm:$0xff]
  %v103 = vld [vmem:[%s0 + $0x1c8] sm:$0xff]
  %v104 = vld [vmem:[%s0 + $0x1d0] sm:$0xff]
  %v105 = vld [vmem:[%s0 + $0x1d8] sm:$0xff]
  %v106 = vld [vmem:[%s0 + $0x1e0] sm:$0xff]
  %v107 = vld [vmem:[%s0 + $0x1e8] sm:$0xff]
  %v108 = vld [vmem:[%s0 + $0x1f0] sm:$0xff]
  %v109 = vld [vmem:[%s0 + $0x1f8] sm:$0xff]
  %v110 = vld [vmem:[%s0 + $0x200] sm:$0xff]
  %v111 = vld [vmem:[%s0 + $0x208] sm:$0xff]
  %v112 = vld [vmem:[%s0 + $0x210] sm:$0xff]
  %v113 = vld [vmem:[%s0 + $0x218] sm:$0xff]
  %v114 = vld [vmem:[%s0 + $0x220] sm:$0xff]
  %v115 = vld [vmem:[%s0 + $0x228] sm:$0xff]
  %v116 = vld [vmem:[%s0 + $0x230] sm:$0xff]
  %v117 = vld [vmem:[%s0 + $0x238] sm:$0xff]
  %v118 = vld [vmem:[%s0 + $0x240] sm:$0xff]
  %v119 = vld [vmem:[%s0 + $0x248] sm:$0xff]
  %v120 = vld [vmem:[%s0 + $0x250] sm:$0xff]
  %v121 = vld [vmem:[%s0 + $0x258] sm:$0xff]
  %v122 = vld [vmem:[%s0 + $0x260] sm:$0xff]
  %v123 = vld [vmem:[%s0 + $0x268] sm:$0xff]
  %v124 = vld [vmem:[%s0 + $0x270] sm:$0xff]
  %v125 = vld [vmem:[%s0 + $0x278] sm:$0xff]
  %v126 = vld [vmem:[%s0 + $0x280] sm:$0xff]
  %v127 = vld [vmem:[%s0 + $0x288] sm:$0xff]
  %v128 = vld [vmem:[%s0 + $0x290] sm:$0xff]
  %v129 = vld [vmem:[%s0 + $0x298] sm:$0xff]
  %v130 = vld [vmem:[%s0 + $0x2a0] sm:$0xff]
  %v131 = vld [vmem:[%s0 + $0x2a8] sm:$0xff]
  %v132 = vld [vmem:[%s0 + $0x2b0] sm:$0xff]
  %v133 = vld [vmem:[%s0 + $0x2b8] sm:$0xff]
  %v134 = vld [vmem:[%s0 + $0x2c0] sm:$0xff]
  %v135 = vld [vmem:[%s0 + $0x2c8] sm:$0xff]
  %v136 = vld [vmem:[%s0 + $0x2d0] sm:$0xff]
  %v137 = vld [vmem:[%s0 + $0x2d8] sm:$0xff]
  %v138 = vld [vmem:[%s0 + $0x2e0] sm:$0xff]
  %v139 = vld [vmem:[%s0 + $0x2e8] sm:$0xff]
  %v140 = vld [vmem:[%s0 + $0x2f0] sm:$0xff]
  %v141 = vld [vmem:[%s0 + $0x2f8] sm:$0xff]
  %v142 = vld [vmem:[%s0 + $0x300] sm:$0xff]
  %v143 = vld [vmem:[%s0 + $0x308] sm:$0xff]
  %v144 = vld [vmem:[%s0 + $0x310] sm:$0xff]
  %v145 = vld [vmem:[%s0 + $0x318] sm:$0xff]
  %v146 = vld [vmem:[%s0 + $0x320] sm:$0xff]
  %v147 = vld [vmem:[%s0 + $0x328] sm:$0xff]
  %v148 = vld [vmem:[%s0 + $0x330] sm:$0xff]
  %v149 = vld [vmem:[%s0 + $0x338] sm:$0xff]
  %v150 = vld [vmem:[%s0 + $0x340] sm:$0xff]
  %v151 = vld [vmem:[%s0 + $0x348] sm:$0xff]
  %v152 = vld [vmem:[%s0 + $0x350] sm:$0xff]
  %v153 = vld [vmem:[%s0 + $0x358] sm:$0xff]
  %v154 = vld [vmem:[%s0 + $0x360] sm:$0xff]
  %v155 = vld [vmem:[%s0 + $0x368] sm:$0xff]
  %v156 = vld [vmem:[%s0 + $0x370] sm:$0xff]
  %v157 = vld [vmem:[%s0 + $0x378] sm:$0xff]
  %v158 = vld [vmem:[%s0 + $0x380] sm:$0xff]
  %v159 = vld [vmem:[%s0 + $0x388] sm:$0xff]
  %v160 = vld [vmem:[%s0 + $0x390] sm:$0xff]
  %v161 = vld [vmem:[%s0 + $0x398] sm:$0xff]
  %v162 = vld [vmem:[%s0 + $0x3a0] sm:$0xff]
  %v163 = vld [vmem:[%s0 + $0x3a8] sm:$0xff]
  %v164 = vld [vmem:[%s0 + $0x3b0] sm:$0xff]
  %v165 = vld [vmem:[%s0 + $0x3b8] sm:$0xff]
  %v166 = vld [vmem:[%s0 + $0x3c0] sm:$0xff]
  %v167 = vld [vmem:[%s0 + $0x3c8] sm:$0xff]
  %v168 = vld [vmem:[%s0 + $0x3d0] sm:$0xff]
  %v169 = vld [vmem:[%s0 + $0x3d8] sm:$0xff]
  %v170 = vld [vmem:[%s0 + $0x3e0] sm:$0xff]
  %v171 = vld [vmem:[%s0 + $0x3e8] sm:$0xff]
  %v172 = vld [vmem:[%s0 + $0x3f0] sm:$0xff]
  %v173 = vld [vmem:[%s0 + $0x3f8] sm:$0xff]
  %v174 = vld [vmem:[%s0 + $0x400] sm:$0xff]
  %v175 = vld [vmem:[%s0 + $0x408] sm:$0xff]
  %v176 = vld [vmem:[%s0 + $0x410] sm:$0xff]
  %v177 = vld [vmem:[%s0 + $0x418] sm:$0xff]
  %v178 = vld [vmem:[%s0 + $0x420] sm:$0xff]
  %v179 = vld [vmem:[%s0 + $0x428] sm:$0xff]
  %v180 = vld [vmem:[%s0 + $0x430] sm:$0xff]
  %v181 = vld [vmem:[%s0 + $0x438] sm:$0xff]
  %v182 = vld [vmem:[%s0 + $0x440] sm:$0xff]
  %v183 = vld [vmem:[%s0 + $0x448] sm:$0xff]
  %v184 = vld [vmem:[%s0 + $0x450] sm:$0xff]
  %v185 = vld [vmem:[%s0 + $0x458] sm:$0xff]
  %v186 = vld [vmem:[%s0 + $0x460] sm:$0xff]
  %v187 = vld [vmem:[%s0 + $0x468] sm:$0xff]
  %v188 = vld [vmem:[%s0 + $0x470] sm:$0xff]
  %v189 = vld [vmem:[%s0 + $0x478] sm:$0xff]
  %v190 = vld [vmem:[%s0 + $0x480] sm:$0xff]
  %v191 = vld [vmem:[%s0 + $0x488] sm:$0xff]
  %v192 = vld [vmem:[%s0 + $0x490] sm:$0xff]
  %v193 = vld [vmem:[%s0 + $0x498] sm:$0xff]
  %v194 = vld [vmem:[%s0 + $0x4a0] sm:$0xff]
  %v195 = vld [vmem:[%s0 + $0x4a8] sm:$0xff]
  %v196 = vld [vmem:[%s0 + $0x4b0] sm:$0xff]
  %v197 = vld [vmem:[%s0 + $0x4b8] sm:$0xff]
  %v198 = vld [vmem:[%s0 + $0x4c0] sm:$0xff]
  %v199 = vld [vmem:[%s0 + $0x4c8] sm:$0xff]
  %v200 = vld [vmem:[%s0 + $0x4d0] sm:$0xff]
  %v201 = vld [vmem:[%s0 + $0x4d8] sm:$0xff]
  %v202 = vld [vmem:[%s0 + $0x4e0] sm:$0xff]
  %v203 = vld [vmem:[%s0 + $0x4e8] sm:$0xff]
  %v204 = vld [vmem:[%s0 + $0x4f0] sm:$0xff]
  %v205 = vld [vmem:[%s0 + $0x4f8] sm:$0xff]
  %v206 = vld [vmem:[%s0 + $0x500] sm:$0xff]
  %v207 = vld [vmem:[%s0 + $0x508] sm:$0xff]
  %v208 = vld [vmem:[%s0 + $0x510] sm:$0xff]
  %v209 = vld [vmem:[%s0 + $0x518] sm:$0xff]
  %v210 = vld [vmem:[%s0 + $0x520] sm:$0xff]
  %v211 = vld [vmem:[%s0 + $0x528] sm:$0xff]
  %v212 = vld [vmem:[%s0 + $0x530] sm:$0xff]
  %v213 = vld [vmem:[%s0 + $0x538] sm:$0xff]
  %v214 = vld [vmem:[%s0 + $0x540] sm:$0xff]
  %v215 = vld [vmem:[%s0 + $0x548] sm:$0xff]
  %v216 = vld [vmem:[%s0 + $0x550] sm:$0xff]
  %v217 = vld [vmem:[%s0 + $0x558] sm:$0xff]
  %v218 = vld [vmem:[%s0 + $0x560] sm:$0xff]
  %v219 = vld [vmem:[%s0 + $0x568] sm:$0xff]
  %v220 = vld [vmem:[%s0 + $0x570] sm:$0xff]
  %v221 = vld [vmem:[%s0 + $0x578] sm:$0xff]
  %v222 = vld [vmem:[%s0 + $0x580] sm:$0xff]
  %v223 = vld [vmem:[%s0 + $0x588] sm:$0xff]
  %v224 = vld [vmem:[%s0 + $0x590] sm:$0xff]
  %v225 = vld [vmem:[%s0 + $0x598] sm:$0xff]
  %v226 = vld [vmem:[%s0 + $0x5a0] sm:$0xff]
  %v227 = vld [vmem:[%s0 + $0x5a8] sm:$0xff]
  %v228 = vld [vmem:[%s0 + $0x5b0] sm:$0xff]
  %v229 = vld [vmem:[%s0 + $0x5b8] sm:$0xff]
  %v230 = vld [vmem:[%s0 + $0x5c0] sm:$0xff]
  %v231 = vld [vmem:[%s0 + $0x5c8] sm:$0xff]
  %v232 = vld [vmem:[%s0 + $0x5d0] sm:$0xff]
  %v233 = vld [vmem:[%s0 + $0x5d8] sm:$0xff]
  %v234 = vld [vmem:[%s0 + $0x5e0] sm:$0xff]
  %v235 = vld [vmem:[%s0 + $0x5e8] sm:$0xff]
  %v236 = vld [vmem:[%s0 + $0x5f0] sm:$0xff]
  %v237 = vld [vmem:[%s0 + $0x5f8] sm:$0xff]
  %v238 = vld [vmem:[%s0 + $0x600] sm:$0xff]
  %v239 = vld [vmem:[%s0 + $0x608] sm:$0xff]
  %v240 = vld [vmem:[%s0 + $0x610] sm:$0xff]
  %v241 = vld [vmem:[%s0 + $0x618] sm:$0xff]
  %v242 = vld [vmem:[%s0 + $0x620] sm:$0xff]
  %v243 = vld [vmem:[%s0 + $0x628] sm:$0xff]
  %v244 = vld [vmem:[%s0 + $0x630] sm:$0xff]
  %v245 = vld [vmem:[%s0 + $0x638] sm:$0xff]
  %v246 = vld [vmem:[%s0 + $0x640] sm:$0xff]
  %v247 = vld [vmem:[%s0 + $0x648] sm:$0xff]
  %v248 = vld [vmem:[%s0 + $0x650] sm:$0xff]
  %v249 = vld [vmem:[%s0 + $0x658] sm:$0xff]
  %v250 = vld [vmem:[%s0 + $0x660] sm:$0xff]
  %v251 = vld [vmem:[%s0 + $0x668] sm:$0xff]
  %v252 = vld [vmem:[%s0 + $0x670] sm:$0xff]
  %v253 = vld [vmem:[%s0 + $0x678] sm:$0xff]
  %v254 = vld [vmem:[%s0 + $0x680] sm:$0xff]
  %v255 = vld [vmem:[%s0 + $0x688] sm:$0xff]
  %v256 = vld [vmem:[%s0 + $0x690] sm:$0xff]
  %v257 = vld [vmem:[%s0 + $0x698] sm:$0xff]
  %v258 = vld [vmem:[%s0 + $0x6a0] sm:$0xff]
  %v259 = vld [vmem:[%s0 + $0x6a8] sm:$0xff]
  %v260 = vld [vmem:[%s0 + $0x6b0] sm:$0xff]
  %v261 = vld [vmem:[%s0 + $0x6b8] sm:$0xff]
  %v262 = vld [vmem:[%s0 + $0x6c0] sm:$0xff]
  %v263 = vld [vmem:[%s0 + $0x6c8] sm:$0xff]
  %v264 = vld [vmem:[%s0 + $0x6d0] sm:$0xff]
  %v265 = vld [vmem:[%s0 + $0x6d8] sm:$0xff]
  %v266 = vld [vmem:[%s0 + $0x6e0] sm:$0xff]
  %v267 = vld [vmem:[%s0 + $0x6e8] sm:$0xff]
  %v268 = vld [vmem:[%s0 + $0x6f0] sm:$0xff]
  %v269 = vld [vmem:[%s0 + $0x6f8] sm:$0xff]
  %v270 = vld [vmem:[%s0 + $0x700] sm:$0xff]
  %v271 = vld [vmem:[%s0 + $0x708] sm:$0xff]
  %v272 = vld [vmem:[%s0 + $0x710] sm:$0xff]
  %v273 = vld [vmem:[%s0 + $0x718] sm:$0xff]
  %v274 = vld [vmem:[%s0 + $0x720] sm:$0xff]
  %v275 = vld [vmem:[%s0 + $0x728] sm:$0xff]
  %v276 = vld [vmem:[%s0 + $0x730] sm:$0xff]
  %v277 = vld [vmem:[%s0 + $0x738] sm:$0xff]
  %v278 = vld [vmem:[%s0 + $0x740] sm:$0xff]
  %v279 = vld [vmem:[%s0 + $0x748] sm:$0xff]
  %v280 = vld [vmem:[%s0 + $0x750] sm:$0xff]
  %v281 = vld [vmem:[%s0 + $0x758] sm:$0xff]
  %v282 = vld [vmem:[%s0 + $0x760] sm:$0xff]
  %v283 = vld [vmem:[%s0 + $0x768] sm:$0xff]
  %v284 = vld [vmem:[%s0 + $0x770] sm:$0xff]
  %v285 = vld [vmem:[%s0 + $0x778] sm:$0xff]
  %v286 = vld [vmem:[%s0 + $0x780] sm:$0xff]
  %v287 = vld [vmem:[%s0 + $0x788] sm:$0xff]
  %v288 = vld [vmem:[%s0 + $0x790] sm:$0xff]
  %v289 = vld [vmem:[%s0 + $0x798] sm:$0xff]
  %v290 = vld [vmem:[%s0 + $0x7a0] sm:$0xff]
  %v291 = vld [vmem:[%s0 + $0x7a8] sm:$0xff]
  %v292 = vld [vmem:[%s0 + $0x7b0] sm:$0xff]
  %v293 = vld [vmem:[%s0 + $0x7b8] sm:$0xff]
  %v294 = vld [vmem:[%s0 + $0x7c0] sm:$0xff]
  %v295 = vld [vmem:[%s0 + $0x7c8] sm:$0xff]
  %v296 = vld [vmem:[%s0 + $0x7d0] sm:$0xff]
  %v297 = vld [vmem:[%s0 + $0x7d8] sm:$0xff]
  %v298 = vld [vmem:[%s0 + $0x7e0] sm:$0xff]
  %v299 = vld [vmem:[%s0 + $0x7e8] sm:$0xff]
  %v300 = vld [vmem:[%s0 + $0x7f0] sm:$0xff]
  %v301 = vld [vmem:[%s0 + $0x7f8] sm:$0xff]
  %v302 = vld [vmem:[%s1] sm:$0x1]
  %304 = vset.pattern.permute.xlu0 0
  %305 = vperm.xlu0 %304, %v46
  %v306 = vpop.permute.xlu0 %305
  %309 = vset.pattern.permute.xlu0 0
  %310 = vperm.xlu0 %309, %v47
  %v311 = vpop.permute.xlu0 %310
  %314 = vset.pattern.permute.xlu0 0
  %315 = vperm.xlu0 %314, %v48
  %v316 = vpop.permute.xlu0 %315
  %319 = vset.pattern.permute.xlu0 0
  %320 = vperm.xlu0 %319, %v49
  %v321 = vpop.permute.xlu0 %320
  %324 = vset.pattern.permute.xlu0 0
  %325 = vperm.xlu0 %324, %v50
  %v326 = vpop.permute.xlu0 %325
  %329 = vset.pattern.permute.xlu0 0
  %330 = vperm.xlu0 %329, %v51
  %v331 = vpop.permute.xlu0 %330
  %334 = vset.pattern.permute.xlu0 0
  %335 = vperm.xlu0 %334, %v52
  %v336 = vpop.permute.xlu0 %335
  %339 = vset.pattern.permute.xlu0 0
  %340 = vperm.xlu0 %339, %v53
  %v341 = vpop.permute.xlu0 %340
  %344 = vset.pattern.permute.xlu0 0
  %345 = vperm.xlu0 %344, %v54
  %v346 = vpop.permute.xlu0 %345
  %349 = vset.pattern.permute.xlu0 0
  %350 = vperm.xlu0 %349, %v55
  %v351 = vpop.permute.xlu0 %350
  %354 = vset.pattern.permute.xlu0 0
  %355 = vperm.xlu0 %354, %v56
  %v356 = vpop.permute.xlu0 %355
  %359 = vset.pattern.permute.xlu0 0
  %360 = vperm.xlu0 %359, %v57
  %v361 = vpop.permute.xlu0 %360
  %364 = vset.pattern.permute.xlu0 0
  %365 = vperm.xlu0 %364, %v58
  %v366 = vpop.permute.xlu0 %365
  %369 = vset.pattern.permute.xlu0 0
  %370 = vperm.xlu0 %369, %v59
  %v371 = vpop.permute.xlu0 %370
  %374 = vset.pattern.permute.xlu0 0
  %375 = vperm.xlu0 %374, %v60
  %v376 = vpop.permute.xlu0 %375
  %379 = vset.pattern.permute.xlu0 0
  %380 = vperm.xlu0 %379, %v61
  %v381 = vpop.permute.xlu0 %380
  %384 = vset.pattern.permute.xlu0 0
  %385 = vperm.xlu0 %384, %v62
  %v386 = vpop.permute.xlu0 %385
  %389 = vset.pattern.permute.xlu0 0
  %390 = vperm.xlu0 %389, %v63
  %v391 = vpop.permute.xlu0 %390
  %394 = vset.pattern.permute.xlu0 0
  %395 = vperm.xlu0 %394, %v64
  %v396 = vpop.permute.xlu0 %395
  %399 = vset.pattern.permute.xlu0 0
  %400 = vperm.xlu0 %399, %v65
  %v401 = vpop.permute.xlu0 %400
  %404 = vset.pattern.permute.xlu0 0
  %405 = vperm.xlu0 %404, %v66
  %v406 = vpop.permute.xlu0 %405
  %409 = vset.pattern.permute.xlu0 0
  %410 = vperm.xlu0 %409, %v67
  %v411 = vpop.permute.xlu0 %410
  %414 = vset.pattern.permute.xlu0 0
  %415 = vperm.xlu0 %414, %v68
  %v416 = vpop.permute.xlu0 %415
  %419 = vset.pattern.permute.xlu0 0
  %420 = vperm.xlu0 %419, %v69
  %v421 = vpop.permute.xlu0 %420
  %424 = vset.pattern.permute.xlu0 0
  %425 = vperm.xlu0 %424, %v70
  %v426 = vpop.permute.xlu0 %425
  %429 = vset.pattern.permute.xlu0 0
  %430 = vperm.xlu0 %429, %v71
  %v431 = vpop.permute.xlu0 %430
  %434 = vset.pattern.permute.xlu0 0
  %435 = vperm.xlu0 %434, %v72
  %v436 = vpop.permute.xlu0 %435
  %439 = vset.pattern.permute.xlu0 0
  %440 = vperm.xlu0 %439, %v73
  %v441 = vpop.permute.xlu0 %440
  %444 = vset.pattern.permute.xlu0 0
  %445 = vperm.xlu0 %444, %v74
  %v446 = vpop.permute.xlu0 %445
  %449 = vset.pattern.permute.xlu0 0
  %450 = vperm.xlu0 %449, %v75
  %v451 = vpop.permute.xlu0 %450
  %454 = vset.pattern.permute.xlu0 0
  %455 = vperm.xlu0 %454, %v76
  %v456 = vpop.permute.xlu0 %455
  %459 = vset.pattern.permute.xlu0 0
  %460 = vperm.xlu0 %459, %v77
  %v461 = vpop.permute.xlu0 %460
  %464 = vset.pattern.permute.xlu0 0
  %465 = vperm.xlu0 %464, %v78
  %v466 = vpop.permute.xlu0 %465
  %469 = vset.pattern.permute.xlu0 0
  %470 = vperm.xlu0 %469, %v79
  %v471 = vpop.permute.xlu0 %470
  %474 = vset.pattern.permute.xlu0 0
  %475 = vperm.xlu0 %474, %v80
  %v476 = vpop.permute.xlu0 %475
  %479 = vset.pattern.permute.xlu0 0
  %480 = vperm.xlu0 %479, %v81
  %v481 = vpop.permute.xlu0 %480
  %484 = vset.pattern.permute.xlu0 0
  %485 = vperm.xlu0 %484, %v82
  %v486 = vpop.permute.xlu0 %485
  %489 = vset.pattern.permute.xlu0 0
  %490 = vperm.xlu0 %489, %v83
  %v491 = vpop.permute.xlu0 %490
  %494 = vset.pattern.permute.xlu0 0
  %495 = vperm.xlu0 %494, %v84
  %v496 = vpop.permute.xlu0 %495
  %499 = vset.pattern.permute.xlu0 0
  %500 = vperm.xlu0 %499, %v85
  %v501 = vpop.permute.xlu0 %500
  %504 = vset.pattern.permute.xlu0 0
  %505 = vperm.xlu0 %504, %v86
  %v506 = vpop.permute.xlu0 %505
  %509 = vset.pattern.permute.xlu0 0
  %510 = vperm.xlu0 %509, %v87
  %v511 = vpop.permute.xlu0 %510
  %514 = vset.pattern.permute.xlu0 0
  %515 = vperm.xlu0 %514, %v88
  %v516 = vpop.permute.xlu0 %515
  %519 = vset.pattern.permute.xlu0 0
  %520 = vperm.xlu0 %519, %v89
  %v521 = vpop.permute.xlu0 %520
  %524 = vset.pattern.permute.xlu0 0
  %525 = vperm.xlu0 %524, %v90
  %v526 = vpop.permute.xlu0 %525
  %529 = vset.pattern.permute.xlu0 0
  %530 = vperm.xlu0 %529, %v91
  %v531 = vpop.permute.xlu0 %530
  %534 = vset.pattern.permute.xlu0 0
  %535 = vperm.xlu0 %534, %v92
  %v536 = vpop.permute.xlu0 %535
  %539 = vset.pattern.permute.xlu0 0
  %540 = vperm.xlu0 %539, %v93
  %v541 = vpop.permute.xlu0 %540
  %544 = vset.pattern.permute.xlu0 0
  %545 = vperm.xlu0 %544, %v94
  %v546 = vpop.permute.xlu0 %545
  %549 = vset.pattern.permute.xlu0 0
  %550 = vperm.xlu0 %549, %v95
  %v551 = vpop.permute.xlu0 %550
  %554 = vset.pattern.permute.xlu0 0
  %555 = vperm.xlu0 %554, %v96
  %v556 = vpop.permute.xlu0 %555
  %559 = vset.pattern.permute.xlu0 0
  %560 = vperm.xlu0 %559, %v97
  %v561 = vpop.permute.xlu0 %560
  %564 = vset.pattern.permute.xlu0 0
  %565 = vperm.xlu0 %564, %v98
  %v566 = vpop.permute.xlu0 %565
  %569 = vset.pattern.permute.xlu0 0
  %570 = vperm.xlu0 %569, %v99
  %v571 = vpop.permute.xlu0 %570
  %574 = vset.pattern.permute.xlu0 0
  %575 = vperm.xlu0 %574, %v100
  %v576 = vpop.permute.xlu0 %575
  %579 = vset.pattern.permute.xlu0 0
  %580 = vperm.xlu0 %579, %v101
  %v581 = vpop.permute.xlu0 %580
  %584 = vset.pattern.permute.xlu0 0
  %585 = vperm.xlu0 %584, %v102
  %v586 = vpop.permute.xlu0 %585
  %589 = vset.pattern.permute.xlu0 0
  %590 = vperm.xlu0 %589, %v103
  %v591 = vpop.permute.xlu0 %590
  %594 = vset.pattern.permute.xlu0 0
  %595 = vperm.xlu0 %594, %v104
  %v596 = vpop.permute.xlu0 %595
  %599 = vset.pattern.permute.xlu0 0
  %600 = vperm.xlu0 %599, %v105
  %v601 = vpop.permute.xlu0 %600
  %604 = vset.pattern.permute.xlu0 0
  %605 = vperm.xlu0 %604, %v106
  %v606 = vpop.permute.xlu0 %605
  %609 = vset.pattern.permute.xlu0 0
  %610 = vperm.xlu0 %609, %v107
  %v611 = vpop.permute.xlu0 %610
  %614 = vset.pattern.permute.xlu0 0
  %615 = vperm.xlu0 %614, %v108
  %v616 = vpop.permute.xlu0 %615
  %619 = vset.pattern.permute.xlu0 0
  %620 = vperm.xlu0 %619, %v109
  %v621 = vpop.permute.xlu0 %620
  %624 = vset.pattern.permute.xlu0 0
  %625 = vperm.xlu0 %624, %v110
  %v626 = vpop.permute.xlu0 %625
  %629 = vset.pattern.permute.xlu0 0
  %630 = vperm.xlu0 %629, %v111
  %v631 = vpop.permute.xlu0 %630
  %634 = vset.pattern.permute.xlu0 0
  %635 = vperm.xlu0 %634, %v112
  %v636 = vpop.permute.xlu0 %635
  %639 = vset.pattern.permute.xlu0 0
  %640 = vperm.xlu0 %639, %v113
  %v641 = vpop.permute.xlu0 %640
  %644 = vset.pattern.permute.xlu0 0
  %645 = vperm.xlu0 %644, %v114
  %v646 = vpop.permute.xlu0 %645
  %649 = vset.pattern.permute.xlu0 0
  %650 = vperm.xlu0 %649, %v115
  %v651 = vpop.permute.xlu0 %650
  %654 = vset.pattern.permute.xlu0 0
  %655 = vperm.xlu0 %654, %v116
  %v656 = vpop.permute.xlu0 %655
  %659 = vset.pattern.permute.xlu0 0
  %660 = vperm.xlu0 %659, %v117
  %v661 = vpop.permute.xlu0 %660
  %664 = vset.pattern.permute.xlu0 0
  %665 = vperm.xlu0 %664, %v118
  %v666 = vpop.permute.xlu0 %665
  %669 = vset.pattern.permute.xlu0 0
  %670 = vperm.xlu0 %669, %v119
  %v671 = vpop.permute.xlu0 %670
  %674 = vset.pattern.permute.xlu0 0
  %675 = vperm.xlu0 %674, %v120
  %v676 = vpop.permute.xlu0 %675
  %679 = vset.pattern.permute.xlu0 0
  %680 = vperm.xlu0 %679, %v121
  %v681 = vpop.permute.xlu0 %680
  %684 = vset.pattern.permute.xlu0 0
  %685 = vperm.xlu0 %684, %v122
  %v686 = vpop.permute.xlu0 %685
  %689 = vset.pattern.permute.xlu0 0
  %690 = vperm.xlu0 %689, %v123
  %v691 = vpop.permute.xlu0 %690
  %694 = vset.pattern.permute.xlu0 0
  %695 = vperm.xlu0 %694, %v124
  %v696 = vpop.permute.xlu0 %695
  %699 = vset.pattern.permute.xlu0 0
  %700 = vperm.xlu0 %699, %v125
  %v701 = vpop.permute.xlu0 %700
  %704 = vset.pattern.permute.xlu0 0
  %705 = vperm.xlu0 %704, %v126
  %v706 = vpop.permute.xlu0 %705
  %709 = vset.pattern.permute.xlu0 0
  %710 = vperm.xlu0 %709, %v127
  %v711 = vpop.permute.xlu0 %710
  %714 = vset.pattern.permute.xlu0 0
  %715 = vperm.xlu0 %714, %v128
  %v716 = vpop.permute.xlu0 %715
  %719 = vset.pattern.permute.xlu0 0
  %720 = vperm.xlu0 %719, %v129
  %v721 = vpop.permute.xlu0 %720
  %724 = vset.pattern.permute.xlu0 0
  %725 = vperm.xlu0 %724, %v130
  %v726 = vpop.permute.xlu0 %725
  %729 = vset.pattern.permute.xlu0 0
  %730 = vperm.xlu0 %729, %v131
  %v731 = vpop.permute.xlu0 %730
  %734 = vset.pattern.permute.xlu0 0
  %735 = vperm.xlu0 %734, %v132
  %v736 = vpop.permute.xlu0 %735
  %739 = vset.pattern.permute.xlu0 0
  %740 = vperm.xlu0 %739, %v133
  %v741 = vpop.permute.xlu0 %740
  %744 = vset.pattern.permute.xlu0 0
  %745 = vperm.xlu0 %744, %v134
  %v746 = vpop.permute.xlu0 %745
  %749 = vset.pattern.permute.xlu0 0
  %750 = vperm.xlu0 %749, %v135
  %v751 = vpop.permute.xlu0 %750
  %754 = vset.pattern.permute.xlu0 0
  %755 = vperm.xlu0 %754, %v136
  %v756 = vpop.permute.xlu0 %755
  %759 = vset.pattern.permute.xlu0 0
  %760 = vperm.xlu0 %759, %v137
  %v761 = vpop.permute.xlu0 %760
  %764 = vset.pattern.permute.xlu0 0
  %765 = vperm.xlu0 %764, %v138
  %v766 = vpop.permute.xlu0 %765
  %769 = vset.pattern.permute.xlu0 0
  %770 = vperm.xlu0 %769, %v139
  %v771 = vpop.permute.xlu0 %770
  %774 = vset.pattern.permute.xlu0 0
  %775 = vperm.xlu0 %774, %v140
  %v776 = vpop.permute.xlu0 %775
  %779 = vset.pattern.permute.xlu0 0
  %780 = vperm.xlu0 %779, %v141
  %v781 = vpop.permute.xlu0 %780
  %784 = vset.pattern.permute.xlu0 0
  %785 = vperm.xlu0 %784, %v142
  %v786 = vpop.permute.xlu0 %785
  %789 = vset.pattern.permute.xlu0 0
  %790 = vperm.xlu0 %789, %v143
  %v791 = vpop.permute.xlu0 %790
  %794 = vset.pattern.permute.xlu0 0
  %795 = vperm.xlu0 %794, %v144
  %v796 = vpop.permute.xlu0 %795
  %799 = vset.pattern.permute.xlu0 0
  %800 = vperm.xlu0 %799, %v145
  %v801 = vpop.permute.xlu0 %800
  %804 = vset.pattern.permute.xlu0 0
  %805 = vperm.xlu0 %804, %v146
  %v806 = vpop.permute.xlu0 %805
  %809 = vset.pattern.permute.xlu0 0
  %810 = vperm.xlu0 %809, %v147
  %v811 = vpop.permute.xlu0 %810
  %814 = vset.pattern.permute.xlu0 0
  %815 = vperm.xlu0 %814, %v148
  %v816 = vpop.permute.xlu0 %815
  %819 = vset.pattern.permute.xlu0 0
  %820 = vperm.xlu0 %819, %v149
  %v821 = vpop.permute.xlu0 %820
  %824 = vset.pattern.permute.xlu0 0
  %825 = vperm.xlu0 %824, %v150
  %v826 = vpop.permute.xlu0 %825
  %829 = vset.pattern.permute.xlu0 0
  %830 = vperm.xlu0 %829, %v151
  %v831 = vpop.permute.xlu0 %830
  %834 = vset.pattern.permute.xlu0 0
  %835 = vperm.xlu0 %834, %v152
  %v836 = vpop.permute.xlu0 %835
  %839 = vset.pattern.permute.xlu0 0
  %840 = vperm.xlu0 %839, %v153
  %v841 = vpop.permute.xlu0 %840
  %844 = vset.pattern.permute.xlu0 0
  %845 = vperm.xlu0 %844, %v154
  %v846 = vpop.permute.xlu0 %845
  %849 = vset.pattern.permute.xlu0 0
  %850 = vperm.xlu0 %849, %v155
  %v851 = vpop.permute.xlu0 %850
  %854 = vset.pattern.permute.xlu0 0
  %855 = vperm.xlu0 %854, %v156
  %v856 = vpop.permute.xlu0 %855
  %859 = vset.pattern.permute.xlu0 0
  %860 = vperm.xlu0 %859, %v157
  %v861 = vpop.permute.xlu0 %860
  %864 = vset.pattern.permute.xlu0 0
  %865 = vperm.xlu0 %864, %v158
  %v866 = vpop.permute.xlu0 %865
  %869 = vset.pattern.permute.xlu0 0
  %870 = vperm.xlu0 %869, %v159
  %v871 = vpop.permute.xlu0 %870
  %874 = vset.pattern.permute.xlu0 0
  %875 = vperm.xlu0 %874, %v160
  %v876 = vpop.permute.xlu0 %875
  %879 = vset.pattern.permute.xlu0 0
  %880 = vperm.xlu0 %879, %v161
  %v881 = vpop.permute.xlu0 %880
  %884 = vset.pattern.permute.xlu0 0
  %885 = vperm.xlu0 %884, %v162
  %v886 = vpop.permute.xlu0 %885
  %889 = vset.pattern.permute.xlu0 0
  %890 = vperm.xlu0 %889, %v163
  %v891 = vpop.permute.xlu0 %890
  %894 = vset.pattern.permute.xlu0 0
  %895 = vperm.xlu0 %894, %v164
  %v896 = vpop.permute.xlu0 %895
  %899 = vset.pattern.permute.xlu0 0
  %900 = vperm.xlu0 %899, %v165
  %v901 = vpop.permute.xlu0 %900
  %904 = vset.pattern.permute.xlu0 0
  %905 = vperm.xlu0 %904, %v166
  %v906 = vpop.permute.xlu0 %905
  %909 = vset.pattern.permute.xlu0 0
  %910 = vperm.xlu0 %909, %v167
  %v911 = vpop.permute.xlu0 %910
  %914 = vset.pattern.permute.xlu0 0
  %915 = vperm.xlu0 %914, %v168
  %v916 = vpop.permute.xlu0 %915
  %919 = vset.pattern.permute.xlu0 0
  %920 = vperm.xlu0 %919, %v169
  %v921 = vpop.permute.xlu0 %920
  %924 = vset.pattern.permute.xlu0 0
  %925 = vperm.xlu0 %924, %v170
  %v926 = vpop.permute.xlu0 %925
  %929 = vset.pattern.permute.xlu0 0
  %930 = vperm.xlu0 %929, %v171
  %v931 = vpop.permute.xlu0 %930
  %934 = vset.pattern.permute.xlu0 0
  %935 = vperm.xlu0 %934, %v172
  %v936 = vpop.permute.xlu0 %935
  %939 = vset.pattern.permute.xlu0 0
  %940 = vperm.xlu0 %939, %v173
  %v941 = vpop.permute.xlu0 %940
  %944 = vset.pattern.permute.xlu0 0
  %945 = vperm.xlu0 %944, %v174
  %v946 = vpop.permute.xlu0 %945
  %949 = vset.pattern.permute.xlu0 0
  %950 = vperm.xlu0 %949, %v175
  %v951 = vpop.permute.xlu0 %950
  %954 = vset.pattern.permute.xlu0 0
  %955 = vperm.xlu0 %954, %v176
  %v956 = vpop.permute.xlu0 %955
  %959 = vset.pattern.permute.xlu0 0
  %960 = vperm.xlu0 %959, %v177
  %v961 = vpop.permute.xlu0 %960
  %964 = vset.pattern.permute.xlu0 0
  %965 = vperm.xlu0 %964, %v178
  %v966 = vpop.permute.xlu0 %965
  %969 = vset.pattern.permute.xlu0 0
  %970 = vperm.xlu0 %969, %v179
  %v971 = vpop.permute.xlu0 %970
  %974 = vset.pattern.permute.xlu0 0
  %975 = vperm.xlu0 %974, %v180
  %v976 = vpop.permute.xlu0 %975
  %979 = vset.pattern.permute.xlu0 0
  %980 = vperm.xlu0 %979, %v181
  %v981 = vpop.permute.xlu0 %980
  %984 = vset.pattern.permute.xlu0 0
  %985 = vperm.xlu0 %984, %v182
  %v986 = vpop.permute.xlu0 %985
  %989 = vset.pattern.permute.xlu0 0
  %990 = vperm.xlu0 %989, %v183
  %v991 = vpop.permute.xlu0 %990
  %994 = vset.pattern.permute.xlu0 0
  %995 = vperm.xlu0 %994, %v184
  %v996 = vpop.permute.xlu0 %995
  %999 = vset.pattern.permute.xlu0 0
  %1000 = vperm.xlu0 %999, %v185
  %v1001 = vpop.permute.xlu0 %1000
  %1004 = vset.pattern.permute.xlu0 0
  %1005 = vperm.xlu0 %1004, %v186
  %v1006 = vpop.permute.xlu0 %1005
  %1009 = vset.pattern.permute.xlu0 0
  %1010 = vperm.xlu0 %1009, %v187
  %v1011 = vpop.permute.xlu0 %1010
  %1014 = vset.pattern.permute.xlu0 0
  %1015 = vperm.xlu0 %1014, %v188
  %v1016 = vpop.permute.xlu0 %1015
  %1019 = vset.pattern.permute.xlu0 0
  %1020 = vperm.xlu0 %1019, %v189
  %v1021 = vpop.permute.xlu0 %1020
  %1024 = vset.pattern.permute.xlu0 0
  %1025 = vperm.xlu0 %1024, %v190
  %v1026 = vpop.permute.xlu0 %1025
  %1029 = vset.pattern.permute.xlu0 0
  %1030 = vperm.xlu0 %1029, %v191
  %v1031 = vpop.permute.xlu0 %1030
  %1034 = vset.pattern.permute.xlu0 0
  %1035 = vperm.xlu0 %1034, %v192
  %v1036 = vpop.permute.xlu0 %1035
  %1039 = vset.pattern.permute.xlu0 0
  %1040 = vperm.xlu0 %1039, %v193
  %v1041 = vpop.permute.xlu0 %1040
  %1044 = vset.pattern.permute.xlu0 0
  %1045 = vperm.xlu0 %1044, %v194
  %v1046 = vpop.permute.xlu0 %1045
  %1049 = vset.pattern.permute.xlu0 0
  %1050 = vperm.xlu0 %1049, %v195
  %v1051 = vpop.permute.xlu0 %1050
  %1054 = vset.pattern.permute.xlu0 0
  %1055 = vperm.xlu0 %1054, %v196
  %v1056 = vpop.permute.xlu0 %1055
  %1059 = vset.pattern.permute.xlu0 0
  %1060 = vperm.xlu0 %1059, %v197
  %v1061 = vpop.permute.xlu0 %1060
  %1064 = vset.pattern.permute.xlu0 0
  %1065 = vperm.xlu0 %1064, %v198
  %v1066 = vpop.permute.xlu0 %1065
  %1069 = vset.pattern.permute.xlu0 0
  %1070 = vperm.xlu0 %1069, %v199
  %v1071 = vpop.permute.xlu0 %1070
  %1074 = vset.pattern.permute.xlu0 0
  %1075 = vperm.xlu0 %1074, %v200
  %v1076 = vpop.permute.xlu0 %1075
  %1079 = vset.pattern.permute.xlu0 0
  %1080 = vperm.xlu0 %1079, %v201
  %v1081 = vpop.permute.xlu0 %1080
  %1084 = vset.pattern.permute.xlu0 0
  %1085 = vperm.xlu0 %1084, %v202
  %v1086 = vpop.permute.xlu0 %1085
  %1089 = vset.pattern.permute.xlu0 0
  %1090 = vperm.xlu0 %1089, %v203
  %v1091 = vpop.permute.xlu0 %1090
  %1094 = vset.pattern.permute.xlu0 0
  %1095 = vperm.xlu0 %1094, %v204
  %v1096 = vpop.permute.xlu0 %1095
  %1099 = vset.pattern.permute.xlu0 0
  %1100 = vperm.xlu0 %1099, %v205
  %v1101 = vpop.permute.xlu0 %1100
  %1104 = vset.pattern.permute.xlu0 0
  %1105 = vperm.xlu0 %1104, %v206
  %v1106 = vpop.permute.xlu0 %1105
  %1109 = vset.pattern.permute.xlu0 0
  %1110 = vperm.xlu0 %1109, %v207
  %v1111 = vpop.permute.xlu0 %1110
  %1114 = vset.pattern.permute.xlu0 0
  %1115 = vperm.xlu0 %1114, %v208
  %v1116 = vpop.permute.xlu0 %1115
  %1119 = vset.pattern.permute.xlu0 0
  %1120 = vperm.xlu0 %1119, %v209
  %v1121 = vpop.permute.xlu0 %1120
  %1124 = vset.pattern.permute.xlu0 0
  %1125 = vperm.xlu0 %1124, %v210
  %v1126 = vpop.permute.xlu0 %1125
  %1129 = vset.pattern.permute.xlu0 0
  %1130 = vperm.xlu0 %1129, %v211
  %v1131 = vpop.permute.xlu0 %1130
  %1134 = vset.pattern.permute.xlu0 0
  %1135 = vperm.xlu0 %1134, %v212
  %v1136 = vpop.permute.xlu0 %1135
  %1139 = vset.pattern.permute.xlu0 0
  %1140 = vperm.xlu0 %1139, %v213
  %v1141 = vpop.permute.xlu0 %1140
  %1144 = vset.pattern.permute.xlu0 0
  %1145 = vperm.xlu0 %1144, %v214
  %v1146 = vpop.permute.xlu0 %1145
  %1149 = vset.pattern.permute.xlu0 0
  %1150 = vperm.xlu0 %1149, %v215
  %v1151 = vpop.permute.xlu0 %1150
  %1154 = vset.pattern.permute.xlu0 0
  %1155 = vperm.xlu0 %1154, %v216
  %v1156 = vpop.permute.xlu0 %1155
  %1159 = vset.pattern.permute.xlu0 0
  %1160 = vperm.xlu0 %1159, %v217
  %v1161 = vpop.permute.xlu0 %1160
  %1164 = vset.pattern.permute.xlu0 0
  %1165 = vperm.xlu0 %1164, %v218
  %v1166 = vpop.permute.xlu0 %1165
  %1169 = vset.pattern.permute.xlu0 0
  %1170 = vperm.xlu0 %1169, %v219
  %v1171 = vpop.permute.xlu0 %1170
  %1174 = vset.pattern.permute.xlu0 0
  %1175 = vperm.xlu0 %1174, %v220
  %v1176 = vpop.permute.xlu0 %1175
  %1179 = vset.pattern.permute.xlu0 0
  %1180 = vperm.xlu0 %1179, %v221
  %v1181 = vpop.permute.xlu0 %1180
  %1184 = vset.pattern.permute.xlu0 0
  %1185 = vperm.xlu0 %1184, %v222
  %v1186 = vpop.permute.xlu0 %1185
  %1189 = vset.pattern.permute.xlu0 0
  %1190 = vperm.xlu0 %1189, %v223
  %v1191 = vpop.permute.xlu0 %1190
  %1194 = vset.pattern.permute.xlu0 0
  %1195 = vperm.xlu0 %1194, %v224
  %v1196 = vpop.permute.xlu0 %1195
  %1199 = vset.pattern.permute.xlu0 0
  %1200 = vperm.xlu0 %1199, %v225
  %v1201 = vpop.permute.xlu0 %1200
  %1204 = vset.pattern.permute.xlu0 0
  %1205 = vperm.xlu0 %1204, %v226
  %v1206 = vpop.permute.xlu0 %1205
  %1209 = vset.pattern.permute.xlu0 0
  %1210 = vperm.xlu0 %1209, %v227
  %v1211 = vpop.permute.xlu0 %1210
  %1214 = vset.pattern.permute.xlu0 0
  %1215 = vperm.xlu0 %1214, %v228
  %v1216 = vpop.permute.xlu0 %1215
  %1219 = vset.pattern.permute.xlu0 0
  %1220 = vperm.xlu0 %1219, %v229
  %v1221 = vpop.permute.xlu0 %1220
  %1224 = vset.pattern.permute.xlu0 0
  %1225 = vperm.xlu0 %1224, %v230
  %v1226 = vpop.permute.xlu0 %1225
  %1229 = vset.pattern.permute.xlu0 0
  %1230 = vperm.xlu0 %1229, %v231
  %v1231 = vpop.permute.xlu0 %1230
  %1234 = vset.pattern.permute.xlu0 0
  %1235 = vperm.xlu0 %1234, %v232
  %v1236 = vpop.permute.xlu0 %1235
  %1239 = vset.pattern.permute.xlu0 0
  %1240 = vperm.xlu0 %1239, %v233
  %v1241 = vpop.permute.xlu0 %1240
  %1244 = vset.pattern.permute.xlu0 0
  %1245 = vperm.xlu0 %1244, %v234
  %v1246 = vpop.permute.xlu0 %1245
  %1249 = vset.pattern.permute.xlu0 0
  %1250 = vperm.xlu0 %1249, %v235
  %v1251 = vpop.permute.xlu0 %1250
  %1254 = vset.pattern.permute.xlu0 0
  %1255 = vperm.xlu0 %1254, %v236
  %v1256 = vpop.permute.xlu0 %1255
  %1259 = vset.pattern.permute.xlu0 0
  %1260 = vperm.xlu0 %1259, %v237
  %v1261 = vpop.permute.xlu0 %1260
  %1264 = vset.pattern.permute.xlu0 0
  %1265 = vperm.xlu0 %1264, %v238
  %v1266 = vpop.permute.xlu0 %1265
  %1269 = vset.pattern.permute.xlu0 0
  %1270 = vperm.xlu0 %1269, %v239
  %v1271 = vpop.permute.xlu0 %1270
  %1274 = vset.pattern.permute.xlu0 0
  %1275 = vperm.xlu0 %1274, %v240
  %v1276 = vpop.permute.xlu0 %1275
  %1279 = vset.pattern.permute.xlu0 0
  %1280 = vperm.xlu0 %1279, %v241
  %v1281 = vpop.permute.xlu0 %1280
  %1284 = vset.pattern.permute.xlu0 0
  %1285 = vperm.xlu0 %1284, %v242
  %v1286 = vpop.permute.xlu0 %1285
  %1289 = vset.pattern.permute.xlu0 0
  %1290 = vperm.xlu0 %1289, %v243
  %v1291 = vpop.permute.xlu0 %1290
  %1294 = vset.pattern.permute.xlu0 0
  %1295 = vperm.xlu0 %1294, %v244
  %v1296 = vpop.permute.xlu0 %1295
  %1299 = vset.pattern.permute.xlu0 0
  %1300 = vperm.xlu0 %1299, %v245
  %v1301 = vpop.permute.xlu0 %1300
  %1304 = vset.pattern.permute.xlu0 0
  %1305 = vperm.xlu0 %1304, %v246
  %v1306 = vpop.permute.xlu0 %1305
  %1309 = vset.pattern.permute.xlu0 0
  %1310 = vperm.xlu0 %1309, %v247
  %v1311 = vpop.permute.xlu0 %1310
  %1314 = vset.pattern.permute.xlu0 0
  %1315 = vperm.xlu0 %1314, %v248
  %v1316 = vpop.permute.xlu0 %1315
  %1319 = vset.pattern.permute.xlu0 0
  %1320 = vperm.xlu0 %1319, %v249
  %v1321 = vpop.permute.xlu0 %1320
  %1324 = vset.pattern.permute.xlu0 0
  %1325 = vperm.xlu0 %1324, %v250
  %v1326 = vpop.permute.xlu0 %1325
  %1329 = vset.pattern.permute.xlu0 0
  %1330 = vperm.xlu0 %1329, %v251
  %v1331 = vpop.permute.xlu0 %1330
  %1334 = vset.pattern.permute.xlu0 0
  %1335 = vperm.xlu0 %1334, %v252
  %v1336 = vpop.permute.xlu0 %1335
  %1339 = vset.pattern.permute.xlu0 0
  %1340 = vperm.xlu0 %1339, %v253
  %v1341 = vpop.permute.xlu0 %1340
  %1344 = vset.pattern.permute.xlu0 0
  %1345 = vperm.xlu0 %1344, %v254
  %v1346 = vpop.permute.xlu0 %1345
  %1349 = vset.pattern.permute.xlu0 0
  %1350 = vperm.xlu0 %1349, %v255
  %v1351 = vpop.permute.xlu0 %1350
  %1354 = vset.pattern.permute.xlu0 0
  %1355 = vperm.xlu0 %1354, %v256
  %v1356 = vpop.permute.xlu0 %1355
  %1359 = vset.pattern.permute.xlu0 0
  %1360 = vperm.xlu0 %1359, %v257
  %v1361 = vpop.permute.xlu0 %1360
  %1364 = vset.pattern.permute.xlu0 0
  %1365 = vperm.xlu0 %1364, %v258
  %v1366 = vpop.permute.xlu0 %1365
  %1369 = vset.pattern.permute.xlu0 0
  %1370 = vperm.xlu0 %1369, %v259
  %v1371 = vpop.permute.xlu0 %1370
  %1374 = vset.pattern.permute.xlu0 0
  %1375 = vperm.xlu0 %1374, %v260
  %v1376 = vpop.permute.xlu0 %1375
  %1379 = vset.pattern.permute.xlu0 0
  %1380 = vperm.xlu0 %1379, %v261
  %v1381 = vpop.permute.xlu0 %1380
  %1384 = vset.pattern.permute.xlu0 0
  %1385 = vperm.xlu0 %1384, %v262
  %v1386 = vpop.permute.xlu0 %1385
  %1389 = vset.pattern.permute.xlu0 0
  %1390 = vperm.xlu0 %1389, %v263
  %v1391 = vpop.permute.xlu0 %1390
  %1394 = vset.pattern.permute.xlu0 0
  %1395 = vperm.xlu0 %1394, %v264
  %v1396 = vpop.permute.xlu0 %1395
  %1399 = vset.pattern.permute.xlu0 0
  %1400 = vperm.xlu0 %1399, %v265
  %v1401 = vpop.permute.xlu0 %1400
  %1404 = vset.pattern.permute.xlu0 0
  %1405 = vperm.xlu0 %1404, %v266
  %v1406 = vpop.permute.xlu0 %1405
  %1409 = vset.pattern.permute.xlu0 0
  %1410 = vperm.xlu0 %1409, %v267
  %v1411 = vpop.permute.xlu0 %1410
  %1414 = vset.pattern.permute.xlu0 0
  %1415 = vperm.xlu0 %1414, %v268
  %v1416 = vpop.permute.xlu0 %1415
  %1419 = vset.pattern.permute.xlu0 0
  %1420 = vperm.xlu0 %1419, %v269
  %v1421 = vpop.permute.xlu0 %1420
  %1424 = vset.pattern.permute.xlu0 0
  %1425 = vperm.xlu0 %1424, %v270
  %v1426 = vpop.permute.xlu0 %1425
  %1429 = vset.pattern.permute.xlu0 0
  %1430 = vperm.xlu0 %1429, %v271
  %v1431 = vpop.permute.xlu0 %1430
  %1434 = vset.pattern.permute.xlu0 0
  %1435 = vperm.xlu0 %1434, %v272
  %v1436 = vpop.permute.xlu0 %1435
  %1439 = vset.pattern.permute.xlu0 0
  %1440 = vperm.xlu0 %1439, %v273
  %v1441 = vpop.permute.xlu0 %1440
  %1444 = vset.pattern.permute.xlu0 0
  %1445 = vperm.xlu0 %1444, %v274
  %v1446 = vpop.permute.xlu0 %1445
  %1449 = vset.pattern.permute.xlu0 0
  %1450 = vperm.xlu0 %1449, %v275
  %v1451 = vpop.permute.xlu0 %1450
  %1454 = vset.pattern.permute.xlu0 0
  %1455 = vperm.xlu0 %1454, %v276
  %v1456 = vpop.permute.xlu0 %1455
  %1459 = vset.pattern.permute.xlu0 0
  %1460 = vperm.xlu0 %1459, %v277
  %v1461 = vpop.permute.xlu0 %1460
  %1464 = vset.pattern.permute.xlu0 0
  %1465 = vperm.xlu0 %1464, %v278
  %v1466 = vpop.permute.xlu0 %1465
  %1469 = vset.pattern.permute.xlu0 0
  %1470 = vperm.xlu0 %1469, %v279
  %v1471 = vpop.permute.xlu0 %1470
  %1474 = vset.pattern.permute.xlu0 0
  %1475 = vperm.xlu0 %1474, %v280
  %v1476 = vpop.permute.xlu0 %1475
  %1479 = vset.pattern.permute.xlu0 0
  %1480 = vperm.xlu0 %1479, %v281
  %v1481 = vpop.permute.xlu0 %1480
  %1484 = vset.pattern.permute.xlu0 0
  %1485 = vperm.xlu0 %1484, %v282
  %v1486 = vpop.permute.xlu0 %1485
  %1489 = vset.pattern.permute.xlu0 0
  %1490 = vperm.xlu0 %1489, %v283
  %v1491 = vpop.permute.xlu0 %1490
  %1494 = vset.pattern.permute.xlu0 0
  %1495 = vperm.xlu0 %1494, %v284
  %v1496 = vpop.permute.xlu0 %1495
  %1499 = vset.pattern.permute.xlu0 0
  %1500 = vperm.xlu0 %1499, %v285
  %v1501 = vpop.permute.xlu0 %1500
  %1504 = vset.pattern.permute.xlu0 0
  %1505 = vperm.xlu0 %1504, %v286
  %v1506 = vpop.permute.xlu0 %1505
  %1509 = vset.pattern.permute.xlu0 0
  %1510 = vperm.xlu0 %1509, %v287
  %v1511 = vpop.permute.xlu0 %1510
  %1514 = vset.pattern.permute.xlu0 0
  %1515 = vperm.xlu0 %1514, %v288
  %v1516 = vpop.permute.xlu0 %1515
  %1519 = vset.pattern.permute.xlu0 0
  %1520 = vperm.xlu0 %1519, %v289
  %v1521 = vpop.permute.xlu0 %1520
  %1524 = vset.pattern.permute.xlu0 0
  %1525 = vperm.xlu0 %1524, %v290
  %v1526 = vpop.permute.xlu0 %1525
  %1529 = vset.pattern.permute.xlu0 0
  %1530 = vperm.xlu0 %1529, %v291
  %v1531 = vpop.permute.xlu0 %1530
  %1534 = vset.pattern.permute.xlu0 0
  %1535 = vperm.xlu0 %1534, %v292
  %v1536 = vpop.permute.xlu0 %1535
  %1539 = vset.pattern.permute.xlu0 0
  %1540 = vperm.xlu0 %1539, %v293
  %v1541 = vpop.permute.xlu0 %1540
  %1544 = vset.pattern.permute.xlu0 0
  %1545 = vperm.xlu0 %1544, %v294
  %v1546 = vpop.permute.xlu0 %1545
  %1549 = vset.pattern.permute.xlu0 0
  %1550 = vperm.xlu0 %1549, %v295
  %v1551 = vpop.permute.xlu0 %1550
  %1554 = vset.pattern.permute.xlu0 0
  %1555 = vperm.xlu0 %1554, %v296
  %v1556 = vpop.permute.xlu0 %1555
  %1559 = vset.pattern.permute.xlu0 0
  %1560 = vperm.xlu0 %1559, %v297
  %v1561 = vpop.permute.xlu0 %1560
  %1564 = vset.pattern.permute.xlu0 0
  %1565 = vperm.xlu0 %1564, %v298
  %v1566 = vpop.permute.xlu0 %1565
  %1569 = vset.pattern.permute.xlu0 0
  %1570 = vperm.xlu0 %1569, %v299
  %v1571 = vpop.permute.xlu0 %1570
  %1574 = vset.pattern.permute.xlu0 0
  %1575 = vperm.xlu0 %1574, %v300
  %v1576 = vpop.permute.xlu0 %1575
  %1579 = vset.pattern.permute.xlu0 0
  %1580 = vperm.xlu0 %1579, %v301
  %v1581 = vpop.permute.xlu0 %1580
  %v1583 = vlaneseq
  %v1584 = vshrl.u32 %v1583, 7
  %v1585 = vsub.s32 0, %v1584
  %v1586 = vrot.slane %v302, %v1585
  %v1587 = vmul.f32 %v306, %v1586
  %v1588 = vmul.f32 %v311, %v1586
  %v1589 = vmul.f32 %v316, %v1586
  %v1590 = vmul.f32 %v321, %v1586
  %v1591 = vmul.f32 %v326, %v1586
  %v1592 = vmul.f32 %v331, %v1586
  %v1593 = vmul.f32 %v336, %v1586
  %v1594 = vmul.f32 %v341, %v1586
  %v1595 = vmul.f32 %v346, %v1586
  %v1596 = vmul.f32 %v351, %v1586
  %v1597 = vmul.f32 %v356, %v1586
  %v1598 = vmul.f32 %v361, %v1586
  %v1599 = vmul.f32 %v366, %v1586
  %v1600 = vmul.f32 %v371, %v1586
  %v1601 = vmul.f32 %v376, %v1586
  %v1602 = vmul.f32 %v381, %v1586
  %v1603 = vmul.f32 %v386, %v1586
  %v1604 = vmul.f32 %v391, %v1586
  %v1605 = vmul.f32 %v396, %v1586
  %v1606 = vmul.f32 %v401, %v1586
  %v1607 = vmul.f32 %v406, %v1586
  %v1608 = vmul.f32 %v411, %v1586
  %v1609 = vmul.f32 %v416, %v1586
  %v1610 = vmul.f32 %v421, %v1586
  %v1611 = vmul.f32 %v426, %v1586
  %v1612 = vmul.f32 %v431, %v1586
  %v1613 = vmul.f32 %v436, %v1586
  %v1614 = vmul.f32 %v441, %v1586
  %v1615 = vmul.f32 %v446, %v1586
  %v1616 = vmul.f32 %v451, %v1586
  %v1617 = vmul.f32 %v456, %v1586
  %v1618 = vmul.f32 %v461, %v1586
  %v1619 = vmul.f32 %v466, %v1586
  %v1620 = vmul.f32 %v471, %v1586
  %v1621 = vmul.f32 %v476, %v1586
  %v1622 = vmul.f32 %v481, %v1586
  %v1623 = vmul.f32 %v486, %v1586
  %v1624 = vmul.f32 %v491, %v1586
  %v1625 = vmul.f32 %v496, %v1586
  %v1626 = vmul.f32 %v501, %v1586
  %v1627 = vmul.f32 %v506, %v1586
  %v1628 = vmul.f32 %v511, %v1586
  %v1629 = vmul.f32 %v516, %v1586
  %v1630 = vmul.f32 %v521, %v1586
  %v1631 = vmul.f32 %v526, %v1586
  %v1632 = vmul.f32 %v531, %v1586
  %v1633 = vmul.f32 %v536, %v1586
  %v1634 = vmul.f32 %v541, %v1586
  %v1635 = vmul.f32 %v546, %v1586
  %v1636 = vmul.f32 %v551, %v1586
  %v1637 = vmul.f32 %v556, %v1586
  %v1638 = vmul.f32 %v561, %v1586
  %v1639 = vmul.f32 %v566, %v1586
  %v1640 = vmul.f32 %v571, %v1586
  %v1641 = vmul.f32 %v576, %v1586
  %v1642 = vmul.f32 %v581, %v1586
  %v1643 = vmul.f32 %v586, %v1586
  %v1644 = vmul.f32 %v591, %v1586
  %v1645 = vmul.f32 %v596, %v1586
  %v1646 = vmul.f32 %v601, %v1586
  %v1647 = vmul.f32 %v606, %v1586
  %v1648 = vmul.f32 %v611, %v1586
  %v1649 = vmul.f32 %v616, %v1586
  %v1650 = vmul.f32 %v621, %v1586
  %v1651 = vmul.f32 %v626, %v1586
  %v1652 = vmul.f32 %v631, %v1586
  %v1653 = vmul.f32 %v636, %v1586
  %v1654 = vmul.f32 %v641, %v1586
  %v1655 = vmul.f32 %v646, %v1586
  %v1656 = vmul.f32 %v651, %v1586
  %v1657 = vmul.f32 %v656, %v1586
  %v1658 = vmul.f32 %v661, %v1586
  %v1659 = vmul.f32 %v666, %v1586
  %v1660 = vmul.f32 %v671, %v1586
  %v1661 = vmul.f32 %v676, %v1586
  %v1662 = vmul.f32 %v681, %v1586
  %v1663 = vmul.f32 %v686, %v1586
  %v1664 = vmul.f32 %v691, %v1586
  %v1665 = vmul.f32 %v696, %v1586
  %v1666 = vmul.f32 %v701, %v1586
  %v1667 = vmul.f32 %v706, %v1586
  %v1668 = vmul.f32 %v711, %v1586
  %v1669 = vmul.f32 %v716, %v1586
  %v1670 = vmul.f32 %v721, %v1586
  %v1671 = vmul.f32 %v726, %v1586
  %v1672 = vmul.f32 %v731, %v1586
  %v1673 = vmul.f32 %v736, %v1586
  %v1674 = vmul.f32 %v741, %v1586
  %v1675 = vmul.f32 %v746, %v1586
  %v1676 = vmul.f32 %v751, %v1586
  %v1677 = vmul.f32 %v756, %v1586
  %v1678 = vmul.f32 %v761, %v1586
  %v1679 = vmul.f32 %v766, %v1586
  %v1680 = vmul.f32 %v771, %v1586
  %v1681 = vmul.f32 %v776, %v1586
  %v1682 = vmul.f32 %v781, %v1586
  %v1683 = vmul.f32 %v786, %v1586
  %v1684 = vmul.f32 %v791, %v1586
  %v1685 = vmul.f32 %v796, %v1586
  %v1686 = vmul.f32 %v801, %v1586
  %v1687 = vmul.f32 %v806, %v1586
  %v1688 = vmul.f32 %v811, %v1586
  %v1689 = vmul.f32 %v816, %v1586
  %v1690 = vmul.f32 %v821, %v1586
  %v1691 = vmul.f32 %v826, %v1586
  %v1692 = vmul.f32 %v831, %v1586
  %v1693 = vmul.f32 %v836, %v1586
  %v1694 = vmul.f32 %v841, %v1586
  %v1695 = vmul.f32 %v846, %v1586
  %v1696 = vmul.f32 %v851, %v1586
  %v1697 = vmul.f32 %v856, %v1586
  %v1698 = vmul.f32 %v861, %v1586
  %v1699 = vmul.f32 %v866, %v1586
  %v1700 = vmul.f32 %v871, %v1586
  %v1701 = vmul.f32 %v876, %v1586
  %v1702 = vmul.f32 %v881, %v1586
  %v1703 = vmul.f32 %v886, %v1586
  %v1704 = vmul.f32 %v891, %v1586
  %v1705 = vmul.f32 %v896, %v1586
  %v1706 = vmul.f32 %v901, %v1586
  %v1707 = vmul.f32 %v906, %v1586
  %v1708 = vmul.f32 %v911, %v1586
  %v1709 = vmul.f32 %v916, %v1586
  %v1710 = vmul.f32 %v921, %v1586
  %v1711 = vmul.f32 %v926, %v1586
  %v1712 = vmul.f32 %v931, %v1586
  %v1713 = vmul.f32 %v936, %v1586
  %v1714 = vmul.f32 %v941, %v1586
  %v1715 = vmul.f32 %v946, %v1586
  %v1716 = vmul.f32 %v951, %v1586
  %v1717 = vmul.f32 %v956, %v1586
  %v1718 = vmul.f32 %v961, %v1586
  %v1719 = vmul.f32 %v966, %v1586
  %v1720 = vmul.f32 %v971, %v1586
  %v1721 = vmul.f32 %v976, %v1586
  %v1722 = vmul.f32 %v981, %v1586
  %v1723 = vmul.f32 %v986, %v1586
  %v1724 = vmul.f32 %v991, %v1586
  %v1725 = vmul.f32 %v996, %v1586
  %v1726 = vmul.f32 %v1001, %v1586
  %v1727 = vmul.f32 %v1006, %v1586
  %v1728 = vmul.f32 %v1011, %v1586
  %v1729 = vmul.f32 %v1016, %v1586
  %v1730 = vmul.f32 %v1021, %v1586
  %v1731 = vmul.f32 %v1026, %v1586
  %v1732 = vmul.f32 %v1031, %v1586
  %v1733 = vmul.f32 %v1036, %v1586
  %v1734 = vmul.f32 %v1041, %v1586
  %v1735 = vmul.f32 %v1046, %v1586
  %v1736 = vmul.f32 %v1051, %v1586
  %v1737 = vmul.f32 %v1056, %v1586
  %v1738 = vmul.f32 %v1061, %v1586
  %v1739 = vmul.f32 %v1066, %v1586
  %v1740 = vmul.f32 %v1071, %v1586
  %v1741 = vmul.f32 %v1076, %v1586
  %v1742 = vmul.f32 %v1081, %v1586
  %v1743 = vmul.f32 %v1086, %v1586
  %v1744 = vmul.f32 %v1091, %v1586
  %v1745 = vmul.f32 %v1096, %v1586
  %v1746 = vmul.f32 %v1101, %v1586
  %v1747 = vmul.f32 %v1106, %v1586
  %v1748 = vmul.f32 %v1111, %v1586
  %v1749 = vmul.f32 %v1116, %v1586
  %v1750 = vmul.f32 %v1121, %v1586
  %v1751 = vmul.f32 %v1126, %v1586
  %v1752 = vmul.f32 %v1131, %v1586
  %v1753 = vmul.f32 %v1136, %v1586
  %v1754 = vmul.f32 %v1141, %v1586
  %v1755 = vmul.f32 %v1146, %v1586
  %v1756 = vmul.f32 %v1151, %v1586
  %v1757 = vmul.f32 %v1156, %v1586
  %v1758 = vmul.f32 %v1161, %v1586
  %v1759 = vmul.f32 %v1166, %v1586
  %v1760 = vmul.f32 %v1171, %v1586
  %v1761 = vmul.f32 %v1176, %v1586
  %v1762 = vmul.f32 %v1181, %v1586
  %v1763 = vmul.f32 %v1186, %v1586
  %v1764 = vmul.f32 %v1191, %v1586
  %v1765 = vmul.f32 %v1196, %v1586
  %v1766 = vmul.f32 %v1201, %v1586
  %v1767 = vmul.f32 %v1206, %v1586
  %v1768 = vmul.f32 %v1211, %v1586
  %v1769 = vmul.f32 %v1216, %v1586
  %v1770 = vmul.f32 %v1221, %v1586
  %v1771 = vmul.f32 %v1226, %v1586
  %v1772 = vmul.f32 %v1231, %v1586
  %v1773 = vmul.f32 %v1236, %v1586
  %v1774 = vmul.f32 %v1241, %v1586
  %v1775 = vmul.f32 %v1246, %v1586
  %v1776 = vmul.f32 %v1251, %v1586
  %v1777 = vmul.f32 %v1256, %v1586
  %v1778 = vmul.f32 %v1261, %v1586
  %v1779 = vmul.f32 %v1266, %v1586
  %v1780 = vmul.f32 %v1271, %v1586
  %v1781 = vmul.f32 %v1276, %v1586
  %v1782 = vmul.f32 %v1281, %v1586
  %v1783 = vmul.f32 %v1286, %v1586
  %v1784 = vmul.f32 %v1291, %v1586
  %v1785 = vmul.f32 %v1296, %v1586
  %v1786 = vmul.f32 %v1301, %v1586
  %v1787 = vmul.f32 %v1306, %v1586
  %v1788 = vmul.f32 %v1311, %v1586
  %v1789 = vmul.f32 %v1316, %v1586
  %v1790 = vmul.f32 %v1321, %v1586
  %v1791 = vmul.f32 %v1326, %v1586
  %v1792 = vmul.f32 %v1331, %v1586
  %v1793 = vmul.f32 %v1336, %v1586
  %v1794 = vmul.f32 %v1341, %v1586
  %v1795 = vmul.f32 %v1346, %v1586
  %v1796 = vmul.f32 %v1351, %v1586
  %v1797 = vmul.f32 %v1356, %v1586
  %v1798 = vmul.f32 %v1361, %v1586
  %v1799 = vmul.f32 %v1366, %v1586
  %v1800 = vmul.f32 %v1371, %v1586
  %v1801 = vmul.f32 %v1376, %v1586
  %v1802 = vmul.f32 %v1381, %v1586
  %v1803 = vmul.f32 %v1386, %v1586
  %v1804 = vmul.f32 %v1391, %v1586
  %v1805 = vmul.f32 %v1396, %v1586
  %v1806 = vmul.f32 %v1401, %v1586
  %v1807 = vmul.f32 %v1406, %v1586
  %v1808 = vmul.f32 %v1411, %v1586
  %v1809 = vmul.f32 %v1416, %v1586
  %v1810 = vmul.f32 %v1421, %v1586
  %v1811 = vmul.f32 %v1426, %v1586
  %v1812 = vmul.f32 %v1431, %v1586
  %v1813 = vmul.f32 %v1436, %v1586
  %v1814 = vmul.f32 %v1441, %v1586
  %v1815 = vmul.f32 %v1446, %v1586
  %v1816 = vmul.f32 %v1451, %v1586
  %v1817 = vmul.f32 %v1456, %v1586
  %v1818 = vmul.f32 %v1461, %v1586
  %v1819 = vmul.f32 %v1466, %v1586
  %v1820 = vmul.f32 %v1471, %v1586
  %v1821 = vmul.f32 %v1476, %v1586
  %v1822 = vmul.f32 %v1481, %v1586
  %v1823 = vmul.f32 %v1486, %v1586
  %v1824 = vmul.f32 %v1491, %v1586
  %v1825 = vmul.f32 %v1496, %v1586
  %v1826 = vmul.f32 %v1501, %v1586
  %v1827 = vmul.f32 %v1506, %v1586
  %v1828 = vmul.f32 %v1511, %v1586
  %v1829 = vmul.f32 %v1516, %v1586
  %v1830 = vmul.f32 %v1521, %v1586
  %v1831 = vmul.f32 %v1526, %v1586
  %v1832 = vmul.f32 %v1531, %v1586
  %v1833 = vmul.f32 %v1536, %v1586
  %v1834 = vmul.f32 %v1541, %v1586
  %v1835 = vmul.f32 %v1546, %v1586
  %v1836 = vmul.f32 %v1551, %v1586
  %v1837 = vmul.f32 %v1556, %v1586
  %v1838 = vmul.f32 %v1561, %v1586
  %v1839 = vmul.f32 %v1566, %v1586
  %v1840 = vmul.f32 %v1571, %v1586
  %v1841 = vmul.f32 %v1576, %v1586
  %v1842 = vmul.f32 %v1581, %v1586
  %v1843 = vld [vmem:[%s1 + $0x1] sm:$0x1]
  %1844 = vset.pattern.permute.xlu0 1
  %1845 = vperm.xlu0 %1844, %v46
  %v1846 = vpop.permute.xlu0 %1845
  %1848 = vset.pattern.permute.xlu0 1
  %1849 = vperm.xlu0 %1848, %v47
  %v1850 = vpop.permute.xlu0 %1849
  %1852 = vset.pattern.permute.xlu0 1
  %1853 = vperm.xlu0 %1852, %v48
  %v1854 = vpop.permute.xlu0 %1853
  %1856 = vset.pattern.permute.xlu0 1
  %1857 = vperm.xlu0 %1856, %v49
  %v1858 = vpop.permute.xlu0 %1857
  %1860 = vset.pattern.permute.xlu0 1
  %1861 = vperm.xlu0 %1860, %v50
  %v1862 = vpop.permute.xlu0 %1861
  %1864 = vset.pattern.permute.xlu0 1
  %1865 = vperm.xlu0 %1864, %v51
  %v1866 = vpop.permute.xlu0 %1865
  %1868 = vset.pattern.permute.xlu0 1
  %1869 = vperm.xlu0 %1868, %v52
  %v1870 = vpop.permute.xlu0 %1869
  %1872 = vset.pattern.permute.xlu0 1
  %1873 = vperm.xlu0 %1872, %v53
  %v1874 = vpop.permute.xlu0 %1873
  %1876 = vset.pattern.permute.xlu0 1
  %1877 = vperm.xlu0 %1876, %v54
  %v1878 = vpop.permute.xlu0 %1877
  %1880 = vset.pattern.permute.xlu0 1
  %1881 = vperm.xlu0 %1880, %v55
  %v1882 = vpop.permute.xlu0 %1881
  %1884 = vset.pattern.permute.xlu0 1
  %1885 = vperm.xlu0 %1884, %v56
  %v1886 = vpop.permute.xlu0 %1885
  %1888 = vset.pattern.permute.xlu0 1
  %1889 = vperm.xlu0 %1888, %v57
  %v1890 = vpop.permute.xlu0 %1889
  %1892 = vset.pattern.permute.xlu0 1
  %1893 = vperm.xlu0 %1892, %v58
  %v1894 = vpop.permute.xlu0 %1893
  %1896 = vset.pattern.permute.xlu0 1
  %1897 = vperm.xlu0 %1896, %v59
  %v1898 = vpop.permute.xlu0 %1897
  %1900 = vset.pattern.permute.xlu0 1
  %1901 = vperm.xlu0 %1900, %v60
  %v1902 = vpop.permute.xlu0 %1901
  %1904 = vset.pattern.permute.xlu0 1
  %1905 = vperm.xlu0 %1904, %v61
  %v1906 = vpop.permute.xlu0 %1905
  %1908 = vset.pattern.permute.xlu0 1
  %1909 = vperm.xlu0 %1908, %v62
  %v1910 = vpop.permute.xlu0 %1909
  %1912 = vset.pattern.permute.xlu0 1
  %1913 = vperm.xlu0 %1912, %v63
  %v1914 = vpop.permute.xlu0 %1913
  %1916 = vset.pattern.permute.xlu0 1
  %1917 = vperm.xlu0 %1916, %v64
  %v1918 = vpop.permute.xlu0 %1917
  %1920 = vset.pattern.permute.xlu0 1
  %1921 = vperm.xlu0 %1920, %v65
  %v1922 = vpop.permute.xlu0 %1921
  %1924 = vset.pattern.permute.xlu0 1
  %1925 = vperm.xlu0 %1924, %v66
  %v1926 = vpop.permute.xlu0 %1925
  %1928 = vset.pattern.permute.xlu0 1
  %1929 = vperm.xlu0 %1928, %v67
  %v1930 = vpop.permute.xlu0 %1929
  %1932 = vset.pattern.permute.xlu0 1
  %1933 = vperm.xlu0 %1932, %v68
  %v1934 = vpop.permute.xlu0 %1933
  %1936 = vset.pattern.permute.xlu0 1
  %1937 = vperm.xlu0 %1936, %v69
  %v1938 = vpop.permute.xlu0 %1937
  %1940 = vset.pattern.permute.xlu0 1
  %1941 = vperm.xlu0 %1940, %v70
  %v1942 = vpop.permute.xlu0 %1941
  %1944 = vset.pattern.permute.xlu0 1
  %1945 = vperm.xlu0 %1944, %v71
  %v1946 = vpop.permute.xlu0 %1945
  %1948 = vset.pattern.permute.xlu0 1
  %1949 = vperm.xlu0 %1948, %v72
  %v1950 = vpop.permute.xlu0 %1949
  %1952 = vset.pattern.permute.xlu0 1
  %1953 = vperm.xlu0 %1952, %v73
  %v1954 = vpop.permute.xlu0 %1953
  %1956 = vset.pattern.permute.xlu0 1
  %1957 = vperm.xlu0 %1956, %v74
  %v1958 = vpop.permute.xlu0 %1957
  %1960 = vset.pattern.permute.xlu0 1
  %1961 = vperm.xlu0 %1960, %v75
  %v1962 = vpop.permute.xlu0 %1961
  %1964 = vset.pattern.permute.xlu0 1
  %1965 = vperm.xlu0 %1964, %v76
  %v1966 = vpop.permute.xlu0 %1965
  %1968 = vset.pattern.permute.xlu0 1
  %1969 = vperm.xlu0 %1968, %v77
  %v1970 = vpop.permute.xlu0 %1969
  %1972 = vset.pattern.permute.xlu0 1
  %1973 = vperm.xlu0 %1972, %v78
  %v1974 = vpop.permute.xlu0 %1973
  %1976 = vset.pattern.permute.xlu0 1
  %1977 = vperm.xlu0 %1976, %v79
  %v1978 = vpop.permute.xlu0 %1977
  %1980 = vset.pattern.permute.xlu0 1
  %1981 = vperm.xlu0 %1980, %v80
  %v1982 = vpop.permute.xlu0 %1981
  %1984 = vset.pattern.permute.xlu0 1
  %1985 = vperm.xlu0 %1984, %v81
  %v1986 = vpop.permute.xlu0 %1985
  %1988 = vset.pattern.permute.xlu0 1
  %1989 = vperm.xlu0 %1988, %v82
  %v1990 = vpop.permute.xlu0 %1989
  %1992 = vset.pattern.permute.xlu0 1
  %1993 = vperm.xlu0 %1992, %v83
  %v1994 = vpop.permute.xlu0 %1993
  %1996 = vset.pattern.permute.xlu0 1
  %1997 = vperm.xlu0 %1996, %v84
  %v1998 = vpop.permute.xlu0 %1997
  %2000 = vset.pattern.permute.xlu0 1
  %2001 = vperm.xlu0 %2000, %v85
  %v2002 = vpop.permute.xlu0 %2001
  %2004 = vset.pattern.permute.xlu0 1
  %2005 = vperm.xlu0 %2004, %v86
  %v2006 = vpop.permute.xlu0 %2005
  %2008 = vset.pattern.permute.xlu0 1
  %2009 = vperm.xlu0 %2008, %v87
  %v2010 = vpop.permute.xlu0 %2009
  %2012 = vset.pattern.permute.xlu0 1
  %2013 = vperm.xlu0 %2012, %v88
  %v2014 = vpop.permute.xlu0 %2013
  %2016 = vset.pattern.permute.xlu0 1
  %2017 = vperm.xlu0 %2016, %v89
  %v2018 = vpop.permute.xlu0 %2017
  %2020 = vset.pattern.permute.xlu0 1
  %2021 = vperm.xlu0 %2020, %v90
  %v2022 = vpop.permute.xlu0 %2021
  %2024 = vset.pattern.permute.xlu0 1
  %2025 = vperm.xlu0 %2024, %v91
  %v2026 = vpop.permute.xlu0 %2025
  %2028 = vset.pattern.permute.xlu0 1
  %2029 = vperm.xlu0 %2028, %v92
  %v2030 = vpop.permute.xlu0 %2029
  %2032 = vset.pattern.permute.xlu0 1
  %2033 = vperm.xlu0 %2032, %v93
  %v2034 = vpop.permute.xlu0 %2033
  %2036 = vset.pattern.permute.xlu0 1
  %2037 = vperm.xlu0 %2036, %v94
  %v2038 = vpop.permute.xlu0 %2037
  %2040 = vset.pattern.permute.xlu0 1
  %2041 = vperm.xlu0 %2040, %v95
  %v2042 = vpop.permute.xlu0 %2041
  %2044 = vset.pattern.permute.xlu0 1
  %2045 = vperm.xlu0 %2044, %v96
  %v2046 = vpop.permute.xlu0 %2045
  %2048 = vset.pattern.permute.xlu0 1
  %2049 = vperm.xlu0 %2048, %v97
  %v2050 = vpop.permute.xlu0 %2049
  %2052 = vset.pattern.permute.xlu0 1
  %2053 = vperm.xlu0 %2052, %v98
  %v2054 = vpop.permute.xlu0 %2053
  %2056 = vset.pattern.permute.xlu0 1
  %2057 = vperm.xlu0 %2056, %v99
  %v2058 = vpop.permute.xlu0 %2057
  %2060 = vset.pattern.permute.xlu0 1
  %2061 = vperm.xlu0 %2060, %v100
  %v2062 = vpop.permute.xlu0 %2061
  %2064 = vset.pattern.permute.xlu0 1
  %2065 = vperm.xlu0 %2064, %v101
  %v2066 = vpop.permute.xlu0 %2065
  %2068 = vset.pattern.permute.xlu0 1
  %2069 = vperm.xlu0 %2068, %v102
  %v2070 = vpop.permute.xlu0 %2069
  %2072 = vset.pattern.permute.xlu0 1
  %2073 = vperm.xlu0 %2072, %v103
  %v2074 = vpop.permute.xlu0 %2073
  %2076 = vset.pattern.permute.xlu0 1
  %2077 = vperm.xlu0 %2076, %v104
  %v2078 = vpop.permute.xlu0 %2077
  %2080 = vset.pattern.permute.xlu0 1
  %2081 = vperm.xlu0 %2080, %v105
  %v2082 = vpop.permute.xlu0 %2081
  %2084 = vset.pattern.permute.xlu0 1
  %2085 = vperm.xlu0 %2084, %v106
  %v2086 = vpop.permute.xlu0 %2085
  %2088 = vset.pattern.permute.xlu0 1
  %2089 = vperm.xlu0 %2088, %v107
  %v2090 = vpop.permute.xlu0 %2089
  %2092 = vset.pattern.permute.xlu0 1
  %2093 = vperm.xlu0 %2092, %v108
  %v2094 = vpop.permute.xlu0 %2093
  %2096 = vset.pattern.permute.xlu0 1
  %2097 = vperm.xlu0 %2096, %v109
  %v2098 = vpop.permute.xlu0 %2097
  %2100 = vset.pattern.permute.xlu0 1
  %2101 = vperm.xlu0 %2100, %v110
  %v2102 = vpop.permute.xlu0 %2101
  %2104 = vset.pattern.permute.xlu0 1
  %2105 = vperm.xlu0 %2104, %v111
  %v2106 = vpop.permute.xlu0 %2105
  %2108 = vset.pattern.permute.xlu0 1
  %2109 = vperm.xlu0 %2108, %v112
  %v2110 = vpop.permute.xlu0 %2109
  %2112 = vset.pattern.permute.xlu0 1
  %2113 = vperm.xlu0 %2112, %v113
  %v2114 = vpop.permute.xlu0 %2113
  %2116 = vset.pattern.permute.xlu0 1
  %2117 = vperm.xlu0 %2116, %v114
  %v2118 = vpop.permute.xlu0 %2117
  %2120 = vset.pattern.permute.xlu0 1
  %2121 = vperm.xlu0 %2120, %v115
  %v2122 = vpop.permute.xlu0 %2121
  %2124 = vset.pattern.permute.xlu0 1
  %2125 = vperm.xlu0 %2124, %v116
  %v2126 = vpop.permute.xlu0 %2125
  %2128 = vset.pattern.permute.xlu0 1
  %2129 = vperm.xlu0 %2128, %v117
  %v2130 = vpop.permute.xlu0 %2129
  %2132 = vset.pattern.permute.xlu0 1
  %2133 = vperm.xlu0 %2132, %v118
  %v2134 = vpop.permute.xlu0 %2133
  %2136 = vset.pattern.permute.xlu0 1
  %2137 = vperm.xlu0 %2136, %v119
  %v2138 = vpop.permute.xlu0 %2137
  %2140 = vset.pattern.permute.xlu0 1
  %2141 = vperm.xlu0 %2140, %v120
  %v2142 = vpop.permute.xlu0 %2141
  %2144 = vset.pattern.permute.xlu0 1
  %2145 = vperm.xlu0 %2144, %v121
  %v2146 = vpop.permute.xlu0 %2145
  %2148 = vset.pattern.permute.xlu0 1
  %2149 = vperm.xlu0 %2148, %v122
  %v2150 = vpop.permute.xlu0 %2149
  %2152 = vset.pattern.permute.xlu0 1
  %2153 = vperm.xlu0 %2152, %v123
  %v2154 = vpop.permute.xlu0 %2153
  %2156 = vset.pattern.permute.xlu0 1
  %2157 = vperm.xlu0 %2156, %v124
  %v2158 = vpop.permute.xlu0 %2157
  %2160 = vset.pattern.permute.xlu0 1
  %2161 = vperm.xlu0 %2160, %v125
  %v2162 = vpop.permute.xlu0 %2161
  %2164 = vset.pattern.permute.xlu0 1
  %2165 = vperm.xlu0 %2164, %v126
  %v2166 = vpop.permute.xlu0 %2165
  %2168 = vset.pattern.permute.xlu0 1
  %2169 = vperm.xlu0 %2168, %v127
  %v2170 = vpop.permute.xlu0 %2169
  %2172 = vset.pattern.permute.xlu0 1
  %2173 = vperm.xlu0 %2172, %v128
  %v2174 = vpop.permute.xlu0 %2173
  %2176 = vset.pattern.permute.xlu0 1
  %2177 = vperm.xlu0 %2176, %v129
  %v2178 = vpop.permute.xlu0 %2177
  %2180 = vset.pattern.permute.xlu0 1
  %2181 = vperm.xlu0 %2180, %v130
  %v2182 = vpop.permute.xlu0 %2181
  %2184 = vset.pattern.permute.xlu0 1
  %2185 = vperm.xlu0 %2184, %v131
  %v2186 = vpop.permute.xlu0 %2185
  %2188 = vset.pattern.permute.xlu0 1
  %2189 = vperm.xlu0 %2188, %v132
  %v2190 = vpop.permute.xlu0 %2189
  %2192 = vset.pattern.permute.xlu0 1
  %2193 = vperm.xlu0 %2192, %v133
  %v2194 = vpop.permute.xlu0 %2193
  %2196 = vset.pattern.permute.xlu0 1
  %2197 = vperm.xlu0 %2196, %v134
  %v2198 = vpop.permute.xlu0 %2197
  %2200 = vset.pattern.permute.xlu0 1
  %2201 = vperm.xlu0 %2200, %v135
  %v2202 = vpop.permute.xlu0 %2201
  %2204 = vset.pattern.permute.xlu0 1
  %2205 = vperm.xlu0 %2204, %v136
  %v2206 = vpop.permute.xlu0 %2205
  %2208 = vset.pattern.permute.xlu0 1
  %2209 = vperm.xlu0 %2208, %v137
  %v2210 = vpop.permute.xlu0 %2209
  %2212 = vset.pattern.permute.xlu0 1
  %2213 = vperm.xlu0 %2212, %v138
  %v2214 = vpop.permute.xlu0 %2213
  %2216 = vset.pattern.permute.xlu0 1
  %2217 = vperm.xlu0 %2216, %v139
  %v2218 = vpop.permute.xlu0 %2217
  %2220 = vset.pattern.permute.xlu0 1
  %2221 = vperm.xlu0 %2220, %v140
  %v2222 = vpop.permute.xlu0 %2221
  %2224 = vset.pattern.permute.xlu0 1
  %2225 = vperm.xlu0 %2224, %v141
  %v2226 = vpop.permute.xlu0 %2225
  %2228 = vset.pattern.permute.xlu0 1
  %2229 = vperm.xlu0 %2228, %v142
  %v2230 = vpop.permute.xlu0 %2229
  %2232 = vset.pattern.permute.xlu0 1
  %2233 = vperm.xlu0 %2232, %v143
  %v2234 = vpop.permute.xlu0 %2233
  %2236 = vset.pattern.permute.xlu0 1
  %2237 = vperm.xlu0 %2236, %v144
  %v2238 = vpop.permute.xlu0 %2237
  %2240 = vset.pattern.permute.xlu0 1
  %2241 = vperm.xlu0 %2240, %v145
  %v2242 = vpop.permute.xlu0 %2241
  %2244 = vset.pattern.permute.xlu0 1
  %2245 = vperm.xlu0 %2244, %v146
  %v2246 = vpop.permute.xlu0 %2245
  %2248 = vset.pattern.permute.xlu0 1
  %2249 = vperm.xlu0 %2248, %v147
  %v2250 = vpop.permute.xlu0 %2249
  %2252 = vset.pattern.permute.xlu0 1
  %2253 = vperm.xlu0 %2252, %v148
  %v2254 = vpop.permute.xlu0 %2253
  %2256 = vset.pattern.permute.xlu0 1
  %2257 = vperm.xlu0 %2256, %v149
  %v2258 = vpop.permute.xlu0 %2257
  %2260 = vset.pattern.permute.xlu0 1
  %2261 = vperm.xlu0 %2260, %v150
  %v2262 = vpop.permute.xlu0 %2261
  %2264 = vset.pattern.permute.xlu0 1
  %2265 = vperm.xlu0 %2264, %v151
  %v2266 = vpop.permute.xlu0 %2265
  %2268 = vset.pattern.permute.xlu0 1
  %2269 = vperm.xlu0 %2268, %v152
  %v2270 = vpop.permute.xlu0 %2269
  %2272 = vset.pattern.permute.xlu0 1
  %2273 = vperm.xlu0 %2272, %v153
  %v2274 = vpop.permute.xlu0 %2273
  %2276 = vset.pattern.permute.xlu0 1
  %2277 = vperm.xlu0 %2276, %v154
  %v2278 = vpop.permute.xlu0 %2277
  %2280 = vset.pattern.permute.xlu0 1
  %2281 = vperm.xlu0 %2280, %v155
  %v2282 = vpop.permute.xlu0 %2281
  %2284 = vset.pattern.permute.xlu0 1
  %2285 = vperm.xlu0 %2284, %v156
  %v2286 = vpop.permute.xlu0 %2285
  %2288 = vset.pattern.permute.xlu0 1
  %2289 = vperm.xlu0 %2288, %v157
  %v2290 = vpop.permute.xlu0 %2289
  %2292 = vset.pattern.permute.xlu0 1
  %2293 = vperm.xlu0 %2292, %v158
  %v2294 = vpop.permute.xlu0 %2293
  %2296 = vset.pattern.permute.xlu0 1
  %2297 = vperm.xlu0 %2296, %v159
  %v2298 = vpop.permute.xlu0 %2297
  %2300 = vset.pattern.permute.xlu0 1
  %2301 = vperm.xlu0 %2300, %v160
  %v2302 = vpop.permute.xlu0 %2301
  %2304 = vset.pattern.permute.xlu0 1
  %2305 = vperm.xlu0 %2304, %v161
  %v2306 = vpop.permute.xlu0 %2305
  %2308 = vset.pattern.permute.xlu0 1
  %2309 = vperm.xlu0 %2308, %v162
  %v2310 = vpop.permute.xlu0 %2309
  %2312 = vset.pattern.permute.xlu0 1
  %2313 = vperm.xlu0 %2312, %v163
  %v2314 = vpop.permute.xlu0 %2313
  %2316 = vset.pattern.permute.xlu0 1
  %2317 = vperm.xlu0 %2316, %v164
  %v2318 = vpop.permute.xlu0 %2317
  %2320 = vset.pattern.permute.xlu0 1
  %2321 = vperm.xlu0 %2320, %v165
  %v2322 = vpop.permute.xlu0 %2321
  %2324 = vset.pattern.permute.xlu0 1
  %2325 = vperm.xlu0 %2324, %v166
  %v2326 = vpop.permute.xlu0 %2325
  %2328 = vset.pattern.permute.xlu0 1
  %2329 = vperm.xlu0 %2328, %v167
  %v2330 = vpop.permute.xlu0 %2329
  %2332 = vset.pattern.permute.xlu0 1
  %2333 = vperm.xlu0 %2332, %v168
  %v2334 = vpop.permute.xlu0 %2333
  %2336 = vset.pattern.permute.xlu0 1
  %2337 = vperm.xlu0 %2336, %v169
  %v2338 = vpop.permute.xlu0 %2337
  %2340 = vset.pattern.permute.xlu0 1
  %2341 = vperm.xlu0 %2340, %v170
  %v2342 = vpop.permute.xlu0 %2341
  %2344 = vset.pattern.permute.xlu0 1
  %2345 = vperm.xlu0 %2344, %v171
  %v2346 = vpop.permute.xlu0 %2345
  %2348 = vset.pattern.permute.xlu0 1
  %2349 = vperm.xlu0 %2348, %v172
  %v2350 = vpop.permute.xlu0 %2349
  %2352 = vset.pattern.permute.xlu0 1
  %2353 = vperm.xlu0 %2352, %v173
  %v2354 = vpop.permute.xlu0 %2353
  %2356 = vset.pattern.permute.xlu0 1
  %2357 = vperm.xlu0 %2356, %v174
  %v2358 = vpop.permute.xlu0 %2357
  %2360 = vset.pattern.permute.xlu0 1
  %2361 = vperm.xlu0 %2360, %v175
  %v2362 = vpop.permute.xlu0 %2361
  %2364 = vset.pattern.permute.xlu0 1
  %2365 = vperm.xlu0 %2364, %v176
  %v2366 = vpop.permute.xlu0 %2365
  %2368 = vset.pattern.permute.xlu0 1
  %2369 = vperm.xlu0 %2368, %v177
  %v2370 = vpop.permute.xlu0 %2369
  %2372 = vset.pattern.permute.xlu0 1
  %2373 = vperm.xlu0 %2372, %v178
  %v2374 = vpop.permute.xlu0 %2373
  %2376 = vset.pattern.permute.xlu0 1
  %2377 = vperm.xlu0 %2376, %v179
  %v2378 = vpop.permute.xlu0 %2377
  %2380 = vset.pattern.permute.xlu0 1
  %2381 = vperm.xlu0 %2380, %v180
  %v2382 = vpop.permute.xlu0 %2381
  %2384 = vset.pattern.permute.xlu0 1
  %2385 = vperm.xlu0 %2384, %v181
  %v2386 = vpop.permute.xlu0 %2385
  %2388 = vset.pattern.permute.xlu0 1
  %2389 = vperm.xlu0 %2388, %v182
  %v2390 = vpop.permute.xlu0 %2389
  %2392 = vset.pattern.permute.xlu0 1
  %2393 = vperm.xlu0 %2392, %v183
  %v2394 = vpop.permute.xlu0 %2393
  %2396 = vset.pattern.permute.xlu0 1
  %2397 = vperm.xlu0 %2396, %v184
  %v2398 = vpop.permute.xlu0 %2397
  %2400 = vset.pattern.permute.xlu0 1
  %2401 = vperm.xlu0 %2400, %v185
  %v2402 = vpop.permute.xlu0 %2401
  %2404 = vset.pattern.permute.xlu0 1
  %2405 = vperm.xlu0 %2404, %v186
  %v2406 = vpop.permute.xlu0 %2405
  %2408 = vset.pattern.permute.xlu0 1
  %2409 = vperm.xlu0 %2408, %v187
  %v2410 = vpop.permute.xlu0 %2409
  %2412 = vset.pattern.permute.xlu0 1
  %2413 = vperm.xlu0 %2412, %v188
  %v2414 = vpop.permute.xlu0 %2413
  %2416 = vset.pattern.permute.xlu0 1
  %2417 = vperm.xlu0 %2416, %v189
  %v2418 = vpop.permute.xlu0 %2417
  %2420 = vset.pattern.permute.xlu0 1
  %2421 = vperm.xlu0 %2420, %v190
  %v2422 = vpop.permute.xlu0 %2421
  %2424 = vset.pattern.permute.xlu0 1
  %2425 = vperm.xlu0 %2424, %v191
  %v2426 = vpop.permute.xlu0 %2425
  %2428 = vset.pattern.permute.xlu0 1
  %2429 = vperm.xlu0 %2428, %v192
  %v2430 = vpop.permute.xlu0 %2429
  %2432 = vset.pattern.permute.xlu0 1
  %2433 = vperm.xlu0 %2432, %v193
  %v2434 = vpop.permute.xlu0 %2433
  %2436 = vset.pattern.permute.xlu0 1
  %2437 = vperm.xlu0 %2436, %v194
  %v2438 = vpop.permute.xlu0 %2437
  %2440 = vset.pattern.permute.xlu0 1
  %2441 = vperm.xlu0 %2440, %v195
  %v2442 = vpop.permute.xlu0 %2441
  %2444 = vset.pattern.permute.xlu0 1
  %2445 = vperm.xlu0 %2444, %v196
  %v2446 = vpop.permute.xlu0 %2445
  %2448 = vset.pattern.permute.xlu0 1
  %2449 = vperm.xlu0 %2448, %v197
  %v2450 = vpop.permute.xlu0 %2449
  %2452 = vset.pattern.permute.xlu0 1
  %2453 = vperm.xlu0 %2452, %v198
  %v2454 = vpop.permute.xlu0 %2453
  %2456 = vset.pattern.permute.xlu0 1
  %2457 = vperm.xlu0 %2456, %v199
  %v2458 = vpop.permute.xlu0 %2457
  %2460 = vset.pattern.permute.xlu0 1
  %2461 = vperm.xlu0 %2460, %v200
  %v2462 = vpop.permute.xlu0 %2461
  %2464 = vset.pattern.permute.xlu0 1
  %2465 = vperm.xlu0 %2464, %v201
  %v2466 = vpop.permute.xlu0 %2465
  %2468 = vset.pattern.permute.xlu0 1
  %2469 = vperm.xlu0 %2468, %v202
  %v2470 = vpop.permute.xlu0 %2469
  %2472 = vset.pattern.permute.xlu0 1
  %2473 = vperm.xlu0 %2472, %v203
  %v2474 = vpop.permute.xlu0 %2473
  %2476 = vset.pattern.permute.xlu0 1
  %2477 = vperm.xlu0 %2476, %v204
  %v2478 = vpop.permute.xlu0 %2477
  %2480 = vset.pattern.permute.xlu0 1
  %2481 = vperm.xlu0 %2480, %v205
  %v2482 = vpop.permute.xlu0 %2481
  %2484 = vset.pattern.permute.xlu0 1
  %2485 = vperm.xlu0 %2484, %v206
  %v2486 = vpop.permute.xlu0 %2485
  %2488 = vset.pattern.permute.xlu0 1
  %2489 = vperm.xlu0 %2488, %v207
  %v2490 = vpop.permute.xlu0 %2489
  %2492 = vset.pattern.permute.xlu0 1
  %2493 = vperm.xlu0 %2492, %v208
  %v2494 = vpop.permute.xlu0 %2493
  %2496 = vset.pattern.permute.xlu0 1
  %2497 = vperm.xlu0 %2496, %v209
  %v2498 = vpop.permute.xlu0 %2497
  %2500 = vset.pattern.permute.xlu0 1
  %2501 = vperm.xlu0 %2500, %v210
  %v2502 = vpop.permute.xlu0 %2501
  %2504 = vset.pattern.permute.xlu0 1
  %2505 = vperm.xlu0 %2504, %v211
  %v2506 = vpop.permute.xlu0 %2505
  %2508 = vset.pattern.permute.xlu0 1
  %2509 = vperm.xlu0 %2508, %v212
  %v2510 = vpop.permute.xlu0 %2509
  %2512 = vset.pattern.permute.xlu0 1
  %2513 = vperm.xlu0 %2512, %v213
  %v2514 = vpop.permute.xlu0 %2513
  %2516 = vset.pattern.permute.xlu0 1
  %2517 = vperm.xlu0 %2516, %v214
  %v2518 = vpop.permute.xlu0 %2517
  %2520 = vset.pattern.permute.xlu0 1
  %2521 = vperm.xlu0 %2520, %v215
  %v2522 = vpop.permute.xlu0 %2521
  %2524 = vset.pattern.permute.xlu0 1
  %2525 = vperm.xlu0 %2524, %v216
  %v2526 = vpop.permute.xlu0 %2525
  %2528 = vset.pattern.permute.xlu0 1
  %2529 = vperm.xlu0 %2528, %v217
  %v2530 = vpop.permute.xlu0 %2529
  %2532 = vset.pattern.permute.xlu0 1
  %2533 = vperm.xlu0 %2532, %v218
  %v2534 = vpop.permute.xlu0 %2533
  %2536 = vset.pattern.permute.xlu0 1
  %2537 = vperm.xlu0 %2536, %v219
  %v2538 = vpop.permute.xlu0 %2537
  %2540 = vset.pattern.permute.xlu0 1
  %2541 = vperm.xlu0 %2540, %v220
  %v2542 = vpop.permute.xlu0 %2541
  %2544 = vset.pattern.permute.xlu0 1
  %2545 = vperm.xlu0 %2544, %v221
  %v2546 = vpop.permute.xlu0 %2545
  %2548 = vset.pattern.permute.xlu0 1
  %2549 = vperm.xlu0 %2548, %v222
  %v2550 = vpop.permute.xlu0 %2549
  %2552 = vset.pattern.permute.xlu0 1
  %2553 = vperm.xlu0 %2552, %v223
  %v2554 = vpop.permute.xlu0 %2553
  %2556 = vset.pattern.permute.xlu0 1
  %2557 = vperm.xlu0 %2556, %v224
  %v2558 = vpop.permute.xlu0 %2557
  %2560 = vset.pattern.permute.xlu0 1
  %2561 = vperm.xlu0 %2560, %v225
  %v2562 = vpop.permute.xlu0 %2561
  %2564 = vset.pattern.permute.xlu0 1
  %2565 = vperm.xlu0 %2564, %v226
  %v2566 = vpop.permute.xlu0 %2565
  %2568 = vset.pattern.permute.xlu0 1
  %2569 = vperm.xlu0 %2568, %v227
  %v2570 = vpop.permute.xlu0 %2569
  %2572 = vset.pattern.permute.xlu0 1
  %2573 = vperm.xlu0 %2572, %v228
  %v2574 = vpop.permute.xlu0 %2573
  %2576 = vset.pattern.permute.xlu0 1
  %2577 = vperm.xlu0 %2576, %v229
  %v2578 = vpop.permute.xlu0 %2577
  %2580 = vset.pattern.permute.xlu0 1
  %2581 = vperm.xlu0 %2580, %v230
  %v2582 = vpop.permute.xlu0 %2581
  %2584 = vset.pattern.permute.xlu0 1
  %2585 = vperm.xlu0 %2584, %v231
  %v2586 = vpop.permute.xlu0 %2585
  %2588 = vset.pattern.permute.xlu0 1
  %2589 = vperm.xlu0 %2588, %v232
  %v2590 = vpop.permute.xlu0 %2589
  %2592 = vset.pattern.permute.xlu0 1
  %2593 = vperm.xlu0 %2592, %v233
  %v2594 = vpop.permute.xlu0 %2593
  %2596 = vset.pattern.permute.xlu0 1
  %2597 = vperm.xlu0 %2596, %v234
  %v2598 = vpop.permute.xlu0 %2597
  %2600 = vset.pattern.permute.xlu0 1
  %2601 = vperm.xlu0 %2600, %v235
  %v2602 = vpop.permute.xlu0 %2601
  %2604 = vset.pattern.permute.xlu0 1
  %2605 = vperm.xlu0 %2604, %v236
  %v2606 = vpop.permute.xlu0 %2605
  %2608 = vset.pattern.permute.xlu0 1
  %2609 = vperm.xlu0 %2608, %v237
  %v2610 = vpop.permute.xlu0 %2609
  %2612 = vset.pattern.permute.xlu0 1
  %2613 = vperm.xlu0 %2612, %v238
  %v2614 = vpop.permute.xlu0 %2613
  %2616 = vset.pattern.permute.xlu0 1
  %2617 = vperm.xlu0 %2616, %v239
  %v2618 = vpop.permute.xlu0 %2617
  %2620 = vset.pattern.permute.xlu0 1
  %2621 = vperm.xlu0 %2620, %v240
  %v2622 = vpop.permute.xlu0 %2621
  %2624 = vset.pattern.permute.xlu0 1
  %2625 = vperm.xlu0 %2624, %v241
  %v2626 = vpop.permute.xlu0 %2625
  %2628 = vset.pattern.permute.xlu0 1
  %2629 = vperm.xlu0 %2628, %v242
  %v2630 = vpop.permute.xlu0 %2629
  %2632 = vset.pattern.permute.xlu0 1
  %2633 = vperm.xlu0 %2632, %v243
  %v2634 = vpop.permute.xlu0 %2633
  %2636 = vset.pattern.permute.xlu0 1
  %2637 = vperm.xlu0 %2636, %v244
  %v2638 = vpop.permute.xlu0 %2637
  %2640 = vset.pattern.permute.xlu0 1
  %2641 = vperm.xlu0 %2640, %v245
  %v2642 = vpop.permute.xlu0 %2641
  %2644 = vset.pattern.permute.xlu0 1
  %2645 = vperm.xlu0 %2644, %v246
  %v2646 = vpop.permute.xlu0 %2645
  %2648 = vset.pattern.permute.xlu0 1
  %2649 = vperm.xlu0 %2648, %v247
  %v2650 = vpop.permute.xlu0 %2649
  %2652 = vset.pattern.permute.xlu0 1
  %2653 = vperm.xlu0 %2652, %v248
  %v2654 = vpop.permute.xlu0 %2653
  %2656 = vset.pattern.permute.xlu0 1
  %2657 = vperm.xlu0 %2656, %v249
  %v2658 = vpop.permute.xlu0 %2657
  %2660 = vset.pattern.permute.xlu0 1
  %2661 = vperm.xlu0 %2660, %v250
  %v2662 = vpop.permute.xlu0 %2661
  %2664 = vset.pattern.permute.xlu0 1
  %2665 = vperm.xlu0 %2664, %v251
  %v2666 = vpop.permute.xlu0 %2665
  %2668 = vset.pattern.permute.xlu0 1
  %2669 = vperm.xlu0 %2668, %v252
  %v2670 = vpop.permute.xlu0 %2669
  %2672 = vset.pattern.permute.xlu0 1
  %2673 = vperm.xlu0 %2672, %v253
  %v2674 = vpop.permute.xlu0 %2673
  %2676 = vset.pattern.permute.xlu0 1
  %2677 = vperm.xlu0 %2676, %v254
  %v2678 = vpop.permute.xlu0 %2677
  %2680 = vset.pattern.permute.xlu0 1
  %2681 = vperm.xlu0 %2680, %v255
  %v2682 = vpop.permute.xlu0 %2681
  %2684 = vset.pattern.permute.xlu0 1
  %2685 = vperm.xlu0 %2684, %v256
  %v2686 = vpop.permute.xlu0 %2685
  %2688 = vset.pattern.permute.xlu0 1
  %2689 = vperm.xlu0 %2688, %v257
  %v2690 = vpop.permute.xlu0 %2689
  %2692 = vset.pattern.permute.xlu0 1
  %2693 = vperm.xlu0 %2692, %v258
  %v2694 = vpop.permute.xlu0 %2693
  %2696 = vset.pattern.permute.xlu0 1
  %2697 = vperm.xlu0 %2696, %v259
  %v2698 = vpop.permute.xlu0 %2697
  %2700 = vset.pattern.permute.xlu0 1
  %2701 = vperm.xlu0 %2700, %v260
  %v2702 = vpop.permute.xlu0 %2701
  %2704 = vset.pattern.permute.xlu0 1
  %2705 = vperm.xlu0 %2704, %v261
  %v2706 = vpop.permute.xlu0 %2705
  %2708 = vset.pattern.permute.xlu0 1
  %2709 = vperm.xlu0 %2708, %v262
  %v2710 = vpop.permute.xlu0 %2709
  %2712 = vset.pattern.permute.xlu0 1
  %2713 = vperm.xlu0 %2712, %v263
  %v2714 = vpop.permute.xlu0 %2713
  %2716 = vset.pattern.permute.xlu0 1
  %2717 = vperm.xlu0 %2716, %v264
  %v2718 = vpop.permute.xlu0 %2717
  %2720 = vset.pattern.permute.xlu0 1
  %2721 = vperm.xlu0 %2720, %v265
  %v2722 = vpop.permute.xlu0 %2721
  %2724 = vset.pattern.permute.xlu0 1
  %2725 = vperm.xlu0 %2724, %v266
  %v2726 = vpop.permute.xlu0 %2725
  %2728 = vset.pattern.permute.xlu0 1
  %2729 = vperm.xlu0 %2728, %v267
  %v2730 = vpop.permute.xlu0 %2729
  %2732 = vset.pattern.permute.xlu0 1
  %2733 = vperm.xlu0 %2732, %v268
  %v2734 = vpop.permute.xlu0 %2733
  %2736 = vset.pattern.permute.xlu0 1
  %2737 = vperm.xlu0 %2736, %v269
  %v2738 = vpop.permute.xlu0 %2737
  %2740 = vset.pattern.permute.xlu0 1
  %2741 = vperm.xlu0 %2740, %v270
  %v2742 = vpop.permute.xlu0 %2741
  %2744 = vset.pattern.permute.xlu0 1
  %2745 = vperm.xlu0 %2744, %v271
  %v2746 = vpop.permute.xlu0 %2745
  %2748 = vset.pattern.permute.xlu0 1
  %2749 = vperm.xlu0 %2748, %v272
  %v2750 = vpop.permute.xlu0 %2749
  %2752 = vset.pattern.permute.xlu0 1
  %2753 = vperm.xlu0 %2752, %v273
  %v2754 = vpop.permute.xlu0 %2753
  %2756 = vset.pattern.permute.xlu0 1
  %2757 = vperm.xlu0 %2756, %v274
  %v2758 = vpop.permute.xlu0 %2757
  %2760 = vset.pattern.permute.xlu0 1
  %2761 = vperm.xlu0 %2760, %v275
  %v2762 = vpop.permute.xlu0 %2761
  %2764 = vset.pattern.permute.xlu0 1
  %2765 = vperm.xlu0 %2764, %v276
  %v2766 = vpop.permute.xlu0 %2765
  %2768 = vset.pattern.permute.xlu0 1
  %2769 = vperm.xlu0 %2768, %v277
  %v2770 = vpop.permute.xlu0 %2769
  %2772 = vset.pattern.permute.xlu0 1
  %2773 = vperm.xlu0 %2772, %v278
  %v2774 = vpop.permute.xlu0 %2773
  %2776 = vset.pattern.permute.xlu0 1
  %2777 = vperm.xlu0 %2776, %v279
  %v2778 = vpop.permute.xlu0 %2777
  %2780 = vset.pattern.permute.xlu0 1
  %2781 = vperm.xlu0 %2780, %v280
  %v2782 = vpop.permute.xlu0 %2781
  %2784 = vset.pattern.permute.xlu0 1
  %2785 = vperm.xlu0 %2784, %v281
  %v2786 = vpop.permute.xlu0 %2785
  %2788 = vset.pattern.permute.xlu0 1
  %2789 = vperm.xlu0 %2788, %v282
  %v2790 = vpop.permute.xlu0 %2789
  %2792 = vset.pattern.permute.xlu0 1
  %2793 = vperm.xlu0 %2792, %v283
  %v2794 = vpop.permute.xlu0 %2793
  %2796 = vset.pattern.permute.xlu0 1
  %2797 = vperm.xlu0 %2796, %v284
  %v2798 = vpop.permute.xlu0 %2797
  %2800 = vset.pattern.permute.xlu0 1
  %2801 = vperm.xlu0 %2800, %v285
  %v2802 = vpop.permute.xlu0 %2801
  %2804 = vset.pattern.permute.xlu0 1
  %2805 = vperm.xlu0 %2804, %v286
  %v2806 = vpop.permute.xlu0 %2805
  %2808 = vset.pattern.permute.xlu0 1
  %2809 = vperm.xlu0 %2808, %v287
  %v2810 = vpop.permute.xlu0 %2809
  %2812 = vset.pattern.permute.xlu0 1
  %2813 = vperm.xlu0 %2812, %v288
  %v2814 = vpop.permute.xlu0 %2813
  %2816 = vset.pattern.permute.xlu0 1
  %2817 = vperm.xlu0 %2816, %v289
  %v2818 = vpop.permute.xlu0 %2817
  %2820 = vset.pattern.permute.xlu0 1
  %2821 = vperm.xlu0 %2820, %v290
  %v2822 = vpop.permute.xlu0 %2821
  %2824 = vset.pattern.permute.xlu0 1
  %2825 = vperm.xlu0 %2824, %v291
  %v2826 = vpop.permute.xlu0 %2825
  %2828 = vset.pattern.permute.xlu0 1
  %2829 = vperm.xlu0 %2828, %v292
  %v2830 = vpop.permute.xlu0 %2829
  %2832 = vset.pattern.permute.xlu0 1
  %2833 = vperm.xlu0 %2832, %v293
  %v2834 = vpop.permute.xlu0 %2833
  %2836 = vset.pattern.permute.xlu0 1
  %2837 = vperm.xlu0 %2836, %v294
  %v2838 = vpop.permute.xlu0 %2837
  %2840 = vset.pattern.permute.xlu0 1
  %2841 = vperm.xlu0 %2840, %v295
  %v2842 = vpop.permute.xlu0 %2841
  %2844 = vset.pattern.permute.xlu0 1
  %2845 = vperm.xlu0 %2844, %v296
  %v2846 = vpop.permute.xlu0 %2845
  %2848 = vset.pattern.permute.xlu0 1
  %2849 = vperm.xlu0 %2848, %v297
  %v2850 = vpop.permute.xlu0 %2849
  %2852 = vset.pattern.permute.xlu0 1
  %2853 = vperm.xlu0 %2852, %v298
  %v2854 = vpop.permute.xlu0 %2853
  %2856 = vset.pattern.permute.xlu0 1
  %2857 = vperm.xlu0 %2856, %v299
  %v2858 = vpop.permute.xlu0 %2857
  %2860 = vset.pattern.permute.xlu0 1
  %2861 = vperm.xlu0 %2860, %v300
  %v2862 = vpop.permute.xlu0 %2861
  %2864 = vset.pattern.permute.xlu0 1
  %2865 = vperm.xlu0 %2864, %v301
  %v2866 = vpop.permute.xlu0 %2865
  %v2868 = vlaneseq
  %v2869 = vshrl.u32 %v2868, 7
  %v2870 = vsub.s32 0, %v2869
  %v2871 = vrot.slane %v1843, %v2870
  %v2872 = vmul.f32 %v1846, %v2871
  %v2873 = vmul.f32 %v1850, %v2871
  %v2874 = vmul.f32 %v1854, %v2871
  %v2875 = vmul.f32 %v1858, %v2871
  %v2876 = vmul.f32 %v1862, %v2871
  %v2877 = vmul.f32 %v1866, %v2871
  %v2878 = vmul.f32 %v1870, %v2871
  %v2879 = vmul.f32 %v1874, %v2871
  %v2880 = vmul.f32 %v1878, %v2871
  %v2881 = vmul.f32 %v1882, %v2871
  %v2882 = vmul.f32 %v1886, %v2871
  %v2883 = vmul.f32 %v1890, %v2871
  %v2884 = vmul.f32 %v1894, %v2871
  %v2885 = vmul.f32 %v1898, %v2871
  %v2886 = vmul.f32 %v1902, %v2871
  %v2887 = vmul.f32 %v1906, %v2871
  %v2888 = vmul.f32 %v1910, %v2871
  %v2889 = vmul.f32 %v1914, %v2871
  %v2890 = vmul.f32 %v1918, %v2871
  %v2891 = vmul.f32 %v1922, %v2871
  %v2892 = vmul.f32 %v1926, %v2871
  %v2893 = vmul.f32 %v1930, %v2871
  %v2894 = vmul.f32 %v1934, %v2871
  %v2895 = vmul.f32 %v1938, %v2871
  %v2896 = vmul.f32 %v1942, %v2871
  %v2897 = vmul.f32 %v1946, %v2871
  %v2898 = vmul.f32 %v1950, %v2871
  %v2899 = vmul.f32 %v1954, %v2871
  %v2900 = vmul.f32 %v1958, %v2871
  %v2901 = vmul.f32 %v1962, %v2871
  %v2902 = vmul.f32 %v1966, %v2871
  %v2903 = vmul.f32 %v1970, %v2871
  %v2904 = vmul.f32 %v1974, %v2871
  %v2905 = vmul.f32 %v1978, %v2871
  %v2906 = vmul.f32 %v1982, %v2871
  %v2907 = vmul.f32 %v1986, %v2871
  %v2908 = vmul.f32 %v1990, %v2871
  %v2909 = vmul.f32 %v1994, %v2871
  %v2910 = vmul.f32 %v1998, %v2871
  %v2911 = vmul.f32 %v2002, %v2871
  %v2912 = vmul.f32 %v2006, %v2871
  %v2913 = vmul.f32 %v2010, %v2871
  %v2914 = vmul.f32 %v2014, %v2871
  %v2915 = vmul.f32 %v2018, %v2871
  %v2916 = vmul.f32 %v2022, %v2871
  %v2917 = vmul.f32 %v2026, %v2871
  %v2918 = vmul.f32 %v2030, %v2871
  %v2919 = vmul.f32 %v2034, %v2871
  %v2920 = vmul.f32 %v2038, %v2871
  %v2921 = vmul.f32 %v2042, %v2871
  %v2922 = vmul.f32 %v2046, %v2871
  %v2923 = vmul.f32 %v2050, %v2871
  %v2924 = vmul.f32 %v2054, %v2871
  %v2925 = vmul.f32 %v2058, %v2871
  %v2926 = vmul.f32 %v2062, %v2871
  %v2927 = vmul.f32 %v2066, %v2871
  %v2928 = vmul.f32 %v2070, %v2871
  %v2929 = vmul.f32 %v2074, %v2871
  %v2930 = vmul.f32 %v2078, %v2871
  %v2931 = vmul.f32 %v2082, %v2871
  %v2932 = vmul.f32 %v2086, %v2871
  %v2933 = vmul.f32 %v2090, %v2871
  %v2934 = vmul.f32 %v2094, %v2871
  %v2935 = vmul.f32 %v2098, %v2871
  %v2936 = vmul.f32 %v2102, %v2871
  %v2937 = vmul.f32 %v2106, %v2871
  %v2938 = vmul.f32 %v2110, %v2871
  %v2939 = vmul.f32 %v2114, %v2871
  %v2940 = vmul.f32 %v2118, %v2871
  %v2941 = vmul.f32 %v2122, %v2871
  %v2942 = vmul.f32 %v2126, %v2871
  %v2943 = vmul.f32 %v2130, %v2871
  %v2944 = vmul.f32 %v2134, %v2871
  %v2945 = vmul.f32 %v2138, %v2871
  %v2946 = vmul.f32 %v2142, %v2871
  %v2947 = vmul.f32 %v2146, %v2871
  %v2948 = vmul.f32 %v2150, %v2871
  %v2949 = vmul.f32 %v2154, %v2871
  %v2950 = vmul.f32 %v2158, %v2871
  %v2951 = vmul.f32 %v2162, %v2871
  %v2952 = vmul.f32 %v2166, %v2871
  %v2953 = vmul.f32 %v2170, %v2871
  %v2954 = vmul.f32 %v2174, %v2871
  %v2955 = vmul.f32 %v2178, %v2871
  %v2956 = vmul.f32 %v2182, %v2871
  %v2957 = vmul.f32 %v2186, %v2871
  %v2958 = vmul.f32 %v2190, %v2871
  %v2959 = vmul.f32 %v2194, %v2871
  %v2960 = vmul.f32 %v2198, %v2871
  %v2961 = vmul.f32 %v2202, %v2871
  %v2962 = vmul.f32 %v2206, %v2871
  %v2963 = vmul.f32 %v2210, %v2871
  %v2964 = vmul.f32 %v2214, %v2871
  %v2965 = vmul.f32 %v2218, %v2871
  %v2966 = vmul.f32 %v2222, %v2871
  %v2967 = vmul.f32 %v2226, %v2871
  %v2968 = vmul.f32 %v2230, %v2871
  %v2969 = vmul.f32 %v2234, %v2871
  %v2970 = vmul.f32 %v2238, %v2871
  %v2971 = vmul.f32 %v2242, %v2871
  %v2972 = vmul.f32 %v2246, %v2871
  %v2973 = vmul.f32 %v2250, %v2871
  %v2974 = vmul.f32 %v2254, %v2871
  %v2975 = vmul.f32 %v2258, %v2871
  %v2976 = vmul.f32 %v2262, %v2871
  %v2977 = vmul.f32 %v2266, %v2871
  %v2978 = vmul.f32 %v2270, %v2871
  %v2979 = vmul.f32 %v2274, %v2871
  %v2980 = vmul.f32 %v2278, %v2871
  %v2981 = vmul.f32 %v2282, %v2871
  %v2982 = vmul.f32 %v2286, %v2871
  %v2983 = vmul.f32 %v2290, %v2871
  %v2984 = vmul.f32 %v2294, %v2871
  %v2985 = vmul.f32 %v2298, %v2871
  %v2986 = vmul.f32 %v2302, %v2871
  %v2987 = vmul.f32 %v2306, %v2871
  %v2988 = vmul.f32 %v2310, %v2871
  %v2989 = vmul.f32 %v2314, %v2871
  %v2990 = vmul.f32 %v2318, %v2871
  %v2991 = vmul.f32 %v2322, %v2871
  %v2992 = vmul.f32 %v2326, %v2871
  %v2993 = vmul.f32 %v2330, %v2871
  %v2994 = vmul.f32 %v2334, %v2871
  %v2995 = vmul.f32 %v2338, %v2871
  %v2996 = vmul.f32 %v2342, %v2871
  %v2997 = vmul.f32 %v2346, %v2871
  %v2998 = vmul.f32 %v2350, %v2871
  %v2999 = vmul.f32 %v2354, %v2871
  %v3000 = vmul.f32 %v2358, %v2871
  %v3001 = vmul.f32 %v2362, %v2871
  %v3002 = vmul.f32 %v2366, %v2871
  %v3003 = vmul.f32 %v2370, %v2871
  %v3004 = vmul.f32 %v2374, %v2871
  %v3005 = vmul.f32 %v2378, %v2871
  %v3006 = vmul.f32 %v2382, %v2871
  %v3007 = vmul.f32 %v2386, %v2871
  %v3008 = vmul.f32 %v2390, %v2871
  %v3009 = vmul.f32 %v2394, %v2871
  %v3010 = vmul.f32 %v2398, %v2871
  %v3011 = vmul.f32 %v2402, %v2871
  %v3012 = vmul.f32 %v2406, %v2871
  %v3013 = vmul.f32 %v2410, %v2871
  %v3014 = vmul.f32 %v2414, %v2871
  %v3015 = vmul.f32 %v2418, %v2871
  %v3016 = vmul.f32 %v2422, %v2871
  %v3017 = vmul.f32 %v2426, %v2871
  %v3018 = vmul.f32 %v2430, %v2871
  %v3019 = vmul.f32 %v2434, %v2871
  %v3020 = vmul.f32 %v2438, %v2871
  %v3021 = vmul.f32 %v2442, %v2871
  %v3022 = vmul.f32 %v2446, %v2871
  %v3023 = vmul.f32 %v2450, %v2871
  %v3024 = vmul.f32 %v2454, %v2871
  %v3025 = vmul.f32 %v2458, %v2871
  %v3026 = vmul.f32 %v2462, %v2871
  %v3027 = vmul.f32 %v2466, %v2871
  %v3028 = vmul.f32 %v2470, %v2871
  %v3029 = vmul.f32 %v2474, %v2871
  %v3030 = vmul.f32 %v2478, %v2871
  %v3031 = vmul.f32 %v2482, %v2871
  %v3032 = vmul.f32 %v2486, %v2871
  %v3033 = vmul.f32 %v2490, %v2871
  %v3034 = vmul.f32 %v2494, %v2871
  %v3035 = vmul.f32 %v2498, %v2871
  %v3036 = vmul.f32 %v2502, %v2871
  %v3037 = vmul.f32 %v2506, %v2871
  %v3038 = vmul.f32 %v2510, %v2871
  %v3039 = vmul.f32 %v2514, %v2871
  %v3040 = vmul.f32 %v2518, %v2871
  %v3041 = vmul.f32 %v2522, %v2871
  %v3042 = vmul.f32 %v2526, %v2871
  %v3043 = vmul.f32 %v2530, %v2871
  %v3044 = vmul.f32 %v2534, %v2871
  %v3045 = vmul.f32 %v2538, %v2871
  %v3046 = vmul.f32 %v2542, %v2871
  %v3047 = vmul.f32 %v2546, %v2871
  %v3048 = vmul.f32 %v2550, %v2871
  %v3049 = vmul.f32 %v2554, %v2871
  %v3050 = vmul.f32 %v2558, %v2871
  %v3051 = vmul.f32 %v2562, %v2871
  %v3052 = vmul.f32 %v2566, %v2871
  %v3053 = vmul.f32 %v2570, %v2871
  %v3054 = vmul.f32 %v2574, %v2871
  %v3055 = vmul.f32 %v2578, %v2871
  %v3056 = vmul.f32 %v2582, %v2871
  %v3057 = vmul.f32 %v2586, %v2871
  %v3058 = vmul.f32 %v2590, %v2871
  %v3059 = vmul.f32 %v2594, %v2871
  %v3060 = vmul.f32 %v2598, %v2871
  %v3061 = vmul.f32 %v2602, %v2871
  %v3062 = vmul.f32 %v2606, %v2871
  %v3063 = vmul.f32 %v2610, %v2871
  %v3064 = vmul.f32 %v2614, %v2871
  %v3065 = vmul.f32 %v2618, %v2871
  %v3066 = vmul.f32 %v2622, %v2871
  %v3067 = vmul.f32 %v2626, %v2871
  %v3068 = vmul.f32 %v2630, %v2871
  %v3069 = vmul.f32 %v2634, %v2871
  %v3070 = vmul.f32 %v2638, %v2871
  %v3071 = vmul.f32 %v2642, %v2871
  %v3072 = vmul.f32 %v2646, %v2871
  %v3073 = vmul.f32 %v2650, %v2871
  %v3074 = vmul.f32 %v2654, %v2871
  %v3075 = vmul.f32 %v2658, %v2871
  %v3076 = vmul.f32 %v2662, %v2871
  %v3077 = vmul.f32 %v2666, %v2871
  %v3078 = vmul.f32 %v2670, %v2871
  %v3079 = vmul.f32 %v2674, %v2871
  %v3080 = vmul.f32 %v2678, %v2871
  %v3081 = vmul.f32 %v2682, %v2871
  %v3082 = vmul.f32 %v2686, %v2871
  %v3083 = vmul.f32 %v2690, %v2871
  %v3084 = vmul.f32 %v2694, %v2871
  %v3085 = vmul.f32 %v2698, %v2871
  %v3086 = vmul.f32 %v2702, %v2871
  %v3087 = vmul.f32 %v2706, %v2871
  %v3088 = vmul.f32 %v2710, %v2871
  %v3089 = vmul.f32 %v2714, %v2871
  %v3090 = vmul.f32 %v2718, %v2871
  %v3091 = vmul.f32 %v2722, %v2871
  %v3092 = vmul.f32 %v2726, %v2871
  %v3093 = vmul.f32 %v2730, %v2871
  %v3094 = vmul.f32 %v2734, %v2871
  %v3095 = vmul.f32 %v2738, %v2871
  %v3096 = vmul.f32 %v2742, %v2871
  %v3097 = vmul.f32 %v2746, %v2871
  %v3098 = vmul.f32 %v2750, %v2871
  %v3099 = vmul.f32 %v2754, %v2871
  %v3100 = vmul.f32 %v2758, %v2871
  %v3101 = vmul.f32 %v2762, %v2871
  %v3102 = vmul.f32 %v2766, %v2871
  %v3103 = vmul.f32 %v2770, %v2871
  %v3104 = vmul.f32 %v2774, %v2871
  %v3105 = vmul.f32 %v2778, %v2871
  %v3106 = vmul.f32 %v2782, %v2871
  %v3107 = vmul.f32 %v2786, %v2871
  %v3108 = vmul.f32 %v2790, %v2871
  %v3109 = vmul.f32 %v2794, %v2871
  %v3110 = vmul.f32 %v2798, %v2871
  %v3111 = vmul.f32 %v2802, %v2871
  %v3112 = vmul.f32 %v2806, %v2871
  %v3113 = vmul.f32 %v2810, %v2871
  %v3114 = vmul.f32 %v2814, %v2871
  %v3115 = vmul.f32 %v2818, %v2871
  %v3116 = vmul.f32 %v2822, %v2871
  %v3117 = vmul.f32 %v2826, %v2871
  %v3118 = vmul.f32 %v2830, %v2871
  %v3119 = vmul.f32 %v2834, %v2871
  %v3120 = vmul.f32 %v2838, %v2871
  %v3121 = vmul.f32 %v2842, %v2871
  %v3122 = vmul.f32 %v2846, %v2871
  %v3123 = vmul.f32 %v2850, %v2871
  %v3124 = vmul.f32 %v2854, %v2871
  %v3125 = vmul.f32 %v2858, %v2871
  %v3126 = vmul.f32 %v2862, %v2871
  %v3127 = vmul.f32 %v2866, %v2871
  %v3128 = vadd.f32 %v1587, %v2872
  %v3129 = vadd.f32 %v1588, %v2873
  %v3130 = vadd.f32 %v1589, %v2874
  %v3131 = vadd.f32 %v1590, %v2875
  %v3132 = vadd.f32 %v1591, %v2876
  %v3133 = vadd.f32 %v1592, %v2877
  %v3134 = vadd.f32 %v1593, %v2878
  %v3135 = vadd.f32 %v1594, %v2879
  %v3136 = vadd.f32 %v1595, %v2880
  %v3137 = vadd.f32 %v1596, %v2881
  %v3138 = vadd.f32 %v1597, %v2882
  %v3139 = vadd.f32 %v1598, %v2883
  %v3140 = vadd.f32 %v1599, %v2884
  %v3141 = vadd.f32 %v1600, %v2885
  %v3142 = vadd.f32 %v1601, %v2886
  %v3143 = vadd.f32 %v1602, %v2887
  %v3144 = vadd.f32 %v1603, %v2888
  %v3145 = vadd.f32 %v1604, %v2889
  %v3146 = vadd.f32 %v1605, %v2890
  %v3147 = vadd.f32 %v1606, %v2891
  %v3148 = vadd.f32 %v1607, %v2892
  %v3149 = vadd.f32 %v1608, %v2893
  %v3150 = vadd.f32 %v1609, %v2894
  %v3151 = vadd.f32 %v1610, %v2895
  %v3152 = vadd.f32 %v1611, %v2896
  %v3153 = vadd.f32 %v1612, %v2897
  %v3154 = vadd.f32 %v1613, %v2898
  %v3155 = vadd.f32 %v1614, %v2899
  %v3156 = vadd.f32 %v1615, %v2900
  %v3157 = vadd.f32 %v1616, %v2901
  %v3158 = vadd.f32 %v1617, %v2902
  %v3159 = vadd.f32 %v1618, %v2903
  %v3160 = vadd.f32 %v1619, %v2904
  %v3161 = vadd.f32 %v1620, %v2905
  %v3162 = vadd.f32 %v1621, %v2906
  %v3163 = vadd.f32 %v1622, %v2907
  %v3164 = vadd.f32 %v1623, %v2908
  %v3165 = vadd.f32 %v1624, %v2909
  %v3166 = vadd.f32 %v1625, %v2910
  %v3167 = vadd.f32 %v1626, %v2911
  %v3168 = vadd.f32 %v1627, %v2912
  %v3169 = vadd.f32 %v1628, %v2913
  %v3170 = vadd.f32 %v1629, %v2914
  %v3171 = vadd.f32 %v1630, %v2915
  %v3172 = vadd.f32 %v1631, %v2916
  %v3173 = vadd.f32 %v1632, %v2917
  %v3174 = vadd.f32 %v1633, %v2918
  %v3175 = vadd.f32 %v1634, %v2919
  %v3176 = vadd.f32 %v1635, %v2920
  %v3177 = vadd.f32 %v1636, %v2921
  %v3178 = vadd.f32 %v1637, %v2922
  %v3179 = vadd.f32 %v1638, %v2923
  %v3180 = vadd.f32 %v1639, %v2924
  %v3181 = vadd.f32 %v1640, %v2925
  %v3182 = vadd.f32 %v1641, %v2926
  %v3183 = vadd.f32 %v1642, %v2927
  %v3184 = vadd.f32 %v1643, %v2928
  %v3185 = vadd.f32 %v1644, %v2929
  %v3186 = vadd.f32 %v1645, %v2930
  %v3187 = vadd.f32 %v1646, %v2931
  %v3188 = vadd.f32 %v1647, %v2932
  %v3189 = vadd.f32 %v1648, %v2933
  %v3190 = vadd.f32 %v1649, %v2934
  %v3191 = vadd.f32 %v1650, %v2935
  %v3192 = vadd.f32 %v1651, %v2936
  %v3193 = vadd.f32 %v1652, %v2937
  %v3194 = vadd.f32 %v1653, %v2938
  %v3195 = vadd.f32 %v1654, %v2939
  %v3196 = vadd.f32 %v1655, %v2940
  %v3197 = vadd.f32 %v1656, %v2941
  %v3198 = vadd.f32 %v1657, %v2942
  %v3199 = vadd.f32 %v1658, %v2943
  %v3200 = vadd.f32 %v1659, %v2944
  %v3201 = vadd.f32 %v1660, %v2945
  %v3202 = vadd.f32 %v1661, %v2946
  %v3203 = vadd.f32 %v1662, %v2947
  %v3204 = vadd.f32 %v1663, %v2948
  %v3205 = vadd.f32 %v1664, %v2949
  %v3206 = vadd.f32 %v1665, %v2950
  %v3207 = vadd.f32 %v1666, %v2951
  %v3208 = vadd.f32 %v1667, %v2952
  %v3209 = vadd.f32 %v1668, %v2953
  %v3210 = vadd.f32 %v1669, %v2954
  %v3211 = vadd.f32 %v1670, %v2955
  %v3212 = vadd.f32 %v1671, %v2956
  %v3213 = vadd.f32 %v1672, %v2957
  %v3214 = vadd.f32 %v1673, %v2958
  %v3215 = vadd.f32 %v1674, %v2959
  %v3216 = vadd.f32 %v1675, %v2960
  %v3217 = vadd.f32 %v1676, %v2961
  %v3218 = vadd.f32 %v1677, %v2962
  %v3219 = vadd.f32 %v1678, %v2963
  %v3220 = vadd.f32 %v1679, %v2964
  %v3221 = vadd.f32 %v1680, %v2965
  %v3222 = vadd.f32 %v1681, %v2966
  %v3223 = vadd.f32 %v1682, %v2967
  %v3224 = vadd.f32 %v1683, %v2968
  %v3225 = vadd.f32 %v1684, %v2969
  %v3226 = vadd.f32 %v1685, %v2970
  %v3227 = vadd.f32 %v1686, %v2971
  %v3228 = vadd.f32 %v1687, %v2972
  %v3229 = vadd.f32 %v1688, %v2973
  %v3230 = vadd.f32 %v1689, %v2974
  %v3231 = vadd.f32 %v1690, %v2975
  %v3232 = vadd.f32 %v1691, %v2976
  %v3233 = vadd.f32 %v1692, %v2977
  %v3234 = vadd.f32 %v1693, %v2978
  %v3235 = vadd.f32 %v1694, %v2979
  %v3236 = vadd.f32 %v1695, %v2980
  %v3237 = vadd.f32 %v1696, %v2981
  %v3238 = vadd.f32 %v1697, %v2982
  %v3239 = vadd.f32 %v1698, %v2983
  %v3240 = vadd.f32 %v1699, %v2984
  %v3241 = vadd.f32 %v1700, %v2985
  %v3242 = vadd.f32 %v1701, %v2986
  %v3243 = vadd.f32 %v1702, %v2987
  %v3244 = vadd.f32 %v1703, %v2988
  %v3245 = vadd.f32 %v1704, %v2989
  %v3246 = vadd.f32 %v1705, %v2990
  %v3247 = vadd.f32 %v1706, %v2991
  %v3248 = vadd.f32 %v1707, %v2992
  %v3249 = vadd.f32 %v1708, %v2993
  %v3250 = vadd.f32 %v1709, %v2994
  %v3251 = vadd.f32 %v1710, %v2995
  %v3252 = vadd.f32 %v1711, %v2996
  %v3253 = vadd.f32 %v1712, %v2997
  %v3254 = vadd.f32 %v1713, %v2998
  %v3255 = vadd.f32 %v1714, %v2999
  %v3256 = vadd.f32 %v1715, %v3000
  %v3257 = vadd.f32 %v1716, %v3001
  %v3258 = vadd.f32 %v1717, %v3002
  %v3259 = vadd.f32 %v1718, %v3003
  %v3260 = vadd.f32 %v1719, %v3004
  %v3261 = vadd.f32 %v1720, %v3005
  %v3262 = vadd.f32 %v1721, %v3006
  %v3263 = vadd.f32 %v1722, %v3007
  %v3264 = vadd.f32 %v1723, %v3008
  %v3265 = vadd.f32 %v1724, %v3009
  %v3266 = vadd.f32 %v1725, %v3010
  %v3267 = vadd.f32 %v1726, %v3011
  %v3268 = vadd.f32 %v1727, %v3012
  %v3269 = vadd.f32 %v1728, %v3013
  %v3270 = vadd.f32 %v1729, %v3014
  %v3271 = vadd.f32 %v1730, %v3015
  %v3272 = vadd.f32 %v1731, %v3016
  %v3273 = vadd.f32 %v1732, %v3017
  %v3274 = vadd.f32 %v1733, %v3018
  %v3275 = vadd.f32 %v1734, %v3019
  %v3276 = vadd.f32 %v1735, %v3020
  %v3277 = vadd.f32 %v1736, %v3021
  %v3278 = vadd.f32 %v1737, %v3022
  %v3279 = vadd.f32 %v1738, %v3023
  %v3280 = vadd.f32 %v1739, %v3024
  %v3281 = vadd.f32 %v1740, %v3025
  %v3282 = vadd.f32 %v1741, %v3026
  %v3283 = vadd.f32 %v1742, %v3027
  %v3284 = vadd.f32 %v1743, %v3028
  %v3285 = vadd.f32 %v1744, %v3029
  %v3286 = vadd.f32 %v1745, %v3030
  %v3287 = vadd.f32 %v1746, %v3031
  %v3288 = vadd.f32 %v1747, %v3032
  %v3289 = vadd.f32 %v1748, %v3033
  %v3290 = vadd.f32 %v1749, %v3034
  %v3291 = vadd.f32 %v1750, %v3035
  %v3292 = vadd.f32 %v1751, %v3036
  %v3293 = vadd.f32 %v1752, %v3037
  %v3294 = vadd.f32 %v1753, %v3038
  %v3295 = vadd.f32 %v1754, %v3039
  %v3296 = vadd.f32 %v1755, %v3040
  %v3297 = vadd.f32 %v1756, %v3041
  %v3298 = vadd.f32 %v1757, %v3042
  %v3299 = vadd.f32 %v1758, %v3043
  %v3300 = vadd.f32 %v1759, %v3044
  %v3301 = vadd.f32 %v1760, %v3045
  %v3302 = vadd.f32 %v1761, %v3046
  %v3303 = vadd.f32 %v1762, %v3047
  %v3304 = vadd.f32 %v1763, %v3048
  %v3305 = vadd.f32 %v1764, %v3049
  %v3306 = vadd.f32 %v1765, %v3050
  %v3307 = vadd.f32 %v1766, %v3051
  %v3308 = vadd.f32 %v1767, %v3052
  %v3309 = vadd.f32 %v1768, %v3053
  %v3310 = vadd.f32 %v1769, %v3054
  %v3311 = vadd.f32 %v1770, %v3055
  %v3312 = vadd.f32 %v1771, %v3056
  %v3313 = vadd.f32 %v1772, %v3057
  %v3314 = vadd.f32 %v1773, %v3058
  %v3315 = vadd.f32 %v1774, %v3059
  %v3316 = vadd.f32 %v1775, %v3060
  %v3317 = vadd.f32 %v1776, %v3061
  %v3318 = vadd.f32 %v1777, %v3062
  %v3319 = vadd.f32 %v1778, %v3063
  %v3320 = vadd.f32 %v1779, %v3064
  %v3321 = vadd.f32 %v1780, %v3065
  %v3322 = vadd.f32 %v1781, %v3066
  %v3323 = vadd.f32 %v1782, %v3067
  %v3324 = vadd.f32 %v1783, %v3068
  %v3325 = vadd.f32 %v1784, %v3069
  %v3326 = vadd.f32 %v1785, %v3070
  %v3327 = vadd.f32 %v1786, %v3071
  %v3328 = vadd.f32 %v1787, %v3072
  %v3329 = vadd.f32 %v1788, %v3073
  %v3330 = vadd.f32 %v1789, %v3074
  %v3331 = vadd.f32 %v1790, %v3075
  %v3332 = vadd.f32 %v1791, %v3076
  %v3333 = vadd.f32 %v1792, %v3077
  %v3334 = vadd.f32 %v1793, %v3078
  %v3335 = vadd.f32 %v1794, %v3079
  %v3336 = vadd.f32 %v1795, %v3080
  %v3337 = vadd.f32 %v1796, %v3081
  %v3338 = vadd.f32 %v1797, %v3082
  %v3339 = vadd.f32 %v1798, %v3083
  %v3340 = vadd.f32 %v1799, %v3084
  %v3341 = vadd.f32 %v1800, %v3085
  %v3342 = vadd.f32 %v1801, %v3086
  %v3343 = vadd.f32 %v1802, %v3087
  %v3344 = vadd.f32 %v1803, %v3088
  %v3345 = vadd.f32 %v1804, %v3089
  %v3346 = vadd.f32 %v1805, %v3090
  %v3347 = vadd.f32 %v1806, %v3091
  %v3348 = vadd.f32 %v1807, %v3092
  %v3349 = vadd.f32 %v1808, %v3093
  %v3350 = vadd.f32 %v1809, %v3094
  %v3351 = vadd.f32 %v1810, %v3095
  %v3352 = vadd.f32 %v1811, %v3096
  %v3353 = vadd.f32 %v1812, %v3097
  %v3354 = vadd.f32 %v1813, %v3098
  %v3355 = vadd.f32 %v1814, %v3099
  %v3356 = vadd.f32 %v1815, %v3100
  %v3357 = vadd.f32 %v1816, %v3101
  %v3358 = vadd.f32 %v1817, %v3102
  %v3359 = vadd.f32 %v1818, %v3103
  %v3360 = vadd.f32 %v1819, %v3104
  %v3361 = vadd.f32 %v1820, %v3105
  %v3362 = vadd.f32 %v1821, %v3106
  %v3363 = vadd.f32 %v1822, %v3107
  %v3364 = vadd.f32 %v1823, %v3108
  %v3365 = vadd.f32 %v1824, %v3109
  %v3366 = vadd.f32 %v1825, %v3110
  %v3367 = vadd.f32 %v1826, %v3111
  %v3368 = vadd.f32 %v1827, %v3112
  %v3369 = vadd.f32 %v1828, %v3113
  %v3370 = vadd.f32 %v1829, %v3114
  %v3371 = vadd.f32 %v1830, %v3115
  %v3372 = vadd.f32 %v1831, %v3116
  %v3373 = vadd.f32 %v1832, %v3117
  %v3374 = vadd.f32 %v1833, %v3118
  %v3375 = vadd.f32 %v1834, %v3119
  %v3376 = vadd.f32 %v1835, %v3120
  %v3377 = vadd.f32 %v1836, %v3121
  %v3378 = vadd.f32 %v1837, %v3122
  %v3379 = vadd.f32 %v1838, %v3123
  %v3380 = vadd.f32 %v1839, %v3124
  %v3381 = vadd.f32 %v1840, %v3125
  %v3382 = vadd.f32 %v1841, %v3126
  %v3383 = vadd.f32 %v1842, %v3127
  %v3384 = vld [vmem:[%s1 + $0x2] sm:$0x1]
  %3385 = vset.pattern.permute.xlu0 2
  %3386 = vperm.xlu0 %3385, %v46
  %v3387 = vpop.permute.xlu0 %3386
  %3389 = vset.pattern.permute.xlu0 2
  %3390 = vperm.xlu0 %3389, %v47
  %v3391 = vpop.permute.xlu0 %3390
  %3393 = vset.pattern.permute.xlu0 2
  %3394 = vperm.xlu0 %3393, %v48
  %v3395 = vpop.permute.xlu0 %3394
  %3397 = vset.pattern.permute.xlu0 2
  %3398 = vperm.xlu0 %3397, %v49
  %v3399 = vpop.permute.xlu0 %3398
  %3401 = vset.pattern.permute.xlu0 2
  %3402 = vperm.xlu0 %3401, %v50
  %v3403 = vpop.permute.xlu0 %3402
  %3405 = vset.pattern.permute.xlu0 2
  %3406 = vperm.xlu0 %3405, %v51
  %v3407 = vpop.permute.xlu0 %3406
  %3409 = vset.pattern.permute.xlu0 2
  %3410 = vperm.xlu0 %3409, %v52
  %v3411 = vpop.permute.xlu0 %3410
  %3413 = vset.pattern.permute.xlu0 2
  %3414 = vperm.xlu0 %3413, %v53
  %v3415 = vpop.permute.xlu0 %3414
  %3417 = vset.pattern.permute.xlu0 2
  %3418 = vperm.xlu0 %3417, %v54
  %v3419 = vpop.permute.xlu0 %3418
  %3421 = vset.pattern.permute.xlu0 2
  %3422 = vperm.xlu0 %3421, %v55
  %v3423 = vpop.permute.xlu0 %3422
  %3425 = vset.pattern.permute.xlu0 2
  %3426 = vperm.xlu0 %3425, %v56
  %v3427 = vpop.permute.xlu0 %3426
  %3429 = vset.pattern.permute.xlu0 2
  %3430 = vperm.xlu0 %3429, %v57
  %v3431 = vpop.permute.xlu0 %3430
  %3433 = vset.pattern.permute.xlu0 2
  %3434 = vperm.xlu0 %3433, %v58
  %v3435 = vpop.permute.xlu0 %3434
  %3437 = vset.pattern.permute.xlu0 2
  %3438 = vperm.xlu0 %3437, %v59
  %v3439 = vpop.permute.xlu0 %3438
  %3441 = vset.pattern.permute.xlu0 2
  %3442 = vperm.xlu0 %3441, %v60
  %v3443 = vpop.permute.xlu0 %3442
  %3445 = vset.pattern.permute.xlu0 2
  %3446 = vperm.xlu0 %3445, %v61
  %v3447 = vpop.permute.xlu0 %3446
  %3449 = vset.pattern.permute.xlu0 2
  %3450 = vperm.xlu0 %3449, %v62
  %v3451 = vpop.permute.xlu0 %3450
  %3453 = vset.pattern.permute.xlu0 2
  %3454 = vperm.xlu0 %3453, %v63
  %v3455 = vpop.permute.xlu0 %3454
  %3457 = vset.pattern.permute.xlu0 2
  %3458 = vperm.xlu0 %3457, %v64
  %v3459 = vpop.permute.xlu0 %3458
  %3461 = vset.pattern.permute.xlu0 2
  %3462 = vperm.xlu0 %3461, %v65
  %v3463 = vpop.permute.xlu0 %3462
  %3465 = vset.pattern.permute.xlu0 2
  %3466 = vperm.xlu0 %3465, %v66
  %v3467 = vpop.permute.xlu0 %3466
  %3469 = vset.pattern.permute.xlu0 2
  %3470 = vperm.xlu0 %3469, %v67
  %v3471 = vpop.permute.xlu0 %3470
  %3473 = vset.pattern.permute.xlu0 2
  %3474 = vperm.xlu0 %3473, %v68
  %v3475 = vpop.permute.xlu0 %3474
  %3477 = vset.pattern.permute.xlu0 2
  %3478 = vperm.xlu0 %3477, %v69
  %v3479 = vpop.permute.xlu0 %3478
  %3481 = vset.pattern.permute.xlu0 2
  %3482 = vperm.xlu0 %3481, %v70
  %v3483 = vpop.permute.xlu0 %3482
  %3485 = vset.pattern.permute.xlu0 2
  %3486 = vperm.xlu0 %3485, %v71
  %v3487 = vpop.permute.xlu0 %3486
  %3489 = vset.pattern.permute.xlu0 2
  %3490 = vperm.xlu0 %3489, %v72
  %v3491 = vpop.permute.xlu0 %3490
  %3493 = vset.pattern.permute.xlu0 2
  %3494 = vperm.xlu0 %3493, %v73
  %v3495 = vpop.permute.xlu0 %3494
  %3497 = vset.pattern.permute.xlu0 2
  %3498 = vperm.xlu0 %3497, %v74
  %v3499 = vpop.permute.xlu0 %3498
  %3501 = vset.pattern.permute.xlu0 2
  %3502 = vperm.xlu0 %3501, %v75
  %v3503 = vpop.permute.xlu0 %3502
  %3505 = vset.pattern.permute.xlu0 2
  %3506 = vperm.xlu0 %3505, %v76
  %v3507 = vpop.permute.xlu0 %3506
  %3509 = vset.pattern.permute.xlu0 2
  %3510 = vperm.xlu0 %3509, %v77
  %v3511 = vpop.permute.xlu0 %3510
  %3513 = vset.pattern.permute.xlu0 2
  %3514 = vperm.xlu0 %3513, %v78
  %v3515 = vpop.permute.xlu0 %3514
  %3517 = vset.pattern.permute.xlu0 2
  %3518 = vperm.xlu0 %3517, %v79
  %v3519 = vpop.permute.xlu0 %3518
  %3521 = vset.pattern.permute.xlu0 2
  %3522 = vperm.xlu0 %3521, %v80
  %v3523 = vpop.permute.xlu0 %3522
  %3525 = vset.pattern.permute.xlu0 2
  %3526 = vperm.xlu0 %3525, %v81
  %v3527 = vpop.permute.xlu0 %3526
  %3529 = vset.pattern.permute.xlu0 2
  %3530 = vperm.xlu0 %3529, %v82
  %v3531 = vpop.permute.xlu0 %3530
  %3533 = vset.pattern.permute.xlu0 2
  %3534 = vperm.xlu0 %3533, %v83
  %v3535 = vpop.permute.xlu0 %3534
  %3537 = vset.pattern.permute.xlu0 2
  %3538 = vperm.xlu0 %3537, %v84
  %v3539 = vpop.permute.xlu0 %3538
  %3541 = vset.pattern.permute.xlu0 2
  %3542 = vperm.xlu0 %3541, %v85
  %v3543 = vpop.permute.xlu0 %3542
  %3545 = vset.pattern.permute.xlu0 2
  %3546 = vperm.xlu0 %3545, %v86
  %v3547 = vpop.permute.xlu0 %3546
  %3549 = vset.pattern.permute.xlu0 2
  %3550 = vperm.xlu0 %3549, %v87
  %v3551 = vpop.permute.xlu0 %3550
  %3553 = vset.pattern.permute.xlu0 2
  %3554 = vperm.xlu0 %3553, %v88
  %v3555 = vpop.permute.xlu0 %3554
  %3557 = vset.pattern.permute.xlu0 2
  %3558 = vperm.xlu0 %3557, %v89
  %v3559 = vpop.permute.xlu0 %3558
  %3561 = vset.pattern.permute.xlu0 2
  %3562 = vperm.xlu0 %3561, %v90
  %v3563 = vpop.permute.xlu0 %3562
  %3565 = vset.pattern.permute.xlu0 2
  %3566 = vperm.xlu0 %3565, %v91
  %v3567 = vpop.permute.xlu0 %3566
  %3569 = vset.pattern.permute.xlu0 2
  %3570 = vperm.xlu0 %3569, %v92
  %v3571 = vpop.permute.xlu0 %3570
  %3573 = vset.pattern.permute.xlu0 2
  %3574 = vperm.xlu0 %3573, %v93
  %v3575 = vpop.permute.xlu0 %3574
  %3577 = vset.pattern.permute.xlu0 2
  %3578 = vperm.xlu0 %3577, %v94
  %v3579 = vpop.permute.xlu0 %3578
  %3581 = vset.pattern.permute.xlu0 2
  %3582 = vperm.xlu0 %3581, %v95
  %v3583 = vpop.permute.xlu0 %3582
  %3585 = vset.pattern.permute.xlu0 2
  %3586 = vperm.xlu0 %3585, %v96
  %v3587 = vpop.permute.xlu0 %3586
  %3589 = vset.pattern.permute.xlu0 2
  %3590 = vperm.xlu0 %3589, %v97
  %v3591 = vpop.permute.xlu0 %3590
  %3593 = vset.pattern.permute.xlu0 2
  %3594 = vperm.xlu0 %3593, %v98
  %v3595 = vpop.permute.xlu0 %3594
  %3597 = vset.pattern.permute.xlu0 2
  %3598 = vperm.xlu0 %3597, %v99
  %v3599 = vpop.permute.xlu0 %3598
  %3601 = vset.pattern.permute.xlu0 2
  %3602 = vperm.xlu0 %3601, %v100
  %v3603 = vpop.permute.xlu0 %3602
  %3605 = vset.pattern.permute.xlu0 2
  %3606 = vperm.xlu0 %3605, %v101
  %v3607 = vpop.permute.xlu0 %3606
  %3609 = vset.pattern.permute.xlu0 2
  %3610 = vperm.xlu0 %3609, %v102
  %v3611 = vpop.permute.xlu0 %3610
  %3613 = vset.pattern.permute.xlu0 2
  %3614 = vperm.xlu0 %3613, %v103
  %v3615 = vpop.permute.xlu0 %3614
  %3617 = vset.pattern.permute.xlu0 2
  %3618 = vperm.xlu0 %3617, %v104
  %v3619 = vpop.permute.xlu0 %3618
  %3621 = vset.pattern.permute.xlu0 2
  %3622 = vperm.xlu0 %3621, %v105
  %v3623 = vpop.permute.xlu0 %3622
  %3625 = vset.pattern.permute.xlu0 2
  %3626 = vperm.xlu0 %3625, %v106
  %v3627 = vpop.permute.xlu0 %3626
  %3629 = vset.pattern.permute.xlu0 2
  %3630 = vperm.xlu0 %3629, %v107
  %v3631 = vpop.permute.xlu0 %3630
  %3633 = vset.pattern.permute.xlu0 2
  %3634 = vperm.xlu0 %3633, %v108
  %v3635 = vpop.permute.xlu0 %3634
  %3637 = vset.pattern.permute.xlu0 2
  %3638 = vperm.xlu0 %3637, %v109
  %v3639 = vpop.permute.xlu0 %3638
  %3641 = vset.pattern.permute.xlu0 2
  %3642 = vperm.xlu0 %3641, %v110
  %v3643 = vpop.permute.xlu0 %3642
  %3645 = vset.pattern.permute.xlu0 2
  %3646 = vperm.xlu0 %3645, %v111
  %v3647 = vpop.permute.xlu0 %3646
  %3649 = vset.pattern.permute.xlu0 2
  %3650 = vperm.xlu0 %3649, %v112
  %v3651 = vpop.permute.xlu0 %3650
  %3653 = vset.pattern.permute.xlu0 2
  %3654 = vperm.xlu0 %3653, %v113
  %v3655 = vpop.permute.xlu0 %3654
  %3657 = vset.pattern.permute.xlu0 2
  %3658 = vperm.xlu0 %3657, %v114
  %v3659 = vpop.permute.xlu0 %3658
  %3661 = vset.pattern.permute.xlu0 2
  %3662 = vperm.xlu0 %3661, %v115
  %v3663 = vpop.permute.xlu0 %3662
  %3665 = vset.pattern.permute.xlu0 2
  %3666 = vperm.xlu0 %3665, %v116
  %v3667 = vpop.permute.xlu0 %3666
  %3669 = vset.pattern.permute.xlu0 2
  %3670 = vperm.xlu0 %3669, %v117
  %v3671 = vpop.permute.xlu0 %3670
  %3673 = vset.pattern.permute.xlu0 2
  %3674 = vperm.xlu0 %3673, %v118
  %v3675 = vpop.permute.xlu0 %3674
  %3677 = vset.pattern.permute.xlu0 2
  %3678 = vperm.xlu0 %3677, %v119
  %v3679 = vpop.permute.xlu0 %3678
  %3681 = vset.pattern.permute.xlu0 2
  %3682 = vperm.xlu0 %3681, %v120
  %v3683 = vpop.permute.xlu0 %3682
  %3685 = vset.pattern.permute.xlu0 2
  %3686 = vperm.xlu0 %3685, %v121
  %v3687 = vpop.permute.xlu0 %3686
  %3689 = vset.pattern.permute.xlu0 2
  %3690 = vperm.xlu0 %3689, %v122
  %v3691 = vpop.permute.xlu0 %3690
  %3693 = vset.pattern.permute.xlu0 2
  %3694 = vperm.xlu0 %3693, %v123
  %v3695 = vpop.permute.xlu0 %3694
  %3697 = vset.pattern.permute.xlu0 2
  %3698 = vperm.xlu0 %3697, %v124
  %v3699 = vpop.permute.xlu0 %3698
  %3701 = vset.pattern.permute.xlu0 2
  %3702 = vperm.xlu0 %3701, %v125
  %v3703 = vpop.permute.xlu0 %3702
  %3705 = vset.pattern.permute.xlu0 2
  %3706 = vperm.xlu0 %3705, %v126
  %v3707 = vpop.permute.xlu0 %3706
  %3709 = vset.pattern.permute.xlu0 2
  %3710 = vperm.xlu0 %3709, %v127
  %v3711 = vpop.permute.xlu0 %3710
  %3713 = vset.pattern.permute.xlu0 2
  %3714 = vperm.xlu0 %3713, %v128
  %v3715 = vpop.permute.xlu0 %3714
  %3717 = vset.pattern.permute.xlu0 2
  %3718 = vperm.xlu0 %3717, %v129
  %v3719 = vpop.permute.xlu0 %3718
  %3721 = vset.pattern.permute.xlu0 2
  %3722 = vperm.xlu0 %3721, %v130
  %v3723 = vpop.permute.xlu0 %3722
  %3725 = vset.pattern.permute.xlu0 2
  %3726 = vperm.xlu0 %3725, %v131
  %v3727 = vpop.permute.xlu0 %3726
  %3729 = vset.pattern.permute.xlu0 2
  %3730 = vperm.xlu0 %3729, %v132
  %v3731 = vpop.permute.xlu0 %3730
  %3733 = vset.pattern.permute.xlu0 2
  %3734 = vperm.xlu0 %3733, %v133
  %v3735 = vpop.permute.xlu0 %3734
  %3737 = vset.pattern.permute.xlu0 2
  %3738 = vperm.xlu0 %3737, %v134
  %v3739 = vpop.permute.xlu0 %3738
  %3741 = vset.pattern.permute.xlu0 2
  %3742 = vperm.xlu0 %3741, %v135
  %v3743 = vpop.permute.xlu0 %3742
  %3745 = vset.pattern.permute.xlu0 2
  %3746 = vperm.xlu0 %3745, %v136
  %v3747 = vpop.permute.xlu0 %3746
  %3749 = vset.pattern.permute.xlu0 2
  %3750 = vperm.xlu0 %3749, %v137
  %v3751 = vpop.permute.xlu0 %3750
  %3753 = vset.pattern.permute.xlu0 2
  %3754 = vperm.xlu0 %3753, %v138
  %v3755 = vpop.permute.xlu0 %3754
  %3757 = vset.pattern.permute.xlu0 2
  %3758 = vperm.xlu0 %3757, %v139
  %v3759 = vpop.permute.xlu0 %3758
  %3761 = vset.pattern.permute.xlu0 2
  %3762 = vperm.xlu0 %3761, %v140
  %v3763 = vpop.permute.xlu0 %3762
  %3765 = vset.pattern.permute.xlu0 2
  %3766 = vperm.xlu0 %3765, %v141
  %v3767 = vpop.permute.xlu0 %3766
  %3769 = vset.pattern.permute.xlu0 2
  %3770 = vperm.xlu0 %3769, %v142
  %v3771 = vpop.permute.xlu0 %3770
  %3773 = vset.pattern.permute.xlu0 2
  %3774 = vperm.xlu0 %3773, %v143
  %v3775 = vpop.permute.xlu0 %3774
  %3777 = vset.pattern.permute.xlu0 2
  %3778 = vperm.xlu0 %3777, %v144
  %v3779 = vpop.permute.xlu0 %3778
  %3781 = vset.pattern.permute.xlu0 2
  %3782 = vperm.xlu0 %3781, %v145
  %v3783 = vpop.permute.xlu0 %3782
  %3785 = vset.pattern.permute.xlu0 2
  %3786 = vperm.xlu0 %3785, %v146
  %v3787 = vpop.permute.xlu0 %3786
  %3789 = vset.pattern.permute.xlu0 2
  %3790 = vperm.xlu0 %3789, %v147
  %v3791 = vpop.permute.xlu0 %3790
  %3793 = vset.pattern.permute.xlu0 2
  %3794 = vperm.xlu0 %3793, %v148
  %v3795 = vpop.permute.xlu0 %3794
  %3797 = vset.pattern.permute.xlu0 2
  %3798 = vperm.xlu0 %3797, %v149
  %v3799 = vpop.permute.xlu0 %3798
  %3801 = vset.pattern.permute.xlu0 2
  %3802 = vperm.xlu0 %3801, %v150
  %v3803 = vpop.permute.xlu0 %3802
  %3805 = vset.pattern.permute.xlu0 2
  %3806 = vperm.xlu0 %3805, %v151
  %v3807 = vpop.permute.xlu0 %3806
  %3809 = vset.pattern.permute.xlu0 2
  %3810 = vperm.xlu0 %3809, %v152
  %v3811 = vpop.permute.xlu0 %3810
  %3813 = vset.pattern.permute.xlu0 2
  %3814 = vperm.xlu0 %3813, %v153
  %v3815 = vpop.permute.xlu0 %3814
  %3817 = vset.pattern.permute.xlu0 2
  %3818 = vperm.xlu0 %3817, %v154
  %v3819 = vpop.permute.xlu0 %3818
  %3821 = vset.pattern.permute.xlu0 2
  %3822 = vperm.xlu0 %3821, %v155
  %v3823 = vpop.permute.xlu0 %3822
  %3825 = vset.pattern.permute.xlu0 2
  %3826 = vperm.xlu0 %3825, %v156
  %v3827 = vpop.permute.xlu0 %3826
  %3829 = vset.pattern.permute.xlu0 2
  %3830 = vperm.xlu0 %3829, %v157
  %v3831 = vpop.permute.xlu0 %3830
  %3833 = vset.pattern.permute.xlu0 2
  %3834 = vperm.xlu0 %3833, %v158
  %v3835 = vpop.permute.xlu0 %3834
  %3837 = vset.pattern.permute.xlu0 2
  %3838 = vperm.xlu0 %3837, %v159
  %v3839 = vpop.permute.xlu0 %3838
  %3841 = vset.pattern.permute.xlu0 2
  %3842 = vperm.xlu0 %3841, %v160
  %v3843 = vpop.permute.xlu0 %3842
  %3845 = vset.pattern.permute.xlu0 2
  %3846 = vperm.xlu0 %3845, %v161
  %v3847 = vpop.permute.xlu0 %3846
  %3849 = vset.pattern.permute.xlu0 2
  %3850 = vperm.xlu0 %3849, %v162
  %v3851 = vpop.permute.xlu0 %3850
  %3853 = vset.pattern.permute.xlu0 2
  %3854 = vperm.xlu0 %3853, %v163
  %v3855 = vpop.permute.xlu0 %3854
  %3857 = vset.pattern.permute.xlu0 2
  %3858 = vperm.xlu0 %3857, %v164
  %v3859 = vpop.permute.xlu0 %3858
  %3861 = vset.pattern.permute.xlu0 2
  %3862 = vperm.xlu0 %3861, %v165
  %v3863 = vpop.permute.xlu0 %3862
  %3865 = vset.pattern.permute.xlu0 2
  %3866 = vperm.xlu0 %3865, %v166
  %v3867 = vpop.permute.xlu0 %3866
  %3869 = vset.pattern.permute.xlu0 2
  %3870 = vperm.xlu0 %3869, %v167
  %v3871 = vpop.permute.xlu0 %3870
  %3873 = vset.pattern.permute.xlu0 2
  %3874 = vperm.xlu0 %3873, %v168
  %v3875 = vpop.permute.xlu0 %3874
  %3877 = vset.pattern.permute.xlu0 2
  %3878 = vperm.xlu0 %3877, %v169
  %v3879 = vpop.permute.xlu0 %3878
  %3881 = vset.pattern.permute.xlu0 2
  %3882 = vperm.xlu0 %3881, %v170
  %v3883 = vpop.permute.xlu0 %3882
  %3885 = vset.pattern.permute.xlu0 2
  %3886 = vperm.xlu0 %3885, %v171
  %v3887 = vpop.permute.xlu0 %3886
  %3889 = vset.pattern.permute.xlu0 2
  %3890 = vperm.xlu0 %3889, %v172
  %v3891 = vpop.permute.xlu0 %3890
  %3893 = vset.pattern.permute.xlu0 2
  %3894 = vperm.xlu0 %3893, %v173
  %v3895 = vpop.permute.xlu0 %3894
  %3897 = vset.pattern.permute.xlu0 2
  %3898 = vperm.xlu0 %3897, %v174
  %v3899 = vpop.permute.xlu0 %3898
  %3901 = vset.pattern.permute.xlu0 2
  %3902 = vperm.xlu0 %3901, %v175
  %v3903 = vpop.permute.xlu0 %3902
  %3905 = vset.pattern.permute.xlu0 2
  %3906 = vperm.xlu0 %3905, %v176
  %v3907 = vpop.permute.xlu0 %3906
  %3909 = vset.pattern.permute.xlu0 2
  %3910 = vperm.xlu0 %3909, %v177
  %v3911 = vpop.permute.xlu0 %3910
  %3913 = vset.pattern.permute.xlu0 2
  %3914 = vperm.xlu0 %3913, %v178
  %v3915 = vpop.permute.xlu0 %3914
  %3917 = vset.pattern.permute.xlu0 2
  %3918 = vperm.xlu0 %3917, %v179
  %v3919 = vpop.permute.xlu0 %3918
  %3921 = vset.pattern.permute.xlu0 2
  %3922 = vperm.xlu0 %3921, %v180
  %v3923 = vpop.permute.xlu0 %3922
  %3925 = vset.pattern.permute.xlu0 2
  %3926 = vperm.xlu0 %3925, %v181
  %v3927 = vpop.permute.xlu0 %3926
  %3929 = vset.pattern.permute.xlu0 2
  %3930 = vperm.xlu0 %3929, %v182
  %v3931 = vpop.permute.xlu0 %3930
  %3933 = vset.pattern.permute.xlu0 2
  %3934 = vperm.xlu0 %3933, %v183
  %v3935 = vpop.permute.xlu0 %3934
  %3937 = vset.pattern.permute.xlu0 2
  %3938 = vperm.xlu0 %3937, %v184
  %v3939 = vpop.permute.xlu0 %3938
  %3941 = vset.pattern.permute.xlu0 2
  %3942 = vperm.xlu0 %3941, %v185
  %v3943 = vpop.permute.xlu0 %3942
  %3945 = vset.pattern.permute.xlu0 2
  %3946 = vperm.xlu0 %3945, %v186
  %v3947 = vpop.permute.xlu0 %3946
  %3949 = vset.pattern.permute.xlu0 2
  %3950 = vperm.xlu0 %3949, %v187
  %v3951 = vpop.permute.xlu0 %3950
  %3953 = vset.pattern.permute.xlu0 2
  %3954 = vperm.xlu0 %3953, %v188
  %v3955 = vpop.permute.xlu0 %3954
  %3957 = vset.pattern.permute.xlu0 2
  %3958 = vperm.xlu0 %3957, %v189
  %v3959 = vpop.permute.xlu0 %3958
  %3961 = vset.pattern.permute.xlu0 2
  %3962 = vperm.xlu0 %3961, %v190
  %v3963 = vpop.permute.xlu0 %3962
  %3965 = vset.pattern.permute.xlu0 2
  %3966 = vperm.xlu0 %3965, %v191
  %v3967 = vpop.permute.xlu0 %3966
  %3969 = vset.pattern.permute.xlu0 2
  %3970 = vperm.xlu0 %3969, %v192
  %v3971 = vpop.permute.xlu0 %3970
  %3973 = vset.pattern.permute.xlu0 2
  %3974 = vperm.xlu0 %3973, %v193
  %v3975 = vpop.permute.xlu0 %3974
  %3977 = vset.pattern.permute.xlu0 2
  %3978 = vperm.xlu0 %3977, %v194
  %v3979 = vpop.permute.xlu0 %3978
  %3981 = vset.pattern.permute.xlu0 2
  %3982 = vperm.xlu0 %3981, %v195
  %v3983 = vpop.permute.xlu0 %3982
  %3985 = vset.pattern.permute.xlu0 2
  %3986 = vperm.xlu0 %3985, %v196
  %v3987 = vpop.permute.xlu0 %3986
  %3989 = vset.pattern.permute.xlu0 2
  %3990 = vperm.xlu0 %3989, %v197
  %v3991 = vpop.permute.xlu0 %3990
  %3993 = vset.pattern.permute.xlu0 2
  %3994 = vperm.xlu0 %3993, %v198
  %v3995 = vpop.permute.xlu0 %3994
  %3997 = vset.pattern.permute.xlu0 2
  %3998 = vperm.xlu0 %3997, %v199
  %v3999 = vpop.permute.xlu0 %3998
  %4001 = vset.pattern.permute.xlu0 2
  %4002 = vperm.xlu0 %4001, %v200
  %v4003 = vpop.permute.xlu0 %4002
  %4005 = vset.pattern.permute.xlu0 2
  %4006 = vperm.xlu0 %4005, %v201
  %v4007 = vpop.permute.xlu0 %4006
  %4009 = vset.pattern.permute.xlu0 2
  %4010 = vperm.xlu0 %4009, %v202
  %v4011 = vpop.permute.xlu0 %4010
  %4013 = vset.pattern.permute.xlu0 2
  %4014 = vperm.xlu0 %4013, %v203
  %v4015 = vpop.permute.xlu0 %4014
  %4017 = vset.pattern.permute.xlu0 2
  %4018 = vperm.xlu0 %4017, %v204
  %v4019 = vpop.permute.xlu0 %4018
  %4021 = vset.pattern.permute.xlu0 2
  %4022 = vperm.xlu0 %4021, %v205
  %v4023 = vpop.permute.xlu0 %4022
  %4025 = vset.pattern.permute.xlu0 2
  %4026 = vperm.xlu0 %4025, %v206
  %v4027 = vpop.permute.xlu0 %4026
  %4029 = vset.pattern.permute.xlu0 2
  %4030 = vperm.xlu0 %4029, %v207
  %v4031 = vpop.permute.xlu0 %4030
  %4033 = vset.pattern.permute.xlu0 2
  %4034 = vperm.xlu0 %4033, %v208
  %v4035 = vpop.permute.xlu0 %4034
  %4037 = vset.pattern.permute.xlu0 2
  %4038 = vperm.xlu0 %4037, %v209
  %v4039 = vpop.permute.xlu0 %4038
  %4041 = vset.pattern.permute.xlu0 2
  %4042 = vperm.xlu0 %4041, %v210
  %v4043 = vpop.permute.xlu0 %4042
  %4045 = vset.pattern.permute.xlu0 2
  %4046 = vperm.xlu0 %4045, %v211
  %v4047 = vpop.permute.xlu0 %4046
  %4049 = vset.pattern.permute.xlu0 2
  %4050 = vperm.xlu0 %4049, %v212
  %v4051 = vpop.permute.xlu0 %4050
  %4053 = vset.pattern.permute.xlu0 2
  %4054 = vperm.xlu0 %4053, %v213
  %v4055 = vpop.permute.xlu0 %4054
  %4057 = vset.pattern.permute.xlu0 2
  %4058 = vperm.xlu0 %4057, %v214
  %v4059 = vpop.permute.xlu0 %4058
  %4061 = vset.pattern.permute.xlu0 2
  %4062 = vperm.xlu0 %4061, %v215
  %v4063 = vpop.permute.xlu0 %4062
  %4065 = vset.pattern.permute.xlu0 2
  %4066 = vperm.xlu0 %4065, %v216
  %v4067 = vpop.permute.xlu0 %4066
  %4069 = vset.pattern.permute.xlu0 2
  %4070 = vperm.xlu0 %4069, %v217
  %v4071 = vpop.permute.xlu0 %4070
  %4073 = vset.pattern.permute.xlu0 2
  %4074 = vperm.xlu0 %4073, %v218
  %v4075 = vpop.permute.xlu0 %4074
  %4077 = vset.pattern.permute.xlu0 2
  %4078 = vperm.xlu0 %4077, %v219
  %v4079 = vpop.permute.xlu0 %4078
  %4081 = vset.pattern.permute.xlu0 2
  %4082 = vperm.xlu0 %4081, %v220
  %v4083 = vpop.permute.xlu0 %4082
  %4085 = vset.pattern.permute.xlu0 2
  %4086 = vperm.xlu0 %4085, %v221
  %v4087 = vpop.permute.xlu0 %4086
  %4089 = vset.pattern.permute.xlu0 2
  %4090 = vperm.xlu0 %4089, %v222
  %v4091 = vpop.permute.xlu0 %4090
  %4093 = vset.pattern.permute.xlu0 2
  %4094 = vperm.xlu0 %4093, %v223
  %v4095 = vpop.permute.xlu0 %4094
  %4097 = vset.pattern.permute.xlu0 2
  %4098 = vperm.xlu0 %4097, %v224
  %v4099 = vpop.permute.xlu0 %4098
  %4101 = vset.pattern.permute.xlu0 2
  %4102 = vperm.xlu0 %4101, %v225
  %v4103 = vpop.permute.xlu0 %4102
  %4105 = vset.pattern.permute.xlu0 2
  %4106 = vperm.xlu0 %4105, %v226
  %v4107 = vpop.permute.xlu0 %4106
  %4109 = vset.pattern.permute.xlu0 2
  %4110 = vperm.xlu0 %4109, %v227
  %v4111 = vpop.permute.xlu0 %4110
  %4113 = vset.pattern.permute.xlu0 2
  %4114 = vperm.xlu0 %4113, %v228
  %v4115 = vpop.permute.xlu0 %4114
  %4117 = vset.pattern.permute.xlu0 2
  %4118 = vperm.xlu0 %4117, %v229
  %v4119 = vpop.permute.xlu0 %4118
  %4121 = vset.pattern.permute.xlu0 2
  %4122 = vperm.xlu0 %4121, %v230
  %v4123 = vpop.permute.xlu0 %4122
  %4125 = vset.pattern.permute.xlu0 2
  %4126 = vperm.xlu0 %4125, %v231
  %v4127 = vpop.permute.xlu0 %4126
  %4129 = vset.pattern.permute.xlu0 2
  %4130 = vperm.xlu0 %4129, %v232
  %v4131 = vpop.permute.xlu0 %4130
  %4133 = vset.pattern.permute.xlu0 2
  %4134 = vperm.xlu0 %4133, %v233
  %v4135 = vpop.permute.xlu0 %4134
  %4137 = vset.pattern.permute.xlu0 2
  %4138 = vperm.xlu0 %4137, %v234
  %v4139 = vpop.permute.xlu0 %4138
  %4141 = vset.pattern.permute.xlu0 2
  %4142 = vperm.xlu0 %4141, %v235
  %v4143 = vpop.permute.xlu0 %4142
  %4145 = vset.pattern.permute.xlu0 2
  %4146 = vperm.xlu0 %4145, %v236
  %v4147 = vpop.permute.xlu0 %4146
  %4149 = vset.pattern.permute.xlu0 2
  %4150 = vperm.xlu0 %4149, %v237
  %v4151 = vpop.permute.xlu0 %4150
  %4153 = vset.pattern.permute.xlu0 2
  %4154 = vperm.xlu0 %4153, %v238
  %v4155 = vpop.permute.xlu0 %4154
  %4157 = vset.pattern.permute.xlu0 2
  %4158 = vperm.xlu0 %4157, %v239
  %v4159 = vpop.permute.xlu0 %4158
  %4161 = vset.pattern.permute.xlu0 2
  %4162 = vperm.xlu0 %4161, %v240
  %v4163 = vpop.permute.xlu0 %4162
  %4165 = vset.pattern.permute.xlu0 2
  %4166 = vperm.xlu0 %4165, %v241
  %v4167 = vpop.permute.xlu0 %4166
  %4169 = vset.pattern.permute.xlu0 2
  %4170 = vperm.xlu0 %4169, %v242
  %v4171 = vpop.permute.xlu0 %4170
  %4173 = vset.pattern.permute.xlu0 2
  %4174 = vperm.xlu0 %4173, %v243
  %v4175 = vpop.permute.xlu0 %4174
  %4177 = vset.pattern.permute.xlu0 2
  %4178 = vperm.xlu0 %4177, %v244
  %v4179 = vpop.permute.xlu0 %4178
  %4181 = vset.pattern.permute.xlu0 2
  %4182 = vperm.xlu0 %4181, %v245
  %v4183 = vpop.permute.xlu0 %4182
  %4185 = vset.pattern.permute.xlu0 2
  %4186 = vperm.xlu0 %4185, %v246
  %v4187 = vpop.permute.xlu0 %4186
  %4189 = vset.pattern.permute.xlu0 2
  %4190 = vperm.xlu0 %4189, %v247
  %v4191 = vpop.permute.xlu0 %4190
  %4193 = vset.pattern.permute.xlu0 2
  %4194 = vperm.xlu0 %4193, %v248
  %v4195 = vpop.permute.xlu0 %4194
  %4197 = vset.pattern.permute.xlu0 2
  %4198 = vperm.xlu0 %4197, %v249
  %v4199 = vpop.permute.xlu0 %4198
  %4201 = vset.pattern.permute.xlu0 2
  %4202 = vperm.xlu0 %4201, %v250
  %v4203 = vpop.permute.xlu0 %4202
  %4205 = vset.pattern.permute.xlu0 2
  %4206 = vperm.xlu0 %4205, %v251
  %v4207 = vpop.permute.xlu0 %4206
  %4209 = vset.pattern.permute.xlu0 2
  %4210 = vperm.xlu0 %4209, %v252
  %v4211 = vpop.permute.xlu0 %4210
  %4213 = vset.pattern.permute.xlu0 2
  %4214 = vperm.xlu0 %4213, %v253
  %v4215 = vpop.permute.xlu0 %4214
  %4217 = vset.pattern.permute.xlu0 2
  %4218 = vperm.xlu0 %4217, %v254
  %v4219 = vpop.permute.xlu0 %4218
  %4221 = vset.pattern.permute.xlu0 2
  %4222 = vperm.xlu0 %4221, %v255
  %v4223 = vpop.permute.xlu0 %4222
  %4225 = vset.pattern.permute.xlu0 2
  %4226 = vperm.xlu0 %4225, %v256
  %v4227 = vpop.permute.xlu0 %4226
  %4229 = vset.pattern.permute.xlu0 2
  %4230 = vperm.xlu0 %4229, %v257
  %v4231 = vpop.permute.xlu0 %4230
  %4233 = vset.pattern.permute.xlu0 2
  %4234 = vperm.xlu0 %4233, %v258
  %v4235 = vpop.permute.xlu0 %4234
  %4237 = vset.pattern.permute.xlu0 2
  %4238 = vperm.xlu0 %4237, %v259
  %v4239 = vpop.permute.xlu0 %4238
  %4241 = vset.pattern.permute.xlu0 2
  %4242 = vperm.xlu0 %4241, %v260
  %v4243 = vpop.permute.xlu0 %4242
  %4245 = vset.pattern.permute.xlu0 2
  %4246 = vperm.xlu0 %4245, %v261
  %v4247 = vpop.permute.xlu0 %4246
  %4249 = vset.pattern.permute.xlu0 2
  %4250 = vperm.xlu0 %4249, %v262
  %v4251 = vpop.permute.xlu0 %4250
  %4253 = vset.pattern.permute.xlu0 2
  %4254 = vperm.xlu0 %4253, %v263
  %v4255 = vpop.permute.xlu0 %4254
  %4257 = vset.pattern.permute.xlu0 2
  %4258 = vperm.xlu0 %4257, %v264
  %v4259 = vpop.permute.xlu0 %4258
  %4261 = vset.pattern.permute.xlu0 2
  %4262 = vperm.xlu0 %4261, %v265
  %v4263 = vpop.permute.xlu0 %4262
  %4265 = vset.pattern.permute.xlu0 2
  %4266 = vperm.xlu0 %4265, %v266
  %v4267 = vpop.permute.xlu0 %4266
  %4269 = vset.pattern.permute.xlu0 2
  %4270 = vperm.xlu0 %4269, %v267
  %v4271 = vpop.permute.xlu0 %4270
  %4273 = vset.pattern.permute.xlu0 2
  %4274 = vperm.xlu0 %4273, %v268
  %v4275 = vpop.permute.xlu0 %4274
  %4277 = vset.pattern.permute.xlu0 2
  %4278 = vperm.xlu0 %4277, %v269
  %v4279 = vpop.permute.xlu0 %4278
  %4281 = vset.pattern.permute.xlu0 2
  %4282 = vperm.xlu0 %4281, %v270
  %v4283 = vpop.permute.xlu0 %4282
  %4285 = vset.pattern.permute.xlu0 2
  %4286 = vperm.xlu0 %4285, %v271
  %v4287 = vpop.permute.xlu0 %4286
  %4289 = vset.pattern.permute.xlu0 2
  %4290 = vperm.xlu0 %4289, %v272
  %v4291 = vpop.permute.xlu0 %4290
  %4293 = vset.pattern.permute.xlu0 2
  %4294 = vperm.xlu0 %4293, %v273
  %v4295 = vpop.permute.xlu0 %4294
  %4297 = vset.pattern.permute.xlu0 2
  %4298 = vperm.xlu0 %4297, %v274
  %v4299 = vpop.permute.xlu0 %4298
  %4301 = vset.pattern.permute.xlu0 2
  %4302 = vperm.xlu0 %4301, %v275
  %v4303 = vpop.permute.xlu0 %4302
  %4305 = vset.pattern.permute.xlu0 2
  %4306 = vperm.xlu0 %4305, %v276
  %v4307 = vpop.permute.xlu0 %4306
  %4309 = vset.pattern.permute.xlu0 2
  %4310 = vperm.xlu0 %4309, %v277
  %v4311 = vpop.permute.xlu0 %4310
  %4313 = vset.pattern.permute.xlu0 2
  %4314 = vperm.xlu0 %4313, %v278
  %v4315 = vpop.permute.xlu0 %4314
  %4317 = vset.pattern.permute.xlu0 2
  %4318 = vperm.xlu0 %4317, %v279
  %v4319 = vpop.permute.xlu0 %4318
  %4321 = vset.pattern.permute.xlu0 2
  %4322 = vperm.xlu0 %4321, %v280
  %v4323 = vpop.permute.xlu0 %4322
  %4325 = vset.pattern.permute.xlu0 2
  %4326 = vperm.xlu0 %4325, %v281
  %v4327 = vpop.permute.xlu0 %4326
  %4329 = vset.pattern.permute.xlu0 2
  %4330 = vperm.xlu0 %4329, %v282
  %v4331 = vpop.permute.xlu0 %4330
  %4333 = vset.pattern.permute.xlu0 2
  %4334 = vperm.xlu0 %4333, %v283
  %v4335 = vpop.permute.xlu0 %4334
  %4337 = vset.pattern.permute.xlu0 2
  %4338 = vperm.xlu0 %4337, %v284
  %v4339 = vpop.permute.xlu0 %4338
  %4341 = vset.pattern.permute.xlu0 2
  %4342 = vperm.xlu0 %4341, %v285
  %v4343 = vpop.permute.xlu0 %4342
  %4345 = vset.pattern.permute.xlu0 2
  %4346 = vperm.xlu0 %4345, %v286
  %v4347 = vpop.permute.xlu0 %4346
  %4349 = vset.pattern.permute.xlu0 2
  %4350 = vperm.xlu0 %4349, %v287
  %v4351 = vpop.permute.xlu0 %4350
  %4353 = vset.pattern.permute.xlu0 2
  %4354 = vperm.xlu0 %4353, %v288
  %v4355 = vpop.permute.xlu0 %4354
  %4357 = vset.pattern.permute.xlu0 2
  %4358 = vperm.xlu0 %4357, %v289
  %v4359 = vpop.permute.xlu0 %4358
  %4361 = vset.pattern.permute.xlu0 2
  %4362 = vperm.xlu0 %4361, %v290
  %v4363 = vpop.permute.xlu0 %4362
  %4365 = vset.pattern.permute.xlu0 2
  %4366 = vperm.xlu0 %4365, %v291
  %v4367 = vpop.permute.xlu0 %4366
  %4369 = vset.pattern.permute.xlu0 2
  %4370 = vperm.xlu0 %4369, %v292
  %v4371 = vpop.permute.xlu0 %4370
  %4373 = vset.pattern.permute.xlu0 2
  %4374 = vperm.xlu0 %4373, %v293
  %v4375 = vpop.permute.xlu0 %4374
  %4377 = vset.pattern.permute.xlu0 2
  %4378 = vperm.xlu0 %4377, %v294
  %v4379 = vpop.permute.xlu0 %4378
  %4381 = vset.pattern.permute.xlu0 2
  %4382 = vperm.xlu0 %4381, %v295
  %v4383 = vpop.permute.xlu0 %4382
  %4385 = vset.pattern.permute.xlu0 2
  %4386 = vperm.xlu0 %4385, %v296
  %v4387 = vpop.permute.xlu0 %4386
  %4389 = vset.pattern.permute.xlu0 2
  %4390 = vperm.xlu0 %4389, %v297
  %v4391 = vpop.permute.xlu0 %4390
  %4393 = vset.pattern.permute.xlu0 2
  %4394 = vperm.xlu0 %4393, %v298
  %v4395 = vpop.permute.xlu0 %4394
  %4397 = vset.pattern.permute.xlu0 2
  %4398 = vperm.xlu0 %4397, %v299
  %v4399 = vpop.permute.xlu0 %4398
  %4401 = vset.pattern.permute.xlu0 2
  %4402 = vperm.xlu0 %4401, %v300
  %v4403 = vpop.permute.xlu0 %4402
  %4405 = vset.pattern.permute.xlu0 2
  %4406 = vperm.xlu0 %4405, %v301
  %v4407 = vpop.permute.xlu0 %4406
  %v4409 = vlaneseq
  %v4410 = vshrl.u32 %v4409, 7
  %v4411 = vsub.s32 0, %v4410
  %v4412 = vrot.slane %v3384, %v4411
  %v4413 = vmul.f32 %v3387, %v4412
  %v4414 = vmul.f32 %v3391, %v4412
  %v4415 = vmul.f32 %v3395, %v4412
  %v4416 = vmul.f32 %v3399, %v4412
  %v4417 = vmul.f32 %v3403, %v4412
  %v4418 = vmul.f32 %v3407, %v4412
  %v4419 = vmul.f32 %v3411, %v4412
  %v4420 = vmul.f32 %v3415, %v4412
  %v4421 = vmul.f32 %v3419, %v4412
  %v4422 = vmul.f32 %v3423, %v4412
  %v4423 = vmul.f32 %v3427, %v4412
  %v4424 = vmul.f32 %v3431, %v4412
  %v4425 = vmul.f32 %v3435, %v4412
  %v4426 = vmul.f32 %v3439, %v4412
  %v4427 = vmul.f32 %v3443, %v4412
  %v4428 = vmul.f32 %v3447, %v4412
  %v4429 = vmul.f32 %v3451, %v4412
  %v4430 = vmul.f32 %v3455, %v4412
  %v4431 = vmul.f32 %v3459, %v4412
  %v4432 = vmul.f32 %v3463, %v4412
  %v4433 = vmul.f32 %v3467, %v4412
  %v4434 = vmul.f32 %v3471, %v4412
  %v4435 = vmul.f32 %v3475, %v4412
  %v4436 = vmul.f32 %v3479, %v4412
  %v4437 = vmul.f32 %v3483, %v4412
  %v4438 = vmul.f32 %v3487, %v4412
  %v4439 = vmul.f32 %v3491, %v4412
  %v4440 = vmul.f32 %v3495, %v4412
  %v4441 = vmul.f32 %v3499, %v4412
  %v4442 = vmul.f32 %v3503, %v4412
  %v4443 = vmul.f32 %v3507, %v4412
  %v4444 = vmul.f32 %v3511, %v4412
  %v4445 = vmul.f32 %v3515, %v4412
  %v4446 = vmul.f32 %v3519, %v4412
  %v4447 = vmul.f32 %v3523, %v4412
  %v4448 = vmul.f32 %v3527, %v4412
  %v4449 = vmul.f32 %v3531, %v4412
  %v4450 = vmul.f32 %v3535, %v4412
  %v4451 = vmul.f32 %v3539, %v4412
  %v4452 = vmul.f32 %v3543, %v4412
  %v4453 = vmul.f32 %v3547, %v4412
  %v4454 = vmul.f32 %v3551, %v4412
  %v4455 = vmul.f32 %v3555, %v4412
  %v4456 = vmul.f32 %v3559, %v4412
  %v4457 = vmul.f32 %v3563, %v4412
  %v4458 = vmul.f32 %v3567, %v4412
  %v4459 = vmul.f32 %v3571, %v4412
  %v4460 = vmul.f32 %v3575, %v4412
  %v4461 = vmul.f32 %v3579, %v4412
  %v4462 = vmul.f32 %v3583, %v4412
  %v4463 = vmul.f32 %v3587, %v4412
  %v4464 = vmul.f32 %v3591, %v4412
  %v4465 = vmul.f32 %v3595, %v4412
  %v4466 = vmul.f32 %v3599, %v4412
  %v4467 = vmul.f32 %v3603, %v4412
  %v4468 = vmul.f32 %v3607, %v4412
  %v4469 = vmul.f32 %v3611, %v4412
  %v4470 = vmul.f32 %v3615, %v4412
  %v4471 = vmul.f32 %v3619, %v4412
  %v4472 = vmul.f32 %v3623, %v4412
  %v4473 = vmul.f32 %v3627, %v4412
  %v4474 = vmul.f32 %v3631, %v4412
  %v4475 = vmul.f32 %v3635, %v4412
  %v4476 = vmul.f32 %v3639, %v4412
  %v4477 = vmul.f32 %v3643, %v4412
  %v4478 = vmul.f32 %v3647, %v4412
  %v4479 = vmul.f32 %v3651, %v4412
  %v4480 = vmul.f32 %v3655, %v4412
  %v4481 = vmul.f32 %v3659, %v4412
  %v4482 = vmul.f32 %v3663, %v4412
  %v4483 = vmul.f32 %v3667, %v4412
  %v4484 = vmul.f32 %v3671, %v4412
  %v4485 = vmul.f32 %v3675, %v4412
  %v4486 = vmul.f32 %v3679, %v4412
  %v4487 = vmul.f32 %v3683, %v4412
  %v4488 = vmul.f32 %v3687, %v4412
  %v4489 = vmul.f32 %v3691, %v4412
  %v4490 = vmul.f32 %v3695, %v4412
  %v4491 = vmul.f32 %v3699, %v4412
  %v4492 = vmul.f32 %v3703, %v4412
  %v4493 = vmul.f32 %v3707, %v4412
  %v4494 = vmul.f32 %v3711, %v4412
  %v4495 = vmul.f32 %v3715, %v4412
  %v4496 = vmul.f32 %v3719, %v4412
  %v4497 = vmul.f32 %v3723, %v4412
  %v4498 = vmul.f32 %v3727, %v4412
  %v4499 = vmul.f32 %v3731, %v4412
  %v4500 = vmul.f32 %v3735, %v4412
  %v4501 = vmul.f32 %v3739, %v4412
  %v4502 = vmul.f32 %v3743, %v4412
  %v4503 = vmul.f32 %v3747, %v4412
  %v4504 = vmul.f32 %v3751, %v4412
  %v4505 = vmul.f32 %v3755, %v4412
  %v4506 = vmul.f32 %v3759, %v4412
  %v4507 = vmul.f32 %v3763, %v4412
  %v4508 = vmul.f32 %v3767, %v4412
  %v4509 = vmul.f32 %v3771, %v4412
  %v4510 = vmul.f32 %v3775, %v4412
  %v4511 = vmul.f32 %v3779, %v4412
  %v4512 = vmul.f32 %v3783, %v4412
  %v4513 = vmul.f32 %v3787, %v4412
  %v4514 = vmul.f32 %v3791, %v4412
  %v4515 = vmul.f32 %v3795, %v4412
  %v4516 = vmul.f32 %v3799, %v4412
  %v4517 = vmul.f32 %v3803, %v4412
  %v4518 = vmul.f32 %v3807, %v4412
  %v4519 = vmul.f32 %v3811, %v4412
  %v4520 = vmul.f32 %v3815, %v4412
  %v4521 = vmul.f32 %v3819, %v4412
  %v4522 = vmul.f32 %v3823, %v4412
  %v4523 = vmul.f32 %v3827, %v4412
  %v4524 = vmul.f32 %v3831, %v4412
  %v4525 = vmul.f32 %v3835, %v4412
  %v4526 = vmul.f32 %v3839, %v4412
  %v4527 = vmul.f32 %v3843, %v4412
  %v4528 = vmul.f32 %v3847, %v4412
  %v4529 = vmul.f32 %v3851, %v4412
  %v4530 = vmul.f32 %v3855, %v4412
  %v4531 = vmul.f32 %v3859, %v4412
  %v4532 = vmul.f32 %v3863, %v4412
  %v4533 = vmul.f32 %v3867, %v4412
  %v4534 = vmul.f32 %v3871, %v4412
  %v4535 = vmul.f32 %v3875, %v4412
  %v4536 = vmul.f32 %v3879, %v4412
  %v4537 = vmul.f32 %v3883, %v4412
  %v4538 = vmul.f32 %v3887, %v4412
  %v4539 = vmul.f32 %v3891, %v4412
  %v4540 = vmul.f32 %v3895, %v4412
  %v4541 = vmul.f32 %v3899, %v4412
  %v4542 = vmul.f32 %v3903, %v4412
  %v4543 = vmul.f32 %v3907, %v4412
  %v4544 = vmul.f32 %v3911, %v4412
  %v4545 = vmul.f32 %v3915, %v4412
  %v4546 = vmul.f32 %v3919, %v4412
  %v4547 = vmul.f32 %v3923, %v4412
  %v4548 = vmul.f32 %v3927, %v4412
  %v4549 = vmul.f32 %v3931, %v4412
  %v4550 = vmul.f32 %v3935, %v4412
  %v4551 = vmul.f32 %v3939, %v4412
  %v4552 = vmul.f32 %v3943, %v4412
  %v4553 = vmul.f32 %v3947, %v4412
  %v4554 = vmul.f32 %v3951, %v4412
  %v4555 = vmul.f32 %v3955, %v4412
  %v4556 = vmul.f32 %v3959, %v4412
  %v4557 = vmul.f32 %v3963, %v4412
  %v4558 = vmul.f32 %v3967, %v4412
  %v4559 = vmul.f32 %v3971, %v4412
  %v4560 = vmul.f32 %v3975, %v4412
  %v4561 = vmul.f32 %v3979, %v4412
  %v4562 = vmul.f32 %v3983, %v4412
  %v4563 = vmul.f32 %v3987, %v4412
  %v4564 = vmul.f32 %v3991, %v4412
  %v4565 = vmul.f32 %v3995, %v4412
  %v4566 = vmul.f32 %v3999, %v4412
  %v4567 = vmul.f32 %v4003, %v4412
  %v4568 = vmul.f32 %v4007, %v4412
  %v4569 = vmul.f32 %v4011, %v4412
  %v4570 = vmul.f32 %v4015, %v4412
  %v4571 = vmul.f32 %v4019, %v4412
  %v4572 = vmul.f32 %v4023, %v4412
  %v4573 = vmul.f32 %v4027, %v4412
  %v4574 = vmul.f32 %v4031, %v4412
  %v4575 = vmul.f32 %v4035, %v4412
  %v4576 = vmul.f32 %v4039, %v4412
  %v4577 = vmul.f32 %v4043, %v4412
  %v4578 = vmul.f32 %v4047, %v4412
  %v4579 = vmul.f32 %v4051, %v4412
  %v4580 = vmul.f32 %v4055, %v4412
  %v4581 = vmul.f32 %v4059, %v4412
  %v4582 = vmul.f32 %v4063, %v4412
  %v4583 = vmul.f32 %v4067, %v4412
  %v4584 = vmul.f32 %v4071, %v4412
  %v4585 = vmul.f32 %v4075, %v4412
  %v4586 = vmul.f32 %v4079, %v4412
  %v4587 = vmul.f32 %v4083, %v4412
  %v4588 = vmul.f32 %v4087, %v4412
  %v4589 = vmul.f32 %v4091, %v4412
  %v4590 = vmul.f32 %v4095, %v4412
  %v4591 = vmul.f32 %v4099, %v4412
  %v4592 = vmul.f32 %v4103, %v4412
  %v4593 = vmul.f32 %v4107, %v4412
  %v4594 = vmul.f32 %v4111, %v4412
  %v4595 = vmul.f32 %v4115, %v4412
  %v4596 = vmul.f32 %v4119, %v4412
  %v4597 = vmul.f32 %v4123, %v4412
  %v4598 = vmul.f32 %v4127, %v4412
  %v4599 = vmul.f32 %v4131, %v4412
  %v4600 = vmul.f32 %v4135, %v4412
  %v4601 = vmul.f32 %v4139, %v4412
  %v4602 = vmul.f32 %v4143, %v4412
  %v4603 = vmul.f32 %v4147, %v4412
  %v4604 = vmul.f32 %v4151, %v4412
  %v4605 = vmul.f32 %v4155, %v4412
  %v4606 = vmul.f32 %v4159, %v4412
  %v4607 = vmul.f32 %v4163, %v4412
  %v4608 = vmul.f32 %v4167, %v4412
  %v4609 = vmul.f32 %v4171, %v4412
  %v4610 = vmul.f32 %v4175, %v4412
  %v4611 = vmul.f32 %v4179, %v4412
  %v4612 = vmul.f32 %v4183, %v4412
  %v4613 = vmul.f32 %v4187, %v4412
  %v4614 = vmul.f32 %v4191, %v4412
  %v4615 = vmul.f32 %v4195, %v4412
  %v4616 = vmul.f32 %v4199, %v4412
  %v4617 = vmul.f32 %v4203, %v4412
  %v4618 = vmul.f32 %v4207, %v4412
  %v4619 = vmul.f32 %v4211, %v4412
  %v4620 = vmul.f32 %v4215, %v4412
  %v4621 = vmul.f32 %v4219, %v4412
  %v4622 = vmul.f32 %v4223, %v4412
  %v4623 = vmul.f32 %v4227, %v4412
  %v4624 = vmul.f32 %v4231, %v4412
  %v4625 = vmul.f32 %v4235, %v4412
  %v4626 = vmul.f32 %v4239, %v4412
  %v4627 = vmul.f32 %v4243, %v4412
  %v4628 = vmul.f32 %v4247, %v4412
  %v4629 = vmul.f32 %v4251, %v4412
  %v4630 = vmul.f32 %v4255, %v4412
  %v4631 = vmul.f32 %v4259, %v4412
  %v4632 = vmul.f32 %v4263, %v4412
  %v4633 = vmul.f32 %v4267, %v4412
  %v4634 = vmul.f32 %v4271, %v4412
  %v4635 = vmul.f32 %v4275, %v4412
  %v4636 = vmul.f32 %v4279, %v4412
  %v4637 = vmul.f32 %v4283, %v4412
  %v4638 = vmul.f32 %v4287, %v4412
  %v4639 = vmul.f32 %v4291, %v4412
  %v4640 = vmul.f32 %v4295, %v4412
  %v4641 = vmul.f32 %v4299, %v4412
  %v4642 = vmul.f32 %v4303, %v4412
  %v4643 = vmul.f32 %v4307, %v4412
  %v4644 = vmul.f32 %v4311, %v4412
  %v4645 = vmul.f32 %v4315, %v4412
  %v4646 = vmul.f32 %v4319, %v4412
  %v4647 = vmul.f32 %v4323, %v4412
  %v4648 = vmul.f32 %v4327, %v4412
  %v4649 = vmul.f32 %v4331, %v4412
  %v4650 = vmul.f32 %v4335, %v4412
  %v4651 = vmul.f32 %v4339, %v4412
  %v4652 = vmul.f32 %v4343, %v4412
  %v4653 = vmul.f32 %v4347, %v4412
  %v4654 = vmul.f32 %v4351, %v4412
  %v4655 = vmul.f32 %v4355, %v4412
  %v4656 = vmul.f32 %v4359, %v4412
  %v4657 = vmul.f32 %v4363, %v4412
  %v4658 = vmul.f32 %v4367, %v4412
  %v4659 = vmul.f32 %v4371, %v4412
  %v4660 = vmul.f32 %v4375, %v4412
  %v4661 = vmul.f32 %v4379, %v4412
  %v4662 = vmul.f32 %v4383, %v4412
  %v4663 = vmul.f32 %v4387, %v4412
  %v4664 = vmul.f32 %v4391, %v4412
  %v4665 = vmul.f32 %v4395, %v4412
  %v4666 = vmul.f32 %v4399, %v4412
  %v4667 = vmul.f32 %v4403, %v4412
  %v4668 = vmul.f32 %v4407, %v4412
  %v4669 = vadd.f32 %v3128, %v4413
  %v4670 = vadd.f32 %v3129, %v4414
  %v4671 = vadd.f32 %v3130, %v4415
  %v4672 = vadd.f32 %v3131, %v4416
  %v4673 = vadd.f32 %v3132, %v4417
  %v4674 = vadd.f32 %v3133, %v4418
  %v4675 = vadd.f32 %v3134, %v4419
  %v4676 = vadd.f32 %v3135, %v4420
  %v4677 = vadd.f32 %v3136, %v4421
  %v4678 = vadd.f32 %v3137, %v4422
  %v4679 = vadd.f32 %v3138, %v4423
  %v4680 = vadd.f32 %v3139, %v4424
  %v4681 = vadd.f32 %v3140, %v4425
  %v4682 = vadd.f32 %v3141, %v4426
  %v4683 = vadd.f32 %v3142, %v4427
  %v4684 = vadd.f32 %v3143, %v4428
  %v4685 = vadd.f32 %v3144, %v4429
  %v4686 = vadd.f32 %v3145, %v4430
  %v4687 = vadd.f32 %v3146, %v4431
  %v4688 = vadd.f32 %v3147, %v4432
  %v4689 = vadd.f32 %v3148, %v4433
  %v4690 = vadd.f32 %v3149, %v4434
  %v4691 = vadd.f32 %v3150, %v4435
  %v4692 = vadd.f32 %v3151, %v4436
  %v4693 = vadd.f32 %v3152, %v4437
  %v4694 = vadd.f32 %v3153, %v4438
  %v4695 = vadd.f32 %v3154, %v4439
  %v4696 = vadd.f32 %v3155, %v4440
  %v4697 = vadd.f32 %v3156, %v4441
  %v4698 = vadd.f32 %v3157, %v4442
  %v4699 = vadd.f32 %v3158, %v4443
  %v4700 = vadd.f32 %v3159, %v4444
  %v4701 = vadd.f32 %v3160, %v4445
  %v4702 = vadd.f32 %v3161, %v4446
  %v4703 = vadd.f32 %v3162, %v4447
  %v4704 = vadd.f32 %v3163, %v4448
  %v4705 = vadd.f32 %v3164, %v4449
  %v4706 = vadd.f32 %v3165, %v4450
  %v4707 = vadd.f32 %v3166, %v4451
  %v4708 = vadd.f32 %v3167, %v4452
  %v4709 = vadd.f32 %v3168, %v4453
  %v4710 = vadd.f32 %v3169, %v4454
  %v4711 = vadd.f32 %v3170, %v4455
  %v4712 = vadd.f32 %v3171, %v4456
  %v4713 = vadd.f32 %v3172, %v4457
  %v4714 = vadd.f32 %v3173, %v4458
  %v4715 = vadd.f32 %v3174, %v4459
  %v4716 = vadd.f32 %v3175, %v4460
  %v4717 = vadd.f32 %v3176, %v4461
  %v4718 = vadd.f32 %v3177, %v4462
  %v4719 = vadd.f32 %v3178, %v4463
  %v4720 = vadd.f32 %v3179, %v4464
  %v4721 = vadd.f32 %v3180, %v4465
  %v4722 = vadd.f32 %v3181, %v4466
  %v4723 = vadd.f32 %v3182, %v4467
  %v4724 = vadd.f32 %v3183, %v4468
  %v4725 = vadd.f32 %v3184, %v4469
  %v4726 = vadd.f32 %v3185, %v4470
  %v4727 = vadd.f32 %v3186, %v4471
  %v4728 = vadd.f32 %v3187, %v4472
  %v4729 = vadd.f32 %v3188, %v4473
  %v4730 = vadd.f32 %v3189, %v4474
  %v4731 = vadd.f32 %v3190, %v4475
  %v4732 = vadd.f32 %v3191, %v4476
  %v4733 = vadd.f32 %v3192, %v4477
  %v4734 = vadd.f32 %v3193, %v4478
  %v4735 = vadd.f32 %v3194, %v4479
  %v4736 = vadd.f32 %v3195, %v4480
  %v4737 = vadd.f32 %v3196, %v4481
  %v4738 = vadd.f32 %v3197, %v4482
  %v4739 = vadd.f32 %v3198, %v4483
  %v4740 = vadd.f32 %v3199, %v4484
  %v4741 = vadd.f32 %v3200, %v4485
  %v4742 = vadd.f32 %v3201, %v4486
  %v4743 = vadd.f32 %v3202, %v4487
  %v4744 = vadd.f32 %v3203, %v4488
  %v4745 = vadd.f32 %v3204, %v4489
  %v4746 = vadd.f32 %v3205, %v4490
  %v4747 = vadd.f32 %v3206, %v4491
  %v4748 = vadd.f32 %v3207, %v4492
  %v4749 = vadd.f32 %v3208, %v4493
  %v4750 = vadd.f32 %v3209, %v4494
  %v4751 = vadd.f32 %v3210, %v4495
  %v4752 = vadd.f32 %v3211, %v4496
  %v4753 = vadd.f32 %v3212, %v4497
  %v4754 = vadd.f32 %v3213, %v4498
  %v4755 = vadd.f32 %v3214, %v4499
  %v4756 = vadd.f32 %v3215, %v4500
  %v4757 = vadd.f32 %v3216, %v4501
  %v4758 = vadd.f32 %v3217, %v4502
  %v4759 = vadd.f32 %v3218, %v4503
  %v4760 = vadd.f32 %v3219, %v4504
  %v4761 = vadd.f32 %v3220, %v4505
  %v4762 = vadd.f32 %v3221, %v4506
  %v4763 = vadd.f32 %v3222, %v4507
  %v4764 = vadd.f32 %v3223, %v4508
  %v4765 = vadd.f32 %v3224, %v4509
  %v4766 = vadd.f32 %v3225, %v4510
  %v4767 = vadd.f32 %v3226, %v4511
  %v4768 = vadd.f32 %v3227, %v4512
  %v4769 = vadd.f32 %v3228, %v4513
  %v4770 = vadd.f32 %v3229, %v4514
  %v4771 = vadd.f32 %v3230, %v4515
  %v4772 = vadd.f32 %v3231, %v4516
  %v4773 = vadd.f32 %v3232, %v4517
  %v4774 = vadd.f32 %v3233, %v4518
  %v4775 = vadd.f32 %v3234, %v4519
  %v4776 = vadd.f32 %v3235, %v4520
  %v4777 = vadd.f32 %v3236, %v4521
  %v4778 = vadd.f32 %v3237, %v4522
  %v4779 = vadd.f32 %v3238, %v4523
  %v4780 = vadd.f32 %v3239, %v4524
  %v4781 = vadd.f32 %v3240, %v4525
  %v4782 = vadd.f32 %v3241, %v4526
  %v4783 = vadd.f32 %v3242, %v4527
  %v4784 = vadd.f32 %v3243, %v4528
  %v4785 = vadd.f32 %v3244, %v4529
  %v4786 = vadd.f32 %v3245, %v4530
  %v4787 = vadd.f32 %v3246, %v4531
  %v4788 = vadd.f32 %v3247, %v4532
  %v4789 = vadd.f32 %v3248, %v4533
  %v4790 = vadd.f32 %v3249, %v4534
  %v4791 = vadd.f32 %v3250, %v4535
  %v4792 = vadd.f32 %v3251, %v4536
  %v4793 = vadd.f32 %v3252, %v4537
  %v4794 = vadd.f32 %v3253, %v4538
  %v4795 = vadd.f32 %v3254, %v4539
  %v4796 = vadd.f32 %v3255, %v4540
  %v4797 = vadd.f32 %v3256, %v4541
  %v4798 = vadd.f32 %v3257, %v4542
  %v4799 = vadd.f32 %v3258, %v4543
  %v4800 = vadd.f32 %v3259, %v4544
  %v4801 = vadd.f32 %v3260, %v4545
  %v4802 = vadd.f32 %v3261, %v4546
  %v4803 = vadd.f32 %v3262, %v4547
  %v4804 = vadd.f32 %v3263, %v4548
  %v4805 = vadd.f32 %v3264, %v4549
  %v4806 = vadd.f32 %v3265, %v4550
  %v4807 = vadd.f32 %v3266, %v4551
  %v4808 = vadd.f32 %v3267, %v4552
  %v4809 = vadd.f32 %v3268, %v4553
  %v4810 = vadd.f32 %v3269, %v4554
  %v4811 = vadd.f32 %v3270, %v4555
  %v4812 = vadd.f32 %v3271, %v4556
  %v4813 = vadd.f32 %v3272, %v4557
  %v4814 = vadd.f32 %v3273, %v4558
  %v4815 = vadd.f32 %v3274, %v4559
  %v4816 = vadd.f32 %v3275, %v4560
  %v4817 = vadd.f32 %v3276, %v4561
  %v4818 = vadd.f32 %v3277, %v4562
  %v4819 = vadd.f32 %v3278, %v4563
  %v4820 = vadd.f32 %v3279, %v4564
  %v4821 = vadd.f32 %v3280, %v4565
  %v4822 = vadd.f32 %v3281, %v4566
  %v4823 = vadd.f32 %v3282, %v4567
  %v4824 = vadd.f32 %v3283, %v4568
  %v4825 = vadd.f32 %v3284, %v4569
  %v4826 = vadd.f32 %v3285, %v4570
  %v4827 = vadd.f32 %v3286, %v4571
  %v4828 = vadd.f32 %v3287, %v4572
  %v4829 = vadd.f32 %v3288, %v4573
  %v4830 = vadd.f32 %v3289, %v4574
  %v4831 = vadd.f32 %v3290, %v4575
  %v4832 = vadd.f32 %v3291, %v4576
  %v4833 = vadd.f32 %v3292, %v4577
  %v4834 = vadd.f32 %v3293, %v4578
  %v4835 = vadd.f32 %v3294, %v4579
  %v4836 = vadd.f32 %v3295, %v4580
  %v4837 = vadd.f32 %v3296, %v4581
  %v4838 = vadd.f32 %v3297, %v4582
  %v4839 = vadd.f32 %v3298, %v4583
  %v4840 = vadd.f32 %v3299, %v4584
  %v4841 = vadd.f32 %v3300, %v4585
  %v4842 = vadd.f32 %v3301, %v4586
  %v4843 = vadd.f32 %v3302, %v4587
  %v4844 = vadd.f32 %v3303, %v4588
  %v4845 = vadd.f32 %v3304, %v4589
  %v4846 = vadd.f32 %v3305, %v4590
  %v4847 = vadd.f32 %v3306, %v4591
  %v4848 = vadd.f32 %v3307, %v4592
  %v4849 = vadd.f32 %v3308, %v4593
  %v4850 = vadd.f32 %v3309, %v4594
  %v4851 = vadd.f32 %v3310, %v4595
  %v4852 = vadd.f32 %v3311, %v4596
  %v4853 = vadd.f32 %v3312, %v4597
  %v4854 = vadd.f32 %v3313, %v4598
  %v4855 = vadd.f32 %v3314, %v4599
  %v4856 = vadd.f32 %v3315, %v4600
  %v4857 = vadd.f32 %v3316, %v4601
  %v4858 = vadd.f32 %v3317, %v4602
  %v4859 = vadd.f32 %v3318, %v4603
  %v4860 = vadd.f32 %v3319, %v4604
  %v4861 = vadd.f32 %v3320, %v4605
  %v4862 = vadd.f32 %v3321, %v4606
  %v4863 = vadd.f32 %v3322, %v4607
  %v4864 = vadd.f32 %v3323, %v4608
  %v4865 = vadd.f32 %v3324, %v4609
  %v4866 = vadd.f32 %v3325, %v4610
  %v4867 = vadd.f32 %v3326, %v4611
  %v4868 = vadd.f32 %v3327, %v4612
  %v4869 = vadd.f32 %v3328, %v4613
  %v4870 = vadd.f32 %v3329, %v4614
  %v4871 = vadd.f32 %v3330, %v4615
  %v4872 = vadd.f32 %v3331, %v4616
  %v4873 = vadd.f32 %v3332, %v4617
  %v4874 = vadd.f32 %v3333, %v4618
  %v4875 = vadd.f32 %v3334, %v4619
  %v4876 = vadd.f32 %v3335, %v4620
  %v4877 = vadd.f32 %v3336, %v4621
  %v4878 = vadd.f32 %v3337, %v4622
  %v4879 = vadd.f32 %v3338, %v4623
  %v4880 = vadd.f32 %v3339, %v4624
  %v4881 = vadd.f32 %v3340, %v4625
  %v4882 = vadd.f32 %v3341, %v4626
  %v4883 = vadd.f32 %v3342, %v4627
  %v4884 = vadd.f32 %v3343, %v4628
  %v4885 = vadd.f32 %v3344, %v4629
  %v4886 = vadd.f32 %v3345, %v4630
  %v4887 = vadd.f32 %v3346, %v4631
  %v4888 = vadd.f32 %v3347, %v4632
  %v4889 = vadd.f32 %v3348, %v4633
  %v4890 = vadd.f32 %v3349, %v4634
  %v4891 = vadd.f32 %v3350, %v4635
  %v4892 = vadd.f32 %v3351, %v4636
  %v4893 = vadd.f32 %v3352, %v4637
  %v4894 = vadd.f32 %v3353, %v4638
  %v4895 = vadd.f32 %v3354, %v4639
  %v4896 = vadd.f32 %v3355, %v4640
  %v4897 = vadd.f32 %v3356, %v4641
  %v4898 = vadd.f32 %v3357, %v4642
  %v4899 = vadd.f32 %v3358, %v4643
  %v4900 = vadd.f32 %v3359, %v4644
  %v4901 = vadd.f32 %v3360, %v4645
  %v4902 = vadd.f32 %v3361, %v4646
  %v4903 = vadd.f32 %v3362, %v4647
  %v4904 = vadd.f32 %v3363, %v4648
  %v4905 = vadd.f32 %v3364, %v4649
  %v4906 = vadd.f32 %v3365, %v4650
  %v4907 = vadd.f32 %v3366, %v4651
  %v4908 = vadd.f32 %v3367, %v4652
  %v4909 = vadd.f32 %v3368, %v4653
  %v4910 = vadd.f32 %v3369, %v4654
  %v4911 = vadd.f32 %v3370, %v4655
  %v4912 = vadd.f32 %v3371, %v4656
  %v4913 = vadd.f32 %v3372, %v4657
  %v4914 = vadd.f32 %v3373, %v4658
  %v4915 = vadd.f32 %v3374, %v4659
  %v4916 = vadd.f32 %v3375, %v4660
  %v4917 = vadd.f32 %v3376, %v4661
  %v4918 = vadd.f32 %v3377, %v4662
  %v4919 = vadd.f32 %v3378, %v4663
  %v4920 = vadd.f32 %v3379, %v4664
  %v4921 = vadd.f32 %v3380, %v4665
  %v4922 = vadd.f32 %v3381, %v4666
  %v4923 = vadd.f32 %v3382, %v4667
  %v4924 = vadd.f32 %v3383, %v4668
  %v4925 = vld [vmem:[%s2] sm:$0x1]
  %v4927 = vlaneseq
  %v4928 = vshrl.u32 %v4927, 7
  %v4929 = vsub.s32 0, %v4928
  %v4930 = vrot.slane %v4925, %v4929
  %v4932 = vadd.f32 %v4669, %v4930
  %v4933 = vadd.f32 %v4670, %v4930
  %v4934 = vadd.f32 %v4671, %v4930
  %v4935 = vadd.f32 %v4672, %v4930
  %v4936 = vadd.f32 %v4673, %v4930
  %v4937 = vadd.f32 %v4674, %v4930
  %v4938 = vadd.f32 %v4675, %v4930
  %v4939 = vadd.f32 %v4676, %v4930
  %v4940 = vadd.f32 %v4677, %v4930
  %v4941 = vadd.f32 %v4678, %v4930
  %v4942 = vadd.f32 %v4679, %v4930
  %v4943 = vadd.f32 %v4680, %v4930
  %v4944 = vadd.f32 %v4681, %v4930
  %v4945 = vadd.f32 %v4682, %v4930
  %v4946 = vadd.f32 %v4683, %v4930
  %v4947 = vadd.f32 %v4684, %v4930
  %v4948 = vadd.f32 %v4685, %v4930
  %v4949 = vadd.f32 %v4686, %v4930
  %v4950 = vadd.f32 %v4687, %v4930
  %v4951 = vadd.f32 %v4688, %v4930
  %v4952 = vadd.f32 %v4689, %v4930
  %v4953 = vadd.f32 %v4690, %v4930
  %v4954 = vadd.f32 %v4691, %v4930
  %v4955 = vadd.f32 %v4692, %v4930
  %v4956 = vadd.f32 %v4693, %v4930
  %v4957 = vadd.f32 %v4694, %v4930
  %v4958 = vadd.f32 %v4695, %v4930
  %v4959 = vadd.f32 %v4696, %v4930
  %v4960 = vadd.f32 %v4697, %v4930
  %v4961 = vadd.f32 %v4698, %v4930
  %v4962 = vadd.f32 %v4699, %v4930
  %v4963 = vadd.f32 %v4700, %v4930
  %v4964 = vadd.f32 %v4701, %v4930
  %v4965 = vadd.f32 %v4702, %v4930
  %v4966 = vadd.f32 %v4703, %v4930
  %v4967 = vadd.f32 %v4704, %v4930
  %v4968 = vadd.f32 %v4705, %v4930
  %v4969 = vadd.f32 %v4706, %v4930
  %v4970 = vadd.f32 %v4707, %v4930
  %v4971 = vadd.f32 %v4708, %v4930
  %v4972 = vadd.f32 %v4709, %v4930
  %v4973 = vadd.f32 %v4710, %v4930
  %v4974 = vadd.f32 %v4711, %v4930
  %v4975 = vadd.f32 %v4712, %v4930
  %v4976 = vadd.f32 %v4713, %v4930
  %v4977 = vadd.f32 %v4714, %v4930
  %v4978 = vadd.f32 %v4715, %v4930
  %v4979 = vadd.f32 %v4716, %v4930
  %v4980 = vadd.f32 %v4717, %v4930
  %v4981 = vadd.f32 %v4718, %v4930
  %v4982 = vadd.f32 %v4719, %v4930
  %v4983 = vadd.f32 %v4720, %v4930
  %v4984 = vadd.f32 %v4721, %v4930
  %v4985 = vadd.f32 %v4722, %v4930
  %v4986 = vadd.f32 %v4723, %v4930
  %v4987 = vadd.f32 %v4724, %v4930
  %v4988 = vadd.f32 %v4725, %v4930
  %v4989 = vadd.f32 %v4726, %v4930
  %v4990 = vadd.f32 %v4727, %v4930
  %v4991 = vadd.f32 %v4728, %v4930
  %v4992 = vadd.f32 %v4729, %v4930
  %v4993 = vadd.f32 %v4730, %v4930
  %v4994 = vadd.f32 %v4731, %v4930
  %v4995 = vadd.f32 %v4732, %v4930
  %v4996 = vadd.f32 %v4733, %v4930
  %v4997 = vadd.f32 %v4734, %v4930
  %v4998 = vadd.f32 %v4735, %v4930
  %v4999 = vadd.f32 %v4736, %v4930
  %v5000 = vadd.f32 %v4737, %v4930
  %v5001 = vadd.f32 %v4738, %v4930
  %v5002 = vadd.f32 %v4739, %v4930
  %v5003 = vadd.f32 %v4740, %v4930
  %v5004 = vadd.f32 %v4741, %v4930
  %v5005 = vadd.f32 %v4742, %v4930
  %v5006 = vadd.f32 %v4743, %v4930
  %v5007 = vadd.f32 %v4744, %v4930
  %v5008 = vadd.f32 %v4745, %v4930
  %v5009 = vadd.f32 %v4746, %v4930
  %v5010 = vadd.f32 %v4747, %v4930
  %v5011 = vadd.f32 %v4748, %v4930
  %v5012 = vadd.f32 %v4749, %v4930
  %v5013 = vadd.f32 %v4750, %v4930
  %v5014 = vadd.f32 %v4751, %v4930
  %v5015 = vadd.f32 %v4752, %v4930
  %v5016 = vadd.f32 %v4753, %v4930
  %v5017 = vadd.f32 %v4754, %v4930
  %v5018 = vadd.f32 %v4755, %v4930
  %v5019 = vadd.f32 %v4756, %v4930
  %v5020 = vadd.f32 %v4757, %v4930
  %v5021 = vadd.f32 %v4758, %v4930
  %v5022 = vadd.f32 %v4759, %v4930
  %v5023 = vadd.f32 %v4760, %v4930
  %v5024 = vadd.f32 %v4761, %v4930
  %v5025 = vadd.f32 %v4762, %v4930
  %v5026 = vadd.f32 %v4763, %v4930
  %v5027 = vadd.f32 %v4764, %v4930
  %v5028 = vadd.f32 %v4765, %v4930
  %v5029 = vadd.f32 %v4766, %v4930
  %v5030 = vadd.f32 %v4767, %v4930
  %v5031 = vadd.f32 %v4768, %v4930
  %v5032 = vadd.f32 %v4769, %v4930
  %v5033 = vadd.f32 %v4770, %v4930
  %v5034 = vadd.f32 %v4771, %v4930
  %v5035 = vadd.f32 %v4772, %v4930
  %v5036 = vadd.f32 %v4773, %v4930
  %v5037 = vadd.f32 %v4774, %v4930
  %v5038 = vadd.f32 %v4775, %v4930
  %v5039 = vadd.f32 %v4776, %v4930
  %v5040 = vadd.f32 %v4777, %v4930
  %v5041 = vadd.f32 %v4778, %v4930
  %v5042 = vadd.f32 %v4779, %v4930
  %v5043 = vadd.f32 %v4780, %v4930
  %v5044 = vadd.f32 %v4781, %v4930
  %v5045 = vadd.f32 %v4782, %v4930
  %v5046 = vadd.f32 %v4783, %v4930
  %v5047 = vadd.f32 %v4784, %v4930
  %v5048 = vadd.f32 %v4785, %v4930
  %v5049 = vadd.f32 %v4786, %v4930
  %v5050 = vadd.f32 %v4787, %v4930
  %v5051 = vadd.f32 %v4788, %v4930
  %v5052 = vadd.f32 %v4789, %v4930
  %v5053 = vadd.f32 %v4790, %v4930
  %v5054 = vadd.f32 %v4791, %v4930
  %v5055 = vadd.f32 %v4792, %v4930
  %v5056 = vadd.f32 %v4793, %v4930
  %v5057 = vadd.f32 %v4794, %v4930
  %v5058 = vadd.f32 %v4795, %v4930
  %v5059 = vadd.f32 %v4796, %v4930
  %v5060 = vadd.f32 %v4797, %v4930
  %v5061 = vadd.f32 %v4798, %v4930
  %v5062 = vadd.f32 %v4799, %v4930
  %v5063 = vadd.f32 %v4800, %v4930
  %v5064 = vadd.f32 %v4801, %v4930
  %v5065 = vadd.f32 %v4802, %v4930
  %v5066 = vadd.f32 %v4803, %v4930
  %v5067 = vadd.f32 %v4804, %v4930
  %v5068 = vadd.f32 %v4805, %v4930
  %v5069 = vadd.f32 %v4806, %v4930
  %v5070 = vadd.f32 %v4807, %v4930
  %v5071 = vadd.f32 %v4808, %v4930
  %v5072 = vadd.f32 %v4809, %v4930
  %v5073 = vadd.f32 %v4810, %v4930
  %v5074 = vadd.f32 %v4811, %v4930
  %v5075 = vadd.f32 %v4812, %v4930
  %v5076 = vadd.f32 %v4813, %v4930
  %v5077 = vadd.f32 %v4814, %v4930
  %v5078 = vadd.f32 %v4815, %v4930
  %v5079 = vadd.f32 %v4816, %v4930
  %v5080 = vadd.f32 %v4817, %v4930
  %v5081 = vadd.f32 %v4818, %v4930
  %v5082 = vadd.f32 %v4819, %v4930
  %v5083 = vadd.f32 %v4820, %v4930
  %v5084 = vadd.f32 %v4821, %v4930
  %v5085 = vadd.f32 %v4822, %v4930
  %v5086 = vadd.f32 %v4823, %v4930
  %v5087 = vadd.f32 %v4824, %v4930
  %v5088 = vadd.f32 %v4825, %v4930
  %v5089 = vadd.f32 %v4826, %v4930
  %v5090 = vadd.f32 %v4827, %v4930
  %v5091 = vadd.f32 %v4828, %v4930
  %v5092 = vadd.f32 %v4829, %v4930
  %v5093 = vadd.f32 %v4830, %v4930
  %v5094 = vadd.f32 %v4831, %v4930
  %v5095 = vadd.f32 %v4832, %v4930
  %v5096 = vadd.f32 %v4833, %v4930
  %v5097 = vadd.f32 %v4834, %v4930
  %v5098 = vadd.f32 %v4835, %v4930
  %v5099 = vadd.f32 %v4836, %v4930
  %v5100 = vadd.f32 %v4837, %v4930
  %v5101 = vadd.f32 %v4838, %v4930
  %v5102 = vadd.f32 %v4839, %v4930
  %v5103 = vadd.f32 %v4840, %v4930
  %v5104 = vadd.f32 %v4841, %v4930
  %v5105 = vadd.f32 %v4842, %v4930
  %v5106 = vadd.f32 %v4843, %v4930
  %v5107 = vadd.f32 %v4844, %v4930
  %v5108 = vadd.f32 %v4845, %v4930
  %v5109 = vadd.f32 %v4846, %v4930
  %v5110 = vadd.f32 %v4847, %v4930
  %v5111 = vadd.f32 %v4848, %v4930
  %v5112 = vadd.f32 %v4849, %v4930
  %v5113 = vadd.f32 %v4850, %v4930
  %v5114 = vadd.f32 %v4851, %v4930
  %v5115 = vadd.f32 %v4852, %v4930
  %v5116 = vadd.f32 %v4853, %v4930
  %v5117 = vadd.f32 %v4854, %v4930
  %v5118 = vadd.f32 %v4855, %v4930
  %v5119 = vadd.f32 %v4856, %v4930
  %v5120 = vadd.f32 %v4857, %v4930
  %v5121 = vadd.f32 %v4858, %v4930
  %v5122 = vadd.f32 %v4859, %v4930
  %v5123 = vadd.f32 %v4860, %v4930
  %v5124 = vadd.f32 %v4861, %v4930
  %v5125 = vadd.f32 %v4862, %v4930
  %v5126 = vadd.f32 %v4863, %v4930
  %v5127 = vadd.f32 %v4864, %v4930
  %v5128 = vadd.f32 %v4865, %v4930
  %v5129 = vadd.f32 %v4866, %v4930
  %v5130 = vadd.f32 %v4867, %v4930
  %v5131 = vadd.f32 %v4868, %v4930
  %v5132 = vadd.f32 %v4869, %v4930
  %v5133 = vadd.f32 %v4870, %v4930
  %v5134 = vadd.f32 %v4871, %v4930
  %v5135 = vadd.f32 %v4872, %v4930
  %v5136 = vadd.f32 %v4873, %v4930
  %v5137 = vadd.f32 %v4874, %v4930
  %v5138 = vadd.f32 %v4875, %v4930
  %v5139 = vadd.f32 %v4876, %v4930
  %v5140 = vadd.f32 %v4877, %v4930
  %v5141 = vadd.f32 %v4878, %v4930
  %v5142 = vadd.f32 %v4879, %v4930
  %v5143 = vadd.f32 %v4880, %v4930
  %v5144 = vadd.f32 %v4881, %v4930
  %v5145 = vadd.f32 %v4882, %v4930
  %v5146 = vadd.f32 %v4883, %v4930
  %v5147 = vadd.f32 %v4884, %v4930
  %v5148 = vadd.f32 %v4885, %v4930
  %v5149 = vadd.f32 %v4886, %v4930
  %v5150 = vadd.f32 %v4887, %v4930
  %v5151 = vadd.f32 %v4888, %v4930
  %v5152 = vadd.f32 %v4889, %v4930
  %v5153 = vadd.f32 %v4890, %v4930
  %v5154 = vadd.f32 %v4891, %v4930
  %v5155 = vadd.f32 %v4892, %v4930
  %v5156 = vadd.f32 %v4893, %v4930
  %v5157 = vadd.f32 %v4894, %v4930
  %v5158 = vadd.f32 %v4895, %v4930
  %v5159 = vadd.f32 %v4896, %v4930
  %v5160 = vadd.f32 %v4897, %v4930
  %v5161 = vadd.f32 %v4898, %v4930
  %v5162 = vadd.f32 %v4899, %v4930
  %v5163 = vadd.f32 %v4900, %v4930
  %v5164 = vadd.f32 %v4901, %v4930
  %v5165 = vadd.f32 %v4902, %v4930
  %v5166 = vadd.f32 %v4903, %v4930
  %v5167 = vadd.f32 %v4904, %v4930
  %v5168 = vadd.f32 %v4905, %v4930
  %v5169 = vadd.f32 %v4906, %v4930
  %v5170 = vadd.f32 %v4907, %v4930
  %v5171 = vadd.f32 %v4908, %v4930
  %v5172 = vadd.f32 %v4909, %v4930
  %v5173 = vadd.f32 %v4910, %v4930
  %v5174 = vadd.f32 %v4911, %v4930
  %v5175 = vadd.f32 %v4912, %v4930
  %v5176 = vadd.f32 %v4913, %v4930
  %v5177 = vadd.f32 %v4914, %v4930
  %v5178 = vadd.f32 %v4915, %v4930
  %v5179 = vadd.f32 %v4916, %v4930
  %v5180 = vadd.f32 %v4917, %v4930
  %v5181 = vadd.f32 %v4918, %v4930
  %v5182 = vadd.f32 %v4919, %v4930
  %v5183 = vadd.f32 %v4920, %v4930
  %v5184 = vadd.f32 %v4921, %v4930
  %v5185 = vadd.f32 %v4922, %v4930
  %v5186 = vadd.f32 %v4923, %v4930
  %v5187 = vadd.f32 %v4924, %v4930
  %v5188 = vmax.f32 %v4932, 0.0
  %v5189 = vmax.f32 %v4933, 0.0
  %v5190 = vmax.f32 %v4934, 0.0
  %v5191 = vmax.f32 %v4935, 0.0
  %v5192 = vmax.f32 %v4936, 0.0
  %v5193 = vmax.f32 %v4937, 0.0
  %v5194 = vmax.f32 %v4938, 0.0
  %v5195 = vmax.f32 %v4939, 0.0
  %v5196 = vmax.f32 %v4940, 0.0
  %v5197 = vmax.f32 %v4941, 0.0
  %v5198 = vmax.f32 %v4942, 0.0
  %v5199 = vmax.f32 %v4943, 0.0
  %v5200 = vmax.f32 %v4944, 0.0
  %v5201 = vmax.f32 %v4945, 0.0
  %v5202 = vmax.f32 %v4946, 0.0
  %v5203 = vmax.f32 %v4947, 0.0
  %v5204 = vmax.f32 %v4948, 0.0
  %v5205 = vmax.f32 %v4949, 0.0
  %v5206 = vmax.f32 %v4950, 0.0
  %v5207 = vmax.f32 %v4951, 0.0
  %v5208 = vmax.f32 %v4952, 0.0
  %v5209 = vmax.f32 %v4953, 0.0
  %v5210 = vmax.f32 %v4954, 0.0
  %v5211 = vmax.f32 %v4955, 0.0
  %v5212 = vmax.f32 %v4956, 0.0
  %v5213 = vmax.f32 %v4957, 0.0
  %v5214 = vmax.f32 %v4958, 0.0
  %v5215 = vmax.f32 %v4959, 0.0
  %v5216 = vmax.f32 %v4960, 0.0
  %v5217 = vmax.f32 %v4961, 0.0
  %v5218 = vmax.f32 %v4962, 0.0
  %v5219 = vmax.f32 %v4963, 0.0
  %v5220 = vmax.f32 %v4964, 0.0
  %v5221 = vmax.f32 %v4965, 0.0
  %v5222 = vmax.f32 %v4966, 0.0
  %v5223 = vmax.f32 %v4967, 0.0
  %v5224 = vmax.f32 %v4968, 0.0
  %v5225 = vmax.f32 %v4969, 0.0
  %v5226 = vmax.f32 %v4970, 0.0
  %v5227 = vmax.f32 %v4971, 0.0
  %v5228 = vmax.f32 %v4972, 0.0
  %v5229 = vmax.f32 %v4973, 0.0
  %v5230 = vmax.f32 %v4974, 0.0
  %v5231 = vmax.f32 %v4975, 0.0
  %v5232 = vmax.f32 %v4976, 0.0
  %v5233 = vmax.f32 %v4977, 0.0
  %v5234 = vmax.f32 %v4978, 0.0
  %v5235 = vmax.f32 %v4979, 0.0
  %v5236 = vmax.f32 %v4980, 0.0
  %v5237 = vmax.f32 %v4981, 0.0
  %v5238 = vmax.f32 %v4982, 0.0
  %v5239 = vmax.f32 %v4983, 0.0
  %v5240 = vmax.f32 %v4984, 0.0
  %v5241 = vmax.f32 %v4985, 0.0
  %v5242 = vmax.f32 %v4986, 0.0
  %v5243 = vmax.f32 %v4987, 0.0
  %v5244 = vmax.f32 %v4988, 0.0
  %v5245 = vmax.f32 %v4989, 0.0
  %v5246 = vmax.f32 %v4990, 0.0
  %v5247 = vmax.f32 %v4991, 0.0
  %v5248 = vmax.f32 %v4992, 0.0
  %v5249 = vmax.f32 %v4993, 0.0
  %v5250 = vmax.f32 %v4994, 0.0
  %v5251 = vmax.f32 %v4995, 0.0
  %v5252 = vmax.f32 %v4996, 0.0
  %v5253 = vmax.f32 %v4997, 0.0
  %v5254 = vmax.f32 %v4998, 0.0
  %v5255 = vmax.f32 %v4999, 0.0
  %v5256 = vmax.f32 %v5000, 0.0
  %v5257 = vmax.f32 %v5001, 0.0
  %v5258 = vmax.f32 %v5002, 0.0
  %v5259 = vmax.f32 %v5003, 0.0
  %v5260 = vmax.f32 %v5004, 0.0
  %v5261 = vmax.f32 %v5005, 0.0
  %v5262 = vmax.f32 %v5006, 0.0
  %v5263 = vmax.f32 %v5007, 0.0
  %v5264 = vmax.f32 %v5008, 0.0
  %v5265 = vmax.f32 %v5009, 0.0
  %v5266 = vmax.f32 %v5010, 0.0
  %v5267 = vmax.f32 %v5011, 0.0
  %v5268 = vmax.f32 %v5012, 0.0
  %v5269 = vmax.f32 %v5013, 0.0
  %v5270 = vmax.f32 %v5014, 0.0
  %v5271 = vmax.f32 %v5015, 0.0
  %v5272 = vmax.f32 %v5016, 0.0
  %v5273 = vmax.f32 %v5017, 0.0
  %v5274 = vmax.f32 %v5018, 0.0
  %v5275 = vmax.f32 %v5019, 0.0
  %v5276 = vmax.f32 %v5020, 0.0
  %v5277 = vmax.f32 %v5021, 0.0
  %v5278 = vmax.f32 %v5022, 0.0
  %v5279 = vmax.f32 %v5023, 0.0
  %v5280 = vmax.f32 %v5024, 0.0
  %v5281 = vmax.f32 %v5025, 0.0
  %v5282 = vmax.f32 %v5026, 0.0
  %v5283 = vmax.f32 %v5027, 0.0
  %v5284 = vmax.f32 %v5028, 0.0
  %v5285 = vmax.f32 %v5029, 0.0
  %v5286 = vmax.f32 %v5030, 0.0
  %v5287 = vmax.f32 %v5031, 0.0
  %v5288 = vmax.f32 %v5032, 0.0
  %v5289 = vmax.f32 %v5033, 0.0
  %v5290 = vmax.f32 %v5034, 0.0
  %v5291 = vmax.f32 %v5035, 0.0
  %v5292 = vmax.f32 %v5036, 0.0
  %v5293 = vmax.f32 %v5037, 0.0
  %v5294 = vmax.f32 %v5038, 0.0
  %v5295 = vmax.f32 %v5039, 0.0
  %v5296 = vmax.f32 %v5040, 0.0
  %v5297 = vmax.f32 %v5041, 0.0
  %v5298 = vmax.f32 %v5042, 0.0
  %v5299 = vmax.f32 %v5043, 0.0
  %v5300 = vmax.f32 %v5044, 0.0
  %v5301 = vmax.f32 %v5045, 0.0
  %v5302 = vmax.f32 %v5046, 0.0
  %v5303 = vmax.f32 %v5047, 0.0
  %v5304 = vmax.f32 %v5048, 0.0
  %v5305 = vmax.f32 %v5049, 0.0
  %v5306 = vmax.f32 %v5050, 0.0
  %v5307 = vmax.f32 %v5051, 0.0
  %v5308 = vmax.f32 %v5052, 0.0
  %v5309 = vmax.f32 %v5053, 0.0
  %v5310 = vmax.f32 %v5054, 0.0
  %v5311 = vmax.f32 %v5055, 0.0
  %v5312 = vmax.f32 %v5056, 0.0
  %v5313 = vmax.f32 %v5057, 0.0
  %v5314 = vmax.f32 %v5058, 0.0
  %v5315 = vmax.f32 %v5059, 0.0
  %v5316 = vmax.f32 %v5060, 0.0
  %v5317 = vmax.f32 %v5061, 0.0
  %v5318 = vmax.f32 %v5062, 0.0
  %v5319 = vmax.f32 %v5063, 0.0
  %v5320 = vmax.f32 %v5064, 0.0
  %v5321 = vmax.f32 %v5065, 0.0
  %v5322 = vmax.f32 %v5066, 0.0
  %v5323 = vmax.f32 %v5067, 0.0
  %v5324 = vmax.f32 %v5068, 0.0
  %v5325 = vmax.f32 %v5069, 0.0
  %v5326 = vmax.f32 %v5070, 0.0
  %v5327 = vmax.f32 %v5071, 0.0
  %v5328 = vmax.f32 %v5072, 0.0
  %v5329 = vmax.f32 %v5073, 0.0
  %v5330 = vmax.f32 %v5074, 0.0
  %v5331 = vmax.f32 %v5075, 0.0
  %v5332 = vmax.f32 %v5076, 0.0
  %v5333 = vmax.f32 %v5077, 0.0
  %v5334 = vmax.f32 %v5078, 0.0
  %v5335 = vmax.f32 %v5079, 0.0
  %v5336 = vmax.f32 %v5080, 0.0
  %v5337 = vmax.f32 %v5081, 0.0
  %v5338 = vmax.f32 %v5082, 0.0
  %v5339 = vmax.f32 %v5083, 0.0
  %v5340 = vmax.f32 %v5084, 0.0
  %v5341 = vmax.f32 %v5085, 0.0
  %v5342 = vmax.f32 %v5086, 0.0
  %v5343 = vmax.f32 %v5087, 0.0
  %v5344 = vmax.f32 %v5088, 0.0
  %v5345 = vmax.f32 %v5089, 0.0
  %v5346 = vmax.f32 %v5090, 0.0
  %v5347 = vmax.f32 %v5091, 0.0
  %v5348 = vmax.f32 %v5092, 0.0
  %v5349 = vmax.f32 %v5093, 0.0
  %v5350 = vmax.f32 %v5094, 0.0
  %v5351 = vmax.f32 %v5095, 0.0
  %v5352 = vmax.f32 %v5096, 0.0
  %v5353 = vmax.f32 %v5097, 0.0
  %v5354 = vmax.f32 %v5098, 0.0
  %v5355 = vmax.f32 %v5099, 0.0
  %v5356 = vmax.f32 %v5100, 0.0
  %v5357 = vmax.f32 %v5101, 0.0
  %v5358 = vmax.f32 %v5102, 0.0
  %v5359 = vmax.f32 %v5103, 0.0
  %v5360 = vmax.f32 %v5104, 0.0
  %v5361 = vmax.f32 %v5105, 0.0
  %v5362 = vmax.f32 %v5106, 0.0
  %v5363 = vmax.f32 %v5107, 0.0
  %v5364 = vmax.f32 %v5108, 0.0
  %v5365 = vmax.f32 %v5109, 0.0
  %v5366 = vmax.f32 %v5110, 0.0
  %v5367 = vmax.f32 %v5111, 0.0
  %v5368 = vmax.f32 %v5112, 0.0
  %v5369 = vmax.f32 %v5113, 0.0
  %v5370 = vmax.f32 %v5114, 0.0
  %v5371 = vmax.f32 %v5115, 0.0
  %v5372 = vmax.f32 %v5116, 0.0
  %v5373 = vmax.f32 %v5117, 0.0
  %v5374 = vmax.f32 %v5118, 0.0
  %v5375 = vmax.f32 %v5119, 0.0
  %v5376 = vmax.f32 %v5120, 0.0
  %v5377 = vmax.f32 %v5121, 0.0
  %v5378 = vmax.f32 %v5122, 0.0
  %v5379 = vmax.f32 %v5123, 0.0
  %v5380 = vmax.f32 %v5124, 0.0
  %v5381 = vmax.f32 %v5125, 0.0
  %v5382 = vmax.f32 %v5126, 0.0
  %v5383 = vmax.f32 %v5127, 0.0
  %v5384 = vmax.f32 %v5128, 0.0
  %v5385 = vmax.f32 %v5129, 0.0
  %v5386 = vmax.f32 %v5130, 0.0
  %v5387 = vmax.f32 %v5131, 0.0
  %v5388 = vmax.f32 %v5132, 0.0
  %v5389 = vmax.f32 %v5133, 0.0
  %v5390 = vmax.f32 %v5134, 0.0
  %v5391 = vmax.f32 %v5135, 0.0
  %v5392 = vmax.f32 %v5136, 0.0
  %v5393 = vmax.f32 %v5137, 0.0
  %v5394 = vmax.f32 %v5138, 0.0
  %v5395 = vmax.f32 %v5139, 0.0
  %v5396 = vmax.f32 %v5140, 0.0
  %v5397 = vmax.f32 %v5141, 0.0
  %v5398 = vmax.f32 %v5142, 0.0
  %v5399 = vmax.f32 %v5143, 0.0
  %v5400 = vmax.f32 %v5144, 0.0
  %v5401 = vmax.f32 %v5145, 0.0
  %v5402 = vmax.f32 %v5146, 0.0
  %v5403 = vmax.f32 %v5147, 0.0
  %v5404 = vmax.f32 %v5148, 0.0
  %v5405 = vmax.f32 %v5149, 0.0
  %v5406 = vmax.f32 %v5150, 0.0
  %v5407 = vmax.f32 %v5151, 0.0
  %v5408 = vmax.f32 %v5152, 0.0
  %v5409 = vmax.f32 %v5153, 0.0
  %v5410 = vmax.f32 %v5154, 0.0
  %v5411 = vmax.f32 %v5155, 0.0
  %v5412 = vmax.f32 %v5156, 0.0
  %v5413 = vmax.f32 %v5157, 0.0
  %v5414 = vmax.f32 %v5158, 0.0
  %v5415 = vmax.f32 %v5159, 0.0
  %v5416 = vmax.f32 %v5160, 0.0
  %v5417 = vmax.f32 %v5161, 0.0
  %v5418 = vmax.f32 %v5162, 0.0
  %v5419 = vmax.f32 %v5163, 0.0
  %v5420 = vmax.f32 %v5164, 0.0
  %v5421 = vmax.f32 %v5165, 0.0
  %v5422 = vmax.f32 %v5166, 0.0
  %v5423 = vmax.f32 %v5167, 0.0
  %v5424 = vmax.f32 %v5168, 0.0
  %v5425 = vmax.f32 %v5169, 0.0
  %v5426 = vmax.f32 %v5170, 0.0
  %v5427 = vmax.f32 %v5171, 0.0
  %v5428 = vmax.f32 %v5172, 0.0
  %v5429 = vmax.f32 %v5173, 0.0
  %v5430 = vmax.f32 %v5174, 0.0
  %v5431 = vmax.f32 %v5175, 0.0
  %v5432 = vmax.f32 %v5176, 0.0
  %v5433 = vmax.f32 %v5177, 0.0
  %v5434 = vmax.f32 %v5178, 0.0
  %v5435 = vmax.f32 %v5179, 0.0
  %v5436 = vmax.f32 %v5180, 0.0
  %v5437 = vmax.f32 %v5181, 0.0
  %v5438 = vmax.f32 %v5182, 0.0
  %v5439 = vmax.f32 %v5183, 0.0
  %v5440 = vmax.f32 %v5184, 0.0
  %v5441 = vmax.f32 %v5185, 0.0
  %v5442 = vmax.f32 %v5186, 0.0
  %v5443 = vmax.f32 %v5187, 0.0
  %v5444 = vpack.c.bf16 %v5189, %v5188
  %v5445 = vpack.c.bf16 %v5191, %v5190
  %v5446 = vpack.c.bf16 %v5193, %v5192
  %v5447 = vpack.c.bf16 %v5195, %v5194
  %v5448 = vpack.c.bf16 %v5197, %v5196
  %v5449 = vpack.c.bf16 %v5199, %v5198
  %v5450 = vpack.c.bf16 %v5201, %v5200
  %v5451 = vpack.c.bf16 %v5203, %v5202
  %v5452 = vpack.c.bf16 %v5205, %v5204
  %v5453 = vpack.c.bf16 %v5207, %v5206
  %v5454 = vpack.c.bf16 %v5209, %v5208
  %v5455 = vpack.c.bf16 %v5211, %v5210
  %v5456 = vpack.c.bf16 %v5213, %v5212
  %v5457 = vpack.c.bf16 %v5215, %v5214
  %v5458 = vpack.c.bf16 %v5217, %v5216
  %v5459 = vpack.c.bf16 %v5219, %v5218
  %v5460 = vpack.c.bf16 %v5221, %v5220
  %v5461 = vpack.c.bf16 %v5223, %v5222
  %v5462 = vpack.c.bf16 %v5225, %v5224
  %v5463 = vpack.c.bf16 %v5227, %v5226
  %v5464 = vpack.c.bf16 %v5229, %v5228
  %v5465 = vpack.c.bf16 %v5231, %v5230
  %v5466 = vpack.c.bf16 %v5233, %v5232
  %v5467 = vpack.c.bf16 %v5235, %v5234
  %v5468 = vpack.c.bf16 %v5237, %v5236
  %v5469 = vpack.c.bf16 %v5239, %v5238
  %v5470 = vpack.c.bf16 %v5241, %v5240
  %v5471 = vpack.c.bf16 %v5243, %v5242
  %v5472 = vpack.c.bf16 %v5245, %v5244
  %v5473 = vpack.c.bf16 %v5247, %v5246
  %v5474 = vpack.c.bf16 %v5249, %v5248
  %v5475 = vpack.c.bf16 %v5251, %v5250
  %v5476 = vpack.c.bf16 %v5253, %v5252
  %v5477 = vpack.c.bf16 %v5255, %v5254
  %v5478 = vpack.c.bf16 %v5257, %v5256
  %v5479 = vpack.c.bf16 %v5259, %v5258
  %v5480 = vpack.c.bf16 %v5261, %v5260
  %v5481 = vpack.c.bf16 %v5263, %v5262
  %v5482 = vpack.c.bf16 %v5265, %v5264
  %v5483 = vpack.c.bf16 %v5267, %v5266
  %v5484 = vpack.c.bf16 %v5269, %v5268
  %v5485 = vpack.c.bf16 %v5271, %v5270
  %v5486 = vpack.c.bf16 %v5273, %v5272
  %v5487 = vpack.c.bf16 %v5275, %v5274
  %v5488 = vpack.c.bf16 %v5277, %v5276
  %v5489 = vpack.c.bf16 %v5279, %v5278
  %v5490 = vpack.c.bf16 %v5281, %v5280
  %v5491 = vpack.c.bf16 %v5283, %v5282
  %v5492 = vpack.c.bf16 %v5285, %v5284
  %v5493 = vpack.c.bf16 %v5287, %v5286
  %v5494 = vpack.c.bf16 %v5289, %v5288
  %v5495 = vpack.c.bf16 %v5291, %v5290
  %v5496 = vpack.c.bf16 %v5293, %v5292
  %v5497 = vpack.c.bf16 %v5295, %v5294
  %v5498 = vpack.c.bf16 %v5297, %v5296
  %v5499 = vpack.c.bf16 %v5299, %v5298
  %v5500 = vpack.c.bf16 %v5301, %v5300
  %v5501 = vpack.c.bf16 %v5303, %v5302
  %v5502 = vpack.c.bf16 %v5305, %v5304
  %v5503 = vpack.c.bf16 %v5307, %v5306
  %v5504 = vpack.c.bf16 %v5309, %v5308
  %v5505 = vpack.c.bf16 %v5311, %v5310
  %v5506 = vpack.c.bf16 %v5313, %v5312
  %v5507 = vpack.c.bf16 %v5315, %v5314
  %v5508 = vpack.c.bf16 %v5317, %v5316
  %v5509 = vpack.c.bf16 %v5319, %v5318
  %v5510 = vpack.c.bf16 %v5321, %v5320
  %v5511 = vpack.c.bf16 %v5323, %v5322
  %v5512 = vpack.c.bf16 %v5325, %v5324
  %v5513 = vpack.c.bf16 %v5327, %v5326
  %v5514 = vpack.c.bf16 %v5329, %v5328
  %v5515 = vpack.c.bf16 %v5331, %v5330
  %v5516 = vpack.c.bf16 %v5333, %v5332
  %v5517 = vpack.c.bf16 %v5335, %v5334
  %v5518 = vpack.c.bf16 %v5337, %v5336
  %v5519 = vpack.c.bf16 %v5339, %v5338
  %v5520 = vpack.c.bf16 %v5341, %v5340
  %v5521 = vpack.c.bf16 %v5343, %v5342
  %v5522 = vpack.c.bf16 %v5345, %v5344
  %v5523 = vpack.c.bf16 %v5347, %v5346
  %v5524 = vpack.c.bf16 %v5349, %v5348
  %v5525 = vpack.c.bf16 %v5351, %v5350
  %v5526 = vpack.c.bf16 %v5353, %v5352
  %v5527 = vpack.c.bf16 %v5355, %v5354
  %v5528 = vpack.c.bf16 %v5357, %v5356
  %v5529 = vpack.c.bf16 %v5359, %v5358
  %v5530 = vpack.c.bf16 %v5361, %v5360
  %v5531 = vpack.c.bf16 %v5363, %v5362
  %v5532 = vpack.c.bf16 %v5365, %v5364
  %v5533 = vpack.c.bf16 %v5367, %v5366
  %v5534 = vpack.c.bf16 %v5369, %v5368
  %v5535 = vpack.c.bf16 %v5371, %v5370
  %v5536 = vpack.c.bf16 %v5373, %v5372
  %v5537 = vpack.c.bf16 %v5375, %v5374
  %v5538 = vpack.c.bf16 %v5377, %v5376
  %v5539 = vpack.c.bf16 %v5379, %v5378
  %v5540 = vpack.c.bf16 %v5381, %v5380
  %v5541 = vpack.c.bf16 %v5383, %v5382
  %v5542 = vpack.c.bf16 %v5385, %v5384
  %v5543 = vpack.c.bf16 %v5387, %v5386
  %v5544 = vpack.c.bf16 %v5389, %v5388
  %v5545 = vpack.c.bf16 %v5391, %v5390
  %v5546 = vpack.c.bf16 %v5393, %v5392
  %v5547 = vpack.c.bf16 %v5395, %v5394
  %v5548 = vpack.c.bf16 %v5397, %v5396
  %v5549 = vpack.c.bf16 %v5399, %v5398
  %v5550 = vpack.c.bf16 %v5401, %v5400
  %v5551 = vpack.c.bf16 %v5403, %v5402
  %v5552 = vpack.c.bf16 %v5405, %v5404
  %v5553 = vpack.c.bf16 %v5407, %v5406
  %v5554 = vpack.c.bf16 %v5409, %v5408
  %v5555 = vpack.c.bf16 %v5411, %v5410
  %v5556 = vpack.c.bf16 %v5413, %v5412
  %v5557 = vpack.c.bf16 %v5415, %v5414
  %v5558 = vpack.c.bf16 %v5417, %v5416
  %v5559 = vpack.c.bf16 %v5419, %v5418
  %v5560 = vpack.c.bf16 %v5421, %v5420
  %v5561 = vpack.c.bf16 %v5423, %v5422
  %v5562 = vpack.c.bf16 %v5425, %v5424
  %v5563 = vpack.c.bf16 %v5427, %v5426
  %v5564 = vpack.c.bf16 %v5429, %v5428
  %v5565 = vpack.c.bf16 %v5431, %v5430
  %v5566 = vpack.c.bf16 %v5433, %v5432
  %v5567 = vpack.c.bf16 %v5435, %v5434
  %v5568 = vpack.c.bf16 %v5437, %v5436
  %v5569 = vpack.c.bf16 %v5439, %v5438
  %v5570 = vpack.c.bf16 %v5441, %v5440
  %v5571 = vpack.c.bf16 %v5443, %v5442
  %v5572 = vld [vmem:[%s3] sm:$0xf]
  %v5573 = vld [vmem:[%s3 + $0x4] sm:$0xf]
  %v5574 = vld [vmem:[%s3 + $0x8] sm:$0xf]
  %v5575 = vld [vmem:[%s3 + $0xc] sm:$0xf]
  %v5576 = vld [vmem:[%s3 + $0x10] sm:$0xf]
  %v5577 = vld [vmem:[%s3 + $0x14] sm:$0xf]
  %v5578 = vld [vmem:[%s3 + $0x18] sm:$0xf]
  %v5579 = vld [vmem:[%s3 + $0x1c] sm:$0xf]
  %v5580 = vld [vmem:[%s4] sm:$0x1]
  %v5582 = vlaneseq
  %v5583 = vshrl.u32 %v5582, 7
  %v5584 = vsub.s32 0, %v5583
  %v5585 = vrot.slane %v5580, %v5584
  %v5595 = vunpack.c.l.b16 %v5572
  %v5596 = vunpack.c.l.b16 %v5573
  %v5597 = vunpack.c.l.b16 %v5574
  %v5598 = vunpack.c.l.b16 %v5575
  %v5599 = vunpack.c.l.b16 %v5576
  %v5600 = vunpack.c.l.b16 %v5577
  %v5601 = vunpack.c.l.b16 %v5578
  %v5602 = vunpack.c.l.b16 %v5579
  %v5603 = vpack.c.b16 %v5596, %v5595
  %v5604 = vpack.c.b16 %v5598, %v5597
  %v5605 = vpack.c.b16 %v5600, %v5599
  %v5606 = vpack.c.b16 %v5602, %v5601
  %vm5611 = vcmask 523264
  %v5613 = vsel %vm5611, %v5444, 0
  %v5616 = vsel %vm5611, %v5445, 0
  %v5619 = vsel %vm5611, %v5446, 0
  %v5622 = vsel %vm5611, %v5447, 0
  %v5625 = vsel %vm5611, %v5448, 0
  %v5628 = vsel %vm5611, %v5449, 0
  %v5631 = vsel %vm5611, %v5450, 0
  %v5634 = vsel %vm5611, %v5451, 0
  %v5637 = vsel %vm5611, %v5452, 0
  %v5640 = vsel %vm5611, %v5453, 0
  %v5643 = vsel %vm5611, %v5454, 0
  %v5646 = vsel %vm5611, %v5455, 0
  %v5649 = vsel %vm5611, %v5456, 0
  %v5652 = vsel %vm5611, %v5457, 0
  %v5655 = vsel %vm5611, %v5458, 0
  %v5658 = vsel %vm5611, %v5459, 0
  %v5661 = vsel %vm5611, %v5460, 0
  %v5664 = vsel %vm5611, %v5461, 0
  %v5667 = vsel %vm5611, %v5462, 0
  %v5670 = vsel %vm5611, %v5463, 0
  %v5673 = vsel %vm5611, %v5464, 0
  %v5676 = vsel %vm5611, %v5465, 0
  %v5679 = vsel %vm5611, %v5466, 0
  %v5682 = vsel %vm5611, %v5467, 0
  %v5685 = vsel %vm5611, %v5468, 0
  %v5688 = vsel %vm5611, %v5469, 0
  %v5691 = vsel %vm5611, %v5470, 0
  %v5694 = vsel %vm5611, %v5471, 0
  %v5697 = vsel %vm5611, %v5472, 0
  %v5700 = vsel %vm5611, %v5473, 0
  %v5703 = vsel %vm5611, %v5474, 0
  %v5706 = vsel %vm5611, %v5475, 0
  %v5709 = vsel %vm5611, %v5476, 0
  %v5712 = vsel %vm5611, %v5477, 0
  %v5715 = vsel %vm5611, %v5478, 0
  %v5718 = vsel %vm5611, %v5479, 0
  %v5721 = vsel %vm5611, %v5480, 0
  %v5724 = vsel %vm5611, %v5481, 0
  %v5727 = vsel %vm5611, %v5482, 0
  %v5730 = vsel %vm5611, %v5483, 0
  %v5733 = vsel %vm5611, %v5484, 0
  %v5736 = vsel %vm5611, %v5485, 0
  %v5739 = vsel %vm5611, %v5486, 0
  %v5742 = vsel %vm5611, %v5487, 0
  %v5745 = vsel %vm5611, %v5488, 0
  %v5748 = vsel %vm5611, %v5489, 0
  %v5751 = vsel %vm5611, %v5490, 0
  %v5754 = vsel %vm5611, %v5491, 0
  %v5757 = vsel %vm5611, %v5492, 0
  %v5760 = vsel %vm5611, %v5493, 0
  %v5763 = vsel %vm5611, %v5494, 0
  %v5766 = vsel %vm5611, %v5495, 0
  %v5769 = vsel %vm5611, %v5496, 0
  %v5772 = vsel %vm5611, %v5497, 0
  %v5775 = vsel %vm5611, %v5498, 0
  %v5778 = vsel %vm5611, %v5499, 0
  %v5781 = vsel %vm5611, %v5500, 0
  %v5784 = vsel %vm5611, %v5501, 0
  %v5787 = vsel %vm5611, %v5502, 0
  %v5790 = vsel %vm5611, %v5503, 0
  %v5793 = vsel %vm5611, %v5504, 0
  %v5796 = vsel %vm5611, %v5505, 0
  %v5799 = vsel %vm5611, %v5506, 0
  %v5802 = vsel %vm5611, %v5507, 0
  %v5805 = vsel %vm5611, %v5508, 0
  %v5808 = vsel %vm5611, %v5509, 0
  %v5811 = vsel %vm5611, %v5510, 0
  %v5814 = vsel %vm5611, %v5511, 0
  %v5817 = vsel %vm5611, %v5512, 0
  %v5820 = vsel %vm5611, %v5513, 0
  %v5823 = vsel %vm5611, %v5514, 0
  %v5826 = vsel %vm5611, %v5515, 0
  %v5829 = vsel %vm5611, %v5516, 0
  %v5832 = vsel %vm5611, %v5517, 0
  %v5835 = vsel %vm5611, %v5518, 0
  %v5838 = vsel %vm5611, %v5519, 0
  %v5841 = vsel %vm5611, %v5520, 0
  %v5844 = vsel %vm5611, %v5521, 0
  %v5847 = vsel %vm5611, %v5522, 0
  %v5850 = vsel %vm5611, %v5523, 0
  %v5853 = vsel %vm5611, %v5524, 0
  %v5856 = vsel %vm5611, %v5525, 0
  %v5859 = vsel %vm5611, %v5526, 0
  %v5862 = vsel %vm5611, %v5527, 0
  %v5865 = vsel %vm5611, %v5528, 0
  %v5868 = vsel %vm5611, %v5529, 0
  %v5871 = vsel %vm5611, %v5530, 0
  %v5874 = vsel %vm5611, %v5531, 0
  %v5877 = vsel %vm5611, %v5532, 0
  %v5880 = vsel %vm5611, %v5533, 0
  %v5883 = vsel %vm5611, %v5534, 0
  %v5886 = vsel %vm5611, %v5535, 0
  %v5889 = vsel %vm5611, %v5536, 0
  %v5892 = vsel %vm5611, %v5537, 0
  %v5895 = vsel %vm5611, %v5538, 0
  %v5898 = vsel %vm5611, %v5539, 0
  %v5901 = vsel %vm5611, %v5540, 0
  %v5904 = vsel %vm5611, %v5541, 0
  %v5907 = vsel %vm5611, %v5542, 0
  %v5910 = vsel %vm5611, %v5543, 0
  %v5913 = vsel %vm5611, %v5544, 0
  %v5916 = vsel %vm5611, %v5545, 0
  %v5919 = vsel %vm5611, %v5546, 0
  %v5922 = vsel %vm5611, %v5547, 0
  %v5925 = vsel %vm5611, %v5548, 0
  %v5928 = vsel %vm5611, %v5549, 0
  %v5931 = vsel %vm5611, %v5550, 0
  %v5934 = vsel %vm5611, %v5551, 0
  %v5937 = vsel %vm5611, %v5552, 0
  %v5940 = vsel %vm5611, %v5553, 0
  %v5943 = vsel %vm5611, %v5554, 0
  %v5946 = vsel %vm5611, %v5555, 0
  %v5949 = vsel %vm5611, %v5556, 0
  %v5952 = vsel %vm5611, %v5557, 0
  %v5955 = vsel %vm5611, %v5558, 0
  %v5958 = vsel %vm5611, %v5559, 0
  %v5961 = vsel %vm5611, %v5560, 0
  %v5964 = vsel %vm5611, %v5561, 0
  %v5967 = vsel %vm5611, %v5562, 0
  %v5970 = vsel %vm5611, %v5563, 0
  %v5973 = vsel %vm5611, %v5564, 0
  %v5976 = vsel %vm5611, %v5565, 0
  %v5979 = vsel %vm5611, %v5566, 0
  %v5982 = vsel %vm5611, %v5567, 0
  %v5985 = vsel %vm5611, %v5568, 0
  %v5988 = vsel %vm5611, %v5569, 0
  %v5991 = vsel %vm5611, %v5570, 0
  %v5994 = vsel %vm5611, %v5571, 0
  %5996 = vmatprep.subr.bf16.mxu0 0
  %5997 = vmatpush1.bf16.msra.mxu0 %v5603
  %5998 = vmatprep.subr.bf16.mxu0 0
  %5999 = vmatpush1.bf16.msra.mxu0 %v5604
  %6000 = vmatprep.subr.bf16.mxu0 0
  %6001 = vmatpush1.bf16.msra.mxu0 %v5605
  %6002 = vmatprep.subr.bf16.mxu0 0
  %6003 = vmatpush1.bf16.msra.mxu0 %v5606
  %6004 = vmatprep.subr.bf16.mxu0 0
  %6005 = vmatpush1.bf16.msra.mxu0 0
  %6006 = vmatprep.subr.bf16.mxu0 0
  %6007 = vmatpush1.bf16.msra.mxu0 0
  %6008 = vmatprep.subr.bf16.mxu0 0
  %6009 = vmatpush1.bf16.msra.mxu0 0
  %6010 = vmatprep.subr.bf16.mxu0 0
  %6011 = vmatpush1.bf16.msra.mxu0 0
  %6012 = vmatprep.subr.bf16.mxu0 0
  %6013 = vmatpush1.bf16.msra.mxu0 0
  %6014 = vmatprep.subr.bf16.mxu0 0
  %6015 = vmatpush1.bf16.msra.mxu0 0
  %6016 = vmatprep.subr.bf16.mxu0 0
  %6017 = vmatpush1.bf16.msra.mxu0 0
  %6018 = vmatprep.subr.bf16.mxu0 0
  %6019 = vmatpush1.bf16.msra.mxu0 0
  %6020 = vmatprep.subr.bf16.mxu0 0
  %6021 = vmatpush1.bf16.msra.mxu0 0
  %6022 = vmatprep.subr.bf16.mxu0 0
  %6023 = vmatpush1.bf16.msra.mxu0 0
  %6024 = vmatprep.subr.bf16.mxu0 0
  %6025 = vmatpush1.bf16.msra.mxu0 0
  %6026 = vmatprep.subr.bf16.mxu0 0
  %6027 = vmatpush1.bf16.msra.mxu0 0
  %6028 = vmatprep.mubr.bf16.mxu0 0
  %6029 = vmatmul.mubr.bf16.gmra.mrb[0].mxu0 %v5613
  %v6030 = vpop.f32.mrb[0].mxu0
  %v6031 = vadd.f32 %v5585, %v6030
  %v6032 = vpop.f32.mrb[0].mxu0
  %v6033 = vpop.f32.mrb[0].mxu0
  %v6034 = vadd.f32 %v5585, %v6033
  %v6035 = vpop.f32.mrb[0].mxu0
  %6036 = vmatprep.mubr.bf16.mxu0 0
  %6037 = vmatmul.mubr.bf16.gmra.mrb[0].mxu0 %v5616
  %v6038 = vpop.f32.mrb[0].mxu0
  %v6039 = vadd.f32 %v5585, %v6038
  %v6040 = vpop.f32.mrb[0].mxu0
  %v6041 = vpop.f32.mrb[0].mxu0
  %v6042 = vadd.f32 %v5585, %v6041
  %v6043 = vpop.f32.mrb[0].mxu0
  %6044 = vmatprep.mubr.bf16.mxu0 0
  %6045 = vmatmul.mubr.bf16.gmra.mrb[0].mxu0 %v5619
  %v6046 = vpop.f32.mrb[0].mxu0
  %v6047 = vadd.f32 %v5585, %v6046
  %v6048 = vpop.f32.mrb[0].mxu0
  %v6049 = vpop.f32.mrb[0].mxu0
  %v6050 = vadd.f32 %v5585, %v6049
  %v6051 = vpop.f32.mrb[0].mxu0
  %6052 = vmatprep.mubr.bf16.mxu0 0
  %6053 = vmatmul.mubr.bf16.gmra.mrb[0].mxu0 %v5622
  %v6054 = vpop.f32.mrb[0].mxu0
  %v6055 = vadd.f32 %v5585, %v6054
  %v6056 = vpop.f32.mrb[0].mxu0
  %v6057 = vpop.f32.mrb[0].mxu0
  %v6058 = vadd.f32 %v5585, %v6057
  %v6059 = vpop.f32.mrb[0].mxu0
  %6060 = vmatprep.mubr.bf16.mxu0 0
  %6061 = vmatmul.mubr.bf16.gmra.mrb[0].mxu0 %v5625
  %v6062 = vpop.f32.mrb[0].mxu0
  %v6063 = vadd.f32 %v5585, %v6062
  %v6064 = vpop.f32.mrb[0].mxu0
  %v6065 = vpop.f32.mrb[0].mxu0
  %v6066 = vadd.f32 %v5585, %v6065
  %v6067 = vpop.f32.mrb[0].mxu0
  %6068 = vmatprep.mubr.bf16.mxu0 0
  %6069 = vmatmul.mubr.bf16.gmra.mrb[0].mxu0 %v5628
  %v6070 = vpop.f32.mrb[0].mxu0
  %v6071 = vadd.f32 %v5585, %v6070
  %v6072 = vpop.f32.mrb[0].mxu0
  %v6073 = vpop.f32.mrb[0].mxu0
  %v6074 = vadd.f32 %v5585, %v6073
  %v6075 = vpop.f32.mrb[0].mxu0
  %6076 = vmatprep.mubr.bf16.mxu0 0
  %6077 = vmatmul.mubr.bf16.gmra.mrb[0].mxu0 %v5631
  %v6078 = vpop.f32.mrb[0].mxu0
  %v6079 = vadd.f32 %v5585, %v6078
  %v6080 = vpop.f32.mrb[0].mxu0
  %v6081 = vpop.f32.mrb[0].mxu0
  %v6082 = vadd.f32 %v5585, %v6081
  %v6083 = vpop.f32.mrb[0].mxu0
  %6084 = vmatprep.mubr.bf16.mxu0 0
  %6085 = vmatmul.mubr.bf16.gmra.mrb[0].mxu0 %v5634
  %v6086 = vpop.f32.mrb[0].mxu0
  %v6087 = vadd.f32 %v5585, %v6086
  %v6088 = vpop.f32.mrb[0].mxu0
  %v6089 = vpop.f32.mrb[0].mxu0
  %v6090 = vadd.f32 %v5585, %v6089
  %v6091 = vpop.f32.mrb[0].mxu0
  %6092 = vmatprep.mubr.bf16.mxu0 0
  %6093 = vmatmul.mubr.bf16.gmra.mrb[0].mxu0 %v5637
  %v6094 = vpop.f32.mrb[0].mxu0
  %v6095 = vadd.f32 %v5585, %v6094
  %v6096 = vpop.f32.mrb[0].mxu0
  %v6097 = vpop.f32.mrb[0].mxu0
  %v6098 = vadd.f32 %v5585, %v6097
  %v6099 = vpop.f32.mrb[0].mxu0
  %6100 = vmatprep.mubr.bf16.mxu0 0
  %6101 = vmatmul.mubr.bf16.gmra.mrb[0].mxu0 %v5640
  %v6102 = vpop.f32.mrb[0].mxu0
  %v6103 = vadd.f32 %v5585, %v6102
  %v6104 = vpop.f32.mrb[0].mxu0
  %v6105 = vpop.f32.mrb[0].mxu0
  %v6106 = vadd.f32 %v5585, %v6105
  %v6107 = vpop.f32.mrb[0].mxu0
  %6108 = vmatprep.mubr.bf16.mxu0 0
  %6109 = vmatmul.mubr.bf16.gmra.mrb[0].mxu0 %v5643
  %v6110 = vpop.f32.mrb[0].mxu0
  %v6111 = vadd.f32 %v5585, %v6110
  %v6112 = vpop.f32.mrb[0].mxu0
  %v6113 = vpop.f32.mrb[0].mxu0
  %v6114 = vadd.f32 %v5585, %v6113
  %v6115 = vpop.f32.mrb[0].mxu0
  %6116 = vmatprep.mubr.bf16.mxu0 0
  %6117 = vmatmul.mubr.bf16.gmra.mrb[0].mxu0 %v5646
  %v6118 = vpop.f32.mrb[0].mxu0
  %v6119 = vadd.f32 %v5585, %v6118
  %v6120 = vpop.f32.mrb[0].mxu0
  %v6121 = vpop.f32.mrb[0].mxu0
  %v6122 = vadd.f32 %v5585, %v6121
  %v6123 = vpop.f32.mrb[0].mxu0
  %6124 = vmatprep.mubr.bf16.mxu0 0
  %6125 = vmatmul.mubr.bf16.gmra.mrb[0].mxu0 %v5649
  %v6126 = vpop.f32.mrb[0].mxu0
  %v6127 = vadd.f32 %v5585, %v6126
  %v6128 = vpop.f32.mrb[0].mxu0
  %v6129 = vpop.f32.mrb[0].mxu0
  %v6130 = vadd.f32 %v5585, %v6129
  %v6131 = vpop.f32.mrb[0].mxu0
  %6132 = vmatprep.mubr.bf16.mxu0 0
  %6133 = vmatmul.mubr.bf16.gmra.mrb[0].mxu0 %v5652
  %v6134 = vpop.f32.mrb[0].mxu0
  %v6135 = vadd.f32 %v5585, %v6134
  %v6136 = vpop.f32.mrb[0].mxu0
  %v6137 = vpop.f32.mrb[0].mxu0
  %v6138 = vadd.f32 %v5585, %v6137
  %v6139 = vpop.f32.mrb[0].mxu0
  %6140 = vmatprep.mubr.bf16.mxu0 0
  %6141 = vmatmul.mubr.bf16.gmra.mrb[0].mxu0 %v5655
  %v6142 = vpop.f32.mrb[0].mxu0
  %v6143 = vadd.f32 %v5585, %v6142
  %v6144 = vpop.f32.mrb[0].mxu0
  %v6145 = vpop.f32.mrb[0].mxu0
  %v6146 = vadd.f32 %v5585, %v6145
  %v6147 = vpop.f32.mrb[0].mxu0
  %6148 = vmatprep.mubr.bf16.mxu0 0
  %6149 = vmatmul.mubr.bf16.gmra.mrb[0].mxu0 %v5658
  %v6150 = vpop.f32.mrb[0].mxu0
  %v6151 = vadd.f32 %v5585, %v6150
  %v6152 = vpop.f32.mrb[0].mxu0
  %v6153 = vpop.f32.mrb[0].mxu0
  %v6154 = vadd.f32 %v5585, %v6153
  %v6155 = vpop.f32.mrb[0].mxu0
  %6156 = vmatprep.mubr.bf16.mxu0 0
  %6157 = vmatmul.mubr.bf16.gmra.mrb[0].mxu0 %v5661
  %v6158 = vpop.f32.mrb[0].mxu0
  %v6159 = vadd.f32 %v5585, %v6158
  %v6160 = vpop.f32.mrb[0].mxu0
  %v6161 = vpop.f32.mrb[0].mxu0
  %v6162 = vadd.f32 %v5585, %v6161
  %v6163 = vpop.f32.mrb[0].mxu0
  %6164 = vmatprep.mubr.bf16.mxu0 0
  %6165 = vmatmul.mubr.bf16.gmra.mrb[0].mxu0 %v5664
  %v6166 = vpop.f32.mrb[0].mxu0
  %v6167 = vadd.f32 %v5585, %v6166
  %v6168 = vpop.f32.mrb[0].mxu0
  %v6169 = vpop.f32.mrb[0].mxu0
  %v6170 = vadd.f32 %v5585, %v6169
  %v6171 = vpop.f32.mrb[0].mxu0
  %6172 = vmatprep.mubr.bf16.mxu0 0
  %6173 = vmatmul.mubr.bf16.gmra.mrb[0].mxu0 %v5667
  %v6174 = vpop.f32.mrb[0].mxu0
  %v6175 = vadd.f32 %v5585, %v6174
  %v6176 = vpop.f32.mrb[0].mxu0
  %v6177 = vpop.f32.mrb[0].mxu0
  %v6178 = vadd.f32 %v5585, %v6177
  %v6179 = vpop.f32.mrb[0].mxu0
  %6180 = vmatprep.mubr.bf16.mxu0 0
  %6181 = vmatmul.mubr.bf16.gmra.mrb[0].mxu0 %v5670
  %v6182 = vpop.f32.mrb[0].mxu0
  %v6183 = vadd.f32 %v5585, %v6182
  %v6184 = vpop.f32.mrb[0].mxu0
  %v6185 = vpop.f32.mrb[0].mxu0
  %v6186 = vadd.f32 %v5585, %v6185
  %v6187 = vpop.f32.mrb[0].mxu0
  %6188 = vmatprep.mubr.bf16.mxu0 0
  %6189 = vmatmul.mubr.bf16.gmra.mrb[0].mxu0 %v5673
  %v6190 = vpop.f32.mrb[0].mxu0
  %v6191 = vadd.f32 %v5585, %v6190
  %v6192 = vpop.f32.mrb[0].mxu0
  %v6193 = vpop.f32.mrb[0].mxu0
  %v6194 = vadd.f32 %v5585, %v6193
  %v6195 = vpop.f32.mrb[0].mxu0
  %6196 = vmatprep.mubr.bf16.mxu0 0
  %6197 = vmatmul.mubr.bf16.gmra.mrb[0].mxu0 %v5676
  %v6198 = vpop.f32.mrb[0].mxu0
  %v6199 = vadd.f32 %v5585, %v6198
  %v6200 = vpop.f32.mrb[0].mxu0
  %v6201 = vpop.f32.mrb[0].mxu0
  %v6202 = vadd.f32 %v5585, %v6201
  %v6203 = vpop.f32.mrb[0].mxu0
  %6204 = vmatprep.mubr.bf16.mxu0 0
  %6205 = vmatmul.mubr.bf16.gmra.mrb[0].mxu0 %v5679
  %v6206 = vpop.f32.mrb[0].mxu0
  %v6207 = vadd.f32 %v5585, %v6206
  %v6208 = vpop.f32.mrb[0].mxu0
  %v6209 = vpop.f32.mrb[0].mxu0
  %v6210 = vadd.f32 %v5585, %v6209
  %v6211 = vpop.f32.mrb[0].mxu0
  %6212 = vmatprep.mubr.bf16.mxu0 0
  %6213 = vmatmul.mubr.bf16.gmra.mrb[0].mxu0 %v5682
  %v6214 = vpop.f32.mrb[0].mxu0
  %v6215 = vadd.f32 %v5585, %v6214
  %v6216 = vpop.f32.mrb[0].mxu0
  %v6217 = vpop.f32.mrb[0].mxu0
  %v6218 = vadd.f32 %v5585, %v6217
  %v6219 = vpop.f32.mrb[0].mxu0
  %6220 = vmatprep.mubr.bf16.mxu0 0
  %6221 = vmatmul.mubr.bf16.gmra.mrb[0].mxu0 %v5685
  %v6222 = vpop.f32.mrb[0].mxu0
  %v6223 = vadd.f32 %v5585, %v6222
  %v6224 = vpop.f32.mrb[0].mxu0
  %v6225 = vpop.f32.mrb[0].mxu0
  %v6226 = vadd.f32 %v5585, %v6225
  %v6227 = vpop.f32.mrb[0].mxu0
  %6228 = vmatprep.mubr.bf16.mxu0 0
  %6229 = vmatmul.mubr.bf16.gmra.mrb[0].mxu0 %v5688
  %v6230 = vpop.f32.mrb[0].mxu0
  %v6231 = vadd.f32 %v5585, %v6230
  %v6232 = vpop.f32.mrb[0].mxu0
  %v6233 = vpop.f32.mrb[0].mxu0
  %v6234 = vadd.f32 %v5585, %v6233
  %v6235 = vpop.f32.mrb[0].mxu0
  %6236 = vmatprep.mubr.bf16.mxu0 0
  %6237 = vmatmul.mubr.bf16.gmra.mrb[0].mxu0 %v5691
  %v6238 = vpop.f32.mrb[0].mxu0
  %v6239 = vadd.f32 %v5585, %v6238
  %v6240 = vpop.f32.mrb[0].mxu0
  %v6241 = vpop.f32.mrb[0].mxu0
  %v6242 = vadd.f32 %v5585, %v6241
  %v6243 = vpop.f32.mrb[0].mxu0
  %6244 = vmatprep.mubr.bf16.mxu0 0
  %6245 = vmatmul.mubr.bf16.gmra.mrb[0].mxu0 %v5694
  %v6246 = vpop.f32.mrb[0].mxu0
  %v6247 = vadd.f32 %v5585, %v6246
  %v6248 = vpop.f32.mrb[0].mxu0
  %v6249 = vpop.f32.mrb[0].mxu0
  %v6250 = vadd.f32 %v5585, %v6249
  %v6251 = vpop.f32.mrb[0].mxu0
  %6252 = vmatprep.mubr.bf16.mxu0 0
  %6253 = vmatmul.mubr.bf16.gmra.mrb[0].mxu0 %v5697
  %v6254 = vpop.f32.mrb[0].mxu0
  %v6255 = vadd.f32 %v5585, %v6254
  %v6256 = vpop.f32.mrb[0].mxu0
  %v6257 = vpop.f32.mrb[0].mxu0
  %v6258 = vadd.f32 %v5585, %v6257
  %v6259 = vpop.f32.mrb[0].mxu0
  %6260 = vmatprep.mubr.bf16.mxu0 0
  %6261 = vmatmul.mubr.bf16.gmra.mrb[0].mxu0 %v5700
  %v6262 = vpop.f32.mrb[0].mxu0
  %v6263 = vadd.f32 %v5585, %v6262
  %v6264 = vpop.f32.mrb[0].mxu0
  %v6265 = vpop.f32.mrb[0].mxu0
  %v6266 = vadd.f32 %v5585, %v6265
  %v6267 = vpop.f32.mrb[0].mxu0
  %6268 = vmatprep.mubr.bf16.mxu0 0
  %6269 = vmatmul.mubr.bf16.gmra.mrb[0].mxu0 %v5703
  %v6270 = vpop.f32.mrb[0].mxu0
  %v6271 = vadd.f32 %v5585, %v6270
  %v6272 = vpop.f32.mrb[0].mxu0
  %v6273 = vpop.f32.mrb[0].mxu0
  %v6274 = vadd.f32 %v5585, %v6273
  %v6275 = vpop.f32.mrb[0].mxu0
  %6276 = vmatprep.mubr.bf16.mxu0 0
  %6277 = vmatmul.mubr.bf16.gmra.mrb[0].mxu0 %v5706
  %v6278 = vpop.f32.mrb[0].mxu0
  %v6279 = vadd.f32 %v5585, %v6278
  %v6280 = vpop.f32.mrb[0].mxu0
  %v6281 = vpop.f32.mrb[0].mxu0
  %v6282 = vadd.f32 %v5585, %v6281
  %v6283 = vpop.f32.mrb[0].mxu0
  %6284 = vmatprep.mubr.bf16.mxu0 0
  %6285 = vmatmul.mubr.bf16.gmra.mrb[0].mxu0 %v5709
  %v6286 = vpop.f32.mrb[0].mxu0
  %v6287 = vadd.f32 %v5585, %v6286
  %v6288 = vpop.f32.mrb[0].mxu0
  %v6289 = vpop.f32.mrb[0].mxu0
  %v6290 = vadd.f32 %v5585, %v6289
  %v6291 = vpop.f32.mrb[0].mxu0
  %6292 = vmatprep.mubr.bf16.mxu0 0
  %6293 = vmatmul.mubr.bf16.gmra.mrb[0].mxu0 %v5712
  %v6294 = vpop.f32.mrb[0].mxu0
  %v6295 = vadd.f32 %v5585, %v6294
  %v6296 = vpop.f32.mrb[0].mxu0
  %v6297 = vpop.f32.mrb[0].mxu0
  %v6298 = vadd.f32 %v5585, %v6297
  %v6299 = vpop.f32.mrb[0].mxu0
  %6300 = vmatprep.mubr.bf16.mxu0 0
  %6301 = vmatmul.mubr.bf16.gmra.mrb[0].mxu0 %v5715
  %v6302 = vpop.f32.mrb[0].mxu0
  %v6303 = vadd.f32 %v5585, %v6302
  %v6304 = vpop.f32.mrb[0].mxu0
  %v6305 = vpop.f32.mrb[0].mxu0
  %v6306 = vadd.f32 %v5585, %v6305
  %v6307 = vpop.f32.mrb[0].mxu0
  %6308 = vmatprep.mubr.bf16.mxu0 0
  %6309 = vmatmul.mubr.bf16.gmra.mrb[0].mxu0 %v5718
  %v6310 = vpop.f32.mrb[0].mxu0
  %v6311 = vadd.f32 %v5585, %v6310
  %v6312 = vpop.f32.mrb[0].mxu0
  %v6313 = vpop.f32.mrb[0].mxu0
  %v6314 = vadd.f32 %v5585, %v6313
  %v6315 = vpop.f32.mrb[0].mxu0
  %6316 = vmatprep.mubr.bf16.mxu0 0
  %6317 = vmatmul.mubr.bf16.gmra.mrb[0].mxu0 %v5721
  %v6318 = vpop.f32.mrb[0].mxu0
  %v6319 = vadd.f32 %v5585, %v6318
  %v6320 = vpop.f32.mrb[0].mxu0
  %v6321 = vpop.f32.mrb[0].mxu0
  %v6322 = vadd.f32 %v5585, %v6321
  %v6323 = vpop.f32.mrb[0].mxu0
  %6324 = vmatprep.mubr.bf16.mxu0 0
  %6325 = vmatmul.mubr.bf16.gmra.mrb[0].mxu0 %v5724
  %v6326 = vpop.f32.mrb[0].mxu0
  %v6327 = vadd.f32 %v5585, %v6326
  %v6328 = vpop.f32.mrb[0].mxu0
  %v6329 = vpop.f32.mrb[0].mxu0
  %v6330 = vadd.f32 %v5585, %v6329
  %v6331 = vpop.f32.mrb[0].mxu0
  %6332 = vmatprep.mubr.bf16.mxu0 0
  %6333 = vmatmul.mubr.bf16.gmra.mrb[0].mxu0 %v5727
  %v6334 = vpop.f32.mrb[0].mxu0
  %v6335 = vadd.f32 %v5585, %v6334
  %v6336 = vpop.f32.mrb[0].mxu0
  %v6337 = vpop.f32.mrb[0].mxu0
  %v6338 = vadd.f32 %v5585, %v6337
  %v6339 = vpop.f32.mrb[0].mxu0
  %6340 = vmatprep.mubr.bf16.mxu0 0
  %6341 = vmatmul.mubr.bf16.gmra.mrb[0].mxu0 %v5730
  %v6342 = vpop.f32.mrb[0].mxu0
  %v6343 = vadd.f32 %v5585, %v6342
  %v6344 = vpop.f32.mrb[0].mxu0
  %v6345 = vpop.f32.mrb[0].mxu0
  %v6346 = vadd.f32 %v5585, %v6345
  %v6347 = vpop.f32.mrb[0].mxu0
  %6348 = vmatprep.mubr.bf16.mxu0 0
  %6349 = vmatmul.mubr.bf16.gmra.mrb[0].mxu0 %v5733
  %v6350 = vpop.f32.mrb[0].mxu0
  %v6351 = vadd.f32 %v5585, %v6350
  %v6352 = vpop.f32.mrb[0].mxu0
  %v6353 = vpop.f32.mrb[0].mxu0
  %v6354 = vadd.f32 %v5585, %v6353
  %v6355 = vpop.f32.mrb[0].mxu0
  %6356 = vmatprep.mubr.bf16.mxu0 0
  %6357 = vmatmul.mubr.bf16.gmra.mrb[0].mxu0 %v5736
  %v6358 = vpop.f32.mrb[0].mxu0
  %v6359 = vadd.f32 %v5585, %v6358
  %v6360 = vpop.f32.mrb[0].mxu0
  %v6361 = vpop.f32.mrb[0].mxu0
  %v6362 = vadd.f32 %v5585, %v6361
  %v6363 = vpop.f32.mrb[0].mxu0
  %6364 = vmatprep.mubr.bf16.mxu0 0
  %6365 = vmatmul.mubr.bf16.gmra.mrb[0].mxu0 %v5739
  %v6366 = vpop.f32.mrb[0].mxu0
  %v6367 = vadd.f32 %v5585, %v6366
  %v6368 = vpop.f32.mrb[0].mxu0
  %v6369 = vpop.f32.mrb[0].mxu0
  %v6370 = vadd.f32 %v5585, %v6369
  %v6371 = vpop.f32.mrb[0].mxu0
  %6372 = vmatprep.mubr.bf16.mxu0 0
  %6373 = vmatmul.mubr.bf16.gmra.mrb[0].mxu0 %v5742
  %v6374 = vpop.f32.mrb[0].mxu0
  %v6375 = vadd.f32 %v5585, %v6374
  %v6376 = vpop.f32.mrb[0].mxu0
  %v6377 = vpop.f32.mrb[0].mxu0
  %v6378 = vadd.f32 %v5585, %v6377
  %v6379 = vpop.f32.mrb[0].mxu0
  %6380 = vmatprep.mubr.bf16.mxu0 0
  %6381 = vmatmul.mubr.bf16.gmra.mrb[0].mxu0 %v5745
  %v6382 = vpop.f32.mrb[0].mxu0
  %v6383 = vadd.f32 %v5585, %v6382
  %v6384 = vpop.f32.mrb[0].mxu0
  %v6385 = vpop.f32.mrb[0].mxu0
  %v6386 = vadd.f32 %v5585, %v6385
  %v6387 = vpop.f32.mrb[0].mxu0
  %6388 = vmatprep.mubr.bf16.mxu0 0
  %6389 = vmatmul.mubr.bf16.gmra.mrb[0].mxu0 %v5748
  %v6390 = vpop.f32.mrb[0].mxu0
  %v6391 = vadd.f32 %v5585, %v6390
  %v6392 = vpop.f32.mrb[0].mxu0
  %v6393 = vpop.f32.mrb[0].mxu0
  %v6394 = vadd.f32 %v5585, %v6393
  %v6395 = vpop.f32.mrb[0].mxu0
  %6396 = vmatprep.mubr.bf16.mxu0 0
  %6397 = vmatmul.mubr.bf16.gmra.mrb[0].mxu0 %v5751
  %v6398 = vpop.f32.mrb[0].mxu0
  %v6399 = vadd.f32 %v5585, %v6398
  %v6400 = vpop.f32.mrb[0].mxu0
  %v6401 = vpop.f32.mrb[0].mxu0
  %v6402 = vadd.f32 %v5585, %v6401
  %v6403 = vpop.f32.mrb[0].mxu0
  %6404 = vmatprep.mubr.bf16.mxu0 0
  %6405 = vmatmul.mubr.bf16.gmra.mrb[0].mxu0 %v5754
  %v6406 = vpop.f32.mrb[0].mxu0
  %v6407 = vadd.f32 %v5585, %v6406
  %v6408 = vpop.f32.mrb[0].mxu0
  %v6409 = vpop.f32.mrb[0].mxu0
  %v6410 = vadd.f32 %v5585, %v6409
  %v6411 = vpop.f32.mrb[0].mxu0
  %6412 = vmatprep.mubr.bf16.mxu0 0
  %6413 = vmatmul.mubr.bf16.gmra.mrb[0].mxu0 %v5757
  %v6414 = vpop.f32.mrb[0].mxu0
  %v6415 = vadd.f32 %v5585, %v6414
  %v6416 = vpop.f32.mrb[0].mxu0
  %v6417 = vpop.f32.mrb[0].mxu0
  %v6418 = vadd.f32 %v5585, %v6417
  %v6419 = vpop.f32.mrb[0].mxu0
  %6420 = vmatprep.mubr.bf16.mxu0 0
  %6421 = vmatmul.mubr.bf16.gmra.mrb[0].mxu0 %v5760
  %v6422 = vpop.f32.mrb[0].mxu0
  %v6423 = vadd.f32 %v5585, %v6422
  %v6424 = vpop.f32.mrb[0].mxu0
  %v6425 = vpop.f32.mrb[0].mxu0
  %v6426 = vadd.f32 %v5585, %v6425
  %v6427 = vpop.f32.mrb[0].mxu0
  %6428 = vmatprep.mubr.bf16.mxu0 0
  %6429 = vmatmul.mubr.bf16.gmra.mrb[0].mxu0 %v5763
  %v6430 = vpop.f32.mrb[0].mxu0
  %v6431 = vadd.f32 %v5585, %v6430
  %v6432 = vpop.f32.mrb[0].mxu0
  %v6433 = vpop.f32.mrb[0].mxu0
  %v6434 = vadd.f32 %v5585, %v6433
  %v6435 = vpop.f32.mrb[0].mxu0
  %6436 = vmatprep.mubr.bf16.mxu0 0
  %6437 = vmatmul.mubr.bf16.gmra.mrb[0].mxu0 %v5766
  %v6438 = vpop.f32.mrb[0].mxu0
  %v6439 = vadd.f32 %v5585, %v6438
  %v6440 = vpop.f32.mrb[0].mxu0
  %v6441 = vpop.f32.mrb[0].mxu0
  %v6442 = vadd.f32 %v5585, %v6441
  %v6443 = vpop.f32.mrb[0].mxu0
  %6444 = vmatprep.mubr.bf16.mxu0 0
  %6445 = vmatmul.mubr.bf16.gmra.mrb[0].mxu0 %v5769
  %v6446 = vpop.f32.mrb[0].mxu0
  %v6447 = vadd.f32 %v5585, %v6446
  %v6448 = vpop.f32.mrb[0].mxu0
  %v6449 = vpop.f32.mrb[0].mxu0
  %v6450 = vadd.f32 %v5585, %v6449
  %v6451 = vpop.f32.mrb[0].mxu0
  %6452 = vmatprep.mubr.bf16.mxu0 0
  %6453 = vmatmul.mubr.bf16.gmra.mrb[0].mxu0 %v5772
  %v6454 = vpop.f32.mrb[0].mxu0
  %v6455 = vadd.f32 %v5585, %v6454
  %v6456 = vpop.f32.mrb[0].mxu0
  %v6457 = vpop.f32.mrb[0].mxu0
  %v6458 = vadd.f32 %v5585, %v6457
  %v6459 = vpop.f32.mrb[0].mxu0
  %6460 = vmatprep.mubr.bf16.mxu0 0
  %6461 = vmatmul.mubr.bf16.gmra.mrb[0].mxu0 %v5775
  %v6462 = vpop.f32.mrb[0].mxu0
  %v6463 = vadd.f32 %v5585, %v6462
  %v6464 = vpop.f32.mrb[0].mxu0
  %v6465 = vpop.f32.mrb[0].mxu0
  %v6466 = vadd.f32 %v5585, %v6465
  %v6467 = vpop.f32.mrb[0].mxu0
  %6468 = vmatprep.mubr.bf16.mxu0 0
  %6469 = vmatmul.mubr.bf16.gmra.mrb[0].mxu0 %v5778
  %v6470 = vpop.f32.mrb[0].mxu0
  %v6471 = vadd.f32 %v5585, %v6470
  %v6472 = vpop.f32.mrb[0].mxu0
  %v6473 = vpop.f32.mrb[0].mxu0
  %v6474 = vadd.f32 %v5585, %v6473
  %v6475 = vpop.f32.mrb[0].mxu0
  %6476 = vmatprep.mubr.bf16.mxu0 0
  %6477 = vmatmul.mubr.bf16.gmra.mrb[0].mxu0 %v5781
  %v6478 = vpop.f32.mrb[0].mxu0
  %v6479 = vadd.f32 %v5585, %v6478
  %v6480 = vpop.f32.mrb[0].mxu0
  %v6481 = vpop.f32.mrb[0].mxu0
  %v6482 = vadd.f32 %v5585, %v6481
  %v6483 = vpop.f32.mrb[0].mxu0
  %6484 = vmatprep.mubr.bf16.mxu0 0
  %6485 = vmatmul.mubr.bf16.gmra.mrb[0].mxu0 %v5784
  %v6486 = vpop.f32.mrb[0].mxu0
  %v6487 = vadd.f32 %v5585, %v6486
  %v6488 = vpop.f32.mrb[0].mxu0
  %v6489 = vpop.f32.mrb[0].mxu0
  %v6490 = vadd.f32 %v5585, %v6489
  %v6491 = vpop.f32.mrb[0].mxu0
  %6492 = vmatprep.mubr.bf16.mxu0 0
  %6493 = vmatmul.mubr.bf16.gmra.mrb[0].mxu0 %v5787
  %v6494 = vpop.f32.mrb[0].mxu0
  %v6495 = vadd.f32 %v5585, %v6494
  %v6496 = vpop.f32.mrb[0].mxu0
  %v6497 = vpop.f32.mrb[0].mxu0
  %v6498 = vadd.f32 %v5585, %v6497
  %v6499 = vpop.f32.mrb[0].mxu0
  %6500 = vmatprep.mubr.bf16.mxu0 0
  %6501 = vmatmul.mubr.bf16.gmra.mrb[0].mxu0 %v5790
  %v6502 = vpop.f32.mrb[0].mxu0
  %v6503 = vadd.f32 %v5585, %v6502
  %v6504 = vpop.f32.mrb[0].mxu0
  %v6505 = vpop.f32.mrb[0].mxu0
  %v6506 = vadd.f32 %v5585, %v6505
  %v6507 = vpop.f32.mrb[0].mxu0
  %6508 = vmatprep.mubr.bf16.mxu0 0
  %6509 = vmatmul.mubr.bf16.gmra.mrb[0].mxu0 %v5793
  %v6510 = vpop.f32.mrb[0].mxu0
  %v6511 = vadd.f32 %v5585, %v6510
  %v6512 = vpop.f32.mrb[0].mxu0
  %v6513 = vpop.f32.mrb[0].mxu0
  %v6514 = vadd.f32 %v5585, %v6513
  %v6515 = vpop.f32.mrb[0].mxu0
  %6516 = vmatprep.mubr.bf16.mxu0 0
  %6517 = vmatmul.mubr.bf16.gmra.mrb[0].mxu0 %v5796
  %v6518 = vpop.f32.mrb[0].mxu0
  %v6519 = vadd.f32 %v5585, %v6518
  %v6520 = vpop.f32.mrb[0].mxu0
  %v6521 = vpop.f32.mrb[0].mxu0
  %v6522 = vadd.f32 %v5585, %v6521
  %v6523 = vpop.f32.mrb[0].mxu0
  %6524 = vmatprep.mubr.bf16.mxu0 0
  %6525 = vmatmul.mubr.bf16.gmra.mrb[0].mxu0 %v5799
  %v6526 = vpop.f32.mrb[0].mxu0
  %v6527 = vadd.f32 %v5585, %v6526
  %v6528 = vpop.f32.mrb[0].mxu0
  %v6529 = vpop.f32.mrb[0].mxu0
  %v6530 = vadd.f32 %v5585, %v6529
  %v6531 = vpop.f32.mrb[0].mxu0
  %6532 = vmatprep.mubr.bf16.mxu0 0
  %6533 = vmatmul.mubr.bf16.gmra.mrb[0].mxu0 %v5802
  %v6534 = vpop.f32.mrb[0].mxu0
  %v6535 = vadd.f32 %v5585, %v6534
  %v6536 = vpop.f32.mrb[0].mxu0
  %v6537 = vpop.f32.mrb[0].mxu0
  %v6538 = vadd.f32 %v5585, %v6537
  %v6539 = vpop.f32.mrb[0].mxu0
  %6540 = vmatprep.mubr.bf16.mxu0 0
  %6541 = vmatmul.mubr.bf16.gmra.mrb[0].mxu0 %v5805
  %v6542 = vpop.f32.mrb[0].mxu0
  %v6543 = vadd.f32 %v5585, %v6542
  %v6544 = vpop.f32.mrb[0].mxu0
  %v6545 = vpop.f32.mrb[0].mxu0
  %v6546 = vadd.f32 %v5585, %v6545
  %v6547 = vpop.f32.mrb[0].mxu0
  %6548 = vmatprep.mubr.bf16.mxu0 0
  %6549 = vmatmul.mubr.bf16.gmra.mrb[0].mxu0 %v5808
  %v6550 = vpop.f32.mrb[0].mxu0
  %v6551 = vadd.f32 %v5585, %v6550
  %v6552 = vpop.f32.mrb[0].mxu0
  %v6553 = vpop.f32.mrb[0].mxu0
  %v6554 = vadd.f32 %v5585, %v6553
  %v6555 = vpop.f32.mrb[0].mxu0
  %6556 = vmatprep.mubr.bf16.mxu0 0
  %6557 = vmatmul.mubr.bf16.gmra.mrb[0].mxu0 %v5811
  %v6558 = vpop.f32.mrb[0].mxu0
  %v6559 = vadd.f32 %v5585, %v6558
  %v6560 = vpop.f32.mrb[0].mxu0
  %v6561 = vpop.f32.mrb[0].mxu0
  %v6562 = vadd.f32 %v5585, %v6561
  %v6563 = vpop.f32.mrb[0].mxu0
  %6564 = vmatprep.mubr.bf16.mxu0 0
  %6565 = vmatmul.mubr.bf16.gmra.mrb[0].mxu0 %v5814
  %v6566 = vpop.f32.mrb[0].mxu0
  %v6567 = vadd.f32 %v5585, %v6566
  %v6568 = vpop.f32.mrb[0].mxu0
  %v6569 = vpop.f32.mrb[0].mxu0
  %v6570 = vadd.f32 %v5585, %v6569
  %v6571 = vpop.f32.mrb[0].mxu0
  %6572 = vmatprep.mubr.bf16.mxu0 0
  %6573 = vmatmul.mubr.bf16.gmra.mrb[0].mxu0 %v5817
  %v6574 = vpop.f32.mrb[0].mxu0
  %v6575 = vadd.f32 %v5585, %v6574
  %v6576 = vpop.f32.mrb[0].mxu0
  %v6577 = vpop.f32.mrb[0].mxu0
  %v6578 = vadd.f32 %v5585, %v6577
  %v6579 = vpop.f32.mrb[0].mxu0
  %6580 = vmatprep.mubr.bf16.mxu0 0
  %6581 = vmatmul.mubr.bf16.gmra.mrb[0].mxu0 %v5820
  %v6582 = vpop.f32.mrb[0].mxu0
  %v6583 = vadd.f32 %v5585, %v6582
  %v6584 = vpop.f32.mrb[0].mxu0
  %v6585 = vpop.f32.mrb[0].mxu0
  %v6586 = vadd.f32 %v5585, %v6585
  %v6587 = vpop.f32.mrb[0].mxu0
  %6588 = vmatprep.mubr.bf16.mxu0 0
  %6589 = vmatmul.mubr.bf16.gmra.mrb[0].mxu0 %v5823
  %v6590 = vpop.f32.mrb[0].mxu0
  %v6591 = vadd.f32 %v5585, %v6590
  %v6592 = vpop.f32.mrb[0].mxu0
  %v6593 = vpop.f32.mrb[0].mxu0
  %v6594 = vadd.f32 %v5585, %v6593
  %v6595 = vpop.f32.mrb[0].mxu0
  %6596 = vmatprep.mubr.bf16.mxu0 0
  %6597 = vmatmul.mubr.bf16.gmra.mrb[0].mxu0 %v5826
  %v6598 = vpop.f32.mrb[0].mxu0
  %v6599 = vadd.f32 %v5585, %v6598
  %v6600 = vpop.f32.mrb[0].mxu0
  %v6601 = vpop.f32.mrb[0].mxu0
  %v6602 = vadd.f32 %v5585, %v6601
  %v6603 = vpop.f32.mrb[0].mxu0
  %6604 = vmatprep.mubr.bf16.mxu0 0
  %6605 = vmatmul.mubr.bf16.gmra.mrb[0].mxu0 %v5829
  %v6606 = vpop.f32.mrb[0].mxu0
  %v6607 = vadd.f32 %v5585, %v6606
  %v6608 = vpop.f32.mrb[0].mxu0
  %v6609 = vpop.f32.mrb[0].mxu0
  %v6610 = vadd.f32 %v5585, %v6609
  %v6611 = vpop.f32.mrb[0].mxu0
  %6612 = vmatprep.mubr.bf16.mxu0 0
  %6613 = vmatmul.mubr.bf16.gmra.mrb[0].mxu0 %v5832
  %v6614 = vpop.f32.mrb[0].mxu0
  %v6615 = vadd.f32 %v5585, %v6614
  %v6616 = vpop.f32.mrb[0].mxu0
  %v6617 = vpop.f32.mrb[0].mxu0
  %v6618 = vadd.f32 %v5585, %v6617
  %v6619 = vpop.f32.mrb[0].mxu0
  %6620 = vmatprep.mubr.bf16.mxu0 0
  %6621 = vmatmul.mubr.bf16.gmra.mrb[0].mxu0 %v5835
  %v6622 = vpop.f32.mrb[0].mxu0
  %v6623 = vadd.f32 %v5585, %v6622
  %v6624 = vpop.f32.mrb[0].mxu0
  %v6625 = vpop.f32.mrb[0].mxu0
  %v6626 = vadd.f32 %v5585, %v6625
  %v6627 = vpop.f32.mrb[0].mxu0
  %6628 = vmatprep.mubr.bf16.mxu0 0
  %6629 = vmatmul.mubr.bf16.gmra.mrb[0].mxu0 %v5838
  %v6630 = vpop.f32.mrb[0].mxu0
  %v6631 = vadd.f32 %v5585, %v6630
  %v6632 = vpop.f32.mrb[0].mxu0
  %v6633 = vpop.f32.mrb[0].mxu0
  %v6634 = vadd.f32 %v5585, %v6633
  %v6635 = vpop.f32.mrb[0].mxu0
  %6636 = vmatprep.mubr.bf16.mxu0 0
  %6637 = vmatmul.mubr.bf16.gmra.mrb[0].mxu0 %v5841
  %v6638 = vpop.f32.mrb[0].mxu0
  %v6639 = vadd.f32 %v5585, %v6638
  %v6640 = vpop.f32.mrb[0].mxu0
  %v6641 = vpop.f32.mrb[0].mxu0
  %v6642 = vadd.f32 %v5585, %v6641
  %v6643 = vpop.f32.mrb[0].mxu0
  %6644 = vmatprep.mubr.bf16.mxu0 0
  %6645 = vmatmul.mubr.bf16.gmra.mrb[0].mxu0 %v5844
  %v6646 = vpop.f32.mrb[0].mxu0
  %v6647 = vadd.f32 %v5585, %v6646
  %v6648 = vpop.f32.mrb[0].mxu0
  %v6649 = vpop.f32.mrb[0].mxu0
  %v6650 = vadd.f32 %v5585, %v6649
  %v6651 = vpop.f32.mrb[0].mxu0
  %6652 = vmatprep.mubr.bf16.mxu0 0
  %6653 = vmatmul.mubr.bf16.gmra.mrb[0].mxu0 %v5847
  %v6654 = vpop.f32.mrb[0].mxu0
  %v6655 = vadd.f32 %v5585, %v6654
  %v6656 = vpop.f32.mrb[0].mxu0
  %v6657 = vpop.f32.mrb[0].mxu0
  %v6658 = vadd.f32 %v5585, %v6657
  %v6659 = vpop.f32.mrb[0].mxu0
  %6660 = vmatprep.mubr.bf16.mxu0 0
  %6661 = vmatmul.mubr.bf16.gmra.mrb[0].mxu0 %v5850
  %v6662 = vpop.f32.mrb[0].mxu0
  %v6663 = vadd.f32 %v5585, %v6662
  %v6664 = vpop.f32.mrb[0].mxu0
  %v6665 = vpop.f32.mrb[0].mxu0
  %v6666 = vadd.f32 %v5585, %v6665
  %v6667 = vpop.f32.mrb[0].mxu0
  %6668 = vmatprep.mubr.bf16.mxu0 0
  %6669 = vmatmul.mubr.bf16.gmra.mrb[0].mxu0 %v5853
  %v6670 = vpop.f32.mrb[0].mxu0
  %v6671 = vadd.f32 %v5585, %v6670
  %v6672 = vpop.f32.mrb[0].mxu0
  %v6673 = vpop.f32.mrb[0].mxu0
  %v6674 = vadd.f32 %v5585, %v6673
  %v6675 = vpop.f32.mrb[0].mxu0
  %6676 = vmatprep.mubr.bf16.mxu0 0
  %6677 = vmatmul.mubr.bf16.gmra.mrb[0].mxu0 %v5856
  %v6678 = vpop.f32.mrb[0].mxu0
  %v6679 = vadd.f32 %v5585, %v6678
  %v6680 = vpop.f32.mrb[0].mxu0
  %v6681 = vpop.f32.mrb[0].mxu0
  %v6682 = vadd.f32 %v5585, %v6681
  %v6683 = vpop.f32.mrb[0].mxu0
  %6684 = vmatprep.mubr.bf16.mxu0 0
  %6685 = vmatmul.mubr.bf16.gmra.mrb[0].mxu0 %v5859
  %v6686 = vpop.f32.mrb[0].mxu0
  %v6687 = vadd.f32 %v5585, %v6686
  %v6688 = vpop.f32.mrb[0].mxu0
  %v6689 = vpop.f32.mrb[0].mxu0
  %v6690 = vadd.f32 %v5585, %v6689
  %v6691 = vpop.f32.mrb[0].mxu0
  %6692 = vmatprep.mubr.bf16.mxu0 0
  %6693 = vmatmul.mubr.bf16.gmra.mrb[0].mxu0 %v5862
  %v6694 = vpop.f32.mrb[0].mxu0
  %v6695 = vadd.f32 %v5585, %v6694
  %v6696 = vpop.f32.mrb[0].mxu0
  %v6697 = vpop.f32.mrb[0].mxu0
  %v6698 = vadd.f32 %v5585, %v6697
  %v6699 = vpop.f32.mrb[0].mxu0
  %6700 = vmatprep.mubr.bf16.mxu0 0
  %6701 = vmatmul.mubr.bf16.gmra.mrb[0].mxu0 %v5865
  %v6702 = vpop.f32.mrb[0].mxu0
  %v6703 = vadd.f32 %v5585, %v6702
  %v6704 = vpop.f32.mrb[0].mxu0
  %v6705 = vpop.f32.mrb[0].mxu0
  %v6706 = vadd.f32 %v5585, %v6705
  %v6707 = vpop.f32.mrb[0].mxu0
  %6708 = vmatprep.mubr.bf16.mxu0 0
  %6709 = vmatmul.mubr.bf16.gmra.mrb[0].mxu0 %v5868
  %v6710 = vpop.f32.mrb[0].mxu0
  %v6711 = vadd.f32 %v5585, %v6710
  %v6712 = vpop.f32.mrb[0].mxu0
  %v6713 = vpop.f32.mrb[0].mxu0
  %v6714 = vadd.f32 %v5585, %v6713
  %v6715 = vpop.f32.mrb[0].mxu0
  %6716 = vmatprep.mubr.bf16.mxu0 0
  %6717 = vmatmul.mubr.bf16.gmra.mrb[0].mxu0 %v5871
  %v6718 = vpop.f32.mrb[0].mxu0
  %v6719 = vadd.f32 %v5585, %v6718
  %v6720 = vpop.f32.mrb[0].mxu0
  %v6721 = vpop.f32.mrb[0].mxu0
  %v6722 = vadd.f32 %v5585, %v6721
  %v6723 = vpop.f32.mrb[0].mxu0
  %6724 = vmatprep.mubr.bf16.mxu0 0
  %6725 = vmatmul.mubr.bf16.gmra.mrb[0].mxu0 %v5874
  %v6726 = vpop.f32.mrb[0].mxu0
  %v6727 = vadd.f32 %v5585, %v6726
  %v6728 = vpop.f32.mrb[0].mxu0
  %v6729 = vpop.f32.mrb[0].mxu0
  %v6730 = vadd.f32 %v5585, %v6729
  %v6731 = vpop.f32.mrb[0].mxu0
  %6732 = vmatprep.mubr.bf16.mxu0 0
  %6733 = vmatmul.mubr.bf16.gmra.mrb[0].mxu0 %v5877
  %v6734 = vpop.f32.mrb[0].mxu0
  %v6735 = vadd.f32 %v5585, %v6734
  %v6736 = vpop.f32.mrb[0].mxu0
  %v6737 = vpop.f32.mrb[0].mxu0
  %v6738 = vadd.f32 %v5585, %v6737
  %v6739 = vpop.f32.mrb[0].mxu0
  %6740 = vmatprep.mubr.bf16.mxu0 0
  %6741 = vmatmul.mubr.bf16.gmra.mrb[0].mxu0 %v5880
  %v6742 = vpop.f32.mrb[0].mxu0
  %v6743 = vadd.f32 %v5585, %v6742
  %v6744 = vpop.f32.mrb[0].mxu0
  %v6745 = vpop.f32.mrb[0].mxu0
  %v6746 = vadd.f32 %v5585, %v6745
  %v6747 = vpop.f32.mrb[0].mxu0
  %6748 = vmatprep.mubr.bf16.mxu0 0
  %6749 = vmatmul.mubr.bf16.gmra.mrb[0].mxu0 %v5883
  %v6750 = vpop.f32.mrb[0].mxu0
  %v6751 = vadd.f32 %v5585, %v6750
  %v6752 = vpop.f32.mrb[0].mxu0
  %v6753 = vpop.f32.mrb[0].mxu0
  %v6754 = vadd.f32 %v5585, %v6753
  %v6755 = vpop.f32.mrb[0].mxu0
  %6756 = vmatprep.mubr.bf16.mxu0 0
  %6757 = vmatmul.mubr.bf16.gmra.mrb[0].mxu0 %v5886
  %v6758 = vpop.f32.mrb[0].mxu0
  %v6759 = vadd.f32 %v5585, %v6758
  %v6760 = vpop.f32.mrb[0].mxu0
  %v6761 = vpop.f32.mrb[0].mxu0
  %v6762 = vadd.f32 %v5585, %v6761
  %v6763 = vpop.f32.mrb[0].mxu0
  %6764 = vmatprep.mubr.bf16.mxu0 0
  %6765 = vmatmul.mubr.bf16.gmra.mrb[0].mxu0 %v5889
  %v6766 = vpop.f32.mrb[0].mxu0
  %v6767 = vadd.f32 %v5585, %v6766
  %v6768 = vpop.f32.mrb[0].mxu0
  %v6769 = vpop.f32.mrb[0].mxu0
  %v6770 = vadd.f32 %v5585, %v6769
  %v6771 = vpop.f32.mrb[0].mxu0
  %6772 = vmatprep.mubr.bf16.mxu0 0
  %6773 = vmatmul.mubr.bf16.gmra.mrb[0].mxu0 %v5892
  %v6774 = vpop.f32.mrb[0].mxu0
  %v6775 = vadd.f32 %v5585, %v6774
  %v6776 = vpop.f32.mrb[0].mxu0
  %v6777 = vpop.f32.mrb[0].mxu0
  %v6778 = vadd.f32 %v5585, %v6777
  %v6779 = vpop.f32.mrb[0].mxu0
  %6780 = vmatprep.mubr.bf16.mxu0 0
  %6781 = vmatmul.mubr.bf16.gmra.mrb[0].mxu0 %v5895
  %v6782 = vpop.f32.mrb[0].mxu0
  %v6783 = vadd.f32 %v5585, %v6782
  %v6784 = vpop.f32.mrb[0].mxu0
  %v6785 = vpop.f32.mrb[0].mxu0
  %v6786 = vadd.f32 %v5585, %v6785
  %v6787 = vpop.f32.mrb[0].mxu0
  %6788 = vmatprep.mubr.bf16.mxu0 0
  %6789 = vmatmul.mubr.bf16.gmra.mrb[0].mxu0 %v5898
  %v6790 = vpop.f32.mrb[0].mxu0
  %v6791 = vadd.f32 %v5585, %v6790
  %v6792 = vpop.f32.mrb[0].mxu0
  %v6793 = vpop.f32.mrb[0].mxu0
  %v6794 = vadd.f32 %v5585, %v6793
  %v6795 = vpop.f32.mrb[0].mxu0
  %6796 = vmatprep.mubr.bf16.mxu0 0
  %6797 = vmatmul.mubr.bf16.gmra.mrb[0].mxu0 %v5901
  %v6798 = vpop.f32.mrb[0].mxu0
  %v6799 = vadd.f32 %v5585, %v6798
  %v6800 = vpop.f32.mrb[0].mxu0
  %v6801 = vpop.f32.mrb[0].mxu0
  %v6802 = vadd.f32 %v5585, %v6801
  %v6803 = vpop.f32.mrb[0].mxu0
  %6804 = vmatprep.mubr.bf16.mxu0 0
  %6805 = vmatmul.mubr.bf16.gmra.mrb[0].mxu0 %v5904
  %v6806 = vpop.f32.mrb[0].mxu0
  %v6807 = vadd.f32 %v5585, %v6806
  %v6808 = vpop.f32.mrb[0].mxu0
  %v6809 = vpop.f32.mrb[0].mxu0
  %v6810 = vadd.f32 %v5585, %v6809
  %v6811 = vpop.f32.mrb[0].mxu0
  %6812 = vmatprep.mubr.bf16.mxu0 0
  %6813 = vmatmul.mubr.bf16.gmra.mrb[0].mxu0 %v5907
  %v6814 = vpop.f32.mrb[0].mxu0
  %v6815 = vadd.f32 %v5585, %v6814
  %v6816 = vpop.f32.mrb[0].mxu0
  %v6817 = vpop.f32.mrb[0].mxu0
  %v6818 = vadd.f32 %v5585, %v6817
  %v6819 = vpop.f32.mrb[0].mxu0
  %6820 = vmatprep.mubr.bf16.mxu0 0
  %6821 = vmatmul.mubr.bf16.gmra.mrb[0].mxu0 %v5910
  %v6822 = vpop.f32.mrb[0].mxu0
  %v6823 = vadd.f32 %v5585, %v6822
  %v6824 = vpop.f32.mrb[0].mxu0
  %v6825 = vpop.f32.mrb[0].mxu0
  %v6826 = vadd.f32 %v5585, %v6825
  %v6827 = vpop.f32.mrb[0].mxu0
  %6828 = vmatprep.mubr.bf16.mxu0 0
  %6829 = vmatmul.mubr.bf16.gmra.mrb[0].mxu0 %v5913
  %v6830 = vpop.f32.mrb[0].mxu0
  %v6831 = vadd.f32 %v5585, %v6830
  %v6832 = vpop.f32.mrb[0].mxu0
  %v6833 = vpop.f32.mrb[0].mxu0
  %v6834 = vadd.f32 %v5585, %v6833
  %v6835 = vpop.f32.mrb[0].mxu0
  %6836 = vmatprep.mubr.bf16.mxu0 0
  %6837 = vmatmul.mubr.bf16.gmra.mrb[0].mxu0 %v5916
  %v6838 = vpop.f32.mrb[0].mxu0
  %v6839 = vadd.f32 %v5585, %v6838
  %v6840 = vpop.f32.mrb[0].mxu0
  %v6841 = vpop.f32.mrb[0].mxu0
  %v6842 = vadd.f32 %v5585, %v6841
  %v6843 = vpop.f32.mrb[0].mxu0
  %6844 = vmatprep.mubr.bf16.mxu0 0
  %6845 = vmatmul.mubr.bf16.gmra.mrb[0].mxu0 %v5919
  %v6846 = vpop.f32.mrb[0].mxu0
  %v6847 = vadd.f32 %v5585, %v6846
  %v6848 = vpop.f32.mrb[0].mxu0
  %v6849 = vpop.f32.mrb[0].mxu0
  %v6850 = vadd.f32 %v5585, %v6849
  %v6851 = vpop.f32.mrb[0].mxu0
  %6852 = vmatprep.mubr.bf16.mxu0 0
  %6853 = vmatmul.mubr.bf16.gmra.mrb[0].mxu0 %v5922
  %v6854 = vpop.f32.mrb[0].mxu0
  %v6855 = vadd.f32 %v5585, %v6854
  %v6856 = vpop.f32.mrb[0].mxu0
  %v6857 = vpop.f32.mrb[0].mxu0
  %v6858 = vadd.f32 %v5585, %v6857
  %v6859 = vpop.f32.mrb[0].mxu0
  %6860 = vmatprep.mubr.bf16.mxu0 0
  %6861 = vmatmul.mubr.bf16.gmra.mrb[0].mxu0 %v5925
  %v6862 = vpop.f32.mrb[0].mxu0
  %v6863 = vadd.f32 %v5585, %v6862
  %v6864 = vpop.f32.mrb[0].mxu0
  %v6865 = vpop.f32.mrb[0].mxu0
  %v6866 = vadd.f32 %v5585, %v6865
  %v6867 = vpop.f32.mrb[0].mxu0
  %6868 = vmatprep.mubr.bf16.mxu0 0
  %6869 = vmatmul.mubr.bf16.gmra.mrb[0].mxu0 %v5928
  %v6870 = vpop.f32.mrb[0].mxu0
  %v6871 = vadd.f32 %v5585, %v6870
  %v6872 = vpop.f32.mrb[0].mxu0
  %v6873 = vpop.f32.mrb[0].mxu0
  %v6874 = vadd.f32 %v5585, %v6873
  %v6875 = vpop.f32.mrb[0].mxu0
  %6876 = vmatprep.mubr.bf16.mxu0 0
  %6877 = vmatmul.mubr.bf16.gmra.mrb[0].mxu0 %v5931
  %v6878 = vpop.f32.mrb[0].mxu0
  %v6879 = vadd.f32 %v5585, %v6878
  %v6880 = vpop.f32.mrb[0].mxu0
  %v6881 = vpop.f32.mrb[0].mxu0
  %v6882 = vadd.f32 %v5585, %v6881
  %v6883 = vpop.f32.mrb[0].mxu0
  %6884 = vmatprep.mubr.bf16.mxu0 0
  %6885 = vmatmul.mubr.bf16.gmra.mrb[0].mxu0 %v5934
  %v6886 = vpop.f32.mrb[0].mxu0
  %v6887 = vadd.f32 %v5585, %v6886
  %v6888 = vpop.f32.mrb[0].mxu0
  %v6889 = vpop.f32.mrb[0].mxu0
  %v6890 = vadd.f32 %v5585, %v6889
  %v6891 = vpop.f32.mrb[0].mxu0
  %6892 = vmatprep.mubr.bf16.mxu0 0
  %6893 = vmatmul.mubr.bf16.gmra.mrb[0].mxu0 %v5937
  %v6894 = vpop.f32.mrb[0].mxu0
  %v6895 = vadd.f32 %v5585, %v6894
  %v6896 = vpop.f32.mrb[0].mxu0
  %v6897 = vpop.f32.mrb[0].mxu0
  %v6898 = vadd.f32 %v5585, %v6897
  %v6899 = vpop.f32.mrb[0].mxu0
  %6900 = vmatprep.mubr.bf16.mxu0 0
  %6901 = vmatmul.mubr.bf16.gmra.mrb[0].mxu0 %v5940
  %v6902 = vpop.f32.mrb[0].mxu0
  %v6903 = vadd.f32 %v5585, %v6902
  %v6904 = vpop.f32.mrb[0].mxu0
  %v6905 = vpop.f32.mrb[0].mxu0
  %v6906 = vadd.f32 %v5585, %v6905
  %v6907 = vpop.f32.mrb[0].mxu0
  %6908 = vmatprep.mubr.bf16.mxu0 0
  %6909 = vmatmul.mubr.bf16.gmra.mrb[0].mxu0 %v5943
  %v6910 = vpop.f32.mrb[0].mxu0
  %v6911 = vadd.f32 %v5585, %v6910
  %v6912 = vpop.f32.mrb[0].mxu0
  %v6913 = vpop.f32.mrb[0].mxu0
  %v6914 = vadd.f32 %v5585, %v6913
  %v6915 = vpop.f32.mrb[0].mxu0
  %6916 = vmatprep.mubr.bf16.mxu0 0
  %6917 = vmatmul.mubr.bf16.gmra.mrb[0].mxu0 %v5946
  %v6918 = vpop.f32.mrb[0].mxu0
  %v6919 = vadd.f32 %v5585, %v6918
  %v6920 = vpop.f32.mrb[0].mxu0
  %v6921 = vpop.f32.mrb[0].mxu0
  %v6922 = vadd.f32 %v5585, %v6921
  %v6923 = vpop.f32.mrb[0].mxu0
  %6924 = vmatprep.mubr.bf16.mxu0 0
  %6925 = vmatmul.mubr.bf16.gmra.mrb[0].mxu0 %v5949
  %v6926 = vpop.f32.mrb[0].mxu0
  %v6927 = vadd.f32 %v5585, %v6926
  %v6928 = vpop.f32.mrb[0].mxu0
  %v6929 = vpop.f32.mrb[0].mxu0
  %v6930 = vadd.f32 %v5585, %v6929
  %v6931 = vpop.f32.mrb[0].mxu0
  %6932 = vmatprep.mubr.bf16.mxu0 0
  %6933 = vmatmul.mubr.bf16.gmra.mrb[0].mxu0 %v5952
  %v6934 = vpop.f32.mrb[0].mxu0
  %v6935 = vadd.f32 %v5585, %v6934
  %v6936 = vpop.f32.mrb[0].mxu0
  %v6937 = vpop.f32.mrb[0].mxu0
  %v6938 = vadd.f32 %v5585, %v6937
  %v6939 = vpop.f32.mrb[0].mxu0
  %6940 = vmatprep.mubr.bf16.mxu0 0
  %6941 = vmatmul.mubr.bf16.gmra.mrb[0].mxu0 %v5955
  %v6942 = vpop.f32.mrb[0].mxu0
  %v6943 = vadd.f32 %v5585, %v6942
  %v6944 = vpop.f32.mrb[0].mxu0
  %v6945 = vpop.f32.mrb[0].mxu0
  %v6946 = vadd.f32 %v5585, %v6945
  %v6947 = vpop.f32.mrb[0].mxu0
  %6948 = vmatprep.mubr.bf16.mxu0 0
  %6949 = vmatmul.mubr.bf16.gmra.mrb[0].mxu0 %v5958
  %v6950 = vpop.f32.mrb[0].mxu0
  %v6951 = vadd.f32 %v5585, %v6950
  %v6952 = vpop.f32.mrb[0].mxu0
  %v6953 = vpop.f32.mrb[0].mxu0
  %v6954 = vadd.f32 %v5585, %v6953
  %v6955 = vpop.f32.mrb[0].mxu0
  %6956 = vmatprep.mubr.bf16.mxu0 0
  %6957 = vmatmul.mubr.bf16.gmra.mrb[0].mxu0 %v5961
  %v6958 = vpop.f32.mrb[0].mxu0
  %v6959 = vadd.f32 %v5585, %v6958
  %v6960 = vpop.f32.mrb[0].mxu0
  %v6961 = vpop.f32.mrb[0].mxu0
  %v6962 = vadd.f32 %v5585, %v6961
  %v6963 = vpop.f32.mrb[0].mxu0
  %6964 = vmatprep.mubr.bf16.mxu0 0
  %6965 = vmatmul.mubr.bf16.gmra.mrb[0].mxu0 %v5964
  %v6966 = vpop.f32.mrb[0].mxu0
  %v6967 = vadd.f32 %v5585, %v6966
  %v6968 = vpop.f32.mrb[0].mxu0
  %v6969 = vpop.f32.mrb[0].mxu0
  %v6970 = vadd.f32 %v5585, %v6969
  %v6971 = vpop.f32.mrb[0].mxu0
  %6972 = vmatprep.mubr.bf16.mxu0 0
  %6973 = vmatmul.mubr.bf16.gmra.mrb[0].mxu0 %v5967
  %v6974 = vpop.f32.mrb[0].mxu0
  %v6975 = vadd.f32 %v5585, %v6974
  %v6976 = vpop.f32.mrb[0].mxu0
  %v6977 = vpop.f32.mrb[0].mxu0
  %v6978 = vadd.f32 %v5585, %v6977
  %v6979 = vpop.f32.mrb[0].mxu0
  %6980 = vmatprep.mubr.bf16.mxu0 0
  %6981 = vmatmul.mubr.bf16.gmra.mrb[0].mxu0 %v5970
  %v6982 = vpop.f32.mrb[0].mxu0
  %v6983 = vadd.f32 %v5585, %v6982
  %v6984 = vpop.f32.mrb[0].mxu0
  %v6985 = vpop.f32.mrb[0].mxu0
  %v6986 = vadd.f32 %v5585, %v6985
  %v6987 = vpop.f32.mrb[0].mxu0
  %6988 = vmatprep.mubr.bf16.mxu0 0
  %6989 = vmatmul.mubr.bf16.gmra.mrb[0].mxu0 %v5973
  %v6990 = vpop.f32.mrb[0].mxu0
  %v6991 = vadd.f32 %v5585, %v6990
  %v6992 = vpop.f32.mrb[0].mxu0
  %v6993 = vpop.f32.mrb[0].mxu0
  %v6994 = vadd.f32 %v5585, %v6993
  %v6995 = vpop.f32.mrb[0].mxu0
  %6996 = vmatprep.mubr.bf16.mxu0 0
  %6997 = vmatmul.mubr.bf16.gmra.mrb[0].mxu0 %v5976
  %v6998 = vpop.f32.mrb[0].mxu0
  %v6999 = vadd.f32 %v5585, %v6998
  %v7000 = vpop.f32.mrb[0].mxu0
  %v7001 = vpop.f32.mrb[0].mxu0
  %v7002 = vadd.f32 %v5585, %v7001
  %v7003 = vpop.f32.mrb[0].mxu0
  %7004 = vmatprep.mubr.bf16.mxu0 0
  %7005 = vmatmul.mubr.bf16.gmra.mrb[0].mxu0 %v5979
  %v7006 = vpop.f32.mrb[0].mxu0
  %v7007 = vadd.f32 %v5585, %v7006
  %v7008 = vpop.f32.mrb[0].mxu0
  %v7009 = vpop.f32.mrb[0].mxu0
  %v7010 = vadd.f32 %v5585, %v7009
  %v7011 = vpop.f32.mrb[0].mxu0
  %7012 = vmatprep.mubr.bf16.mxu0 0
  %7013 = vmatmul.mubr.bf16.gmra.mrb[0].mxu0 %v5982
  %v7014 = vpop.f32.mrb[0].mxu0
  %v7015 = vadd.f32 %v5585, %v7014
  %v7016 = vpop.f32.mrb[0].mxu0
  %v7017 = vpop.f32.mrb[0].mxu0
  %v7018 = vadd.f32 %v5585, %v7017
  %v7019 = vpop.f32.mrb[0].mxu0
  %7020 = vmatprep.mubr.bf16.mxu0 0
  %7021 = vmatmul.mubr.bf16.gmra.mrb[0].mxu0 %v5985
  %v7022 = vpop.f32.mrb[0].mxu0
  %v7023 = vadd.f32 %v5585, %v7022
  %v7024 = vpop.f32.mrb[0].mxu0
  %v7025 = vpop.f32.mrb[0].mxu0
  %v7026 = vadd.f32 %v5585, %v7025
  %v7027 = vpop.f32.mrb[0].mxu0
  %7028 = vmatprep.mubr.bf16.mxu0 0
  %7029 = vmatmul.mubr.bf16.gmra.mrb[0].mxu0 %v5988
  %v7030 = vpop.f32.mrb[0].mxu0
  %v7031 = vadd.f32 %v5585, %v7030
  %v7032 = vpop.f32.mrb[0].mxu0
  %v7033 = vpop.f32.mrb[0].mxu0
  %v7034 = vadd.f32 %v5585, %v7033
  %v7035 = vpop.f32.mrb[0].mxu0
  %7036 = vmatprep.mubr.bf16.mxu0 0
  %7037 = vmatmul.mubr.bf16.gmra.mrb[0].mxu0 %v5991
  %v7038 = vpop.f32.mrb[0].mxu0
  %v7039 = vadd.f32 %v5585, %v7038
  %v7040 = vpop.f32.mrb[0].mxu0
  %v7041 = vpop.f32.mrb[0].mxu0
  %v7042 = vadd.f32 %v5585, %v7041
  %v7043 = vpop.f32.mrb[0].mxu0
  %7044 = vmatprep.mubr.bf16.mxu0 0
  %7045 = vmatmul.mubr.bf16.gmra.mrb[0].mxu0 %v5994
  %v7046 = vpop.f32.mrb[0].mxu0
  %v7047 = vadd.f32 %v5585, %v7046
  %v7048 = vpop.f32.mrb[0].mxu0
  %v7049 = vpop.f32.mrb[0].mxu0
  %v7050 = vadd.f32 %v5585, %v7049
  %v7051 = vpop.f32.mrb[0].mxu0
  %7052 = vdwg.mxu0
  %v7053 = vmax.f32 %v6031, 0.0
  %v7054 = vmax.f32 %v6034, 0.0
  %v7055 = vmax.f32 %v6039, 0.0
  %v7056 = vmax.f32 %v6042, 0.0
  %v7057 = vmax.f32 %v6047, 0.0
  %v7058 = vmax.f32 %v6050, 0.0
  %v7059 = vmax.f32 %v6055, 0.0
  %v7060 = vmax.f32 %v6058, 0.0
  %v7061 = vmax.f32 %v6063, 0.0
  %v7062 = vmax.f32 %v6066, 0.0
  %v7063 = vmax.f32 %v6071, 0.0
  %v7064 = vmax.f32 %v6074, 0.0
  %v7065 = vmax.f32 %v6079, 0.0
  %v7066 = vmax.f32 %v6082, 0.0
  %v7067 = vmax.f32 %v6087, 0.0
  %v7068 = vmax.f32 %v6090, 0.0
  %v7069 = vmax.f32 %v6095, 0.0
  %v7070 = vmax.f32 %v6098, 0.0
  %v7071 = vmax.f32 %v6103, 0.0
  %v7072 = vmax.f32 %v6106, 0.0
  %v7073 = vmax.f32 %v6111, 0.0
  %v7074 = vmax.f32 %v6114, 0.0
  %v7075 = vmax.f32 %v6119, 0.0
  %v7076 = vmax.f32 %v6122, 0.0
  %v7077 = vmax.f32 %v6127, 0.0
  %v7078 = vmax.f32 %v6130, 0.0
  %v7079 = vmax.f32 %v6135, 0.0
  %v7080 = vmax.f32 %v6138, 0.0
  %v7081 = vmax.f32 %v6143, 0.0
  %v7082 = vmax.f32 %v6146, 0.0
  %v7083 = vmax.f32 %v6151, 0.0
  %v7084 = vmax.f32 %v6154, 0.0
  %v7085 = vmax.f32 %v6159, 0.0
  %v7086 = vmax.f32 %v6162, 0.0
  %v7087 = vmax.f32 %v6167, 0.0
  %v7088 = vmax.f32 %v6170, 0.0
  %v7089 = vmax.f32 %v6175, 0.0
  %v7090 = vmax.f32 %v6178, 0.0
  %v7091 = vmax.f32 %v6183, 0.0
  %v7092 = vmax.f32 %v6186, 0.0
  %v7093 = vmax.f32 %v6191, 0.0
  %v7094 = vmax.f32 %v6194, 0.0
  %v7095 = vmax.f32 %v6199, 0.0
  %v7096 = vmax.f32 %v6202, 0.0
  %v7097 = vmax.f32 %v6207, 0.0
  %v7098 = vmax.f32 %v6210, 0.0
  %v7099 = vmax.f32 %v6215, 0.0
  %v7100 = vmax.f32 %v6218, 0.0
  %v7101 = vmax.f32 %v6223, 0.0
  %v7102 = vmax.f32 %v6226, 0.0
  %v7103 = vmax.f32 %v6231, 0.0
  %v7104 = vmax.f32 %v6234, 0.0
  %v7105 = vmax.f32 %v6239, 0.0
  %v7106 = vmax.f32 %v6242, 0.0
  %v7107 = vmax.f32 %v6247, 0.0
  %v7108 = vmax.f32 %v6250, 0.0
  %v7109 = vmax.f32 %v6255, 0.0
  %v7110 = vmax.f32 %v6258, 0.0
  %v7111 = vmax.f32 %v6263, 0.0
  %v7112 = vmax.f32 %v6266, 0.0
  %v7113 = vmax.f32 %v6271, 0.0
  %v7114 = vmax.f32 %v6274, 0.0
  %v7115 = vmax.f32 %v6279, 0.0
  %v7116 = vmax.f32 %v6282, 0.0
  %v7117 = vmax.f32 %v6287, 0.0
  %v7118 = vmax.f32 %v6290, 0.0
  %v7119 = vmax.f32 %v6295, 0.0
  %v7120 = vmax.f32 %v6298, 0.0
  %v7121 = vmax.f32 %v6303, 0.0
  %v7122 = vmax.f32 %v6306, 0.0
  %v7123 = vmax.f32 %v6311, 0.0
  %v7124 = vmax.f32 %v6314, 0.0
  %v7125 = vmax.f32 %v6319, 0.0
  %v7126 = vmax.f32 %v6322, 0.0
  %v7127 = vmax.f32 %v6327, 0.0
  %v7128 = vmax.f32 %v6330, 0.0
  %v7129 = vmax.f32 %v6335, 0.0
  %v7130 = vmax.f32 %v6338, 0.0
  %v7131 = vmax.f32 %v6343, 0.0
  %v7132 = vmax.f32 %v6346, 0.0
  %v7133 = vmax.f32 %v6351, 0.0
  %v7134 = vmax.f32 %v6354, 0.0
  %v7135 = vmax.f32 %v6359, 0.0
  %v7136 = vmax.f32 %v6362, 0.0
  %v7137 = vmax.f32 %v6367, 0.0
  %v7138 = vmax.f32 %v6370, 0.0
  %v7139 = vmax.f32 %v6375, 0.0
  %v7140 = vmax.f32 %v6378, 0.0
  %v7141 = vmax.f32 %v6383, 0.0
  %v7142 = vmax.f32 %v6386, 0.0
  %v7143 = vmax.f32 %v6391, 0.0
  %v7144 = vmax.f32 %v6394, 0.0
  %v7145 = vmax.f32 %v6399, 0.0
  %v7146 = vmax.f32 %v6402, 0.0
  %v7147 = vmax.f32 %v6407, 0.0
  %v7148 = vmax.f32 %v6410, 0.0
  %v7149 = vmax.f32 %v6415, 0.0
  %v7150 = vmax.f32 %v6418, 0.0
  %v7151 = vmax.f32 %v6423, 0.0
  %v7152 = vmax.f32 %v6426, 0.0
  %v7153 = vmax.f32 %v6431, 0.0
  %v7154 = vmax.f32 %v6434, 0.0
  %v7155 = vmax.f32 %v6439, 0.0
  %v7156 = vmax.f32 %v6442, 0.0
  %v7157 = vmax.f32 %v6447, 0.0
  %v7158 = vmax.f32 %v6450, 0.0
  %v7159 = vmax.f32 %v6455, 0.0
  %v7160 = vmax.f32 %v6458, 0.0
  %v7161 = vmax.f32 %v6463, 0.0
  %v7162 = vmax.f32 %v6466, 0.0
  %v7163 = vmax.f32 %v6471, 0.0
  %v7164 = vmax.f32 %v6474, 0.0
  %v7165 = vmax.f32 %v6479, 0.0
  %v7166 = vmax.f32 %v6482, 0.0
  %v7167 = vmax.f32 %v6487, 0.0
  %v7168 = vmax.f32 %v6490, 0.0
  %v7169 = vmax.f32 %v6495, 0.0
  %v7170 = vmax.f32 %v6498, 0.0
  %v7171 = vmax.f32 %v6503, 0.0
  %v7172 = vmax.f32 %v6506, 0.0
  %v7173 = vmax.f32 %v6511, 0.0
  %v7174 = vmax.f32 %v6514, 0.0
  %v7175 = vmax.f32 %v6519, 0.0
  %v7176 = vmax.f32 %v6522, 0.0
  %v7177 = vmax.f32 %v6527, 0.0
  %v7178 = vmax.f32 %v6530, 0.0
  %v7179 = vmax.f32 %v6535, 0.0
  %v7180 = vmax.f32 %v6538, 0.0
  %v7181 = vmax.f32 %v6543, 0.0
  %v7182 = vmax.f32 %v6546, 0.0
  %v7183 = vmax.f32 %v6551, 0.0
  %v7184 = vmax.f32 %v6554, 0.0
  %v7185 = vmax.f32 %v6559, 0.0
  %v7186 = vmax.f32 %v6562, 0.0
  %v7187 = vmax.f32 %v6567, 0.0
  %v7188 = vmax.f32 %v6570, 0.0
  %v7189 = vmax.f32 %v6575, 0.0
  %v7190 = vmax.f32 %v6578, 0.0
  %v7191 = vmax.f32 %v6583, 0.0
  %v7192 = vmax.f32 %v6586, 0.0
  %v7193 = vmax.f32 %v6591, 0.0
  %v7194 = vmax.f32 %v6594, 0.0
  %v7195 = vmax.f32 %v6599, 0.0
  %v7196 = vmax.f32 %v6602, 0.0
  %v7197 = vmax.f32 %v6607, 0.0
  %v7198 = vmax.f32 %v6610, 0.0
  %v7199 = vmax.f32 %v6615, 0.0
  %v7200 = vmax.f32 %v6618, 0.0
  %v7201 = vmax.f32 %v6623, 0.0
  %v7202 = vmax.f32 %v6626, 0.0
  %v7203 = vmax.f32 %v6631, 0.0
  %v7204 = vmax.f32 %v6634, 0.0
  %v7205 = vmax.f32 %v6639, 0.0
  %v7206 = vmax.f32 %v6642, 0.0
  %v7207 = vmax.f32 %v6647, 0.0
  %v7208 = vmax.f32 %v6650, 0.0
  %v7209 = vmax.f32 %v6655, 0.0
  %v7210 = vmax.f32 %v6658, 0.0
  %v7211 = vmax.f32 %v6663, 0.0
  %v7212 = vmax.f32 %v6666, 0.0
  %v7213 = vmax.f32 %v6671, 0.0
  %v7214 = vmax.f32 %v6674, 0.0
  %v7215 = vmax.f32 %v6679, 0.0
  %v7216 = vmax.f32 %v6682, 0.0
  %v7217 = vmax.f32 %v6687, 0.0
  %v7218 = vmax.f32 %v6690, 0.0
  %v7219 = vmax.f32 %v6695, 0.0
  %v7220 = vmax.f32 %v6698, 0.0
  %v7221 = vmax.f32 %v6703, 0.0
  %v7222 = vmax.f32 %v6706, 0.0
  %v7223 = vmax.f32 %v6711, 0.0
  %v7224 = vmax.f32 %v6714, 0.0
  %v7225 = vmax.f32 %v6719, 0.0
  %v7226 = vmax.f32 %v6722, 0.0
  %v7227 = vmax.f32 %v6727, 0.0
  %v7228 = vmax.f32 %v6730, 0.0
  %v7229 = vmax.f32 %v6735, 0.0
  %v7230 = vmax.f32 %v6738, 0.0
  %v7231 = vmax.f32 %v6743, 0.0
  %v7232 = vmax.f32 %v6746, 0.0
  %v7233 = vmax.f32 %v6751, 0.0
  %v7234 = vmax.f32 %v6754, 0.0
  %v7235 = vmax.f32 %v6759, 0.0
  %v7236 = vmax.f32 %v6762, 0.0
  %v7237 = vmax.f32 %v6767, 0.0
  %v7238 = vmax.f32 %v6770, 0.0
  %v7239 = vmax.f32 %v6775, 0.0
  %v7240 = vmax.f32 %v6778, 0.0
  %v7241 = vmax.f32 %v6783, 0.0
  %v7242 = vmax.f32 %v6786, 0.0
  %v7243 = vmax.f32 %v6791, 0.0
  %v7244 = vmax.f32 %v6794, 0.0
  %v7245 = vmax.f32 %v6799, 0.0
  %v7246 = vmax.f32 %v6802, 0.0
  %v7247 = vmax.f32 %v6807, 0.0
  %v7248 = vmax.f32 %v6810, 0.0
  %v7249 = vmax.f32 %v6815, 0.0
  %v7250 = vmax.f32 %v6818, 0.0
  %v7251 = vmax.f32 %v6823, 0.0
  %v7252 = vmax.f32 %v6826, 0.0
  %v7253 = vmax.f32 %v6831, 0.0
  %v7254 = vmax.f32 %v6834, 0.0
  %v7255 = vmax.f32 %v6839, 0.0
  %v7256 = vmax.f32 %v6842, 0.0
  %v7257 = vmax.f32 %v6847, 0.0
  %v7258 = vmax.f32 %v6850, 0.0
  %v7259 = vmax.f32 %v6855, 0.0
  %v7260 = vmax.f32 %v6858, 0.0
  %v7261 = vmax.f32 %v6863, 0.0
  %v7262 = vmax.f32 %v6866, 0.0
  %v7263 = vmax.f32 %v6871, 0.0
  %v7264 = vmax.f32 %v6874, 0.0
  %v7265 = vmax.f32 %v6879, 0.0
  %v7266 = vmax.f32 %v6882, 0.0
  %v7267 = vmax.f32 %v6887, 0.0
  %v7268 = vmax.f32 %v6890, 0.0
  %v7269 = vmax.f32 %v6895, 0.0
  %v7270 = vmax.f32 %v6898, 0.0
  %v7271 = vmax.f32 %v6903, 0.0
  %v7272 = vmax.f32 %v6906, 0.0
  %v7273 = vmax.f32 %v6911, 0.0
  %v7274 = vmax.f32 %v6914, 0.0
  %v7275 = vmax.f32 %v6919, 0.0
  %v7276 = vmax.f32 %v6922, 0.0
  %v7277 = vmax.f32 %v6927, 0.0
  %v7278 = vmax.f32 %v6930, 0.0
  %v7279 = vmax.f32 %v6935, 0.0
  %v7280 = vmax.f32 %v6938, 0.0
  %v7281 = vmax.f32 %v6943, 0.0
  %v7282 = vmax.f32 %v6946, 0.0
  %v7283 = vmax.f32 %v6951, 0.0
  %v7284 = vmax.f32 %v6954, 0.0
  %v7285 = vmax.f32 %v6959, 0.0
  %v7286 = vmax.f32 %v6962, 0.0
  %v7287 = vmax.f32 %v6967, 0.0
  %v7288 = vmax.f32 %v6970, 0.0
  %v7289 = vmax.f32 %v6975, 0.0
  %v7290 = vmax.f32 %v6978, 0.0
  %v7291 = vmax.f32 %v6983, 0.0
  %v7292 = vmax.f32 %v6986, 0.0
  %v7293 = vmax.f32 %v6991, 0.0
  %v7294 = vmax.f32 %v6994, 0.0
  %v7295 = vmax.f32 %v6999, 0.0
  %v7296 = vmax.f32 %v7002, 0.0
  %v7297 = vmax.f32 %v7007, 0.0
  %v7298 = vmax.f32 %v7010, 0.0
  %v7299 = vmax.f32 %v7015, 0.0
  %v7300 = vmax.f32 %v7018, 0.0
  %v7301 = vmax.f32 %v7023, 0.0
  %v7302 = vmax.f32 %v7026, 0.0
  %v7303 = vmax.f32 %v7031, 0.0
  %v7304 = vmax.f32 %v7034, 0.0
  %v7305 = vmax.f32 %v7039, 0.0
  %v7306 = vmax.f32 %v7042, 0.0
  %v7307 = vmax.f32 %v7047, 0.0
  %v7308 = vmax.f32 %v7050, 0.0
  %v7309 = vpack.c.bf16 %v7054, %v7053
  %v7310 = vpack.c.bf16 %v7056, %v7055
  %v7311 = vpack.c.bf16 %v7058, %v7057
  %v7312 = vpack.c.bf16 %v7060, %v7059
  %v7313 = vpack.c.bf16 %v7062, %v7061
  %v7314 = vpack.c.bf16 %v7064, %v7063
  %v7315 = vpack.c.bf16 %v7066, %v7065
  %v7316 = vpack.c.bf16 %v7068, %v7067
  %v7317 = vpack.c.bf16 %v7070, %v7069
  %v7318 = vpack.c.bf16 %v7072, %v7071
  %v7319 = vpack.c.bf16 %v7074, %v7073
  %v7320 = vpack.c.bf16 %v7076, %v7075
  %v7321 = vpack.c.bf16 %v7078, %v7077
  %v7322 = vpack.c.bf16 %v7080, %v7079
  %v7323 = vpack.c.bf16 %v7082, %v7081
  %v7324 = vpack.c.bf16 %v7084, %v7083
  %v7325 = vpack.c.bf16 %v7086, %v7085
  %v7326 = vpack.c.bf16 %v7088, %v7087
  %v7327 = vpack.c.bf16 %v7090, %v7089
  %v7328 = vpack.c.bf16 %v7092, %v7091
  %v7329 = vpack.c.bf16 %v7094, %v7093
  %v7330 = vpack.c.bf16 %v7096, %v7095
  %v7331 = vpack.c.bf16 %v7098, %v7097
  %v7332 = vpack.c.bf16 %v7100, %v7099
  %v7333 = vpack.c.bf16 %v7102, %v7101
  %v7334 = vpack.c.bf16 %v7104, %v7103
  %v7335 = vpack.c.bf16 %v7106, %v7105
  %v7336 = vpack.c.bf16 %v7108, %v7107
  %v7337 = vpack.c.bf16 %v7110, %v7109
  %v7338 = vpack.c.bf16 %v7112, %v7111
  %v7339 = vpack.c.bf16 %v7114, %v7113
  %v7340 = vpack.c.bf16 %v7116, %v7115
  %v7341 = vpack.c.bf16 %v7118, %v7117
  %v7342 = vpack.c.bf16 %v7120, %v7119
  %v7343 = vpack.c.bf16 %v7122, %v7121
  %v7344 = vpack.c.bf16 %v7124, %v7123
  %v7345 = vpack.c.bf16 %v7126, %v7125
  %v7346 = vpack.c.bf16 %v7128, %v7127
  %v7347 = vpack.c.bf16 %v7130, %v7129
  %v7348 = vpack.c.bf16 %v7132, %v7131
  %v7349 = vpack.c.bf16 %v7134, %v7133
  %v7350 = vpack.c.bf16 %v7136, %v7135
  %v7351 = vpack.c.bf16 %v7138, %v7137
  %v7352 = vpack.c.bf16 %v7140, %v7139
  %v7353 = vpack.c.bf16 %v7142, %v7141
  %v7354 = vpack.c.bf16 %v7144, %v7143
  %v7355 = vpack.c.bf16 %v7146, %v7145
  %v7356 = vpack.c.bf16 %v7148, %v7147
  %v7357 = vpack.c.bf16 %v7150, %v7149
  %v7358 = vpack.c.bf16 %v7152, %v7151
  %v7359 = vpack.c.bf16 %v7154, %v7153
  %v7360 = vpack.c.bf16 %v7156, %v7155
  %v7361 = vpack.c.bf16 %v7158, %v7157
  %v7362 = vpack.c.bf16 %v7160, %v7159
  %v7363 = vpack.c.bf16 %v7162, %v7161
  %v7364 = vpack.c.bf16 %v7164, %v7163
  %v7365 = vpack.c.bf16 %v7166, %v7165
  %v7366 = vpack.c.bf16 %v7168, %v7167
  %v7367 = vpack.c.bf16 %v7170, %v7169
  %v7368 = vpack.c.bf16 %v7172, %v7171
  %v7369 = vpack.c.bf16 %v7174, %v7173
  %v7370 = vpack.c.bf16 %v7176, %v7175
  %v7371 = vpack.c.bf16 %v7178, %v7177
  %v7372 = vpack.c.bf16 %v7180, %v7179
  %v7373 = vpack.c.bf16 %v7182, %v7181
  %v7374 = vpack.c.bf16 %v7184, %v7183
  %v7375 = vpack.c.bf16 %v7186, %v7185
  %v7376 = vpack.c.bf16 %v7188, %v7187
  %v7377 = vpack.c.bf16 %v7190, %v7189
  %v7378 = vpack.c.bf16 %v7192, %v7191
  %v7379 = vpack.c.bf16 %v7194, %v7193
  %v7380 = vpack.c.bf16 %v7196, %v7195
  %v7381 = vpack.c.bf16 %v7198, %v7197
  %v7382 = vpack.c.bf16 %v7200, %v7199
  %v7383 = vpack.c.bf16 %v7202, %v7201
  %v7384 = vpack.c.bf16 %v7204, %v7203
  %v7385 = vpack.c.bf16 %v7206, %v7205
  %v7386 = vpack.c.bf16 %v7208, %v7207
  %v7387 = vpack.c.bf16 %v7210, %v7209
  %v7388 = vpack.c.bf16 %v7212, %v7211
  %v7389 = vpack.c.bf16 %v7214, %v7213
  %v7390 = vpack.c.bf16 %v7216, %v7215
  %v7391 = vpack.c.bf16 %v7218, %v7217
  %v7392 = vpack.c.bf16 %v7220, %v7219
  %v7393 = vpack.c.bf16 %v7222, %v7221
  %v7394 = vpack.c.bf16 %v7224, %v7223
  %v7395 = vpack.c.bf16 %v7226, %v7225
  %v7396 = vpack.c.bf16 %v7228, %v7227
  %v7397 = vpack.c.bf16 %v7230, %v7229
  %v7398 = vpack.c.bf16 %v7232, %v7231
  %v7399 = vpack.c.bf16 %v7234, %v7233
  %v7400 = vpack.c.bf16 %v7236, %v7235
  %v7401 = vpack.c.bf16 %v7238, %v7237
  %v7402 = vpack.c.bf16 %v7240, %v7239
  %v7403 = vpack.c.bf16 %v7242, %v7241
  %v7404 = vpack.c.bf16 %v7244, %v7243
  %v7405 = vpack.c.bf16 %v7246, %v7245
  %v7406 = vpack.c.bf16 %v7248, %v7247
  %v7407 = vpack.c.bf16 %v7250, %v7249
  %v7408 = vpack.c.bf16 %v7252, %v7251
  %v7409 = vpack.c.bf16 %v7254, %v7253
  %v7410 = vpack.c.bf16 %v7256, %v7255
  %v7411 = vpack.c.bf16 %v7258, %v7257
  %v7412 = vpack.c.bf16 %v7260, %v7259
  %v7413 = vpack.c.bf16 %v7262, %v7261
  %v7414 = vpack.c.bf16 %v7264, %v7263
  %v7415 = vpack.c.bf16 %v7266, %v7265
  %v7416 = vpack.c.bf16 %v7268, %v7267
  %v7417 = vpack.c.bf16 %v7270, %v7269
  %v7418 = vpack.c.bf16 %v7272, %v7271
  %v7419 = vpack.c.bf16 %v7274, %v7273
  %v7420 = vpack.c.bf16 %v7276, %v7275
  %v7421 = vpack.c.bf16 %v7278, %v7277
  %v7422 = vpack.c.bf16 %v7280, %v7279
  %v7423 = vpack.c.bf16 %v7282, %v7281
  %v7424 = vpack.c.bf16 %v7284, %v7283
  %v7425 = vpack.c.bf16 %v7286, %v7285
  %v7426 = vpack.c.bf16 %v7288, %v7287
  %v7427 = vpack.c.bf16 %v7290, %v7289
  %v7428 = vpack.c.bf16 %v7292, %v7291
  %v7429 = vpack.c.bf16 %v7294, %v7293
  %v7430 = vpack.c.bf16 %v7296, %v7295
  %v7431 = vpack.c.bf16 %v7298, %v7297
  %v7432 = vpack.c.bf16 %v7300, %v7299
  %v7433 = vpack.c.bf16 %v7302, %v7301
  %v7434 = vpack.c.bf16 %v7304, %v7303
  %v7435 = vpack.c.bf16 %v7306, %v7305
  %v7436 = vpack.c.bf16 %v7308, %v7307
  %v7437 = vld [vmem:[%s5] sm:$0xff]
  %v7438 = vld [vmem:[%s5 + $0x8] sm:$0xff]
  %v7439 = vld [vmem:[%s5 + $0x10] sm:$0xff]
  %v7440 = vld [vmem:[%s5 + $0x18] sm:$0xff]
  %v7441 = vld [vmem:[%s5 + $0x20] sm:$0xff]
  %v7442 = vld [vmem:[%s5 + $0x28] sm:$0xff]
  %v7443 = vld [vmem:[%s5 + $0x30] sm:$0xff]
  %v7444 = vld [vmem:[%s5 + $0x38] sm:$0xff]
  %v7445 = vld [vmem:[%s5 + $0x40] sm:$0xff]
  %v7446 = vld [vmem:[%s5 + $0x48] sm:$0xff]
  %v7447 = vld [vmem:[%s5 + $0x50] sm:$0xff]
  %v7448 = vld [vmem:[%s5 + $0x58] sm:$0xff]
  %v7449 = vld [vmem:[%s5 + $0x60] sm:$0xff]
  %v7450 = vld [vmem:[%s5 + $0x68] sm:$0xff]
  %v7451 = vld [vmem:[%s5 + $0x70] sm:$0xff]
  %v7452 = vld [vmem:[%s5 + $0x78] sm:$0xff]
  %v7453 = vld [vmem:[%s6] sm:$0x3]
  %v7455 = vlaneseq
  %v7456 = vshrl.u32 %v7455, 7
  %v7457 = vsub.s32 0, %v7456
  %v7458 = vrot.slane %v7453, %v7457
  %v7459 = vlaneseq
  %v7460 = vshrl.u32 %v7459, 7
  %v7461 = vsub.s32 1, %v7460
  %v7462 = vrot.slane %v7453, %v7461
  %v7481 = vunpack.c.l.b16 %v7437
  %v7482 = vunpack.c.h.b16 %v7437
  %v7483 = vunpack.c.l.b16 %v7438
  %v7484 = vunpack.c.h.b16 %v7438
  %v7485 = vunpack.c.l.b16 %v7439
  %v7486 = vunpack.c.h.b16 %v7439
  %v7487 = vunpack.c.l.b16 %v7440
  %v7488 = vunpack.c.h.b16 %v7440
  %v7489 = vunpack.c.l.b16 %v7441
  %v7490 = vunpack.c.h.b16 %v7441
  %v7491 = vunpack.c.l.b16 %v7442
  %v7492 = vunpack.c.h.b16 %v7442
  %v7493 = vunpack.c.l.b16 %v7443
  %v7494 = vunpack.c.h.b16 %v7443
  %v7495 = vunpack.c.l.b16 %v7444
  %v7496 = vunpack.c.h.b16 %v7444
  %v7497 = vunpack.c.l.b16 %v7445
  %v7498 = vunpack.c.h.b16 %v7445
  %v7499 = vunpack.c.l.b16 %v7446
  %v7500 = vunpack.c.h.b16 %v7446
  %v7501 = vunpack.c.l.b16 %v7447
  %v7502 = vunpack.c.h.b16 %v7447
  %v7503 = vunpack.c.l.b16 %v7448
  %v7504 = vunpack.c.h.b16 %v7448
  %v7505 = vunpack.c.l.b16 %v7449
  %v7506 = vunpack.c.h.b16 %v7449
  %v7507 = vunpack.c.l.b16 %v7450
  %v7508 = vunpack.c.h.b16 %v7450
  %v7509 = vunpack.c.l.b16 %v7451
  %v7510 = vunpack.c.h.b16 %v7451
  %v7511 = vunpack.c.l.b16 %v7452
  %v7512 = vunpack.c.h.b16 %v7452
  %v7513 = vpack.c.b16 %v7483, %v7481
  %v7514 = vpack.c.b16 %v7484, %v7482
  %v7515 = vpack.c.b16 %v7487, %v7485
  %v7516 = vpack.c.b16 %v7488, %v7486
  %v7517 = vpack.c.b16 %v7491, %v7489
  %v7518 = vpack.c.b16 %v7492, %v7490
  %v7519 = vpack.c.b16 %v7495, %v7493
  %v7520 = vpack.c.b16 %v7496, %v7494
  %v7521 = vpack.c.b16 %v7499, %v7497
  %v7522 = vpack.c.b16 %v7500, %v7498
  %v7523 = vpack.c.b16 %v7503, %v7501
  %v7524 = vpack.c.b16 %v7504, %v7502
  %v7525 = vpack.c.b16 %v7507, %v7505
  %v7526 = vpack.c.b16 %v7508, %v7506
  %v7527 = vpack.c.b16 %v7511, %v7509
  %v7528 = vpack.c.b16 %v7512, %v7510
  %7545 = vmatprep.subr.bf16.mxu0 %v7514
  %7546 = vmatpush1.bf16.msra.mxu0 %v7513
  %7547 = vmatprep.subr.bf16.mxu0 %v7516
  %7548 = vmatpush1.bf16.msra.mxu0 %v7515
  %7549 = vmatprep.subr.bf16.mxu0 %v7518
  %7550 = vmatpush1.bf16.msra.mxu0 %v7517
  %7551 = vmatprep.subr.bf16.mxu0 %v7520
  %7552 = vmatpush1.bf16.msra.mxu0 %v7519
  %7553 = vmatprep.subr.bf16.mxu0 %v7522
  %7554 = vmatpush1.bf16.msra.mxu0 %v7521
  %7555 = vmatprep.subr.bf16.mxu0 %v7524
  %7556 = vmatpush1.bf16.msra.mxu0 %v7523
  %7557 = vmatprep.subr.bf16.mxu0 %v7526
  %7558 = vmatpush1.bf16.msra.mxu0 %v7525
  %7559 = vmatprep.subr.bf16.mxu0 %v7528
  %7560 = vmatpush1.bf16.msra.mxu0 %v7527
  %7561 = vmatprep.subr.bf16.mxu0 0
  %7562 = vmatpush1.bf16.msra.mxu0 0
  %7563 = vmatprep.subr.bf16.mxu0 0
  %7564 = vmatpush1.bf16.msra.mxu0 0
  %7565 = vmatprep.subr.bf16.mxu0 0
  %7566 = vmatpush1.bf16.msra.mxu0 0
  %7567 = vmatprep.subr.bf16.mxu0 0
  %7568 = vmatpush1.bf16.msra.mxu0 0
  %7569 = vmatprep.subr.bf16.mxu0 0
  %7570 = vmatpush1.bf16.msra.mxu0 0
  %7571 = vmatprep.subr.bf16.mxu0 0
  %7572 = vmatpush1.bf16.msra.mxu0 0
  %7573 = vmatprep.subr.bf16.mxu0 0
  %7574 = vmatpush1.bf16.msra.mxu0 0
  %7575 = vmatprep.subr.bf16.mxu0 0
  %7576 = vmatpush1.bf16.msra.mxu0 0
  %7577 = vmatprep.mubr.bf16.mxu0 0
  %7578 = vmatmul.mubr.bf16.gmra.mrb[0].mxu0 %v7309
  %v7579 = vpop.f32.mrb[0].mxu0
  %v7580 = vadd.f32 %v7458, %v7579
  %v7581 = vpop.f32.mrb[0].mxu0
  %v7582 = vadd.f32 %v7462, %v7581
  %v7583 = vpop.f32.mrb[0].mxu0
  %v7584 = vadd.f32 %v7458, %v7583
  %v7585 = vpop.f32.mrb[0].mxu0
  %v7586 = vadd.f32 %v7462, %v7585
  %7587 = vmatprep.mubr.bf16.mxu0 0
  %7588 = vmatmul.mubr.bf16.gmra.mrb[0].mxu0 %v7310
  %v7589 = vpop.f32.mrb[0].mxu0
  %v7590 = vadd.f32 %v7458, %v7589
  %v7591 = vpop.f32.mrb[0].mxu0
  %v7592 = vadd.f32 %v7462, %v7591
  %v7593 = vpop.f32.mrb[0].mxu0
  %v7594 = vadd.f32 %v7458, %v7593
  %v7595 = vpop.f32.mrb[0].mxu0
  %v7596 = vadd.f32 %v7462, %v7595
  %7597 = vmatprep.mubr.bf16.mxu0 0
  %7598 = vmatmul.mubr.bf16.gmra.mrb[0].mxu0 %v7311
  %v7599 = vpop.f32.mrb[0].mxu0
  %v7600 = vadd.f32 %v7458, %v7599
  %v7601 = vpop.f32.mrb[0].mxu0
  %v7602 = vadd.f32 %v7462, %v7601
  %v7603 = vpop.f32.mrb[0].mxu0
  %v7604 = vadd.f32 %v7458, %v7603
  %v7605 = vpop.f32.mrb[0].mxu0
  %v7606 = vadd.f32 %v7462, %v7605
  %7607 = vmatprep.mubr.bf16.mxu0 0
  %7608 = vmatmul.mubr.bf16.gmra.mrb[0].mxu0 %v7312
  %v7609 = vpop.f32.mrb[0].mxu0
  %v7610 = vadd.f32 %v7458, %v7609
  %v7611 = vpop.f32.mrb[0].mxu0
  %v7612 = vadd.f32 %v7462, %v7611
  %v7613 = vpop.f32.mrb[0].mxu0
  %v7614 = vadd.f32 %v7458, %v7613
  %v7615 = vpop.f32.mrb[0].mxu0
  %v7616 = vadd.f32 %v7462, %v7615
  %7617 = vmatprep.mubr.bf16.mxu0 0
  %7618 = vmatmul.mubr.bf16.gmra.mrb[0].mxu0 %v7313
  %v7619 = vpop.f32.mrb[0].mxu0
  %v7620 = vadd.f32 %v7458, %v7619
  %v7621 = vpop.f32.mrb[0].mxu0
  %v7622 = vadd.f32 %v7462, %v7621
  %v7623 = vpop.f32.mrb[0].mxu0
  %v7624 = vadd.f32 %v7458, %v7623
  %v7625 = vpop.f32.mrb[0].mxu0
  %v7626 = vadd.f32 %v7462, %v7625
  %7627 = vmatprep.mubr.bf16.mxu0 0
  %7628 = vmatmul.mubr.bf16.gmra.mrb[0].mxu0 %v7314
  %v7629 = vpop.f32.mrb[0].mxu0
  %v7630 = vadd.f32 %v7458, %v7629
  %v7631 = vpop.f32.mrb[0].mxu0
  %v7632 = vadd.f32 %v7462, %v7631
  %v7633 = vpop.f32.mrb[0].mxu0
  %v7634 = vadd.f32 %v7458, %v7633
  %v7635 = vpop.f32.mrb[0].mxu0
  %v7636 = vadd.f32 %v7462, %v7635
  %7637 = vmatprep.mubr.bf16.mxu0 0
  %7638 = vmatmul.mubr.bf16.gmra.mrb[0].mxu0 %v7315
  %v7639 = vpop.f32.mrb[0].mxu0
  %v7640 = vadd.f32 %v7458, %v7639
  %v7641 = vpop.f32.mrb[0].mxu0
  %v7642 = vadd.f32 %v7462, %v7641
  %v7643 = vpop.f32.mrb[0].mxu0
  %v7644 = vadd.f32 %v7458, %v7643
  %v7645 = vpop.f32.mrb[0].mxu0
  %v7646 = vadd.f32 %v7462, %v7645
  %7647 = vmatprep.mubr.bf16.mxu0 0
  %7648 = vmatmul.mubr.bf16.gmra.mrb[0].mxu0 %v7316
  %v7649 = vpop.f32.mrb[0].mxu0
  %v7650 = vadd.f32 %v7458, %v7649
  %v7651 = vpop.f32.mrb[0].mxu0
  %v7652 = vadd.f32 %v7462, %v7651
  %v7653 = vpop.f32.mrb[0].mxu0
  %v7654 = vadd.f32 %v7458, %v7653
  %v7655 = vpop.f32.mrb[0].mxu0
  %v7656 = vadd.f32 %v7462, %v7655
  %7657 = vmatprep.mubr.bf16.mxu0 0
  %7658 = vmatmul.mubr.bf16.gmra.mrb[0].mxu0 %v7317
  %v7659 = vpop.f32.mrb[0].mxu0
  %v7660 = vadd.f32 %v7458, %v7659
  %v7661 = vpop.f32.mrb[0].mxu0
  %v7662 = vadd.f32 %v7462, %v7661
  %v7663 = vpop.f32.mrb[0].mxu0
  %v7664 = vadd.f32 %v7458, %v7663
  %v7665 = vpop.f32.mrb[0].mxu0
  %v7666 = vadd.f32 %v7462, %v7665
  %7667 = vmatprep.mubr.bf16.mxu0 0
  %7668 = vmatmul.mubr.bf16.gmra.mrb[0].mxu0 %v7318
  %v7669 = vpop.f32.mrb[0].mxu0
  %v7670 = vadd.f32 %v7458, %v7669
  %v7671 = vpop.f32.mrb[0].mxu0
  %v7672 = vadd.f32 %v7462, %v7671
  %v7673 = vpop.f32.mrb[0].mxu0
  %v7674 = vadd.f32 %v7458, %v7673
  %v7675 = vpop.f32.mrb[0].mxu0
  %v7676 = vadd.f32 %v7462, %v7675
  %7677 = vmatprep.mubr.bf16.mxu0 0
  %7678 = vmatmul.mubr.bf16.gmra.mrb[0].mxu0 %v7319
  %v7679 = vpop.f32.mrb[0].mxu0
  %v7680 = vadd.f32 %v7458, %v7679
  %v7681 = vpop.f32.mrb[0].mxu0
  %v7682 = vadd.f32 %v7462, %v7681
  %v7683 = vpop.f32.mrb[0].mxu0
  %v7684 = vadd.f32 %v7458, %v7683
  %v7685 = vpop.f32.mrb[0].mxu0
  %v7686 = vadd.f32 %v7462, %v7685
  %7687 = vmatprep.mubr.bf16.mxu0 0
  %7688 = vmatmul.mubr.bf16.gmra.mrb[0].mxu0 %v7320
  %v7689 = vpop.f32.mrb[0].mxu0
  %v7690 = vadd.f32 %v7458, %v7689
  %v7691 = vpop.f32.mrb[0].mxu0
  %v7692 = vadd.f32 %v7462, %v7691
  %v7693 = vpop.f32.mrb[0].mxu0
  %v7694 = vadd.f32 %v7458, %v7693
  %v7695 = vpop.f32.mrb[0].mxu0
  %v7696 = vadd.f32 %v7462, %v7695
  %7697 = vmatprep.mubr.bf16.mxu0 0
  %7698 = vmatmul.mubr.bf16.gmra.mrb[0].mxu0 %v7321
  %v7699 = vpop.f32.mrb[0].mxu0
  %v7700 = vadd.f32 %v7458, %v7699
  %v7701 = vpop.f32.mrb[0].mxu0
  %v7702 = vadd.f32 %v7462, %v7701
  %v7703 = vpop.f32.mrb[0].mxu0
  %v7704 = vadd.f32 %v7458, %v7703
  %v7705 = vpop.f32.mrb[0].mxu0
  %v7706 = vadd.f32 %v7462, %v7705
  %7707 = vmatprep.mubr.bf16.mxu0 0
  %7708 = vmatmul.mubr.bf16.gmra.mrb[0].mxu0 %v7322
  %v7709 = vpop.f32.mrb[0].mxu0
  %v7710 = vadd.f32 %v7458, %v7709
  %v7711 = vpop.f32.mrb[0].mxu0
  %v7712 = vadd.f32 %v7462, %v7711
  %v7713 = vpop.f32.mrb[0].mxu0
  %v7714 = vadd.f32 %v7458, %v7713
  %v7715 = vpop.f32.mrb[0].mxu0
  %v7716 = vadd.f32 %v7462, %v7715
  %7717 = vmatprep.mubr.bf16.mxu0 0
  %7718 = vmatmul.mubr.bf16.gmra.mrb[0].mxu0 %v7323
  %v7719 = vpop.f32.mrb[0].mxu0
  %v7720 = vadd.f32 %v7458, %v7719
  %v7721 = vpop.f32.mrb[0].mxu0
  %v7722 = vadd.f32 %v7462, %v7721
  %v7723 = vpop.f32.mrb[0].mxu0
  %v7724 = vadd.f32 %v7458, %v7723
  %v7725 = vpop.f32.mrb[0].mxu0
  %v7726 = vadd.f32 %v7462, %v7725
  %7727 = vmatprep.mubr.bf16.mxu0 0
  %7728 = vmatmul.mubr.bf16.gmra.mrb[0].mxu0 %v7324
  %v7729 = vpop.f32.mrb[0].mxu0
  %v7730 = vadd.f32 %v7458, %v7729
  %v7731 = vpop.f32.mrb[0].mxu0
  %v7732 = vadd.f32 %v7462, %v7731
  %v7733 = vpop.f32.mrb[0].mxu0
  %v7734 = vadd.f32 %v7458, %v7733
  %v7735 = vpop.f32.mrb[0].mxu0
  %v7736 = vadd.f32 %v7462, %v7735
  %7737 = vmatprep.mubr.bf16.mxu0 0
  %7738 = vmatmul.mubr.bf16.gmra.mrb[0].mxu0 %v7325
  %v7739 = vpop.f32.mrb[0].mxu0
  %v7740 = vadd.f32 %v7458, %v7739
  %v7741 = vpop.f32.mrb[0].mxu0
  %v7742 = vadd.f32 %v7462, %v7741
  %v7743 = vpop.f32.mrb[0].mxu0
  %v7744 = vadd.f32 %v7458, %v7743
  %v7745 = vpop.f32.mrb[0].mxu0
  %v7746 = vadd.f32 %v7462, %v7745
  %7747 = vmatprep.mubr.bf16.mxu0 0
  %7748 = vmatmul.mubr.bf16.gmra.mrb[0].mxu0 %v7326
  %v7749 = vpop.f32.mrb[0].mxu0
  %v7750 = vadd.f32 %v7458, %v7749
  %v7751 = vpop.f32.mrb[0].mxu0
  %v7752 = vadd.f32 %v7462, %v7751
  %v7753 = vpop.f32.mrb[0].mxu0
  %v7754 = vadd.f32 %v7458, %v7753
  %v7755 = vpop.f32.mrb[0].mxu0
  %v7756 = vadd.f32 %v7462, %v7755
  %7757 = vmatprep.mubr.bf16.mxu0 0
  %7758 = vmatmul.mubr.bf16.gmra.mrb[0].mxu0 %v7327
  %v7759 = vpop.f32.mrb[0].mxu0
  %v7760 = vadd.f32 %v7458, %v7759
  %v7761 = vpop.f32.mrb[0].mxu0
  %v7762 = vadd.f32 %v7462, %v7761
  %v7763 = vpop.f32.mrb[0].mxu0
  %v7764 = vadd.f32 %v7458, %v7763
  %v7765 = vpop.f32.mrb[0].mxu0
  %v7766 = vadd.f32 %v7462, %v7765
  %7767 = vmatprep.mubr.bf16.mxu0 0
  %7768 = vmatmul.mubr.bf16.gmra.mrb[0].mxu0 %v7328
  %v7769 = vpop.f32.mrb[0].mxu0
  %v7770 = vadd.f32 %v7458, %v7769
  %v7771 = vpop.f32.mrb[0].mxu0
  %v7772 = vadd.f32 %v7462, %v7771
  %v7773 = vpop.f32.mrb[0].mxu0
  %v7774 = vadd.f32 %v7458, %v7773
  %v7775 = vpop.f32.mrb[0].mxu0
  %v7776 = vadd.f32 %v7462, %v7775
  %7777 = vmatprep.mubr.bf16.mxu0 0
  %7778 = vmatmul.mubr.bf16.gmra.mrb[0].mxu0 %v7329
  %v7779 = vpop.f32.mrb[0].mxu0
  %v7780 = vadd.f32 %v7458, %v7779
  %v7781 = vpop.f32.mrb[0].mxu0
  %v7782 = vadd.f32 %v7462, %v7781
  %v7783 = vpop.f32.mrb[0].mxu0
  %v7784 = vadd.f32 %v7458, %v7783
  %v7785 = vpop.f32.mrb[0].mxu0
  %v7786 = vadd.f32 %v7462, %v7785
  %7787 = vmatprep.mubr.bf16.mxu0 0
  %7788 = vmatmul.mubr.bf16.gmra.mrb[0].mxu0 %v7330
  %v7789 = vpop.f32.mrb[0].mxu0
  %v7790 = vadd.f32 %v7458, %v7789
  %v7791 = vpop.f32.mrb[0].mxu0
  %v7792 = vadd.f32 %v7462, %v7791
  %v7793 = vpop.f32.mrb[0].mxu0
  %v7794 = vadd.f32 %v7458, %v7793
  %v7795 = vpop.f32.mrb[0].mxu0
  %v7796 = vadd.f32 %v7462, %v7795
  %7797 = vmatprep.mubr.bf16.mxu0 0
  %7798 = vmatmul.mubr.bf16.gmra.mrb[0].mxu0 %v7331
  %v7799 = vpop.f32.mrb[0].mxu0
  %v7800 = vadd.f32 %v7458, %v7799
  %v7801 = vpop.f32.mrb[0].mxu0
  %v7802 = vadd.f32 %v7462, %v7801
  %v7803 = vpop.f32.mrb[0].mxu0
  %v7804 = vadd.f32 %v7458, %v7803
  %v7805 = vpop.f32.mrb[0].mxu0
  %v7806 = vadd.f32 %v7462, %v7805
  %7807 = vmatprep.mubr.bf16.mxu0 0
  %7808 = vmatmul.mubr.bf16.gmra.mrb[0].mxu0 %v7332
  %v7809 = vpop.f32.mrb[0].mxu0
  %v7810 = vadd.f32 %v7458, %v7809
  %v7811 = vpop.f32.mrb[0].mxu0
  %v7812 = vadd.f32 %v7462, %v7811
  %v7813 = vpop.f32.mrb[0].mxu0
  %v7814 = vadd.f32 %v7458, %v7813
  %v7815 = vpop.f32.mrb[0].mxu0
  %v7816 = vadd.f32 %v7462, %v7815
  %7817 = vmatprep.mubr.bf16.mxu0 0
  %7818 = vmatmul.mubr.bf16.gmra.mrb[0].mxu0 %v7333
  %v7819 = vpop.f32.mrb[0].mxu0
  %v7820 = vadd.f32 %v7458, %v7819
  %v7821 = vpop.f32.mrb[0].mxu0
  %v7822 = vadd.f32 %v7462, %v7821
  %v7823 = vpop.f32.mrb[0].mxu0
  %v7824 = vadd.f32 %v7458, %v7823
  %v7825 = vpop.f32.mrb[0].mxu0
  %v7826 = vadd.f32 %v7462, %v7825
  %7827 = vmatprep.mubr.bf16.mxu0 0
  %7828 = vmatmul.mubr.bf16.gmra.mrb[0].mxu0 %v7334
  %v7829 = vpop.f32.mrb[0].mxu0
  %v7830 = vadd.f32 %v7458, %v7829
  %v7831 = vpop.f32.mrb[0].mxu0
  %v7832 = vadd.f32 %v7462, %v7831
  %v7833 = vpop.f32.mrb[0].mxu0
  %v7834 = vadd.f32 %v7458, %v7833
  %v7835 = vpop.f32.mrb[0].mxu0
  %v7836 = vadd.f32 %v7462, %v7835
  %7837 = vmatprep.mubr.bf16.mxu0 0
  %7838 = vmatmul.mubr.bf16.gmra.mrb[0].mxu0 %v7335
  %v7839 = vpop.f32.mrb[0].mxu0
  %v7840 = vadd.f32 %v7458, %v7839
  %v7841 = vpop.f32.mrb[0].mxu0
  %v7842 = vadd.f32 %v7462, %v7841
  %v7843 = vpop.f32.mrb[0].mxu0
  %v7844 = vadd.f32 %v7458, %v7843
  %v7845 = vpop.f32.mrb[0].mxu0
  %v7846 = vadd.f32 %v7462, %v7845
  %7847 = vmatprep.mubr.bf16.mxu0 0
  %7848 = vmatmul.mubr.bf16.gmra.mrb[0].mxu0 %v7336
  %v7849 = vpop.f32.mrb[0].mxu0
  %v7850 = vadd.f32 %v7458, %v7849
  %v7851 = vpop.f32.mrb[0].mxu0
  %v7852 = vadd.f32 %v7462, %v7851
  %v7853 = vpop.f32.mrb[0].mxu0
  %v7854 = vadd.f32 %v7458, %v7853
  %v7855 = vpop.f32.mrb[0].mxu0
  %v7856 = vadd.f32 %v7462, %v7855
  %7857 = vmatprep.mubr.bf16.mxu0 0
  %7858 = vmatmul.mubr.bf16.gmra.mrb[0].mxu0 %v7337
  %v7859 = vpop.f32.mrb[0].mxu0
  %v7860 = vadd.f32 %v7458, %v7859
  %v7861 = vpop.f32.mrb[0].mxu0
  %v7862 = vadd.f32 %v7462, %v7861
  %v7863 = vpop.f32.mrb[0].mxu0
  %v7864 = vadd.f32 %v7458, %v7863
  %v7865 = vpop.f32.mrb[0].mxu0
  %v7866 = vadd.f32 %v7462, %v7865
  %7867 = vmatprep.mubr.bf16.mxu0 0
  %7868 = vmatmul.mubr.bf16.gmra.mrb[0].mxu0 %v7338
  %v7869 = vpop.f32.mrb[0].mxu0
  %v7870 = vadd.f32 %v7458, %v7869
  %v7871 = vpop.f32.mrb[0].mxu0
  %v7872 = vadd.f32 %v7462, %v7871
  %v7873 = vpop.f32.mrb[0].mxu0
  %v7874 = vadd.f32 %v7458, %v7873
  %v7875 = vpop.f32.mrb[0].mxu0
  %v7876 = vadd.f32 %v7462, %v7875
  %7877 = vmatprep.mubr.bf16.mxu0 0
  %7878 = vmatmul.mubr.bf16.gmra.mrb[0].mxu0 %v7339
  %v7879 = vpop.f32.mrb[0].mxu0
  %v7880 = vadd.f32 %v7458, %v7879
  %v7881 = vpop.f32.mrb[0].mxu0
  %v7882 = vadd.f32 %v7462, %v7881
  %v7883 = vpop.f32.mrb[0].mxu0
  %v7884 = vadd.f32 %v7458, %v7883
  %v7885 = vpop.f32.mrb[0].mxu0
  %v7886 = vadd.f32 %v7462, %v7885
  %7887 = vmatprep.mubr.bf16.mxu0 0
  %7888 = vmatmul.mubr.bf16.gmra.mrb[0].mxu0 %v7340
  %v7889 = vpop.f32.mrb[0].mxu0
  %v7890 = vadd.f32 %v7458, %v7889
  %v7891 = vpop.f32.mrb[0].mxu0
  %v7892 = vadd.f32 %v7462, %v7891
  %v7893 = vpop.f32.mrb[0].mxu0
  %v7894 = vadd.f32 %v7458, %v7893
  %v7895 = vpop.f32.mrb[0].mxu0
  %v7896 = vadd.f32 %v7462, %v7895
  %7897 = vmatprep.mubr.bf16.mxu0 0
  %7898 = vmatmul.mubr.bf16.gmra.mrb[0].mxu0 %v7341
  %v7899 = vpop.f32.mrb[0].mxu0
  %v7900 = vadd.f32 %v7458, %v7899
  %v7901 = vpop.f32.mrb[0].mxu0
  %v7902 = vadd.f32 %v7462, %v7901
  %v7903 = vpop.f32.mrb[0].mxu0
  %v7904 = vadd.f32 %v7458, %v7903
  %v7905 = vpop.f32.mrb[0].mxu0
  %v7906 = vadd.f32 %v7462, %v7905
  %7907 = vmatprep.mubr.bf16.mxu0 0
  %7908 = vmatmul.mubr.bf16.gmra.mrb[0].mxu0 %v7342
  %v7909 = vpop.f32.mrb[0].mxu0
  %v7910 = vadd.f32 %v7458, %v7909
  %v7911 = vpop.f32.mrb[0].mxu0
  %v7912 = vadd.f32 %v7462, %v7911
  %v7913 = vpop.f32.mrb[0].mxu0
  %v7914 = vadd.f32 %v7458, %v7913
  %v7915 = vpop.f32.mrb[0].mxu0
  %v7916 = vadd.f32 %v7462, %v7915
  %7917 = vmatprep.mubr.bf16.mxu0 0
  %7918 = vmatmul.mubr.bf16.gmra.mrb[0].mxu0 %v7343
  %v7919 = vpop.f32.mrb[0].mxu0
  %v7920 = vadd.f32 %v7458, %v7919
  %v7921 = vpop.f32.mrb[0].mxu0
  %v7922 = vadd.f32 %v7462, %v7921
  %v7923 = vpop.f32.mrb[0].mxu0
  %v7924 = vadd.f32 %v7458, %v7923
  %v7925 = vpop.f32.mrb[0].mxu0
  %v7926 = vadd.f32 %v7462, %v7925
  %7927 = vmatprep.mubr.bf16.mxu0 0
  %7928 = vmatmul.mubr.bf16.gmra.mrb[0].mxu0 %v7344
  %v7929 = vpop.f32.mrb[0].mxu0
  %v7930 = vadd.f32 %v7458, %v7929
  %v7931 = vpop.f32.mrb[0].mxu0
  %v7932 = vadd.f32 %v7462, %v7931
  %v7933 = vpop.f32.mrb[0].mxu0
  %v7934 = vadd.f32 %v7458, %v7933
  %v7935 = vpop.f32.mrb[0].mxu0
  %v7936 = vadd.f32 %v7462, %v7935
  %7937 = vmatprep.mubr.bf16.mxu0 0
  %7938 = vmatmul.mubr.bf16.gmra.mrb[0].mxu0 %v7345
  %v7939 = vpop.f32.mrb[0].mxu0
  %v7940 = vadd.f32 %v7458, %v7939
  %v7941 = vpop.f32.mrb[0].mxu0
  %v7942 = vadd.f32 %v7462, %v7941
  %v7943 = vpop.f32.mrb[0].mxu0
  %v7944 = vadd.f32 %v7458, %v7943
  %v7945 = vpop.f32.mrb[0].mxu0
  %v7946 = vadd.f32 %v7462, %v7945
  %7947 = vmatprep.mubr.bf16.mxu0 0
  %7948 = vmatmul.mubr.bf16.gmra.mrb[0].mxu0 %v7346
  %v7949 = vpop.f32.mrb[0].mxu0
  %v7950 = vadd.f32 %v7458, %v7949
  %v7951 = vpop.f32.mrb[0].mxu0
  %v7952 = vadd.f32 %v7462, %v7951
  %v7953 = vpop.f32.mrb[0].mxu0
  %v7954 = vadd.f32 %v7458, %v7953
  %v7955 = vpop.f32.mrb[0].mxu0
  %v7956 = vadd.f32 %v7462, %v7955
  %7957 = vmatprep.mubr.bf16.mxu0 0
  %7958 = vmatmul.mubr.bf16.gmra.mrb[0].mxu0 %v7347
  %v7959 = vpop.f32.mrb[0].mxu0
  %v7960 = vadd.f32 %v7458, %v7959
  %v7961 = vpop.f32.mrb[0].mxu0
  %v7962 = vadd.f32 %v7462, %v7961
  %v7963 = vpop.f32.mrb[0].mxu0
  %v7964 = vadd.f32 %v7458, %v7963
  %v7965 = vpop.f32.mrb[0].mxu0
  %v7966 = vadd.f32 %v7462, %v7965
  %7967 = vmatprep.mubr.bf16.mxu0 0
  %7968 = vmatmul.mubr.bf16.gmra.mrb[0].mxu0 %v7348
  %v7969 = vpop.f32.mrb[0].mxu0
  %v7970 = vadd.f32 %v7458, %v7969
  %v7971 = vpop.f32.mrb[0].mxu0
  %v7972 = vadd.f32 %v7462, %v7971
  %v7973 = vpop.f32.mrb[0].mxu0
  %v7974 = vadd.f32 %v7458, %v7973
  %v7975 = vpop.f32.mrb[0].mxu0
  %v7976 = vadd.f32 %v7462, %v7975
  %7977 = vmatprep.mubr.bf16.mxu0 0
  %7978 = vmatmul.mubr.bf16.gmra.mrb[0].mxu0 %v7349
  %v7979 = vpop.f32.mrb[0].mxu0
  %v7980 = vadd.f32 %v7458, %v7979
  %v7981 = vpop.f32.mrb[0].mxu0
  %v7982 = vadd.f32 %v7462, %v7981
  %v7983 = vpop.f32.mrb[0].mxu0
  %v7984 = vadd.f32 %v7458, %v7983
  %v7985 = vpop.f32.mrb[0].mxu0
  %v7986 = vadd.f32 %v7462, %v7985
  %7987 = vmatprep.mubr.bf16.mxu0 0
  %7988 = vmatmul.mubr.bf16.gmra.mrb[0].mxu0 %v7350
  %v7989 = vpop.f32.mrb[0].mxu0
  %v7990 = vadd.f32 %v7458, %v7989
  %v7991 = vpop.f32.mrb[0].mxu0
  %v7992 = vadd.f32 %v7462, %v7991
  %v7993 = vpop.f32.mrb[0].mxu0
  %v7994 = vadd.f32 %v7458, %v7993
  %v7995 = vpop.f32.mrb[0].mxu0
  %v7996 = vadd.f32 %v7462, %v7995
  %7997 = vmatprep.mubr.bf16.mxu0 0
  %7998 = vmatmul.mubr.bf16.gmra.mrb[0].mxu0 %v7351
  %v7999 = vpop.f32.mrb[0].mxu0
  %v8000 = vadd.f32 %v7458, %v7999
  %v8001 = vpop.f32.mrb[0].mxu0
  %v8002 = vadd.f32 %v7462, %v8001
  %v8003 = vpop.f32.mrb[0].mxu0
  %v8004 = vadd.f32 %v7458, %v8003
  %v8005 = vpop.f32.mrb[0].mxu0
  %v8006 = vadd.f32 %v7462, %v8005
  %8007 = vmatprep.mubr.bf16.mxu0 0
  %8008 = vmatmul.mubr.bf16.gmra.mrb[0].mxu0 %v7352
  %v8009 = vpop.f32.mrb[0].mxu0
  %v8010 = vadd.f32 %v7458, %v8009
  %v8011 = vpop.f32.mrb[0].mxu0
  %v8012 = vadd.f32 %v7462, %v8011
  %v8013 = vpop.f32.mrb[0].mxu0
  %v8014 = vadd.f32 %v7458, %v8013
  %v8015 = vpop.f32.mrb[0].mxu0
  %v8016 = vadd.f32 %v7462, %v8015
  %8017 = vmatprep.mubr.bf16.mxu0 0
  %8018 = vmatmul.mubr.bf16.gmra.mrb[0].mxu0 %v7353
  %v8019 = vpop.f32.mrb[0].mxu0
  %v8020 = vadd.f32 %v7458, %v8019
  %v8021 = vpop.f32.mrb[0].mxu0
  %v8022 = vadd.f32 %v7462, %v8021
  %v8023 = vpop.f32.mrb[0].mxu0
  %v8024 = vadd.f32 %v7458, %v8023
  %v8025 = vpop.f32.mrb[0].mxu0
  %v8026 = vadd.f32 %v7462, %v8025
  %8027 = vmatprep.mubr.bf16.mxu0 0
  %8028 = vmatmul.mubr.bf16.gmra.mrb[0].mxu0 %v7354
  %v8029 = vpop.f32.mrb[0].mxu0
  %v8030 = vadd.f32 %v7458, %v8029
  %v8031 = vpop.f32.mrb[0].mxu0
  %v8032 = vadd.f32 %v7462, %v8031
  %v8033 = vpop.f32.mrb[0].mxu0
  %v8034 = vadd.f32 %v7458, %v8033
  %v8035 = vpop.f32.mrb[0].mxu0
  %v8036 = vadd.f32 %v7462, %v8035
  %8037 = vmatprep.mubr.bf16.mxu0 0
  %8038 = vmatmul.mubr.bf16.gmra.mrb[0].mxu0 %v7355
  %v8039 = vpop.f32.mrb[0].mxu0
  %v8040 = vadd.f32 %v7458, %v8039
  %v8041 = vpop.f32.mrb[0].mxu0
  %v8042 = vadd.f32 %v7462, %v8041
  %v8043 = vpop.f32.mrb[0].mxu0
  %v8044 = vadd.f32 %v7458, %v8043
  %v8045 = vpop.f32.mrb[0].mxu0
  %v8046 = vadd.f32 %v7462, %v8045
  %8047 = vmatprep.mubr.bf16.mxu0 0
  %8048 = vmatmul.mubr.bf16.gmra.mrb[0].mxu0 %v7356
  %v8049 = vpop.f32.mrb[0].mxu0
  %v8050 = vadd.f32 %v7458, %v8049
  %v8051 = vpop.f32.mrb[0].mxu0
  %v8052 = vadd.f32 %v7462, %v8051
  %v8053 = vpop.f32.mrb[0].mxu0
  %v8054 = vadd.f32 %v7458, %v8053
  %v8055 = vpop.f32.mrb[0].mxu0
  %v8056 = vadd.f32 %v7462, %v8055
  %8057 = vmatprep.mubr.bf16.mxu0 0
  %8058 = vmatmul.mubr.bf16.gmra.mrb[0].mxu0 %v7357
  %v8059 = vpop.f32.mrb[0].mxu0
  %v8060 = vadd.f32 %v7458, %v8059
  %v8061 = vpop.f32.mrb[0].mxu0
  %v8062 = vadd.f32 %v7462, %v8061
  %v8063 = vpop.f32.mrb[0].mxu0
  %v8064 = vadd.f32 %v7458, %v8063
  %v8065 = vpop.f32.mrb[0].mxu0
  %v8066 = vadd.f32 %v7462, %v8065
  %8067 = vmatprep.mubr.bf16.mxu0 0
  %8068 = vmatmul.mubr.bf16.gmra.mrb[0].mxu0 %v7358
  %v8069 = vpop.f32.mrb[0].mxu0
  %v8070 = vadd.f32 %v7458, %v8069
  %v8071 = vpop.f32.mrb[0].mxu0
  %v8072 = vadd.f32 %v7462, %v8071
  %v8073 = vpop.f32.mrb[0].mxu0
  %v8074 = vadd.f32 %v7458, %v8073
  %v8075 = vpop.f32.mrb[0].mxu0
  %v8076 = vadd.f32 %v7462, %v8075
  %8077 = vmatprep.mubr.bf16.mxu0 0
  %8078 = vmatmul.mubr.bf16.gmra.mrb[0].mxu0 %v7359
  %v8079 = vpop.f32.mrb[0].mxu0
  %v8080 = vadd.f32 %v7458, %v8079
  %v8081 = vpop.f32.mrb[0].mxu0
  %v8082 = vadd.f32 %v7462, %v8081
  %v8083 = vpop.f32.mrb[0].mxu0
  %v8084 = vadd.f32 %v7458, %v8083
  %v8085 = vpop.f32.mrb[0].mxu0
  %v8086 = vadd.f32 %v7462, %v8085
  %8087 = vmatprep.mubr.bf16.mxu0 0
  %8088 = vmatmul.mubr.bf16.gmra.mrb[0].mxu0 %v7360
  %v8089 = vpop.f32.mrb[0].mxu0
  %v8090 = vadd.f32 %v7458, %v8089
  %v8091 = vpop.f32.mrb[0].mxu0
  %v8092 = vadd.f32 %v7462, %v8091
  %v8093 = vpop.f32.mrb[0].mxu0
  %v8094 = vadd.f32 %v7458, %v8093
  %v8095 = vpop.f32.mrb[0].mxu0
  %v8096 = vadd.f32 %v7462, %v8095
  %8097 = vmatprep.mubr.bf16.mxu0 0
  %8098 = vmatmul.mubr.bf16.gmra.mrb[0].mxu0 %v7361
  %v8099 = vpop.f32.mrb[0].mxu0
  %v8100 = vadd.f32 %v7458, %v8099
  %v8101 = vpop.f32.mrb[0].mxu0
  %v8102 = vadd.f32 %v7462, %v8101
  %v8103 = vpop.f32.mrb[0].mxu0
  %v8104 = vadd.f32 %v7458, %v8103
  %v8105 = vpop.f32.mrb[0].mxu0
  %v8106 = vadd.f32 %v7462, %v8105
  %8107 = vmatprep.mubr.bf16.mxu0 0
  %8108 = vmatmul.mubr.bf16.gmra.mrb[0].mxu0 %v7362
  %v8109 = vpop.f32.mrb[0].mxu0
  %v8110 = vadd.f32 %v7458, %v8109
  %v8111 = vpop.f32.mrb[0].mxu0
  %v8112 = vadd.f32 %v7462, %v8111
  %v8113 = vpop.f32.mrb[0].mxu0
  %v8114 = vadd.f32 %v7458, %v8113
  %v8115 = vpop.f32.mrb[0].mxu0
  %v8116 = vadd.f32 %v7462, %v8115
  %8117 = vmatprep.mubr.bf16.mxu0 0
  %8118 = vmatmul.mubr.bf16.gmra.mrb[0].mxu0 %v7363
  %v8119 = vpop.f32.mrb[0].mxu0
  %v8120 = vadd.f32 %v7458, %v8119
  %v8121 = vpop.f32.mrb[0].mxu0
  %v8122 = vadd.f32 %v7462, %v8121
  %v8123 = vpop.f32.mrb[0].mxu0
  %v8124 = vadd.f32 %v7458, %v8123
  %v8125 = vpop.f32.mrb[0].mxu0
  %v8126 = vadd.f32 %v7462, %v8125
  %8127 = vmatprep.mubr.bf16.mxu0 0
  %8128 = vmatmul.mubr.bf16.gmra.mrb[0].mxu0 %v7364
  %v8129 = vpop.f32.mrb[0].mxu0
  %v8130 = vadd.f32 %v7458, %v8129
  %v8131 = vpop.f32.mrb[0].mxu0
  %v8132 = vadd.f32 %v7462, %v8131
  %v8133 = vpop.f32.mrb[0].mxu0
  %v8134 = vadd.f32 %v7458, %v8133
  %v8135 = vpop.f32.mrb[0].mxu0
  %v8136 = vadd.f32 %v7462, %v8135
  %8137 = vmatprep.mubr.bf16.mxu0 0
  %8138 = vmatmul.mubr.bf16.gmra.mrb[0].mxu0 %v7365
  %v8139 = vpop.f32.mrb[0].mxu0
  %v8140 = vadd.f32 %v7458, %v8139
  %v8141 = vpop.f32.mrb[0].mxu0
  %v8142 = vadd.f32 %v7462, %v8141
  %v8143 = vpop.f32.mrb[0].mxu0
  %v8144 = vadd.f32 %v7458, %v8143
  %v8145 = vpop.f32.mrb[0].mxu0
  %v8146 = vadd.f32 %v7462, %v8145
  %8147 = vmatprep.mubr.bf16.mxu0 0
  %8148 = vmatmul.mubr.bf16.gmra.mrb[0].mxu0 %v7366
  %v8149 = vpop.f32.mrb[0].mxu0
  %v8150 = vadd.f32 %v7458, %v8149
  %v8151 = vpop.f32.mrb[0].mxu0
  %v8152 = vadd.f32 %v7462, %v8151
  %v8153 = vpop.f32.mrb[0].mxu0
  %v8154 = vadd.f32 %v7458, %v8153
  %v8155 = vpop.f32.mrb[0].mxu0
  %v8156 = vadd.f32 %v7462, %v8155
  %8157 = vmatprep.mubr.bf16.mxu0 0
  %8158 = vmatmul.mubr.bf16.gmra.mrb[0].mxu0 %v7367
  %v8159 = vpop.f32.mrb[0].mxu0
  %v8160 = vadd.f32 %v7458, %v8159
  %v8161 = vpop.f32.mrb[0].mxu0
  %v8162 = vadd.f32 %v7462, %v8161
  %v8163 = vpop.f32.mrb[0].mxu0
  %v8164 = vadd.f32 %v7458, %v8163
  %v8165 = vpop.f32.mrb[0].mxu0
  %v8166 = vadd.f32 %v7462, %v8165
  %8167 = vmatprep.mubr.bf16.mxu0 0
  %8168 = vmatmul.mubr.bf16.gmra.mrb[0].mxu0 %v7368
  %v8169 = vpop.f32.mrb[0].mxu0
  %v8170 = vadd.f32 %v7458, %v8169
  %v8171 = vpop.f32.mrb[0].mxu0
  %v8172 = vadd.f32 %v7462, %v8171
  %v8173 = vpop.f32.mrb[0].mxu0
  %v8174 = vadd.f32 %v7458, %v8173
  %v8175 = vpop.f32.mrb[0].mxu0
  %v8176 = vadd.f32 %v7462, %v8175
  %8177 = vmatprep.mubr.bf16.mxu0 0
  %8178 = vmatmul.mubr.bf16.gmra.mrb[0].mxu0 %v7369
  %v8179 = vpop.f32.mrb[0].mxu0
  %v8180 = vadd.f32 %v7458, %v8179
  %v8181 = vpop.f32.mrb[0].mxu0
  %v8182 = vadd.f32 %v7462, %v8181
  %v8183 = vpop.f32.mrb[0].mxu0
  %v8184 = vadd.f32 %v7458, %v8183
  %v8185 = vpop.f32.mrb[0].mxu0
  %v8186 = vadd.f32 %v7462, %v8185
  %8187 = vmatprep.mubr.bf16.mxu0 0
  %8188 = vmatmul.mubr.bf16.gmra.mrb[0].mxu0 %v7370
  %v8189 = vpop.f32.mrb[0].mxu0
  %v8190 = vadd.f32 %v7458, %v8189
  %v8191 = vpop.f32.mrb[0].mxu0
  %v8192 = vadd.f32 %v7462, %v8191
  %v8193 = vpop.f32.mrb[0].mxu0
  %v8194 = vadd.f32 %v7458, %v8193
  %v8195 = vpop.f32.mrb[0].mxu0
  %v8196 = vadd.f32 %v7462, %v8195
  %8197 = vmatprep.mubr.bf16.mxu0 0
  %8198 = vmatmul.mubr.bf16.gmra.mrb[0].mxu0 %v7371
  %v8199 = vpop.f32.mrb[0].mxu0
  %v8200 = vadd.f32 %v7458, %v8199
  %v8201 = vpop.f32.mrb[0].mxu0
  %v8202 = vadd.f32 %v7462, %v8201
  %v8203 = vpop.f32.mrb[0].mxu0
  %v8204 = vadd.f32 %v7458, %v8203
  %v8205 = vpop.f32.mrb[0].mxu0
  %v8206 = vadd.f32 %v7462, %v8205
  %8207 = vmatprep.mubr.bf16.mxu0 0
  %8208 = vmatmul.mubr.bf16.gmra.mrb[0].mxu0 %v7372
  %v8209 = vpop.f32.mrb[0].mxu0
  %v8210 = vadd.f32 %v7458, %v8209
  %v8211 = vpop.f32.mrb[0].mxu0
  %v8212 = vadd.f32 %v7462, %v8211
  %v8213 = vpop.f32.mrb[0].mxu0
  %v8214 = vadd.f32 %v7458, %v8213
  %v8215 = vpop.f32.mrb[0].mxu0
  %v8216 = vadd.f32 %v7462, %v8215
  %8217 = vmatprep.mubr.bf16.mxu0 0
  %8218 = vmatmul.mubr.bf16.gmra.mrb[0].mxu0 %v7373
  %v8219 = vpop.f32.mrb[0].mxu0
  %v8220 = vadd.f32 %v7458, %v8219
  %v8221 = vpop.f32.mrb[0].mxu0
  %v8222 = vadd.f32 %v7462, %v8221
  %v8223 = vpop.f32.mrb[0].mxu0
  %v8224 = vadd.f32 %v7458, %v8223
  %v8225 = vpop.f32.mrb[0].mxu0
  %v8226 = vadd.f32 %v7462, %v8225
  %8227 = vmatprep.mubr.bf16.mxu0 0
  %8228 = vmatmul.mubr.bf16.gmra.mrb[0].mxu0 %v7374
  %v8229 = vpop.f32.mrb[0].mxu0
  %v8230 = vadd.f32 %v7458, %v8229
  %v8231 = vpop.f32.mrb[0].mxu0
  %v8232 = vadd.f32 %v7462, %v8231
  %v8233 = vpop.f32.mrb[0].mxu0
  %v8234 = vadd.f32 %v7458, %v8233
  %v8235 = vpop.f32.mrb[0].mxu0
  %v8236 = vadd.f32 %v7462, %v8235
  %8237 = vmatprep.mubr.bf16.mxu0 0
  %8238 = vmatmul.mubr.bf16.gmra.mrb[0].mxu0 %v7375
  %v8239 = vpop.f32.mrb[0].mxu0
  %v8240 = vadd.f32 %v7458, %v8239
  %v8241 = vpop.f32.mrb[0].mxu0
  %v8242 = vadd.f32 %v7462, %v8241
  %v8243 = vpop.f32.mrb[0].mxu0
  %v8244 = vadd.f32 %v7458, %v8243
  %v8245 = vpop.f32.mrb[0].mxu0
  %v8246 = vadd.f32 %v7462, %v8245
  %8247 = vmatprep.mubr.bf16.mxu0 0
  %8248 = vmatmul.mubr.bf16.gmra.mrb[0].mxu0 %v7376
  %v8249 = vpop.f32.mrb[0].mxu0
  %v8250 = vadd.f32 %v7458, %v8249
  %v8251 = vpop.f32.mrb[0].mxu0
  %v8252 = vadd.f32 %v7462, %v8251
  %v8253 = vpop.f32.mrb[0].mxu0
  %v8254 = vadd.f32 %v7458, %v8253
  %v8255 = vpop.f32.mrb[0].mxu0
  %v8256 = vadd.f32 %v7462, %v8255
  %8257 = vmatprep.mubr.bf16.mxu0 0
  %8258 = vmatmul.mubr.bf16.gmra.mrb[0].mxu0 %v7377
  %v8259 = vpop.f32.mrb[0].mxu0
  %v8260 = vadd.f32 %v7458, %v8259
  %v8261 = vpop.f32.mrb[0].mxu0
  %v8262 = vadd.f32 %v7462, %v8261
  %v8263 = vpop.f32.mrb[0].mxu0
  %v8264 = vadd.f32 %v7458, %v8263
  %v8265 = vpop.f32.mrb[0].mxu0
  %v8266 = vadd.f32 %v7462, %v8265
  %8267 = vmatprep.mubr.bf16.mxu0 0
  %8268 = vmatmul.mubr.bf16.gmra.mrb[0].mxu0 %v7378
  %v8269 = vpop.f32.mrb[0].mxu0
  %v8270 = vadd.f32 %v7458, %v8269
  %v8271 = vpop.f32.mrb[0].mxu0
  %v8272 = vadd.f32 %v7462, %v8271
  %v8273 = vpop.f32.mrb[0].mxu0
  %v8274 = vadd.f32 %v7458, %v8273
  %v8275 = vpop.f32.mrb[0].mxu0
  %v8276 = vadd.f32 %v7462, %v8275
  %8277 = vmatprep.mubr.bf16.mxu0 0
  %8278 = vmatmul.mubr.bf16.gmra.mrb[0].mxu0 %v7379
  %v8279 = vpop.f32.mrb[0].mxu0
  %v8280 = vadd.f32 %v7458, %v8279
  %v8281 = vpop.f32.mrb[0].mxu0
  %v8282 = vadd.f32 %v7462, %v8281
  %v8283 = vpop.f32.mrb[0].mxu0
  %v8284 = vadd.f32 %v7458, %v8283
  %v8285 = vpop.f32.mrb[0].mxu0
  %v8286 = vadd.f32 %v7462, %v8285
  %8287 = vmatprep.mubr.bf16.mxu0 0
  %8288 = vmatmul.mubr.bf16.gmra.mrb[0].mxu0 %v7380
  %v8289 = vpop.f32.mrb[0].mxu0
  %v8290 = vadd.f32 %v7458, %v8289
  %v8291 = vpop.f32.mrb[0].mxu0
  %v8292 = vadd.f32 %v7462, %v8291
  %v8293 = vpop.f32.mrb[0].mxu0
  %v8294 = vadd.f32 %v7458, %v8293
  %v8295 = vpop.f32.mrb[0].mxu0
  %v8296 = vadd.f32 %v7462, %v8295
  %8297 = vmatprep.mubr.bf16.mxu0 0
  %8298 = vmatmul.mubr.bf16.gmra.mrb[0].mxu0 %v7381
  %v8299 = vpop.f32.mrb[0].mxu0
  %v8300 = vadd.f32 %v7458, %v8299
  %v8301 = vpop.f32.mrb[0].mxu0
  %v8302 = vadd.f32 %v7462, %v8301
  %v8303 = vpop.f32.mrb[0].mxu0
  %v8304 = vadd.f32 %v7458, %v8303
  %v8305 = vpop.f32.mrb[0].mxu0
  %v8306 = vadd.f32 %v7462, %v8305
  %8307 = vmatprep.mubr.bf16.mxu0 0
  %8308 = vmatmul.mubr.bf16.gmra.mrb[0].mxu0 %v7382
  %v8309 = vpop.f32.mrb[0].mxu0
  %v8310 = vadd.f32 %v7458, %v8309
  %v8311 = vpop.f32.mrb[0].mxu0
  %v8312 = vadd.f32 %v7462, %v8311
  %v8313 = vpop.f32.mrb[0].mxu0
  %v8314 = vadd.f32 %v7458, %v8313
  %v8315 = vpop.f32.mrb[0].mxu0
  %v8316 = vadd.f32 %v7462, %v8315
  %8317 = vmatprep.mubr.bf16.mxu0 0
  %8318 = vmatmul.mubr.bf16.gmra.mrb[0].mxu0 %v7383
  %v8319 = vpop.f32.mrb[0].mxu0
  %v8320 = vadd.f32 %v7458, %v8319
  %v8321 = vpop.f32.mrb[0].mxu0
  %v8322 = vadd.f32 %v7462, %v8321
  %v8323 = vpop.f32.mrb[0].mxu0
  %v8324 = vadd.f32 %v7458, %v8323
  %v8325 = vpop.f32.mrb[0].mxu0
  %v8326 = vadd.f32 %v7462, %v8325
  %8327 = vmatprep.mubr.bf16.mxu0 0
  %8328 = vmatmul.mubr.bf16.gmra.mrb[0].mxu0 %v7384
  %v8329 = vpop.f32.mrb[0].mxu0
  %v8330 = vadd.f32 %v7458, %v8329
  %v8331 = vpop.f32.mrb[0].mxu0
  %v8332 = vadd.f32 %v7462, %v8331
  %v8333 = vpop.f32.mrb[0].mxu0
  %v8334 = vadd.f32 %v7458, %v8333
  %v8335 = vpop.f32.mrb[0].mxu0
  %v8336 = vadd.f32 %v7462, %v8335
  %8337 = vmatprep.mubr.bf16.mxu0 0
  %8338 = vmatmul.mubr.bf16.gmra.mrb[0].mxu0 %v7385
  %v8339 = vpop.f32.mrb[0].mxu0
  %v8340 = vadd.f32 %v7458, %v8339
  %v8341 = vpop.f32.mrb[0].mxu0
  %v8342 = vadd.f32 %v7462, %v8341
  %v8343 = vpop.f32.mrb[0].mxu0
  %v8344 = vadd.f32 %v7458, %v8343
  %v8345 = vpop.f32.mrb[0].mxu0
  %v8346 = vadd.f32 %v7462, %v8345
  %8347 = vmatprep.mubr.bf16.mxu0 0
  %8348 = vmatmul.mubr.bf16.gmra.mrb[0].mxu0 %v7386
  %v8349 = vpop.f32.mrb[0].mxu0
  %v8350 = vadd.f32 %v7458, %v8349
  %v8351 = vpop.f32.mrb[0].mxu0
  %v8352 = vadd.f32 %v7462, %v8351
  %v8353 = vpop.f32.mrb[0].mxu0
  %v8354 = vadd.f32 %v7458, %v8353
  %v8355 = vpop.f32.mrb[0].mxu0
  %v8356 = vadd.f32 %v7462, %v8355
  %8357 = vmatprep.mubr.bf16.mxu0 0
  %8358 = vmatmul.mubr.bf16.gmra.mrb[0].mxu0 %v7387
  %v8359 = vpop.f32.mrb[0].mxu0
  %v8360 = vadd.f32 %v7458, %v8359
  %v8361 = vpop.f32.mrb[0].mxu0
  %v8362 = vadd.f32 %v7462, %v8361
  %v8363 = vpop.f32.mrb[0].mxu0
  %v8364 = vadd.f32 %v7458, %v8363
  %v8365 = vpop.f32.mrb[0].mxu0
  %v8366 = vadd.f32 %v7462, %v8365
  %8367 = vmatprep.mubr.bf16.mxu0 0
  %8368 = vmatmul.mubr.bf16.gmra.mrb[0].mxu0 %v7388
  %v8369 = vpop.f32.mrb[0].mxu0
  %v8370 = vadd.f32 %v7458, %v8369
  %v8371 = vpop.f32.mrb[0].mxu0
  %v8372 = vadd.f32 %v7462, %v8371
  %v8373 = vpop.f32.mrb[0].mxu0
  %v8374 = vadd.f32 %v7458, %v8373
  %v8375 = vpop.f32.mrb[0].mxu0
  %v8376 = vadd.f32 %v7462, %v8375
  %8377 = vmatprep.mubr.bf16.mxu0 0
  %8378 = vmatmul.mubr.bf16.gmra.mrb[0].mxu0 %v7389
  %v8379 = vpop.f32.mrb[0].mxu0
  %v8380 = vadd.f32 %v7458, %v8379
  %v8381 = vpop.f32.mrb[0].mxu0
  %v8382 = vadd.f32 %v7462, %v8381
  %v8383 = vpop.f32.mrb[0].mxu0
  %v8384 = vadd.f32 %v7458, %v8383
  %v8385 = vpop.f32.mrb[0].mxu0
  %v8386 = vadd.f32 %v7462, %v8385
  %8387 = vmatprep.mubr.bf16.mxu0 0
  %8388 = vmatmul.mubr.bf16.gmra.mrb[0].mxu0 %v7390
  %v8389 = vpop.f32.mrb[0].mxu0
  %v8390 = vadd.f32 %v7458, %v8389
  %v8391 = vpop.f32.mrb[0].mxu0
  %v8392 = vadd.f32 %v7462, %v8391
  %v8393 = vpop.f32.mrb[0].mxu0
  %v8394 = vadd.f32 %v7458, %v8393
  %v8395 = vpop.f32.mrb[0].mxu0
  %v8396 = vadd.f32 %v7462, %v8395
  %8397 = vmatprep.mubr.bf16.mxu0 0
  %8398 = vmatmul.mubr.bf16.gmra.mrb[0].mxu0 %v7391
  %v8399 = vpop.f32.mrb[0].mxu0
  %v8400 = vadd.f32 %v7458, %v8399
  %v8401 = vpop.f32.mrb[0].mxu0
  %v8402 = vadd.f32 %v7462, %v8401
  %v8403 = vpop.f32.mrb[0].mxu0
  %v8404 = vadd.f32 %v7458, %v8403
  %v8405 = vpop.f32.mrb[0].mxu0
  %v8406 = vadd.f32 %v7462, %v8405
  %8407 = vmatprep.mubr.bf16.mxu0 0
  %8408 = vmatmul.mubr.bf16.gmra.mrb[0].mxu0 %v7392
  %v8409 = vpop.f32.mrb[0].mxu0
  %v8410 = vadd.f32 %v7458, %v8409
  %v8411 = vpop.f32.mrb[0].mxu0
  %v8412 = vadd.f32 %v7462, %v8411
  %v8413 = vpop.f32.mrb[0].mxu0
  %v8414 = vadd.f32 %v7458, %v8413
  %v8415 = vpop.f32.mrb[0].mxu0
  %v8416 = vadd.f32 %v7462, %v8415
  %8417 = vmatprep.mubr.bf16.mxu0 0
  %8418 = vmatmul.mubr.bf16.gmra.mrb[0].mxu0 %v7393
  %v8419 = vpop.f32.mrb[0].mxu0
  %v8420 = vadd.f32 %v7458, %v8419
  %v8421 = vpop.f32.mrb[0].mxu0
  %v8422 = vadd.f32 %v7462, %v8421
  %v8423 = vpop.f32.mrb[0].mxu0
  %v8424 = vadd.f32 %v7458, %v8423
  %v8425 = vpop.f32.mrb[0].mxu0
  %v8426 = vadd.f32 %v7462, %v8425
  %8427 = vmatprep.mubr.bf16.mxu0 0
  %8428 = vmatmul.mubr.bf16.gmra.mrb[0].mxu0 %v7394
  %v8429 = vpop.f32.mrb[0].mxu0
  %v8430 = vadd.f32 %v7458, %v8429
  %v8431 = vpop.f32.mrb[0].mxu0
  %v8432 = vadd.f32 %v7462, %v8431
  %v8433 = vpop.f32.mrb[0].mxu0
  %v8434 = vadd.f32 %v7458, %v8433
  %v8435 = vpop.f32.mrb[0].mxu0
  %v8436 = vadd.f32 %v7462, %v8435
  %8437 = vmatprep.mubr.bf16.mxu0 0
  %8438 = vmatmul.mubr.bf16.gmra.mrb[0].mxu0 %v7395
  %v8439 = vpop.f32.mrb[0].mxu0
  %v8440 = vadd.f32 %v7458, %v8439
  %v8441 = vpop.f32.mrb[0].mxu0
  %v8442 = vadd.f32 %v7462, %v8441
  %v8443 = vpop.f32.mrb[0].mxu0
  %v8444 = vadd.f32 %v7458, %v8443
  %v8445 = vpop.f32.mrb[0].mxu0
  %v8446 = vadd.f32 %v7462, %v8445
  %8447 = vmatprep.mubr.bf16.mxu0 0
  %8448 = vmatmul.mubr.bf16.gmra.mrb[0].mxu0 %v7396
  %v8449 = vpop.f32.mrb[0].mxu0
  %v8450 = vadd.f32 %v7458, %v8449
  %v8451 = vpop.f32.mrb[0].mxu0
  %v8452 = vadd.f32 %v7462, %v8451
  %v8453 = vpop.f32.mrb[0].mxu0
  %v8454 = vadd.f32 %v7458, %v8453
  %v8455 = vpop.f32.mrb[0].mxu0
  %v8456 = vadd.f32 %v7462, %v8455
  %8457 = vmatprep.mubr.bf16.mxu0 0
  %8458 = vmatmul.mubr.bf16.gmra.mrb[0].mxu0 %v7397
  %v8459 = vpop.f32.mrb[0].mxu0
  %v8460 = vadd.f32 %v7458, %v8459
  %v8461 = vpop.f32.mrb[0].mxu0
  %v8462 = vadd.f32 %v7462, %v8461
  %v8463 = vpop.f32.mrb[0].mxu0
  %v8464 = vadd.f32 %v7458, %v8463
  %v8465 = vpop.f32.mrb[0].mxu0
  %v8466 = vadd.f32 %v7462, %v8465
  %8467 = vmatprep.mubr.bf16.mxu0 0
  %8468 = vmatmul.mubr.bf16.gmra.mrb[0].mxu0 %v7398
  %v8469 = vpop.f32.mrb[0].mxu0
  %v8470 = vadd.f32 %v7458, %v8469
  %v8471 = vpop.f32.mrb[0].mxu0
  %v8472 = vadd.f32 %v7462, %v8471
  %v8473 = vpop.f32.mrb[0].mxu0
  %v8474 = vadd.f32 %v7458, %v8473
  %v8475 = vpop.f32.mrb[0].mxu0
  %v8476 = vadd.f32 %v7462, %v8475
  %8477 = vmatprep.mubr.bf16.mxu0 0
  %8478 = vmatmul.mubr.bf16.gmra.mrb[0].mxu0 %v7399
  %v8479 = vpop.f32.mrb[0].mxu0
  %v8480 = vadd.f32 %v7458, %v8479
  %v8481 = vpop.f32.mrb[0].mxu0
  %v8482 = vadd.f32 %v7462, %v8481
  %v8483 = vpop.f32.mrb[0].mxu0
  %v8484 = vadd.f32 %v7458, %v8483
  %v8485 = vpop.f32.mrb[0].mxu0
  %v8486 = vadd.f32 %v7462, %v8485
  %8487 = vmatprep.mubr.bf16.mxu0 0
  %8488 = vmatmul.mubr.bf16.gmra.mrb[0].mxu0 %v7400
  %v8489 = vpop.f32.mrb[0].mxu0
  %v8490 = vadd.f32 %v7458, %v8489
  %v8491 = vpop.f32.mrb[0].mxu0
  %v8492 = vadd.f32 %v7462, %v8491
  %v8493 = vpop.f32.mrb[0].mxu0
  %v8494 = vadd.f32 %v7458, %v8493
  %v8495 = vpop.f32.mrb[0].mxu0
  %v8496 = vadd.f32 %v7462, %v8495
  %8497 = vmatprep.mubr.bf16.mxu0 0
  %8498 = vmatmul.mubr.bf16.gmra.mrb[0].mxu0 %v7401
  %v8499 = vpop.f32.mrb[0].mxu0
  %v8500 = vadd.f32 %v7458, %v8499
  %v8501 = vpop.f32.mrb[0].mxu0
  %v8502 = vadd.f32 %v7462, %v8501
  %v8503 = vpop.f32.mrb[0].mxu0
  %v8504 = vadd.f32 %v7458, %v8503
  %v8505 = vpop.f32.mrb[0].mxu0
  %v8506 = vadd.f32 %v7462, %v8505
  %8507 = vmatprep.mubr.bf16.mxu0 0
  %8508 = vmatmul.mubr.bf16.gmra.mrb[0].mxu0 %v7402
  %v8509 = vpop.f32.mrb[0].mxu0
  %v8510 = vadd.f32 %v7458, %v8509
  %v8511 = vpop.f32.mrb[0].mxu0
  %v8512 = vadd.f32 %v7462, %v8511
  %v8513 = vpop.f32.mrb[0].mxu0
  %v8514 = vadd.f32 %v7458, %v8513
  %v8515 = vpop.f32.mrb[0].mxu0
  %v8516 = vadd.f32 %v7462, %v8515
  %8517 = vmatprep.mubr.bf16.mxu0 0
  %8518 = vmatmul.mubr.bf16.gmra.mrb[0].mxu0 %v7403
  %v8519 = vpop.f32.mrb[0].mxu0
  %v8520 = vadd.f32 %v7458, %v8519
  %v8521 = vpop.f32.mrb[0].mxu0
  %v8522 = vadd.f32 %v7462, %v8521
  %v8523 = vpop.f32.mrb[0].mxu0
  %v8524 = vadd.f32 %v7458, %v8523
  %v8525 = vpop.f32.mrb[0].mxu0
  %v8526 = vadd.f32 %v7462, %v8525
  %8527 = vmatprep.mubr.bf16.mxu0 0
  %8528 = vmatmul.mubr.bf16.gmra.mrb[0].mxu0 %v7404
  %v8529 = vpop.f32.mrb[0].mxu0
  %v8530 = vadd.f32 %v7458, %v8529
  %v8531 = vpop.f32.mrb[0].mxu0
  %v8532 = vadd.f32 %v7462, %v8531
  %v8533 = vpop.f32.mrb[0].mxu0
  %v8534 = vadd.f32 %v7458, %v8533
  %v8535 = vpop.f32.mrb[0].mxu0
  %v8536 = vadd.f32 %v7462, %v8535
  %8537 = vmatprep.mubr.bf16.mxu0 0
  %8538 = vmatmul.mubr.bf16.gmra.mrb[0].mxu0 %v7405
  %v8539 = vpop.f32.mrb[0].mxu0
  %v8540 = vadd.f32 %v7458, %v8539
  %v8541 = vpop.f32.mrb[0].mxu0
  %v8542 = vadd.f32 %v7462, %v8541
  %v8543 = vpop.f32.mrb[0].mxu0
  %v8544 = vadd.f32 %v7458, %v8543
  %v8545 = vpop.f32.mrb[0].mxu0
  %v8546 = vadd.f32 %v7462, %v8545
  %8547 = vmatprep.mubr.bf16.mxu0 0
  %8548 = vmatmul.mubr.bf16.gmra.mrb[0].mxu0 %v7406
  %v8549 = vpop.f32.mrb[0].mxu0
  %v8550 = vadd.f32 %v7458, %v8549
  %v8551 = vpop.f32.mrb[0].mxu0
  %v8552 = vadd.f32 %v7462, %v8551
  %v8553 = vpop.f32.mrb[0].mxu0
  %v8554 = vadd.f32 %v7458, %v8553
  %v8555 = vpop.f32.mrb[0].mxu0
  %v8556 = vadd.f32 %v7462, %v8555
  %8557 = vmatprep.mubr.bf16.mxu0 0
  %8558 = vmatmul.mubr.bf16.gmra.mrb[0].mxu0 %v7407
  %v8559 = vpop.f32.mrb[0].mxu0
  %v8560 = vadd.f32 %v7458, %v8559
  %v8561 = vpop.f32.mrb[0].mxu0
  %v8562 = vadd.f32 %v7462, %v8561
  %v8563 = vpop.f32.mrb[0].mxu0
  %v8564 = vadd.f32 %v7458, %v8563
  %v8565 = vpop.f32.mrb[0].mxu0
  %v8566 = vadd.f32 %v7462, %v8565
  %8567 = vmatprep.mubr.bf16.mxu0 0
  %8568 = vmatmul.mubr.bf16.gmra.mrb[0].mxu0 %v7408
  %v8569 = vpop.f32.mrb[0].mxu0
  %v8570 = vadd.f32 %v7458, %v8569
  %v8571 = vpop.f32.mrb[0].mxu0
  %v8572 = vadd.f32 %v7462, %v8571
  %v8573 = vpop.f32.mrb[0].mxu0
  %v8574 = vadd.f32 %v7458, %v8573
  %v8575 = vpop.f32.mrb[0].mxu0
  %v8576 = vadd.f32 %v7462, %v8575
  %8577 = vmatprep.mubr.bf16.mxu0 0
  %8578 = vmatmul.mubr.bf16.gmra.mrb[0].mxu0 %v7409
  %v8579 = vpop.f32.mrb[0].mxu0
  %v8580 = vadd.f32 %v7458, %v8579
  %v8581 = vpop.f32.mrb[0].mxu0
  %v8582 = vadd.f32 %v7462, %v8581
  %v8583 = vpop.f32.mrb[0].mxu0
  %v8584 = vadd.f32 %v7458, %v8583
  %v8585 = vpop.f32.mrb[0].mxu0
  %v8586 = vadd.f32 %v7462, %v8585
  %8587 = vmatprep.mubr.bf16.mxu0 0
  %8588 = vmatmul.mubr.bf16.gmra.mrb[0].mxu0 %v7410
  %v8589 = vpop.f32.mrb[0].mxu0
  %v8590 = vadd.f32 %v7458, %v8589
  %v8591 = vpop.f32.mrb[0].mxu0
  %v8592 = vadd.f32 %v7462, %v8591
  %v8593 = vpop.f32.mrb[0].mxu0
  %v8594 = vadd.f32 %v7458, %v8593
  %v8595 = vpop.f32.mrb[0].mxu0
  %v8596 = vadd.f32 %v7462, %v8595
  %8597 = vmatprep.mubr.bf16.mxu0 0
  %8598 = vmatmul.mubr.bf16.gmra.mrb[0].mxu0 %v7411
  %v8599 = vpop.f32.mrb[0].mxu0
  %v8600 = vadd.f32 %v7458, %v8599
  %v8601 = vpop.f32.mrb[0].mxu0
  %v8602 = vadd.f32 %v7462, %v8601
  %v8603 = vpop.f32.mrb[0].mxu0
  %v8604 = vadd.f32 %v7458, %v8603
  %v8605 = vpop.f32.mrb[0].mxu0
  %v8606 = vadd.f32 %v7462, %v8605
  %8607 = vmatprep.mubr.bf16.mxu0 0
  %8608 = vmatmul.mubr.bf16.gmra.mrb[0].mxu0 %v7412
  %v8609 = vpop.f32.mrb[0].mxu0
  %v8610 = vadd.f32 %v7458, %v8609
  %v8611 = vpop.f32.mrb[0].mxu0
  %v8612 = vadd.f32 %v7462, %v8611
  %v8613 = vpop.f32.mrb[0].mxu0
  %v8614 = vadd.f32 %v7458, %v8613
  %v8615 = vpop.f32.mrb[0].mxu0
  %v8616 = vadd.f32 %v7462, %v8615
  %8617 = vmatprep.mubr.bf16.mxu0 0
  %8618 = vmatmul.mubr.bf16.gmra.mrb[0].mxu0 %v7413
  %v8619 = vpop.f32.mrb[0].mxu0
  %v8620 = vadd.f32 %v7458, %v8619
  %v8621 = vpop.f32.mrb[0].mxu0
  %v8622 = vadd.f32 %v7462, %v8621
  %v8623 = vpop.f32.mrb[0].mxu0
  %v8624 = vadd.f32 %v7458, %v8623
  %v8625 = vpop.f32.mrb[0].mxu0
  %v8626 = vadd.f32 %v7462, %v8625
  %8627 = vmatprep.mubr.bf16.mxu0 0
  %8628 = vmatmul.mubr.bf16.gmra.mrb[0].mxu0 %v7414
  %v8629 = vpop.f32.mrb[0].mxu0
  %v8630 = vadd.f32 %v7458, %v8629
  %v8631 = vpop.f32.mrb[0].mxu0
  %v8632 = vadd.f32 %v7462, %v8631
  %v8633 = vpop.f32.mrb[0].mxu0
  %v8634 = vadd.f32 %v7458, %v8633
  %v8635 = vpop.f32.mrb[0].mxu0
  %v8636 = vadd.f32 %v7462, %v8635
  %8637 = vmatprep.mubr.bf16.mxu0 0
  %8638 = vmatmul.mubr.bf16.gmra.mrb[0].mxu0 %v7415
  %v8639 = vpop.f32.mrb[0].mxu0
  %v8640 = vadd.f32 %v7458, %v8639
  %v8641 = vpop.f32.mrb[0].mxu0
  %v8642 = vadd.f32 %v7462, %v8641
  %v8643 = vpop.f32.mrb[0].mxu0
  %v8644 = vadd.f32 %v7458, %v8643
  %v8645 = vpop.f32.mrb[0].mxu0
  %v8646 = vadd.f32 %v7462, %v8645
  %8647 = vmatprep.mubr.bf16.mxu0 0
  %8648 = vmatmul.mubr.bf16.gmra.mrb[0].mxu0 %v7416
  %v8649 = vpop.f32.mrb[0].mxu0
  %v8650 = vadd.f32 %v7458, %v8649
  %v8651 = vpop.f32.mrb[0].mxu0
  %v8652 = vadd.f32 %v7462, %v8651
  %v8653 = vpop.f32.mrb[0].mxu0
  %v8654 = vadd.f32 %v7458, %v8653
  %v8655 = vpop.f32.mrb[0].mxu0
  %v8656 = vadd.f32 %v7462, %v8655
  %8657 = vmatprep.mubr.bf16.mxu0 0
  %8658 = vmatmul.mubr.bf16.gmra.mrb[0].mxu0 %v7417
  %v8659 = vpop.f32.mrb[0].mxu0
  %v8660 = vadd.f32 %v7458, %v8659
  %v8661 = vpop.f32.mrb[0].mxu0
  %v8662 = vadd.f32 %v7462, %v8661
  %v8663 = vpop.f32.mrb[0].mxu0
  %v8664 = vadd.f32 %v7458, %v8663
  %v8665 = vpop.f32.mrb[0].mxu0
  %v8666 = vadd.f32 %v7462, %v8665
  %8667 = vmatprep.mubr.bf16.mxu0 0
  %8668 = vmatmul.mubr.bf16.gmra.mrb[0].mxu0 %v7418
  %v8669 = vpop.f32.mrb[0].mxu0
  %v8670 = vadd.f32 %v7458, %v8669
  %v8671 = vpop.f32.mrb[0].mxu0
  %v8672 = vadd.f32 %v7462, %v8671
  %v8673 = vpop.f32.mrb[0].mxu0
  %v8674 = vadd.f32 %v7458, %v8673
  %v8675 = vpop.f32.mrb[0].mxu0
  %v8676 = vadd.f32 %v7462, %v8675
  %8677 = vmatprep.mubr.bf16.mxu0 0
  %8678 = vmatmul.mubr.bf16.gmra.mrb[0].mxu0 %v7419
  %v8679 = vpop.f32.mrb[0].mxu0
  %v8680 = vadd.f32 %v7458, %v8679
  %v8681 = vpop.f32.mrb[0].mxu0
  %v8682 = vadd.f32 %v7462, %v8681
  %v8683 = vpop.f32.mrb[0].mxu0
  %v8684 = vadd.f32 %v7458, %v8683
  %v8685 = vpop.f32.mrb[0].mxu0
  %v8686 = vadd.f32 %v7462, %v8685
  %8687 = vmatprep.mubr.bf16.mxu0 0
  %8688 = vmatmul.mubr.bf16.gmra.mrb[0].mxu0 %v7420
  %v8689 = vpop.f32.mrb[0].mxu0
  %v8690 = vadd.f32 %v7458, %v8689
  %v8691 = vpop.f32.mrb[0].mxu0
  %v8692 = vadd.f32 %v7462, %v8691
  %v8693 = vpop.f32.mrb[0].mxu0
  %v8694 = vadd.f32 %v7458, %v8693
  %v8695 = vpop.f32.mrb[0].mxu0
  %v8696 = vadd.f32 %v7462, %v8695
  %8697 = vmatprep.mubr.bf16.mxu0 0
  %8698 = vmatmul.mubr.bf16.gmra.mrb[0].mxu0 %v7421
  %v8699 = vpop.f32.mrb[0].mxu0
  %v8700 = vadd.f32 %v7458, %v8699
  %v8701 = vpop.f32.mrb[0].mxu0
  %v8702 = vadd.f32 %v7462, %v8701
  %v8703 = vpop.f32.mrb[0].mxu0
  %v8704 = vadd.f32 %v7458, %v8703
  %v8705 = vpop.f32.mrb[0].mxu0
  %v8706 = vadd.f32 %v7462, %v8705
  %8707 = vmatprep.mubr.bf16.mxu0 0
  %8708 = vmatmul.mubr.bf16.gmra.mrb[0].mxu0 %v7422
  %v8709 = vpop.f32.mrb[0].mxu0
  %v8710 = vadd.f32 %v7458, %v8709
  %v8711 = vpop.f32.mrb[0].mxu0
  %v8712 = vadd.f32 %v7462, %v8711
  %v8713 = vpop.f32.mrb[0].mxu0
  %v8714 = vadd.f32 %v7458, %v8713
  %v8715 = vpop.f32.mrb[0].mxu0
  %v8716 = vadd.f32 %v7462, %v8715
  %8717 = vmatprep.mubr.bf16.mxu0 0
  %8718 = vmatmul.mubr.bf16.gmra.mrb[0].mxu0 %v7423
  %v8719 = vpop.f32.mrb[0].mxu0
  %v8720 = vadd.f32 %v7458, %v8719
  %v8721 = vpop.f32.mrb[0].mxu0
  %v8722 = vadd.f32 %v7462, %v8721
  %v8723 = vpop.f32.mrb[0].mxu0
  %v8724 = vadd.f32 %v7458, %v8723
  %v8725 = vpop.f32.mrb[0].mxu0
  %v8726 = vadd.f32 %v7462, %v8725
  %8727 = vmatprep.mubr.bf16.mxu0 0
  %8728 = vmatmul.mubr.bf16.gmra.mrb[0].mxu0 %v7424
  %v8729 = vpop.f32.mrb[0].mxu0
  %v8730 = vadd.f32 %v7458, %v8729
  %v8731 = vpop.f32.mrb[0].mxu0
  %v8732 = vadd.f32 %v7462, %v8731
  %v8733 = vpop.f32.mrb[0].mxu0
  %v8734 = vadd.f32 %v7458, %v8733
  %v8735 = vpop.f32.mrb[0].mxu0
  %v8736 = vadd.f32 %v7462, %v8735
  %8737 = vmatprep.mubr.bf16.mxu0 0
  %8738 = vmatmul.mubr.bf16.gmra.mrb[0].mxu0 %v7425
  %v8739 = vpop.f32.mrb[0].mxu0
  %v8740 = vadd.f32 %v7458, %v8739
  %v8741 = vpop.f32.mrb[0].mxu0
  %v8742 = vadd.f32 %v7462, %v8741
  %v8743 = vpop.f32.mrb[0].mxu0
  %v8744 = vadd.f32 %v7458, %v8743
  %v8745 = vpop.f32.mrb[0].mxu0
  %v8746 = vadd.f32 %v7462, %v8745
  %8747 = vmatprep.mubr.bf16.mxu0 0
  %8748 = vmatmul.mubr.bf16.gmra.mrb[0].mxu0 %v7426
  %v8749 = vpop.f32.mrb[0].mxu0
  %v8750 = vadd.f32 %v7458, %v8749
  %v8751 = vpop.f32.mrb[0].mxu0
  %v8752 = vadd.f32 %v7462, %v8751
  %v8753 = vpop.f32.mrb[0].mxu0
  %v8754 = vadd.f32 %v7458, %v8753
  %v8755 = vpop.f32.mrb[0].mxu0
  %v8756 = vadd.f32 %v7462, %v8755
  %8757 = vmatprep.mubr.bf16.mxu0 0
  %8758 = vmatmul.mubr.bf16.gmra.mrb[0].mxu0 %v7427
  %v8759 = vpop.f32.mrb[0].mxu0
  %v8760 = vadd.f32 %v7458, %v8759
  %v8761 = vpop.f32.mrb[0].mxu0
  %v8762 = vadd.f32 %v7462, %v8761
  %v8763 = vpop.f32.mrb[0].mxu0
  %v8764 = vadd.f32 %v7458, %v8763
  %v8765 = vpop.f32.mrb[0].mxu0
  %v8766 = vadd.f32 %v7462, %v8765
  %8767 = vmatprep.mubr.bf16.mxu0 0
  %8768 = vmatmul.mubr.bf16.gmra.mrb[0].mxu0 %v7428
  %v8769 = vpop.f32.mrb[0].mxu0
  %v8770 = vadd.f32 %v7458, %v8769
  %v8771 = vpop.f32.mrb[0].mxu0
  %v8772 = vadd.f32 %v7462, %v8771
  %v8773 = vpop.f32.mrb[0].mxu0
  %v8774 = vadd.f32 %v7458, %v8773
  %v8775 = vpop.f32.mrb[0].mxu0
  %v8776 = vadd.f32 %v7462, %v8775
  %8777 = vmatprep.mubr.bf16.mxu0 0
  %8778 = vmatmul.mubr.bf16.gmra.mrb[0].mxu0 %v7429
  %v8779 = vpop.f32.mrb[0].mxu0
  %v8780 = vadd.f32 %v7458, %v8779
  %v8781 = vpop.f32.mrb[0].mxu0
  %v8782 = vadd.f32 %v7462, %v8781
  %v8783 = vpop.f32.mrb[0].mxu0
  %v8784 = vadd.f32 %v7458, %v8783
  %v8785 = vpop.f32.mrb[0].mxu0
  %v8786 = vadd.f32 %v7462, %v8785
  %8787 = vmatprep.mubr.bf16.mxu0 0
  %8788 = vmatmul.mubr.bf16.gmra.mrb[0].mxu0 %v7430
  %v8789 = vpop.f32.mrb[0].mxu0
  %v8790 = vadd.f32 %v7458, %v8789
  %v8791 = vpop.f32.mrb[0].mxu0
  %v8792 = vadd.f32 %v7462, %v8791
  %v8793 = vpop.f32.mrb[0].mxu0
  %v8794 = vadd.f32 %v7458, %v8793
  %v8795 = vpop.f32.mrb[0].mxu0
  %v8796 = vadd.f32 %v7462, %v8795
  %8797 = vmatprep.mubr.bf16.mxu0 0
  %8798 = vmatmul.mubr.bf16.gmra.mrb[0].mxu0 %v7431
  %v8799 = vpop.f32.mrb[0].mxu0
  %v8800 = vadd.f32 %v7458, %v8799
  %v8801 = vpop.f32.mrb[0].mxu0
  %v8802 = vadd.f32 %v7462, %v8801
  %v8803 = vpop.f32.mrb[0].mxu0
  %v8804 = vadd.f32 %v7458, %v8803
  %v8805 = vpop.f32.mrb[0].mxu0
  %v8806 = vadd.f32 %v7462, %v8805
  %8807 = vmatprep.mubr.bf16.mxu0 0
  %8808 = vmatmul.mubr.bf16.gmra.mrb[0].mxu0 %v7432
  %v8809 = vpop.f32.mrb[0].mxu0
  %v8810 = vadd.f32 %v7458, %v8809
  %v8811 = vpop.f32.mrb[0].mxu0
  %v8812 = vadd.f32 %v7462, %v8811
  %v8813 = vpop.f32.mrb[0].mxu0
  %v8814 = vadd.f32 %v7458, %v8813
  %v8815 = vpop.f32.mrb[0].mxu0
  %v8816 = vadd.f32 %v7462, %v8815
  %8817 = vmatprep.mubr.bf16.mxu0 0
  %8818 = vmatmul.mubr.bf16.gmra.mrb[0].mxu0 %v7433
  %v8819 = vpop.f32.mrb[0].mxu0
  %v8820 = vadd.f32 %v7458, %v8819
  %v8821 = vpop.f32.mrb[0].mxu0
  %v8822 = vadd.f32 %v7462, %v8821
  %v8823 = vpop.f32.mrb[0].mxu0
  %v8824 = vadd.f32 %v7458, %v8823
  %v8825 = vpop.f32.mrb[0].mxu0
  %v8826 = vadd.f32 %v7462, %v8825
  %8827 = vmatprep.mubr.bf16.mxu0 0
  %8828 = vmatmul.mubr.bf16.gmra.mrb[0].mxu0 %v7434
  %v8829 = vpop.f32.mrb[0].mxu0
  %v8830 = vadd.f32 %v7458, %v8829
  %v8831 = vpop.f32.mrb[0].mxu0
  %v8832 = vadd.f32 %v7462, %v8831
  %v8833 = vpop.f32.mrb[0].mxu0
  %v8834 = vadd.f32 %v7458, %v8833
  %v8835 = vpop.f32.mrb[0].mxu0
  %v8836 = vadd.f32 %v7462, %v8835
  %8837 = vmatprep.mubr.bf16.mxu0 0
  %8838 = vmatmul.mubr.bf16.gmra.mrb[0].mxu0 %v7435
  %v8839 = vpop.f32.mrb[0].mxu0
  %v8840 = vadd.f32 %v7458, %v8839
  %v8841 = vpop.f32.mrb[0].mxu0
  %v8842 = vadd.f32 %v7462, %v8841
  %v8843 = vpop.f32.mrb[0].mxu0
  %v8844 = vadd.f32 %v7458, %v8843
  %v8845 = vpop.f32.mrb[0].mxu0
  %v8846 = vadd.f32 %v7462, %v8845
  %8847 = vmatprep.mubr.bf16.mxu0 0
  %8848 = vmatmul.mubr.bf16.gmra.mrb[0].mxu0 %v7436
  %v8849 = vpop.f32.mrb[0].mxu0
  %v8850 = vadd.f32 %v7458, %v8849
  %v8851 = vpop.f32.mrb[0].mxu0
  %v8852 = vadd.f32 %v7462, %v8851
  %v8853 = vpop.f32.mrb[0].mxu0
  %v8854 = vadd.f32 %v7458, %v8853
  %v8855 = vpop.f32.mrb[0].mxu0
  %v8856 = vadd.f32 %v7462, %v8855
  %8857 = vdwg.mxu0
  %v8858 = vmax.f32 %v7580, 0.0
  %v8859 = vmax.f32 %v7582, 0.0
  %v8860 = vmax.f32 %v7584, 0.0
  %v8861 = vmax.f32 %v7586, 0.0
  %v8862 = vmax.f32 %v7590, 0.0
  %v8863 = vmax.f32 %v7592, 0.0
  %v8864 = vmax.f32 %v7594, 0.0
  %v8865 = vmax.f32 %v7596, 0.0
  %v8866 = vmax.f32 %v7600, 0.0
  %v8867 = vmax.f32 %v7602, 0.0
  %v8868 = vmax.f32 %v7604, 0.0
  %v8869 = vmax.f32 %v7606, 0.0
  %v8870 = vmax.f32 %v7610, 0.0
  %v8871 = vmax.f32 %v7612, 0.0
  %v8872 = vmax.f32 %v7614, 0.0
  %v8873 = vmax.f32 %v7616, 0.0
  %v8874 = vmax.f32 %v7620, 0.0
  %v8875 = vmax.f32 %v7622, 0.0
  %v8876 = vmax.f32 %v7624, 0.0
  %v8877 = vmax.f32 %v7626, 0.0
  %v8878 = vmax.f32 %v7630, 0.0
  %v8879 = vmax.f32 %v7632, 0.0
  %v8880 = vmax.f32 %v7634, 0.0
  %v8881 = vmax.f32 %v7636, 0.0
  %v8882 = vmax.f32 %v7640, 0.0
  %v8883 = vmax.f32 %v7642, 0.0
  %v8884 = vmax.f32 %v7644, 0.0
  %v8885 = vmax.f32 %v7646, 0.0
  %v8886 = vmax.f32 %v7650, 0.0
  %v8887 = vmax.f32 %v7652, 0.0
  %v8888 = vmax.f32 %v7654, 0.0
  %v8889 = vmax.f32 %v7656, 0.0
  %v8890 = vmax.f32 %v7660, 0.0
  %v8891 = vmax.f32 %v7662, 0.0
  %v8892 = vmax.f32 %v7664, 0.0
  %v8893 = vmax.f32 %v7666, 0.0
  %v8894 = vmax.f32 %v7670, 0.0
  %v8895 = vmax.f32 %v7672, 0.0
  %v8896 = vmax.f32 %v7674, 0.0
  %v8897 = vmax.f32 %v7676, 0.0
  %v8898 = vmax.f32 %v7680, 0.0
  %v8899 = vmax.f32 %v7682, 0.0
  %v8900 = vmax.f32 %v7684, 0.0
  %v8901 = vmax.f32 %v7686, 0.0
  %v8902 = vmax.f32 %v7690, 0.0
  %v8903 = vmax.f32 %v7692, 0.0
  %v8904 = vmax.f32 %v7694, 0.0
  %v8905 = vmax.f32 %v7696, 0.0
  %v8906 = vmax.f32 %v7700, 0.0
  %v8907 = vmax.f32 %v7702, 0.0
  %v8908 = vmax.f32 %v7704, 0.0
  %v8909 = vmax.f32 %v7706, 0.0
  %v8910 = vmax.f32 %v7710, 0.0
  %v8911 = vmax.f32 %v7712, 0.0
  %v8912 = vmax.f32 %v7714, 0.0
  %v8913 = vmax.f32 %v7716, 0.0
  %v8914 = vmax.f32 %v7720, 0.0
  %v8915 = vmax.f32 %v7722, 0.0
  %v8916 = vmax.f32 %v7724, 0.0
  %v8917 = vmax.f32 %v7726, 0.0
  %v8918 = vmax.f32 %v7730, 0.0
  %v8919 = vmax.f32 %v7732, 0.0
  %v8920 = vmax.f32 %v7734, 0.0
  %v8921 = vmax.f32 %v7736, 0.0
  %v8922 = vmax.f32 %v7740, 0.0
  %v8923 = vmax.f32 %v7742, 0.0
  %v8924 = vmax.f32 %v7744, 0.0
  %v8925 = vmax.f32 %v7746, 0.0
  %v8926 = vmax.f32 %v7750, 0.0
  %v8927 = vmax.f32 %v7752, 0.0
  %v8928 = vmax.f32 %v7754, 0.0
  %v8929 = vmax.f32 %v7756, 0.0
  %v8930 = vmax.f32 %v7760, 0.0
  %v8931 = vmax.f32 %v7762, 0.0
  %v8932 = vmax.f32 %v7764, 0.0
  %v8933 = vmax.f32 %v7766, 0.0
  %v8934 = vmax.f32 %v7770, 0.0
  %v8935 = vmax.f32 %v7772, 0.0
  %v8936 = vmax.f32 %v7774, 0.0
  %v8937 = vmax.f32 %v7776, 0.0
  %v8938 = vmax.f32 %v7780, 0.0
  %v8939 = vmax.f32 %v7782, 0.0
  %v8940 = vmax.f32 %v7784, 0.0
  %v8941 = vmax.f32 %v7786, 0.0
  %v8942 = vmax.f32 %v7790, 0.0
  %v8943 = vmax.f32 %v7792, 0.0
  %v8944 = vmax.f32 %v7794, 0.0
  %v8945 = vmax.f32 %v7796, 0.0
  %v8946 = vmax.f32 %v7800, 0.0
  %v8947 = vmax.f32 %v7802, 0.0
  %v8948 = vmax.f32 %v7804, 0.0
  %v8949 = vmax.f32 %v7806, 0.0
  %v8950 = vmax.f32 %v7810, 0.0
  %v8951 = vmax.f32 %v7812, 0.0
  %v8952 = vmax.f32 %v7814, 0.0
  %v8953 = vmax.f32 %v7816, 0.0
  %v8954 = vmax.f32 %v7820, 0.0
  %v8955 = vmax.f32 %v7822, 0.0
  %v8956 = vmax.f32 %v7824, 0.0
  %v8957 = vmax.f32 %v7826, 0.0
  %v8958 = vmax.f32 %v7830, 0.0
  %v8959 = vmax.f32 %v7832, 0.0
  %v8960 = vmax.f32 %v7834, 0.0
  %v8961 = vmax.f32 %v7836, 0.0
  %v8962 = vmax.f32 %v7840, 0.0
  %v8963 = vmax.f32 %v7842, 0.0
  %v8964 = vmax.f32 %v7844, 0.0
  %v8965 = vmax.f32 %v7846, 0.0
  %v8966 = vmax.f32 %v7850, 0.0
  %v8967 = vmax.f32 %v7852, 0.0
  %v8968 = vmax.f32 %v7854, 0.0
  %v8969 = vmax.f32 %v7856, 0.0
  %v8970 = vmax.f32 %v7860, 0.0
  %v8971 = vmax.f32 %v7862, 0.0
  %v8972 = vmax.f32 %v7864, 0.0
  %v8973 = vmax.f32 %v7866, 0.0
  %v8974 = vmax.f32 %v7870, 0.0
  %v8975 = vmax.f32 %v7872, 0.0
  %v8976 = vmax.f32 %v7874, 0.0
  %v8977 = vmax.f32 %v7876, 0.0
  %v8978 = vmax.f32 %v7880, 0.0
  %v8979 = vmax.f32 %v7882, 0.0
  %v8980 = vmax.f32 %v7884, 0.0
  %v8981 = vmax.f32 %v7886, 0.0
  %v8982 = vmax.f32 %v7890, 0.0
  %v8983 = vmax.f32 %v7892, 0.0
  %v8984 = vmax.f32 %v7894, 0.0
  %v8985 = vmax.f32 %v7896, 0.0
  %v8986 = vmax.f32 %v7900, 0.0
  %v8987 = vmax.f32 %v7902, 0.0
  %v8988 = vmax.f32 %v7904, 0.0
  %v8989 = vmax.f32 %v7906, 0.0
  %v8990 = vmax.f32 %v7910, 0.0
  %v8991 = vmax.f32 %v7912, 0.0
  %v8992 = vmax.f32 %v7914, 0.0
  %v8993 = vmax.f32 %v7916, 0.0
  %v8994 = vmax.f32 %v7920, 0.0
  %v8995 = vmax.f32 %v7922, 0.0
  %v8996 = vmax.f32 %v7924, 0.0
  %v8997 = vmax.f32 %v7926, 0.0
  %v8998 = vmax.f32 %v7930, 0.0
  %v8999 = vmax.f32 %v7932, 0.0
  %v9000 = vmax.f32 %v7934, 0.0
  %v9001 = vmax.f32 %v7936, 0.0
  %v9002 = vmax.f32 %v7940, 0.0
  %v9003 = vmax.f32 %v7942, 0.0
  %v9004 = vmax.f32 %v7944, 0.0
  %v9005 = vmax.f32 %v7946, 0.0
  %v9006 = vmax.f32 %v7950, 0.0
  %v9007 = vmax.f32 %v7952, 0.0
  %v9008 = vmax.f32 %v7954, 0.0
  %v9009 = vmax.f32 %v7956, 0.0
  %v9010 = vmax.f32 %v7960, 0.0
  %v9011 = vmax.f32 %v7962, 0.0
  %v9012 = vmax.f32 %v7964, 0.0
  %v9013 = vmax.f32 %v7966, 0.0
  %v9014 = vmax.f32 %v7970, 0.0
  %v9015 = vmax.f32 %v7972, 0.0
  %v9016 = vmax.f32 %v7974, 0.0
  %v9017 = vmax.f32 %v7976, 0.0
  %v9018 = vmax.f32 %v7980, 0.0
  %v9019 = vmax.f32 %v7982, 0.0
  %v9020 = vmax.f32 %v7984, 0.0
  %v9021 = vmax.f32 %v7986, 0.0
  %v9022 = vmax.f32 %v7990, 0.0
  %v9023 = vmax.f32 %v7992, 0.0
  %v9024 = vmax.f32 %v7994, 0.0
  %v9025 = vmax.f32 %v7996, 0.0
  %v9026 = vmax.f32 %v8000, 0.0
  %v9027 = vmax.f32 %v8002, 0.0
  %v9028 = vmax.f32 %v8004, 0.0
  %v9029 = vmax.f32 %v8006, 0.0
  %v9030 = vmax.f32 %v8010, 0.0
  %v9031 = vmax.f32 %v8012, 0.0
  %v9032 = vmax.f32 %v8014, 0.0
  %v9033 = vmax.f32 %v8016, 0.0
  %v9034 = vmax.f32 %v8020, 0.0
  %v9035 = vmax.f32 %v8022, 0.0
  %v9036 = vmax.f32 %v8024, 0.0
  %v9037 = vmax.f32 %v8026, 0.0
  %v9038 = vmax.f32 %v8030, 0.0
  %v9039 = vmax.f32 %v8032, 0.0
  %v9040 = vmax.f32 %v8034, 0.0
  %v9041 = vmax.f32 %v8036, 0.0
  %v9042 = vmax.f32 %v8040, 0.0
  %v9043 = vmax.f32 %v8042, 0.0
  %v9044 = vmax.f32 %v8044, 0.0
  %v9045 = vmax.f32 %v8046, 0.0
  %v9046 = vmax.f32 %v8050, 0.0
  %v9047 = vmax.f32 %v8052, 0.0
  %v9048 = vmax.f32 %v8054, 0.0
  %v9049 = vmax.f32 %v8056, 0.0
  %v9050 = vmax.f32 %v8060, 0.0
  %v9051 = vmax.f32 %v8062, 0.0
  %v9052 = vmax.f32 %v8064, 0.0
  %v9053 = vmax.f32 %v8066, 0.0
  %v9054 = vmax.f32 %v8070, 0.0
  %v9055 = vmax.f32 %v8072, 0.0
  %v9056 = vmax.f32 %v8074, 0.0
  %v9057 = vmax.f32 %v8076, 0.0
  %v9058 = vmax.f32 %v8080, 0.0
  %v9059 = vmax.f32 %v8082, 0.0
  %v9060 = vmax.f32 %v8084, 0.0
  %v9061 = vmax.f32 %v8086, 0.0
  %v9062 = vmax.f32 %v8090, 0.0
  %v9063 = vmax.f32 %v8092, 0.0
  %v9064 = vmax.f32 %v8094, 0.0
  %v9065 = vmax.f32 %v8096, 0.0
  %v9066 = vmax.f32 %v8100, 0.0
  %v9067 = vmax.f32 %v8102, 0.0
  %v9068 = vmax.f32 %v8104, 0.0
  %v9069 = vmax.f32 %v8106, 0.0
  %v9070 = vmax.f32 %v8110, 0.0
  %v9071 = vmax.f32 %v8112, 0.0
  %v9072 = vmax.f32 %v8114, 0.0
  %v9073 = vmax.f32 %v8116, 0.0
  %v9074 = vmax.f32 %v8120, 0.0
  %v9075 = vmax.f32 %v8122, 0.0
  %v9076 = vmax.f32 %v8124, 0.0
  %v9077 = vmax.f32 %v8126, 0.0
  %v9078 = vmax.f32 %v8130, 0.0
  %v9079 = vmax.f32 %v8132, 0.0
  %v9080 = vmax.f32 %v8134, 0.0
  %v9081 = vmax.f32 %v8136, 0.0
  %v9082 = vmax.f32 %v8140, 0.0
  %v9083 = vmax.f32 %v8142, 0.0
  %v9084 = vmax.f32 %v8144, 0.0
  %v9085 = vmax.f32 %v8146, 0.0
  %v9086 = vmax.f32 %v8150, 0.0
  %v9087 = vmax.f32 %v8152, 0.0
  %v9088 = vmax.f32 %v8154, 0.0
  %v9089 = vmax.f32 %v8156, 0.0
  %v9090 = vmax.f32 %v8160, 0.0
  %v9091 = vmax.f32 %v8162, 0.0
  %v9092 = vmax.f32 %v8164, 0.0
  %v9093 = vmax.f32 %v8166, 0.0
  %v9094 = vmax.f32 %v8170, 0.0
  %v9095 = vmax.f32 %v8172, 0.0
  %v9096 = vmax.f32 %v8174, 0.0
  %v9097 = vmax.f32 %v8176, 0.0
  %v9098 = vmax.f32 %v8180, 0.0
  %v9099 = vmax.f32 %v8182, 0.0
  %v9100 = vmax.f32 %v8184, 0.0
  %v9101 = vmax.f32 %v8186, 0.0
  %v9102 = vmax.f32 %v8190, 0.0
  %v9103 = vmax.f32 %v8192, 0.0
  %v9104 = vmax.f32 %v8194, 0.0
  %v9105 = vmax.f32 %v8196, 0.0
  %v9106 = vmax.f32 %v8200, 0.0
  %v9107 = vmax.f32 %v8202, 0.0
  %v9108 = vmax.f32 %v8204, 0.0
  %v9109 = vmax.f32 %v8206, 0.0
  %v9110 = vmax.f32 %v8210, 0.0
  %v9111 = vmax.f32 %v8212, 0.0
  %v9112 = vmax.f32 %v8214, 0.0
  %v9113 = vmax.f32 %v8216, 0.0
  %v9114 = vmax.f32 %v8220, 0.0
  %v9115 = vmax.f32 %v8222, 0.0
  %v9116 = vmax.f32 %v8224, 0.0
  %v9117 = vmax.f32 %v8226, 0.0
  %v9118 = vmax.f32 %v8230, 0.0
  %v9119 = vmax.f32 %v8232, 0.0
  %v9120 = vmax.f32 %v8234, 0.0
  %v9121 = vmax.f32 %v8236, 0.0
  %v9122 = vmax.f32 %v8240, 0.0
  %v9123 = vmax.f32 %v8242, 0.0
  %v9124 = vmax.f32 %v8244, 0.0
  %v9125 = vmax.f32 %v8246, 0.0
  %v9126 = vmax.f32 %v8250, 0.0
  %v9127 = vmax.f32 %v8252, 0.0
  %v9128 = vmax.f32 %v8254, 0.0
  %v9129 = vmax.f32 %v8256, 0.0
  %v9130 = vmax.f32 %v8260, 0.0
  %v9131 = vmax.f32 %v8262, 0.0
  %v9132 = vmax.f32 %v8264, 0.0
  %v9133 = vmax.f32 %v8266, 0.0
  %v9134 = vmax.f32 %v8270, 0.0
  %v9135 = vmax.f32 %v8272, 0.0
  %v9136 = vmax.f32 %v8274, 0.0
  %v9137 = vmax.f32 %v8276, 0.0
  %v9138 = vmax.f32 %v8280, 0.0
  %v9139 = vmax.f32 %v8282, 0.0
  %v9140 = vmax.f32 %v8284, 0.0
  %v9141 = vmax.f32 %v8286, 0.0
  %v9142 = vmax.f32 %v8290, 0.0
  %v9143 = vmax.f32 %v8292, 0.0
  %v9144 = vmax.f32 %v8294, 0.0
  %v9145 = vmax.f32 %v8296, 0.0
  %v9146 = vmax.f32 %v8300, 0.0
  %v9147 = vmax.f32 %v8302, 0.0
  %v9148 = vmax.f32 %v8304, 0.0
  %v9149 = vmax.f32 %v8306, 0.0
  %v9150 = vmax.f32 %v8310, 0.0
  %v9151 = vmax.f32 %v8312, 0.0
  %v9152 = vmax.f32 %v8314, 0.0
  %v9153 = vmax.f32 %v8316, 0.0
  %v9154 = vmax.f32 %v8320, 0.0
  %v9155 = vmax.f32 %v8322, 0.0
  %v9156 = vmax.f32 %v8324, 0.0
  %v9157 = vmax.f32 %v8326, 0.0
  %v9158 = vmax.f32 %v8330, 0.0
  %v9159 = vmax.f32 %v8332, 0.0
  %v9160 = vmax.f32 %v8334, 0.0
  %v9161 = vmax.f32 %v8336, 0.0
  %v9162 = vmax.f32 %v8340, 0.0
  %v9163 = vmax.f32 %v8342, 0.0
  %v9164 = vmax.f32 %v8344, 0.0
  %v9165 = vmax.f32 %v8346, 0.0
  %v9166 = vmax.f32 %v8350, 0.0
  %v9167 = vmax.f32 %v8352, 0.0
  %v9168 = vmax.f32 %v8354, 0.0
  %v9169 = vmax.f32 %v8356, 0.0
  %v9170 = vmax.f32 %v8360, 0.0
  %v9171 = vmax.f32 %v8362, 0.0
  %v9172 = vmax.f32 %v8364, 0.0
  %v9173 = vmax.f32 %v8366, 0.0
  %v9174 = vmax.f32 %v8370, 0.0
  %v9175 = vmax.f32 %v8372, 0.0
  %v9176 = vmax.f32 %v8374, 0.0
  %v9177 = vmax.f32 %v8376, 0.0
  %v9178 = vmax.f32 %v8380, 0.0
  %v9179 = vmax.f32 %v8382, 0.0
  %v9180 = vmax.f32 %v8384, 0.0
  %v9181 = vmax.f32 %v8386, 0.0
  %v9182 = vmax.f32 %v8390, 0.0
  %v9183 = vmax.f32 %v8392, 0.0
  %v9184 = vmax.f32 %v8394, 0.0
  %v9185 = vmax.f32 %v8396, 0.0
  %v9186 = vmax.f32 %v8400, 0.0
  %v9187 = vmax.f32 %v8402, 0.0
  %v9188 = vmax.f32 %v8404, 0.0
  %v9189 = vmax.f32 %v8406, 0.0
  %v9190 = vmax.f32 %v8410, 0.0
  %v9191 = vmax.f32 %v8412, 0.0
  %v9192 = vmax.f32 %v8414, 0.0
  %v9193 = vmax.f32 %v8416, 0.0
  %v9194 = vmax.f32 %v8420, 0.0
  %v9195 = vmax.f32 %v8422, 0.0
  %v9196 = vmax.f32 %v8424, 0.0
  %v9197 = vmax.f32 %v8426, 0.0
  %v9198 = vmax.f32 %v8430, 0.0
  %v9199 = vmax.f32 %v8432, 0.0
  %v9200 = vmax.f32 %v8434, 0.0
  %v9201 = vmax.f32 %v8436, 0.0
  %v9202 = vmax.f32 %v8440, 0.0
  %v9203 = vmax.f32 %v8442, 0.0
  %v9204 = vmax.f32 %v8444, 0.0
  %v9205 = vmax.f32 %v8446, 0.0
  %v9206 = vmax.f32 %v8450, 0.0
  %v9207 = vmax.f32 %v8452, 0.0
  %v9208 = vmax.f32 %v8454, 0.0
  %v9209 = vmax.f32 %v8456, 0.0
  %v9210 = vmax.f32 %v8460, 0.0
  %v9211 = vmax.f32 %v8462, 0.0
  %v9212 = vmax.f32 %v8464, 0.0
  %v9213 = vmax.f32 %v8466, 0.0
  %v9214 = vmax.f32 %v8470, 0.0
  %v9215 = vmax.f32 %v8472, 0.0
  %v9216 = vmax.f32 %v8474, 0.0
  %v9217 = vmax.f32 %v8476, 0.0
  %v9218 = vmax.f32 %v8480, 0.0
  %v9219 = vmax.f32 %v8482, 0.0
  %v9220 = vmax.f32 %v8484, 0.0
  %v9221 = vmax.f32 %v8486, 0.0
  %v9222 = vmax.f32 %v8490, 0.0
  %v9223 = vmax.f32 %v8492, 0.0
  %v9224 = vmax.f32 %v8494, 0.0
  %v9225 = vmax.f32 %v8496, 0.0
  %v9226 = vmax.f32 %v8500, 0.0
  %v9227 = vmax.f32 %v8502, 0.0
  %v9228 = vmax.f32 %v8504, 0.0
  %v9229 = vmax.f32 %v8506, 0.0
  %v9230 = vmax.f32 %v8510, 0.0
  %v9231 = vmax.f32 %v8512, 0.0
  %v9232 = vmax.f32 %v8514, 0.0
  %v9233 = vmax.f32 %v8516, 0.0
  %v9234 = vmax.f32 %v8520, 0.0
  %v9235 = vmax.f32 %v8522, 0.0
  %v9236 = vmax.f32 %v8524, 0.0
  %v9237 = vmax.f32 %v8526, 0.0
  %v9238 = vmax.f32 %v8530, 0.0
  %v9239 = vmax.f32 %v8532, 0.0
  %v9240 = vmax.f32 %v8534, 0.0
  %v9241 = vmax.f32 %v8536, 0.0
  %v9242 = vmax.f32 %v8540, 0.0
  %v9243 = vmax.f32 %v8542, 0.0
  %v9244 = vmax.f32 %v8544, 0.0
  %v9245 = vmax.f32 %v8546, 0.0
  %v9246 = vmax.f32 %v8550, 0.0
  %v9247 = vmax.f32 %v8552, 0.0
  %v9248 = vmax.f32 %v8554, 0.0
  %v9249 = vmax.f32 %v8556, 0.0
  %v9250 = vmax.f32 %v8560, 0.0
  %v9251 = vmax.f32 %v8562, 0.0
  %v9252 = vmax.f32 %v8564, 0.0
  %v9253 = vmax.f32 %v8566, 0.0
  %v9254 = vmax.f32 %v8570, 0.0
  %v9255 = vmax.f32 %v8572, 0.0
  %v9256 = vmax.f32 %v8574, 0.0
  %v9257 = vmax.f32 %v8576, 0.0
  %v9258 = vmax.f32 %v8580, 0.0
  %v9259 = vmax.f32 %v8582, 0.0
  %v9260 = vmax.f32 %v8584, 0.0
  %v9261 = vmax.f32 %v8586, 0.0
  %v9262 = vmax.f32 %v8590, 0.0
  %v9263 = vmax.f32 %v8592, 0.0
  %v9264 = vmax.f32 %v8594, 0.0
  %v9265 = vmax.f32 %v8596, 0.0
  %v9266 = vmax.f32 %v8600, 0.0
  %v9267 = vmax.f32 %v8602, 0.0
  %v9268 = vmax.f32 %v8604, 0.0
  %v9269 = vmax.f32 %v8606, 0.0
  %v9270 = vmax.f32 %v8610, 0.0
  %v9271 = vmax.f32 %v8612, 0.0
  %v9272 = vmax.f32 %v8614, 0.0
  %v9273 = vmax.f32 %v8616, 0.0
  %v9274 = vmax.f32 %v8620, 0.0
  %v9275 = vmax.f32 %v8622, 0.0
  %v9276 = vmax.f32 %v8624, 0.0
  %v9277 = vmax.f32 %v8626, 0.0
  %v9278 = vmax.f32 %v8630, 0.0
  %v9279 = vmax.f32 %v8632, 0.0
  %v9280 = vmax.f32 %v8634, 0.0
  %v9281 = vmax.f32 %v8636, 0.0
  %v9282 = vmax.f32 %v8640, 0.0
  %v9283 = vmax.f32 %v8642, 0.0
  %v9284 = vmax.f32 %v8644, 0.0
  %v9285 = vmax.f32 %v8646, 0.0
  %v9286 = vmax.f32 %v8650, 0.0
  %v9287 = vmax.f32 %v8652, 0.0
  %v9288 = vmax.f32 %v8654, 0.0
  %v9289 = vmax.f32 %v8656, 0.0
  %v9290 = vmax.f32 %v8660, 0.0
  %v9291 = vmax.f32 %v8662, 0.0
  %v9292 = vmax.f32 %v8664, 0.0
  %v9293 = vmax.f32 %v8666, 0.0
  %v9294 = vmax.f32 %v8670, 0.0
  %v9295 = vmax.f32 %v8672, 0.0
  %v9296 = vmax.f32 %v8674, 0.0
  %v9297 = vmax.f32 %v8676, 0.0
  %v9298 = vmax.f32 %v8680, 0.0
  %v9299 = vmax.f32 %v8682, 0.0
  %v9300 = vmax.f32 %v8684, 0.0
  %v9301 = vmax.f32 %v8686, 0.0
  %v9302 = vmax.f32 %v8690, 0.0
  %v9303 = vmax.f32 %v8692, 0.0
  %v9304 = vmax.f32 %v8694, 0.0
  %v9305 = vmax.f32 %v8696, 0.0
  %v9306 = vmax.f32 %v8700, 0.0
  %v9307 = vmax.f32 %v8702, 0.0
  %v9308 = vmax.f32 %v8704, 0.0
  %v9309 = vmax.f32 %v8706, 0.0
  %v9310 = vmax.f32 %v8710, 0.0
  %v9311 = vmax.f32 %v8712, 0.0
  %v9312 = vmax.f32 %v8714, 0.0
  %v9313 = vmax.f32 %v8716, 0.0
  %v9314 = vmax.f32 %v8720, 0.0
  %v9315 = vmax.f32 %v8722, 0.0
  %v9316 = vmax.f32 %v8724, 0.0
  %v9317 = vmax.f32 %v8726, 0.0
  %v9318 = vmax.f32 %v8730, 0.0
  %v9319 = vmax.f32 %v8732, 0.0
  %v9320 = vmax.f32 %v8734, 0.0
  %v9321 = vmax.f32 %v8736, 0.0
  %v9322 = vmax.f32 %v8740, 0.0
  %v9323 = vmax.f32 %v8742, 0.0
  %v9324 = vmax.f32 %v8744, 0.0
  %v9325 = vmax.f32 %v8746, 0.0
  %v9326 = vmax.f32 %v8750, 0.0
  %v9327 = vmax.f32 %v8752, 0.0
  %v9328 = vmax.f32 %v8754, 0.0
  %v9329 = vmax.f32 %v8756, 0.0
  %v9330 = vmax.f32 %v8760, 0.0
  %v9331 = vmax.f32 %v8762, 0.0
  %v9332 = vmax.f32 %v8764, 0.0
  %v9333 = vmax.f32 %v8766, 0.0
  %v9334 = vmax.f32 %v8770, 0.0
  %v9335 = vmax.f32 %v8772, 0.0
  %v9336 = vmax.f32 %v8774, 0.0
  %v9337 = vmax.f32 %v8776, 0.0
  %v9338 = vmax.f32 %v8780, 0.0
  %v9339 = vmax.f32 %v8782, 0.0
  %v9340 = vmax.f32 %v8784, 0.0
  %v9341 = vmax.f32 %v8786, 0.0
  %v9342 = vmax.f32 %v8790, 0.0
  %v9343 = vmax.f32 %v8792, 0.0
  %v9344 = vmax.f32 %v8794, 0.0
  %v9345 = vmax.f32 %v8796, 0.0
  %v9346 = vmax.f32 %v8800, 0.0
  %v9347 = vmax.f32 %v8802, 0.0
  %v9348 = vmax.f32 %v8804, 0.0
  %v9349 = vmax.f32 %v8806, 0.0
  %v9350 = vmax.f32 %v8810, 0.0
  %v9351 = vmax.f32 %v8812, 0.0
  %v9352 = vmax.f32 %v8814, 0.0
  %v9353 = vmax.f32 %v8816, 0.0
  %v9354 = vmax.f32 %v8820, 0.0
  %v9355 = vmax.f32 %v8822, 0.0
  %v9356 = vmax.f32 %v8824, 0.0
  %v9357 = vmax.f32 %v8826, 0.0
  %v9358 = vmax.f32 %v8830, 0.0
  %v9359 = vmax.f32 %v8832, 0.0
  %v9360 = vmax.f32 %v8834, 0.0
  %v9361 = vmax.f32 %v8836, 0.0
  %v9362 = vmax.f32 %v8840, 0.0
  %v9363 = vmax.f32 %v8842, 0.0
  %v9364 = vmax.f32 %v8844, 0.0
  %v9365 = vmax.f32 %v8846, 0.0
  %v9366 = vmax.f32 %v8850, 0.0
  %v9367 = vmax.f32 %v8852, 0.0
  %v9368 = vmax.f32 %v8854, 0.0
  %v9369 = vmax.f32 %v8856, 0.0
  %v9370 = vmax.f32 %v8858, %v8860
  %v9371 = vmax.f32 %v9370, %v8862
  %v9372 = vmax.f32 %v9371, %v8864
  %v9373 = vmax.f32 %v9372, %v8866
  %v9374 = vmax.f32 %v9373, %v8868
  %v9375 = vmax.f32 %v9374, %v8870
  %v9376 = vmax.f32 %v9375, %v8872
  %v9377 = vmax.f32 %v9376, %v8874
  %v9378 = vmax.f32 %v9377, %v8876
  %v9379 = vmax.f32 %v9378, %v8878
  %v9380 = vmax.f32 %v9379, %v8880
  %v9381 = vmax.f32 %v9380, %v8882
  %v9382 = vmax.f32 %v9381, %v8884
  %v9383 = vmax.f32 %v9382, %v8886
  %v9384 = vmax.f32 %v9383, %v8888
  %v9385 = vmax.f32 %v9384, %v8890
  %v9386 = vmax.f32 %v9385, %v8892
  %v9387 = vmax.f32 %v9386, %v8894
  %v9388 = vmax.f32 %v9387, %v8896
  %v9389 = vmax.f32 %v9388, %v8898
  %v9390 = vmax.f32 %v9389, %v8900
  %v9391 = vmax.f32 %v9390, %v8902
  %v9392 = vmax.f32 %v9391, %v8904
  %v9393 = vmax.f32 %v9392, %v8906
  %v9394 = vmax.f32 %v9393, %v8908
  %v9395 = vmax.f32 %v9394, %v8910
  %v9396 = vmax.f32 %v9395, %v8912
  %v9397 = vmax.f32 %v9396, %v8914
  %v9398 = vmax.f32 %v9397, %v8916
  %v9399 = vmax.f32 %v9398, %v8918
  %v9400 = vmax.f32 %v9399, %v8920
  %v9401 = vmax.f32 %v9400, %v8922
  %v9402 = vmax.f32 %v9401, %v8924
  %v9403 = vmax.f32 %v9402, %v8926
  %v9404 = vmax.f32 %v9403, %v8928
  %v9405 = vmax.f32 %v9404, %v8930
  %v9406 = vmax.f32 %v9405, %v8932
  %v9407 = vmax.f32 %v9406, %v8934
  %v9408 = vmax.f32 %v9407, %v8936
  %v9409 = vmax.f32 %v9408, %v8938
  %v9410 = vmax.f32 %v9409, %v8940
  %v9411 = vmax.f32 %v9410, %v8942
  %v9412 = vmax.f32 %v9411, %v8944
  %v9413 = vmax.f32 %v9412, %v8946
  %v9414 = vmax.f32 %v9413, %v8948
  %v9415 = vmax.f32 %v9414, %v8950
  %v9416 = vmax.f32 %v9415, %v8952
  %v9417 = vmax.f32 %v9416, %v8954
  %v9418 = vmax.f32 %v9417, %v8956
  %v9419 = vmax.f32 %v9418, %v8958
  %v9420 = vmax.f32 %v9419, %v8960
  %v9421 = vmax.f32 %v9420, %v8962
  %v9422 = vmax.f32 %v9421, %v8964
  %v9423 = vmax.f32 %v9422, %v8966
  %v9424 = vmax.f32 %v9423, %v8968
  %v9425 = vmax.f32 %v9424, %v8970
  %v9426 = vmax.f32 %v9425, %v8972
  %v9427 = vmax.f32 %v9426, %v8974
  %v9428 = vmax.f32 %v9427, %v8976
  %v9429 = vmax.f32 %v9428, %v8978
  %v9430 = vmax.f32 %v9429, %v8980
  %v9431 = vmax.f32 %v9430, %v8982
  %v9432 = vmax.f32 %v9431, %v8984
  %v9433 = vmax.f32 %v9432, %v8986
  %v9434 = vmax.f32 %v9433, %v8988
  %v9435 = vmax.f32 %v9434, %v8990
  %v9436 = vmax.f32 %v9435, %v8992
  %v9437 = vmax.f32 %v9436, %v8994
  %v9438 = vmax.f32 %v9437, %v8996
  %v9439 = vmax.f32 %v9438, %v8998
  %v9440 = vmax.f32 %v9439, %v9000
  %v9441 = vmax.f32 %v9440, %v9002
  %v9442 = vmax.f32 %v9441, %v9004
  %v9443 = vmax.f32 %v9442, %v9006
  %v9444 = vmax.f32 %v9443, %v9008
  %v9445 = vmax.f32 %v9444, %v9010
  %v9446 = vmax.f32 %v9445, %v9012
  %v9447 = vmax.f32 %v9446, %v9014
  %v9448 = vmax.f32 %v9447, %v9016
  %v9449 = vmax.f32 %v9448, %v9018
  %v9450 = vmax.f32 %v9449, %v9020
  %v9451 = vmax.f32 %v9450, %v9022
  %v9452 = vmax.f32 %v9451, %v9024
  %v9453 = vmax.f32 %v9452, %v9026
  %v9454 = vmax.f32 %v9453, %v9028
  %v9455 = vmax.f32 %v9454, %v9030
  %v9456 = vmax.f32 %v9455, %v9032
  %v9457 = vmax.f32 %v9456, %v9034
  %v9458 = vmax.f32 %v9457, %v9036
  %v9459 = vmax.f32 %v9458, %v9038
  %v9460 = vmax.f32 %v9459, %v9040
  %v9461 = vmax.f32 %v9460, %v9042
  %v9462 = vmax.f32 %v9461, %v9044
  %v9463 = vmax.f32 %v9462, %v9046
  %v9464 = vmax.f32 %v9463, %v9048
  %v9465 = vmax.f32 %v9464, %v9050
  %v9466 = vmax.f32 %v9465, %v9052
  %v9467 = vmax.f32 %v9466, %v9054
  %v9468 = vmax.f32 %v9467, %v9056
  %v9469 = vmax.f32 %v9468, %v9058
  %v9470 = vmax.f32 %v9469, %v9060
  %v9471 = vmax.f32 %v9470, %v9062
  %v9472 = vmax.f32 %v9471, %v9064
  %v9473 = vmax.f32 %v9472, %v9066
  %v9474 = vmax.f32 %v9473, %v9068
  %v9475 = vmax.f32 %v9474, %v9070
  %v9476 = vmax.f32 %v9475, %v9072
  %v9477 = vmax.f32 %v9476, %v9074
  %v9478 = vmax.f32 %v9477, %v9076
  %v9479 = vmax.f32 %v9478, %v9078
  %v9480 = vmax.f32 %v9479, %v9080
  %v9481 = vmax.f32 %v9480, %v9082
  %v9482 = vmax.f32 %v9481, %v9084
  %v9483 = vmax.f32 %v9482, %v9086
  %v9484 = vmax.f32 %v9483, %v9088
  %v9485 = vmax.f32 %v9484, %v9090
  %v9486 = vmax.f32 %v9485, %v9092
  %v9487 = vmax.f32 %v9486, %v9094
  %v9488 = vmax.f32 %v9487, %v9096
  %v9489 = vmax.f32 %v9488, %v9098
  %v9490 = vmax.f32 %v9489, %v9100
  %v9491 = vmax.f32 %v9490, %v9102
  %v9492 = vmax.f32 %v9491, %v9104
  %v9493 = vmax.f32 %v9492, %v9106
  %v9494 = vmax.f32 %v9493, %v9108
  %v9495 = vmax.f32 %v9494, %v9110
  %v9496 = vmax.f32 %v9495, %v9112
  %v9497 = vrot.slane %v9496, 4
  %v9498 = vmax.f32 %v9496, %v9497
  %v9499 = vrot.slane %v9498, 2
  %v9500 = vmax.f32 %v9498, %v9499
  %v9501 = vrot.slane %v9500, 1
  %v9502 = vmax.f32 %v9500, %v9501
  %v9503 = vmax.f32 %v8859, %v8861
  %v9504 = vmax.f32 %v9503, %v8863
  %v9505 = vmax.f32 %v9504, %v8865
  %v9506 = vmax.f32 %v9505, %v8867
  %v9507 = vmax.f32 %v9506, %v8869
  %v9508 = vmax.f32 %v9507, %v8871
  %v9509 = vmax.f32 %v9508, %v8873
  %v9510 = vmax.f32 %v9509, %v8875
  %v9511 = vmax.f32 %v9510, %v8877
  %v9512 = vmax.f32 %v9511, %v8879
  %v9513 = vmax.f32 %v9512, %v8881
  %v9514 = vmax.f32 %v9513, %v8883
  %v9515 = vmax.f32 %v9514, %v8885
  %v9516 = vmax.f32 %v9515, %v8887
  %v9517 = vmax.f32 %v9516, %v8889
  %v9518 = vmax.f32 %v9517, %v8891
  %v9519 = vmax.f32 %v9518, %v8893
  %v9520 = vmax.f32 %v9519, %v8895
  %v9521 = vmax.f32 %v9520, %v8897
  %v9522 = vmax.f32 %v9521, %v8899
  %v9523 = vmax.f32 %v9522, %v8901
  %v9524 = vmax.f32 %v9523, %v8903
  %v9525 = vmax.f32 %v9524, %v8905
  %v9526 = vmax.f32 %v9525, %v8907
  %v9527 = vmax.f32 %v9526, %v8909
  %v9528 = vmax.f32 %v9527, %v8911
  %v9529 = vmax.f32 %v9528, %v8913
  %v9530 = vmax.f32 %v9529, %v8915
  %v9531 = vmax.f32 %v9530, %v8917
  %v9532 = vmax.f32 %v9531, %v8919
  %v9533 = vmax.f32 %v9532, %v8921
  %v9534 = vmax.f32 %v9533, %v8923
  %v9535 = vmax.f32 %v9534, %v8925
  %v9536 = vmax.f32 %v9535, %v8927
  %v9537 = vmax.f32 %v9536, %v8929
  %v9538 = vmax.f32 %v9537, %v8931
  %v9539 = vmax.f32 %v9538, %v8933
  %v9540 = vmax.f32 %v9539, %v8935
  %v9541 = vmax.f32 %v9540, %v8937
  %v9542 = vmax.f32 %v9541, %v8939
  %v9543 = vmax.f32 %v9542, %v8941
  %v9544 = vmax.f32 %v9543, %v8943
  %v9545 = vmax.f32 %v9544, %v8945
  %v9546 = vmax.f32 %v9545, %v8947
  %v9547 = vmax.f32 %v9546, %v8949
  %v9548 = vmax.f32 %v9547, %v8951
  %v9549 = vmax.f32 %v9548, %v8953
  %v9550 = vmax.f32 %v9549, %v8955
  %v9551 = vmax.f32 %v9550, %v8957
  %v9552 = vmax.f32 %v9551, %v8959
  %v9553 = vmax.f32 %v9552, %v8961
  %v9554 = vmax.f32 %v9553, %v8963
  %v9555 = vmax.f32 %v9554, %v8965
  %v9556 = vmax.f32 %v9555, %v8967
  %v9557 = vmax.f32 %v9556, %v8969
  %v9558 = vmax.f32 %v9557, %v8971
  %v9559 = vmax.f32 %v9558, %v8973
  %v9560 = vmax.f32 %v9559, %v8975
  %v9561 = vmax.f32 %v9560, %v8977
  %v9562 = vmax.f32 %v9561, %v8979
  %v9563 = vmax.f32 %v9562, %v8981
  %v9564 = vmax.f32 %v9563, %v8983
  %v9565 = vmax.f32 %v9564, %v8985
  %v9566 = vmax.f32 %v9565, %v8987
  %v9567 = vmax.f32 %v9566, %v8989
  %v9568 = vmax.f32 %v9567, %v8991
  %v9569 = vmax.f32 %v9568, %v8993
  %v9570 = vmax.f32 %v9569, %v8995
  %v9571 = vmax.f32 %v9570, %v8997
  %v9572 = vmax.f32 %v9571, %v8999
  %v9573 = vmax.f32 %v9572, %v9001
  %v9574 = vmax.f32 %v9573, %v9003
  %v9575 = vmax.f32 %v9574, %v9005
  %v9576 = vmax.f32 %v9575, %v9007
  %v9577 = vmax.f32 %v9576, %v9009
  %v9578 = vmax.f32 %v9577, %v9011
  %v9579 = vmax.f32 %v9578, %v9013
  %v9580 = vmax.f32 %v9579, %v9015
  %v9581 = vmax.f32 %v9580, %v9017
  %v9582 = vmax.f32 %v9581, %v9019
  %v9583 = vmax.f32 %v9582, %v9021
  %v9584 = vmax.f32 %v9583, %v9023
  %v9585 = vmax.f32 %v9584, %v9025
  %v9586 = vmax.f32 %v9585, %v9027
  %v9587 = vmax.f32 %v9586, %v9029
  %v9588 = vmax.f32 %v9587, %v9031
  %v9589 = vmax.f32 %v9588, %v9033
  %v9590 = vmax.f32 %v9589, %v9035
  %v9591 = vmax.f32 %v9590, %v9037
  %v9592 = vmax.f32 %v9591, %v9039
  %v9593 = vmax.f32 %v9592, %v9041
  %v9594 = vmax.f32 %v9593, %v9043
  %v9595 = vmax.f32 %v9594, %v9045
  %v9596 = vmax.f32 %v9595, %v9047
  %v9597 = vmax.f32 %v9596, %v9049
  %v9598 = vmax.f32 %v9597, %v9051
  %v9599 = vmax.f32 %v9598, %v9053
  %v9600 = vmax.f32 %v9599, %v9055
  %v9601 = vmax.f32 %v9600, %v9057
  %v9602 = vmax.f32 %v9601, %v9059
  %v9603 = vmax.f32 %v9602, %v9061
  %v9604 = vmax.f32 %v9603, %v9063
  %v9605 = vmax.f32 %v9604, %v9065
  %v9606 = vmax.f32 %v9605, %v9067
  %v9607 = vmax.f32 %v9606, %v9069
  %v9608 = vmax.f32 %v9607, %v9071
  %v9609 = vmax.f32 %v9608, %v9073
  %v9610 = vmax.f32 %v9609, %v9075
  %v9611 = vmax.f32 %v9610, %v9077
  %v9612 = vmax.f32 %v9611, %v9079
  %v9613 = vmax.f32 %v9612, %v9081
  %v9614 = vmax.f32 %v9613, %v9083
  %v9615 = vmax.f32 %v9614, %v9085
  %v9616 = vmax.f32 %v9615, %v9087
  %v9617 = vmax.f32 %v9616, %v9089
  %v9618 = vmax.f32 %v9617, %v9091
  %v9619 = vmax.f32 %v9618, %v9093
  %v9620 = vmax.f32 %v9619, %v9095
  %v9621 = vmax.f32 %v9620, %v9097
  %v9622 = vmax.f32 %v9621, %v9099
  %v9623 = vmax.f32 %v9622, %v9101
  %v9624 = vmax.f32 %v9623, %v9103
  %v9625 = vmax.f32 %v9624, %v9105
  %v9626 = vmax.f32 %v9625, %v9107
  %v9627 = vmax.f32 %v9626, %v9109
  %v9628 = vmax.f32 %v9627, %v9111
  %v9629 = vmax.f32 %v9628, %v9113
  %v9630 = vrot.slane %v9629, 4
  %v9631 = vmax.f32 %v9629, %v9630
  %v9632 = vrot.slane %v9631, 2
  %v9633 = vmax.f32 %v9631, %v9632
  %v9634 = vrot.slane %v9633, 1
  %v9635 = vmax.f32 %v9633, %v9634
  %v9636 = vmax.f32 %v9114, %v9116
  %v9637 = vmax.f32 %v9636, %v9118
  %v9638 = vmax.f32 %v9637, %v9120
  %v9639 = vmax.f32 %v9638, %v9122
  %v9640 = vmax.f32 %v9639, %v9124
  %v9641 = vmax.f32 %v9640, %v9126
  %v9642 = vmax.f32 %v9641, %v9128
  %v9643 = vmax.f32 %v9642, %v9130
  %v9644 = vmax.f32 %v9643, %v9132
  %v9645 = vmax.f32 %v9644, %v9134
  %v9646 = vmax.f32 %v9645, %v9136
  %v9647 = vmax.f32 %v9646, %v9138
  %v9648 = vmax.f32 %v9647, %v9140
  %v9649 = vmax.f32 %v9648, %v9142
  %v9650 = vmax.f32 %v9649, %v9144
  %v9651 = vmax.f32 %v9650, %v9146
  %v9652 = vmax.f32 %v9651, %v9148
  %v9653 = vmax.f32 %v9652, %v9150
  %v9654 = vmax.f32 %v9653, %v9152
  %v9655 = vmax.f32 %v9654, %v9154
  %v9656 = vmax.f32 %v9655, %v9156
  %v9657 = vmax.f32 %v9656, %v9158
  %v9658 = vmax.f32 %v9657, %v9160
  %v9659 = vmax.f32 %v9658, %v9162
  %v9660 = vmax.f32 %v9659, %v9164
  %v9661 = vmax.f32 %v9660, %v9166
  %v9662 = vmax.f32 %v9661, %v9168
  %v9663 = vmax.f32 %v9662, %v9170
  %v9664 = vmax.f32 %v9663, %v9172
  %v9665 = vmax.f32 %v9664, %v9174
  %v9666 = vmax.f32 %v9665, %v9176
  %v9667 = vmax.f32 %v9666, %v9178
  %v9668 = vmax.f32 %v9667, %v9180
  %v9669 = vmax.f32 %v9668, %v9182
  %v9670 = vmax.f32 %v9669, %v9184
  %v9671 = vmax.f32 %v9670, %v9186
  %v9672 = vmax.f32 %v9671, %v9188
  %v9673 = vmax.f32 %v9672, %v9190
  %v9674 = vmax.f32 %v9673, %v9192
  %v9675 = vmax.f32 %v9674, %v9194
  %v9676 = vmax.f32 %v9675, %v9196
  %v9677 = vmax.f32 %v9676, %v9198
  %v9678 = vmax.f32 %v9677, %v9200
  %v9679 = vmax.f32 %v9678, %v9202
  %v9680 = vmax.f32 %v9679, %v9204
  %v9681 = vmax.f32 %v9680, %v9206
  %v9682 = vmax.f32 %v9681, %v9208
  %v9683 = vmax.f32 %v9682, %v9210
  %v9684 = vmax.f32 %v9683, %v9212
  %v9685 = vmax.f32 %v9684, %v9214
  %v9686 = vmax.f32 %v9685, %v9216
  %v9687 = vmax.f32 %v9686, %v9218
  %v9688 = vmax.f32 %v9687, %v9220
  %v9689 = vmax.f32 %v9688, %v9222
  %v9690 = vmax.f32 %v9689, %v9224
  %v9691 = vmax.f32 %v9690, %v9226
  %v9692 = vmax.f32 %v9691, %v9228
  %v9693 = vmax.f32 %v9692, %v9230
  %v9694 = vmax.f32 %v9693, %v9232
  %v9695 = vmax.f32 %v9694, %v9234
  %v9696 = vmax.f32 %v9695, %v9236
  %v9697 = vmax.f32 %v9696, %v9238
  %v9698 = vmax.f32 %v9697, %v9240
  %v9699 = vmax.f32 %v9698, %v9242
  %v9700 = vmax.f32 %v9699, %v9244
  %v9701 = vmax.f32 %v9700, %v9246
  %v9702 = vmax.f32 %v9701, %v9248
  %v9703 = vmax.f32 %v9702, %v9250
  %v9704 = vmax.f32 %v9703, %v9252
  %v9705 = vmax.f32 %v9704, %v9254
  %v9706 = vmax.f32 %v9705, %v9256
  %v9707 = vmax.f32 %v9706, %v9258
  %v9708 = vmax.f32 %v9707, %v9260
  %v9709 = vmax.f32 %v9708, %v9262
  %v9710 = vmax.f32 %v9709, %v9264
  %v9711 = vmax.f32 %v9710, %v9266
  %v9712 = vmax.f32 %v9711, %v9268
  %v9713 = vmax.f32 %v9712, %v9270
  %v9714 = vmax.f32 %v9713, %v9272
  %v9715 = vmax.f32 %v9714, %v9274
  %v9716 = vmax.f32 %v9715, %v9276
  %v9717 = vmax.f32 %v9716, %v9278
  %v9718 = vmax.f32 %v9717, %v9280
  %v9719 = vmax.f32 %v9718, %v9282
  %v9720 = vmax.f32 %v9719, %v9284
  %v9721 = vmax.f32 %v9720, %v9286
  %v9722 = vmax.f32 %v9721, %v9288
  %v9723 = vmax.f32 %v9722, %v9290
  %v9724 = vmax.f32 %v9723, %v9292
  %v9725 = vmax.f32 %v9724, %v9294
  %v9726 = vmax.f32 %v9725, %v9296
  %v9727 = vmax.f32 %v9726, %v9298
  %v9728 = vmax.f32 %v9727, %v9300
  %v9729 = vmax.f32 %v9728, %v9302
  %v9730 = vmax.f32 %v9729, %v9304
  %v9731 = vmax.f32 %v9730, %v9306
  %v9732 = vmax.f32 %v9731, %v9308
  %v9733 = vmax.f32 %v9732, %v9310
  %v9734 = vmax.f32 %v9733, %v9312
  %v9735 = vmax.f32 %v9734, %v9314
  %v9736 = vmax.f32 %v9735, %v9316
  %v9737 = vmax.f32 %v9736, %v9318
  %v9738 = vmax.f32 %v9737, %v9320
  %v9739 = vmax.f32 %v9738, %v9322
  %v9740 = vmax.f32 %v9739, %v9324
  %v9741 = vmax.f32 %v9740, %v9326
  %v9742 = vmax.f32 %v9741, %v9328
  %v9743 = vmax.f32 %v9742, %v9330
  %v9744 = vmax.f32 %v9743, %v9332
  %v9745 = vmax.f32 %v9744, %v9334
  %v9746 = vmax.f32 %v9745, %v9336
  %v9747 = vmax.f32 %v9746, %v9338
  %v9748 = vmax.f32 %v9747, %v9340
  %v9749 = vmax.f32 %v9748, %v9342
  %v9750 = vmax.f32 %v9749, %v9344
  %v9751 = vmax.f32 %v9750, %v9346
  %v9752 = vmax.f32 %v9751, %v9348
  %v9753 = vmax.f32 %v9752, %v9350
  %v9754 = vmax.f32 %v9753, %v9352
  %v9755 = vmax.f32 %v9754, %v9354
  %v9756 = vmax.f32 %v9755, %v9356
  %v9757 = vmax.f32 %v9756, %v9358
  %v9758 = vmax.f32 %v9757, %v9360
  %v9759 = vmax.f32 %v9758, %v9362
  %v9760 = vmax.f32 %v9759, %v9364
  %v9761 = vmax.f32 %v9760, %v9366
  %v9762 = vmax.f32 %v9761, %v9368
  %v9763 = vrot.slane %v9762, 4
  %v9764 = vmax.f32 %v9762, %v9763
  %v9765 = vrot.slane %v9764, 2
  %v9766 = vmax.f32 %v9764, %v9765
  %v9767 = vrot.slane %v9766, 1
  %v9768 = vmax.f32 %v9766, %v9767
  %v9769 = vmax.f32 %v9115, %v9117
  %v9770 = vmax.f32 %v9769, %v9119
  %v9771 = vmax.f32 %v9770, %v9121
  %v9772 = vmax.f32 %v9771, %v9123
  %v9773 = vmax.f32 %v9772, %v9125
  %v9774 = vmax.f32 %v9773, %v9127
  %v9775 = vmax.f32 %v9774, %v9129
  %v9776 = vmax.f32 %v9775, %v9131
  %v9777 = vmax.f32 %v9776, %v9133
  %v9778 = vmax.f32 %v9777, %v9135
  %v9779 = vmax.f32 %v9778, %v9137
  %v9780 = vmax.f32 %v9779, %v9139
  %v9781 = vmax.f32 %v9780, %v9141
  %v9782 = vmax.f32 %v9781, %v9143
  %v9783 = vmax.f32 %v9782, %v9145
  %v9784 = vmax.f32 %v9783, %v9147
  %v9785 = vmax.f32 %v9784, %v9149
  %v9786 = vmax.f32 %v9785, %v9151
  %v9787 = vmax.f32 %v9786, %v9153
  %v9788 = vmax.f32 %v9787, %v9155
  %v9789 = vmax.f32 %v9788, %v9157
  %v9790 = vmax.f32 %v9789, %v9159
  %v9791 = vmax.f32 %v9790, %v9161
  %v9792 = vmax.f32 %v9791, %v9163
  %v9793 = vmax.f32 %v9792, %v9165
  %v9794 = vmax.f32 %v9793, %v9167
  %v9795 = vmax.f32 %v9794, %v9169
  %v9796 = vmax.f32 %v9795, %v9171
  %v9797 = vmax.f32 %v9796, %v9173
  %v9798 = vmax.f32 %v9797, %v9175
  %v9799 = vmax.f32 %v9798, %v9177
  %v9800 = vmax.f32 %v9799, %v9179
  %v9801 = vmax.f32 %v9800, %v9181
  %v9802 = vmax.f32 %v9801, %v9183
  %v9803 = vmax.f32 %v9802, %v9185
  %v9804 = vmax.f32 %v9803, %v9187
  %v9805 = vmax.f32 %v9804, %v9189
  %v9806 = vmax.f32 %v9805, %v9191
  %v9807 = vmax.f32 %v9806, %v9193
  %v9808 = vmax.f32 %v9807, %v9195
  %v9809 = vmax.f32 %v9808, %v9197
  %v9810 = vmax.f32 %v9809, %v9199
  %v9811 = vmax.f32 %v9810, %v9201
  %v9812 = vmax.f32 %v9811, %v9203
  %v9813 = vmax.f32 %v9812, %v9205
  %v9814 = vmax.f32 %v9813, %v9207
  %v9815 = vmax.f32 %v9814, %v9209
  %v9816 = vmax.f32 %v9815, %v9211
  %v9817 = vmax.f32 %v9816, %v9213
  %v9818 = vmax.f32 %v9817, %v9215
  %v9819 = vmax.f32 %v9818, %v9217
  %v9820 = vmax.f32 %v9819, %v9219
  %v9821 = vmax.f32 %v9820, %v9221
  %v9822 = vmax.f32 %v9821, %v9223
  %v9823 = vmax.f32 %v9822, %v9225
  %v9824 = vmax.f32 %v9823, %v9227
  %v9825 = vmax.f32 %v9824, %v9229
  %v9826 = vmax.f32 %v9825, %v9231
  %v9827 = vmax.f32 %v9826, %v9233
  %v9828 = vmax.f32 %v9827, %v9235
  %v9829 = vmax.f32 %v9828, %v9237
  %v9830 = vmax.f32 %v9829, %v9239
  %v9831 = vmax.f32 %v9830, %v9241
  %v9832 = vmax.f32 %v9831, %v9243
  %v9833 = vmax.f32 %v9832, %v9245
  %v9834 = vmax.f32 %v9833, %v9247
  %v9835 = vmax.f32 %v9834, %v9249
  %v9836 = vmax.f32 %v9835, %v9251
  %v9837 = vmax.f32 %v9836, %v9253
  %v9838 = vmax.f32 %v9837, %v9255
  %v9839 = vmax.f32 %v9838, %v9257
  %v9840 = vmax.f32 %v9839, %v9259
  %v9841 = vmax.f32 %v9840, %v9261
  %v9842 = vmax.f32 %v9841, %v9263
  %v9843 = vmax.f32 %v9842, %v9265
  %v9844 = vmax.f32 %v9843, %v9267
  %v9845 = vmax.f32 %v9844, %v9269
  %v9846 = vmax.f32 %v9845, %v9271
  %v9847 = vmax.f32 %v9846, %v9273
  %v9848 = vmax.f32 %v9847, %v9275
  %v9849 = vmax.f32 %v9848, %v9277
  %v9850 = vmax.f32 %v9849, %v9279
  %v9851 = vmax.f32 %v9850, %v9281
  %v9852 = vmax.f32 %v9851, %v9283
  %v9853 = vmax.f32 %v9852, %v9285
  %v9854 = vmax.f32 %v9853, %v9287
  %v9855 = vmax.f32 %v9854, %v9289
  %v9856 = vmax.f32 %v9855, %v9291
  %v9857 = vmax.f32 %v9856, %v9293
  %v9858 = vmax.f32 %v9857, %v9295
  %v9859 = vmax.f32 %v9858, %v9297
  %v9860 = vmax.f32 %v9859, %v9299
  %v9861 = vmax.f32 %v9860, %v9301
  %v9862 = vmax.f32 %v9861, %v9303
  %v9863 = vmax.f32 %v9862, %v9305
  %v9864 = vmax.f32 %v9863, %v9307
  %v9865 = vmax.f32 %v9864, %v9309
  %v9866 = vmax.f32 %v9865, %v9311
  %v9867 = vmax.f32 %v9866, %v9313
  %v9868 = vmax.f32 %v9867, %v9315
  %v9869 = vmax.f32 %v9868, %v9317
  %v9870 = vmax.f32 %v9869, %v9319
  %v9871 = vmax.f32 %v9870, %v9321
  %v9872 = vmax.f32 %v9871, %v9323
  %v9873 = vmax.f32 %v9872, %v9325
  %v9874 = vmax.f32 %v9873, %v9327
  %v9875 = vmax.f32 %v9874, %v9329
  %v9876 = vmax.f32 %v9875, %v9331
  %v9877 = vmax.f32 %v9876, %v9333
  %v9878 = vmax.f32 %v9877, %v9335
  %v9879 = vmax.f32 %v9878, %v9337
  %v9880 = vmax.f32 %v9879, %v9339
  %v9881 = vmax.f32 %v9880, %v9341
  %v9882 = vmax.f32 %v9881, %v9343
  %v9883 = vmax.f32 %v9882, %v9345
  %v9884 = vmax.f32 %v9883, %v9347
  %v9885 = vmax.f32 %v9884, %v9349
  %v9886 = vmax.f32 %v9885, %v9351
  %v9887 = vmax.f32 %v9886, %v9353
  %v9888 = vmax.f32 %v9887, %v9355
  %v9889 = vmax.f32 %v9888, %v9357
  %v9890 = vmax.f32 %v9889, %v9359
  %v9891 = vmax.f32 %v9890, %v9361
  %v9892 = vmax.f32 %v9891, %v9363
  %v9893 = vmax.f32 %v9892, %v9365
  %v9894 = vmax.f32 %v9893, %v9367
  %v9895 = vmax.f32 %v9894, %v9369
  %v9896 = vrot.slane %v9895, 4
  %v9897 = vmax.f32 %v9895, %v9896
  %v9898 = vrot.slane %v9897, 2
  %v9899 = vmax.f32 %v9897, %v9898
  %v9900 = vrot.slane %v9899, 1
  %v9901 = vmax.f32 %v9899, %v9900
  %v9902 = vld [vmem:[#allocation2] sm:$0xf]
  %v9907 = vcombine.low %v9502, %v9635
  %v9909 = vunpack.c.l.s4 1983009808
  %v9910 = vunpack.c.0.s8 %v9909
  %v9911 = vlaneseq
  %v9912 = vshrl.u32 %v9911, 7
  %v9913 = vsub.s32 %v9910, %v9912
  %v9914 = vrot.slane %v9907, %v9913
  %v9915 = vcombine.low %v9768, %v9901
  %v9917 = vunpack.c.l.s4 1983009808
  %v9918 = vunpack.c.0.s8 %v9917
  %v9919 = vlaneseq
  %v9920 = vshrl.u32 %v9919, 7
  %v9921 = vsub.s32 %v9918, %v9920
  %v9922 = vrot.slane %v9915, %v9921
  %vm9923 = vcmask 1044484
  %v9924 = vsel %vm9923, %v9914, %v9914
  %vm9925 = vcmask 1046534
  %v9926 = vsel %vm9925, %v9914, %v9924
  %v9927 = vrot.slane %v9922, 7
  %vm9928 = vcmask 1041409
  %v9929 = vsel %vm9928, %v9927, %v9926
  %vm9930 = vcmask 1043459
  %v9931 = vsel %vm9930, %v9927, %v9929
  %vm9932 = vcmask 1045509
  %v9933 = vsel %vm9932, %v9927, %v9931
  %vm9934 = vcmask 1047559
  %v9935 = vsel %vm9934, %v9927, %v9933
  %v9937 = vmax.f32 %v9902, %v9935
  %9938 = vst [vmem:[#allocation2] sm:$0xf] %v9937
  // Predicated region
  $region50: #{tpu_custom_call.1} parent=0 // pred_check
    %p9939 = pneg %p41
  $region51: #{tpu_custom_call.1} parent=0 // pred_check_branch
    %9941 = sbr.rel (%p9939) target = $region53
  $region52: #{tpu_custom_call.1} parent=0 // pred_region
    %v9942 = vld [vmem:[#allocation2] sm:$0xf]
    %v9945 = vunpack.c.l.s4 1983009808
    %v9946 = vunpack.c.0.s8 %v9945
    %v9947 = vlaneseq
    %v9948 = vshrl.u32 %v9947, 7
    %v9949 = vsub.s32 %v9946, %v9948
    %v9950 = vrot.slane %v9942, %v9949
    %v9951 = vcombine.high %v9950, %v9950
    %v9954 = vpack.c.bf16 %v9950, %v9950
    %v9955 = vpack.c.bf16 %v9951, %v9951
    %v9956 = vld [vmem:[%s7] sm:$0xf]
    %v9957 = vld [vmem:[%s7 + $0x4] sm:$0xf]
    %v9958 = vld [vmem:[%s7 + $0x8] sm:$0xf]
    %v9959 = vld [vmem:[%s7 + $0xc] sm:$0xf]
    %v9960 = vld [vmem:[%s7 + $0x10] sm:$0xf]
    %v9961 = vld [vmem:[%s7 + $0x14] sm:$0xf]
    %v9962 = vld [vmem:[%s7 + $0x18] sm:$0xf]
    %v9963 = vld [vmem:[%s7 + $0x1c] sm:$0xf]
    %v9964 = vld [vmem:[%s7 + $0x20] sm:$0xf]
    %v9965 = vld [vmem:[%s7 + $0x24] sm:$0xf]
    %v9966 = vld [vmem:[%s7 + $0x28] sm:$0xf]
    %v9967 = vld [vmem:[%s7 + $0x2c] sm:$0xf]
    %v9968 = vld [vmem:[%s7 + $0x30] sm:$0xf]
    %v9969 = vld [vmem:[%s7 + $0x34] sm:$0xf]
    %v9970 = vld [vmem:[%s7 + $0x38] sm:$0xf]
    %v9971 = vld [vmem:[%s7 + $0x3c] sm:$0xf]
    %v9972 = vld [vmem:[%s7 + $0x40] sm:$0xf]
    %v9973 = vld [vmem:[%s7 + $0x44] sm:$0xf]
    %v9974 = vld [vmem:[%s7 + $0x48] sm:$0xf]
    %v9975 = vld [vmem:[%s7 + $0x4c] sm:$0xf]
    %v9976 = vld [vmem:[%s7 + $0x50] sm:$0xf]
    %v9977 = vld [vmem:[%s7 + $0x54] sm:$0xf]
    %v9978 = vld [vmem:[%s7 + $0x58] sm:$0xf]
    %v9979 = vld [vmem:[%s7 + $0x5c] sm:$0xf]
    %v9980 = vld [vmem:[%s7 + $0x60] sm:$0xf]
    %v9981 = vld [vmem:[%s7 + $0x64] sm:$0xf]
    %v9982 = vld [vmem:[%s7 + $0x68] sm:$0xf]
    %v9983 = vld [vmem:[%s7 + $0x6c] sm:$0xf]
    %v9984 = vld [vmem:[%s7 + $0x70] sm:$0xf]
    %v9985 = vld [vmem:[%s7 + $0x74] sm:$0xf]
    %v9986 = vld [vmem:[%s7 + $0x78] sm:$0xf]
    %v9987 = vld [vmem:[%s7 + $0x7c] sm:$0xf]
    %v9988 = vld [vmem:[%s8] sm:$0x1]
    %v9990 = vlaneseq
    %v9991 = vshrl.u32 %v9990, 7
    %v9992 = vsub.s32 0, %v9991
    %v9993 = vrot.slane %v9988, %v9992
    %v10027 = vunpack.c.l.b16 %v9956
    %v10028 = vunpack.c.l.b16 %v9957
    %v10029 = vunpack.c.l.b16 %v9958
    %v10030 = vunpack.c.l.b16 %v9959
    %v10031 = vunpack.c.l.b16 %v9960
    %v10032 = vunpack.c.l.b16 %v9961
    %v10033 = vunpack.c.l.b16 %v9962
    %v10034 = vunpack.c.l.b16 %v9963
    %v10035 = vunpack.c.l.b16 %v9964
    %v10036 = vunpack.c.l.b16 %v9965
    %v10037 = vunpack.c.l.b16 %v9966
    %v10038 = vunpack.c.l.b16 %v9967
    %v10039 = vunpack.c.l.b16 %v9968
    %v10040 = vunpack.c.l.b16 %v9969
    %v10041 = vunpack.c.l.b16 %v9970
    %v10042 = vunpack.c.l.b16 %v9971
    %v10043 = vunpack.c.l.b16 %v9972
    %v10044 = vunpack.c.l.b16 %v9973
    %v10045 = vunpack.c.l.b16 %v9974
    %v10046 = vunpack.c.l.b16 %v9975
    %v10047 = vunpack.c.l.b16 %v9976
    %v10048 = vunpack.c.l.b16 %v9977
    %v10049 = vunpack.c.l.b16 %v9978
    %v10050 = vunpack.c.l.b16 %v9979
    %v10051 = vunpack.c.l.b16 %v9980
    %v10052 = vunpack.c.l.b16 %v9981
    %v10053 = vunpack.c.l.b16 %v9982
    %v10054 = vunpack.c.l.b16 %v9983
    %v10055 = vunpack.c.l.b16 %v9984
    %v10056 = vunpack.c.l.b16 %v9985
    %v10057 = vunpack.c.l.b16 %v9986
    %v10058 = vunpack.c.l.b16 %v9987
    %v10059 = vpack.c.b16 %v10028, %v10027
    %v10060 = vpack.c.b16 %v10030, %v10029
    %v10061 = vpack.c.b16 %v10032, %v10031
    %v10062 = vpack.c.b16 %v10034, %v10033
    %v10063 = vpack.c.b16 %v10036, %v10035
    %v10064 = vpack.c.b16 %v10038, %v10037
    %v10065 = vpack.c.b16 %v10040, %v10039
    %v10066 = vpack.c.b16 %v10042, %v10041
    %v10067 = vpack.c.b16 %v10044, %v10043
    %v10068 = vpack.c.b16 %v10046, %v10045
    %v10069 = vpack.c.b16 %v10048, %v10047
    %v10070 = vpack.c.b16 %v10050, %v10049
    %v10071 = vpack.c.b16 %v10052, %v10051
    %v10072 = vpack.c.b16 %v10054, %v10053
    %v10073 = vpack.c.b16 %v10056, %v10055
    %v10074 = vpack.c.b16 %v10058, %v10057
    %10091 = vmatprep.subr.bf16.mxu0 0
    %10092 = vmatpush1.bf16.msra.mxu0 %v10059
    %10093 = vmatprep.subr.bf16.mxu0 0
    %10094 = vmatpush1.bf16.msra.mxu0 %v10060
    %10095 = vmatprep.subr.bf16.mxu0 0
    %10096 = vmatpush1.bf16.msra.mxu0 %v10061
    %10097 = vmatprep.subr.bf16.mxu0 0
    %10098 = vmatpush1.bf16.msra.mxu0 %v10062
    %10099 = vmatprep.subr.bf16.mxu0 0
    %10100 = vmatpush1.bf16.msra.mxu0 %v10063
    %10101 = vmatprep.subr.bf16.mxu0 0
    %10102 = vmatpush1.bf16.msra.mxu0 %v10064
    %10103 = vmatprep.subr.bf16.mxu0 0
    %10104 = vmatpush1.bf16.msra.mxu0 %v10065
    %10105 = vmatprep.subr.bf16.mxu0 0
    %10106 = vmatpush1.bf16.msra.mxu0 %v10066
    %10107 = vmatprep.subr.bf16.mxu0 0
    %10108 = vmatpush1.bf16.msra.mxu0 %v10067
    %10109 = vmatprep.subr.bf16.mxu0 0
    %10110 = vmatpush1.bf16.msra.mxu0 %v10068
    %10111 = vmatprep.subr.bf16.mxu0 0
    %10112 = vmatpush1.bf16.msra.mxu0 %v10069
    %10113 = vmatprep.subr.bf16.mxu0 0
    %10114 = vmatpush1.bf16.msra.mxu0 %v10070
    %10115 = vmatprep.subr.bf16.mxu0 0
    %10116 = vmatpush1.bf16.msra.mxu0 %v10071
    %10117 = vmatprep.subr.bf16.mxu0 0
    %10118 = vmatpush1.bf16.msra.mxu0 %v10072
    %10119 = vmatprep.subr.bf16.mxu0 0
    %10120 = vmatpush1.bf16.msra.mxu0 %v10073
    %10121 = vmatprep.subr.bf16.mxu0 0
    %10122 = vmatpush1.bf16.msra.mxu0 %v10074
    %10123 = vmatprep.mubr.bf16.mxu0 %v9955
    %10124 = vmatmul.mubr.bf16.gmra.mrb[0].mxu0 %v9954
    %v10125 = vpop.f32.mrb[0].mxu0
    %v10126 = vadd.f32 %v9993, %v10125
    %v10127 = vpop.f32.mrb[0].mxu0
    %v10128 = vpop.f32.mrb[0].mxu0
    %v10129 = vpop.f32.mrb[0].mxu0
    %10130 = vdwg.mxu0
    %v10131 = vmax.f32 %v10126, 0.0
    %v10132 = vld [vmem:[%s9] sm:$0xff]
    %v10133 = vld [vmem:[%s9 + $0x8] sm:$0xff]
    %v10134 = vld [vmem:[%s9 + $0x10] sm:$0xff]
    %v10135 = vld [vmem:[%s9 + $0x18] sm:$0xff]
    %v10136 = vld [vmem:[%s9 + $0x20] sm:$0xff]
    %v10137 = vld [vmem:[%s9 + $0x28] sm:$0xff]
    %v10138 = vld [vmem:[%s9 + $0x30] sm:$0xff]
    %v10139 = vld [vmem:[%s9 + $0x38] sm:$0xff]
    %v10140 = vld [vmem:[%s9 + $0x40] sm:$0xff]
    %v10141 = vld [vmem:[%s9 + $0x48] sm:$0xff]
    %v10142 = vld [vmem:[%s9 + $0x50] sm:$0xff]
    %v10143 = vld [vmem:[%s9 + $0x58] sm:$0xff]
    %v10144 = vld [vmem:[%s9 + $0x60] sm:$0xff]
    %v10145 = vld [vmem:[%s9 + $0x68] sm:$0xff]
    %v10146 = vld [vmem:[%s9 + $0x70] sm:$0xff]
    %v10147 = vld [vmem:[%s9 + $0x78] sm:$0xff]
    %v10148 = vld [vmem:[#allocation3] sm:$0x1]
    %v10150 = vlaneseq
    %v10151 = vshrl.u32 %v10150, 7
    %v10152 = vsub.s32 0, %v10151
    %v10153 = vrot.slane %v10148, %v10152
    %10155 = vmatprep.subr.mxu0 0.0
    %10156 = vmatpush1.msra.mxu0 %v10132
    %10157 = vmatprep.subr.mxu0 0.0
    %10158 = vmatpush1.msra.mxu0 %v10133
    %10159 = vmatprep.subr.mxu0 0.0
    %10160 = vmatpush1.msra.mxu0 %v10134
    %10161 = vmatprep.subr.mxu0 0.0
    %10162 = vmatpush1.msra.mxu0 %v10135
    %10163 = vmatprep.subr.mxu0 0.0
    %10164 = vmatpush1.msra.mxu0 %v10136
    %10165 = vmatprep.subr.mxu0 0.0
    %10166 = vmatpush1.msra.mxu0 %v10137
    %10167 = vmatprep.subr.mxu0 0.0
    %10168 = vmatpush1.msra.mxu0 %v10138
    %10169 = vmatprep.subr.mxu0 0.0
    %10170 = vmatpush1.msra.mxu0 %v10139
    %10171 = vmatprep.subr.mxu0 0.0
    %10172 = vmatpush1.msra.mxu0 %v10140
    %10173 = vmatprep.subr.mxu0 0.0
    %10174 = vmatpush1.msra.mxu0 %v10141
    %10175 = vmatprep.subr.mxu0 0.0
    %10176 = vmatpush1.msra.mxu0 %v10142
    %10177 = vmatprep.subr.mxu0 0.0
    %10178 = vmatpush1.msra.mxu0 %v10143
    %10179 = vmatprep.subr.mxu0 0.0
    %10180 = vmatpush1.msra.mxu0 %v10144
    %10181 = vmatprep.subr.mxu0 0.0
    %10182 = vmatpush1.msra.mxu0 %v10145
    %10183 = vmatprep.subr.mxu0 0.0
    %10184 = vmatpush1.msra.mxu0 %v10146
    %10185 = vmatprep.subr.mxu0 0.0
    %10186 = vmatpush1.msra.mxu0 %v10147
    %10187 = vmatprep.subr.mxu0 0.0
    %10188 = vmatpush1.msra.mxu0 0.0
    %10189 = vmatprep.subr.mxu0 0.0
    %10190 = vmatpush1.msra.mxu0 0.0
    %10191 = vmatprep.subr.mxu0 0.0
    %10192 = vmatpush1.msra.mxu0 0.0
    %10193 = vmatprep.subr.mxu0 0.0
    %10194 = vmatpush1.msra.mxu0 0.0
    %10195 = vmatprep.subr.mxu0 0.0
    %10196 = vmatpush1.msra.mxu0 0.0
    %10197 = vmatprep.subr.mxu0 0.0
    %10198 = vmatpush1.msra.mxu0 0.0
    %10199 = vmatprep.subr.mxu0 0.0
    %10200 = vmatpush1.msra.mxu0 0.0
    %10201 = vmatprep.subr.mxu0 0.0
    %10202 = vmatpush1.msra.mxu0 0.0
    %10203 = vmatprep.subr.mxu0 0.0
    %10204 = vmatpush1.msra.mxu0 0.0
    %10205 = vmatprep.subr.mxu0 0.0
    %10206 = vmatpush1.msra.mxu0 0.0
    %10207 = vmatprep.subr.mxu0 0.0
    %10208 = vmatpush1.msra.mxu0 0.0
    %10209 = vmatprep.subr.mxu0 0.0
    %10210 = vmatpush1.msra.mxu0 0.0
    %10211 = vmatprep.subr.mxu0 0.0
    %10212 = vmatpush1.msra.mxu0 0.0
    %10213 = vmatprep.subr.mxu0 0.0
    %10214 = vmatpush1.msra.mxu0 0.0
    %10215 = vmatprep.subr.mxu0 0.0
    %10216 = vmatpush1.msra.mxu0 0.0
    %10217 = vmatprep.subr.mxu0 0.0
    %10218 = vmatpush1.msra.mxu0 0.0
    %10219 = vmatprep.mubr.f32.mxu0 0.0
    %10220 = vmatmul.mubr.f32.gmra.mrb[0].mxu0 %v10131
    %v10221 = vpop.f32.mrb[0].mxu0
    %v10222 = vadd.f32 %v10153, %v10221
    %v10223 = vpop.f32.mrb[0].mxu0
    %10224 = vdwg.mxu0
    %v10225 = vxor.u32 %v10222, 2147483648
    %v10226 = vmul.f32 %v10225, 1.442695
    %v10227 = vpow.pop %v10226
    %v10228 = vadd.f32 %v10227, 1.0
    %v10229 = vrcp.pop %v10228
    %v10230 = vmul.f32 1.0, %v10229
    %vm10231 = vcmask 1024
    %10232 = vst.msk [vmem:[%s11] sm:$0x3] %vm10231, %v10230
  $region53: #{tpu_custom_call.1} parent=0 // pred_fallthru
    _
  // Predicated region
  $region54: #{tpu_custom_call.1} parent=0 // pred_check
    _
  $region55: #{tpu_custom_call.1} parent=0 // pred_check_branch
    %10234 = sbr.rel (0) target = $region57
  $region56: #{tpu_custom_call.1} parent=0 // pred_region
    _
  $region57: #{tpu_custom_call.1} parent=0 // pred_fallthru
    _
  // Predicated region
  $region58: #{tpu_custom_call.1} parent=0 // pred_check
    _
  $region59: #{tpu_custom_call.1} parent=0 // pred_check_branch
    %10236 = sbr.rel (0) target = $region61
  $region60: #{tpu_custom_call.1} parent=0 // pred_region
    _
  $region61: #{tpu_custom_call.1} parent=0 // pred_fallthru
    _

</llo_original>
